<compile_context>
chip_gen: v7x
topology: tpu7x:2x2x1
jax: 0.10.0
libtpu: 0.0.40
codegen_flags: <defaults>
</compile_context>

<pallas_src>
import math
from functools import partial

import jax
import jax.numpy as jnp
from jax import lax
from jax.experimental import pallas as pl
from jax.experimental.pallas import tpu as pltpu

BF16 = jnp.bfloat16
F32 = jnp.float32


# ---------------------------------------------------------------------------
# Kernel 1: tgt_fc linear + positional-encoding add (all rows in one block)
# ---------------------------------------------------------------------------
def _input_proj_kernel(x_ref, w_ref, b_ref, pe_ref, o_ref):
    y = jnp.dot(x_ref[...].astype(BF16), w_ref[...], preferred_element_type=F32)
    o_ref[...] = (y + b_ref[...] + pe_ref[...]).astype(o_ref.dtype)


def input_proj_pe(tgt2d, w, b, pe_tiled):
    R, In = tgt2d.shape
    H = w.shape[1]
    return pl.pallas_call(
        _input_proj_kernel,
        grid=(1,),
        in_specs=[
            pl.BlockSpec((R, In), lambda i: (0, 0)),
            pl.BlockSpec((In, H), lambda i: (0, 0)),
            pl.BlockSpec((1, H), lambda i: (0, 0)),
            pl.BlockSpec((R, H), lambda i: (0, 0)),
        ],
        out_specs=pl.BlockSpec((R, H), lambda i: (0, 0)),
        out_shape=jax.ShapeDtypeStruct((R, H), BF16),
        compiler_params=pltpu.CompilerParams(dimension_semantics=("arbitrary",)),
    )(tgt2d, w, b, pe_tiled)


# ---------------------------------------------------------------------------
# Kernel 2: fused self-attention + cross-attention block (per layer, grid over batch)
# ---------------------------------------------------------------------------
def _mha(q_all, k_all, v_all, wo_ref, bo_ref, g_ref, be_ref, resid, *, nhead, eps):
    # q_all: (T, H) f32 (scale already folded into Wq), k_all/v_all: (S, H) f32
    H = q_all.shape[-1]
    dh = H // nhead
    outs = []
    for h in range(nhead):                       # static unroll, nhead small
        lo = h * dh
        qh = q_all[:, lo:lo + dh].astype(BF16)
        kh = k_all[:, lo:lo + dh].astype(BF16)
        vh = v_all[:, lo:lo + dh].astype(BF16)
        # scores: contract on the last (dh) dim -> no XLU transpose
        s = lax.dot_general(qh, kh, (((1,), (1,)), ((), ())),
                            preferred_element_type=F32)            # (T, S)
        m = jnp.max(s, axis=-1, keepdims=True)
        p = jnp.exp(s - m)
        denom = jnp.sum(p, axis=-1, keepdims=True)
        p = p * pl.reciprocal(denom, approx=True)
        outs.append(jnp.dot(p.astype(BF16), vh, preferred_element_type=F32))  # (T, dh)
    attn = jnp.concatenate(outs, axis=-1)                           # (T, H)
    y = jnp.dot(attn.astype(BF16), wo_ref[...], preferred_element_type=F32)
    y = y + bo_ref[...] + resid                                     # residual add
    mean = jnp.mean(y, axis=-1, keepdims=True)
    c = y - mean
    var = jnp.mean(c * c, axis=-1, keepdims=True)
    return c * lax.rsqrt(var + eps) * g_ref[...] + be_ref[...]


def _dual_attn_kernel(x_ref, src_ref,
                      sa_wqkv_ref, sa_bqkv_ref, sa_wo_ref, sa_bo_ref, g1_ref, be1_ref,
                      ca_wq_ref, ca_bq_ref, ca_wkv_ref, ca_bkv_ref, ca_wo_ref, ca_bo_ref,
                      g2_ref, be2_ref, o_ref, *, nhead, eps):
    H = x_ref.shape[-1]
    x = x_ref[...].astype(F32)                     # (T, H) residual base
    src = src_ref[...]                             # (S, H) bf16

    # ---- self-attention: single (T,H)@(H,3H) GEMM for all heads' Q,K,V ----
    qkv = jnp.dot(x_ref[...].astype(BF16), sa_wqkv_ref[...],
                  preferred_element_type=F32) + sa_bqkv_ref[...]
    q = qkv[:, 0:H]
    k = qkv[:, H:2 * H]
    v = qkv[:, 2 * H:3 * H]
    x = _mha(q, k, v, sa_wo_ref, sa_bo_ref, g1_ref, be1_ref, x, nhead=nhead, eps=eps)

    # ---- cross-attention: (T,H)@(H,H) for Q, (S,H)@(H,2H) for K,V ----
    q2 = jnp.dot(x.astype(BF16), ca_wq_ref[...],
                 preferred_element_type=F32) + ca_bq_ref[...]
    kv = jnp.dot(src, ca_wkv_ref[...], preferred_element_type=F32) + ca_bkv_ref[...]
    k2 = kv[:, 0:H]
    v2 = kv[:, H:2 * H]
    x = _mha(q2, k2, v2, ca_wo_ref, ca_bo_ref, g2_ref, be2_ref, x, nhead=nhead, eps=eps)

    o_ref[...] = x.astype(o_ref.dtype)


def dual_attn_block(x2d, src2d, lp, B, T, S, nhead, eps=1e-5):
    H = x2d.shape[1]
    dh = H // nhead
    sa, ca = lp["self_attn"], lp["cross_attn"]

    gemm_flops = 2 * B * (T * H * 3 * H + T * H * H        # self QKV + out-proj
                          + T * H * H + S * H * 2 * H      # cross Q + KV
                          + T * H * H)                      # cross out-proj
    attn_flops = 2 * B * nhead * (2 * T * S * dh) * 2       # scores + PV, both attns
    bytes_accessed = (B * (2 * T * H + S * H + T * H) * 2              # activations bf16
                      + (3 * H * H + H * H + H * H + 2 * H * H + H * H) * 2  # weights bf16
                      + (3 * H + 6 * H + 2 * H + 4 * H) * 4)            # biases / LN f32
    cost = pl.CostEstimate(flops=gemm_flops + attn_flops,
                           transcendentals=2 * B * nhead * T * S,
                           bytes_accessed=bytes_accessed)

    return pl.pallas_call(
        partial(_dual_attn_kernel, nhead=nhead, eps=eps),
        grid=(B,),
        in_specs=[
            pl.BlockSpec((T, H), lambda b: (b, 0)),
            pl.BlockSpec((S, H), lambda b: (b, 0)),
            pl.BlockSpec((H, 3 * H), lambda b: (0, 0)),
            pl.BlockSpec((1, 3 * H), lambda b: (0, 0)),
            pl.BlockSpec((H, H), lambda b: (0, 0)),
            pl.BlockSpec((1, H), lambda b: (0, 0)),
            pl.BlockSpec((1, H), lambda b: (0, 0)),
            pl.BlockSpec((1, H), lambda b: (0, 0)),
            pl.BlockSpec((H, H), lambda b: (0, 0)),
            pl.BlockSpec((1, H), lambda b: (0, 0)),
            pl.BlockSpec((H, 2 * H), lambda b: (0, 0)),
            pl.BlockSpec((1, 2 * H), lambda b: (0, 0)),
            pl.BlockSpec((H, H), lambda b: (0, 0)),
            pl.BlockSpec((1, H), lambda b: (0, 0)),
            pl.BlockSpec((1, H), lambda b: (0, 0)),
            pl.BlockSpec((1, H), lambda b: (0, 0)),
        ],
        out_specs=pl.BlockSpec((T, H), lambda b: (b, 0)),
        out_shape=jax.ShapeDtypeStruct((B * T, H), BF16),
        compiler_params=pltpu.CompilerParams(dimension_semantics=("parallel",)),
        cost_estimate=cost,
    )(x2d, src2d,
      sa["w_qkv"], sa["b_qkv"], sa["w_o"], sa["b_o"], lp["g1"], lp["be1"],
      ca["w_q"], ca["b_q"], ca["w_kv"], ca["b_kv"], ca["w_o"], ca["b_o"],
      lp["g2"], lp["be2"])


# ---------------------------------------------------------------------------
# Kernel 3: fused FFN block (+ optional fused final decoder LayerNorm)
#   Rows = all B*T inside the block; grid only over dff chunks so each weight
#   chunk is streamed exactly once per layer.  f32 accumulator scratch.
# ---------------------------------------------------------------------------
def _ffn_kernel(x_ref, w1_ref, b1_ref, w2_ref, b2_ref, g_ref, be_ref,
                fg_ref, fb_ref, o_ref, acc_ref, *, eps, final_ln):
    j = pl.program_id(0)

    @pl.when(j == 0)
    def _():
        acc_ref[...] = jnp.zeros_like(acc_ref)

    h = jnp.dot(x_ref[...].astype(BF16), w1_ref[...],
                preferred_element_type=F32) + b1_ref[...]            # (R, tdff)
    h = jnp.maximum(h, 0.0)
    acc_ref[...] += jnp.dot(h.astype(BF16), w2_ref[...],
                            preferred_element_type=F32)              # (R, H)

    @pl.when(j == pl.num_programs(0) - 1)
    def _():
        y = acc_ref[...] + b2_ref[...] + x_ref[...].astype(F32)      # bias + residual
        mean = jnp.mean(y, axis=-1, keepdims=True)
        c = y - mean
        var = jnp.mean(c * c, axis=-1, keepdims=True)
        y = c * lax.rsqrt(var + eps) * g_ref[...] + be_ref[...]
        if final_ln:                                                 # static flag
            mean = jnp.mean(y, axis=-1, keepdims=True)
            c = y - mean
            var = jnp.mean(c * c, axis=-1, keepdims=True)
            y = c * lax.rsqrt(var + eps) * fg_ref[...] + fb_ref[...]
        o_ref[...] = y.astype(o_ref.dtype)


def ffn_block(x2d, lp, final_g, final_b, *, tdff=512, eps=1e-5,
              final_ln=False, out_dtype=BF16):
    R, H = x2d.shape
    dff = lp["w1"].shape[1]
    tdff = min(tdff, dff)             # keep a multiple of 256 for v6e/v7x MXU fill
    assert dff % tdff == 0
    n_chunks = dff // tdff

    cost = pl.CostEstimate(
        flops=2 * R * H * dff * 2,
        transcendentals=0,
        bytes_accessed=2 * R * H * 2 + 2 * H * dff * 2 + (dff + 6 * H) * 4)

    return pl.pallas_call(
        partial(_ffn_kernel, eps=eps, final_ln=final_ln),
        grid=(n_chunks,),
        in_specs=[
            pl.BlockSpec((R, H), lambda j: (0, 0)),
            pl.BlockSpec((H, tdff), lambda j: (0, j)),
            pl.BlockSpec((1, tdff), lambda j: (0, j)),
            pl.BlockSpec((tdff, H), lambda j: (j, 0)),
            pl.BlockSpec((1, H), lambda j: (0, 0)),
            pl.BlockSpec((1, H), lambda j: (0, 0)),
            pl.BlockSpec((1, H), lambda j: (0, 0)),
            pl.BlockSpec((1, H), lambda j: (0, 0)),
            pl.BlockSpec((1, H), lambda j: (0, 0)),
        ],
        out_specs=pl.BlockSpec((R, H), lambda j: (0, 0)),
        out_shape=jax.ShapeDtypeStruct((R, H), out_dtype),
        scratch_shapes=[pltpu.VMEM((R, H), F32)],
        compiler_params=pltpu.CompilerParams(dimension_semantics=("arbitrary",)),
        cost_estimate=cost,
    )(x2d, lp["w1"], lp["b1"], lp["w2"], lp["b2"], lp["g3"], lp["be3"],
      final_g, final_b)


# ---------------------------------------------------------------------------
# Parameters / model glue
# ---------------------------------------------------------------------------
def positional_encoding(max_len, dim):
    assert dim % 2 == 0, "positional encoding expects an even model dimension"
    pos = jnp.arange(max_len, dtype=F32)[:, None]
    div = jnp.exp(jnp.arange(0, dim, 2, dtype=F32) * (-math.log(10000.0) / dim))
    pe = jnp.zeros((max_len, dim), F32)
    pe = pe.at[:, 0::2].set(jnp.sin(pos * div))
    pe = pe.at[:, 1::2].set(jnp.cos(pos * div))
    return pe


def init_params(key, input_size, hidden, num_layers, nhead, dff, max_len=64):
    dh = hidden // nhead
    scale = 1.0 / math.sqrt(dh)          # folded into Wq / bq at prep time

    def rnd(k, shape):
        return 0.02 * jax.random.normal(k, shape, F32)

    keys = jax.random.split(key, 1 + num_layers)
    params = {
        "tgt_fc_w": rnd(keys[0], (input_size, hidden)).astype(BF16),
        "tgt_fc_b": jnp.zeros((1, hidden), F32),
        "pe": positional_encoding(max_len, hidden),
        "final_g": jnp.ones((1, hidden), F32),
        "final_b": jnp.zeros((1, hidden), F32),
        "layers": [],
    }
    for l in range(num_layers):
        ks = jax.random.split(keys[1 + l], 6)
        w_qkv = rnd(ks[0], (hidden, 3 * hidden))
        w_qkv = w_qkv.at[:, :hidden].multiply(scale)     # fold 1/sqrt(dh) into Q proj
        w_q = rnd(ks[1], (hidden, hidden)) * scale
        params["layers"].append({
            "self_attn": {
                "w_qkv": w_qkv.astype(BF16),
                "b_qkv": jnp.zeros((1, 3 * hidden), F32),
                "w_o": rnd(ks[2], (hidden, hidden)).astype(BF16),
                "b_o": jnp.zeros((1, hidden), F32),
            },
            "cross_attn": {
                "w_q": w_q.astype(BF16),
                "b_q": jnp.zeros((1, hidden), F32),
                "w_kv": rnd(ks[3], (hidden, 2 * hidden)).astype(BF16),
                "b_kv": jnp.zeros((1, 2 * hidden), F32),
                "w_o": rnd(ks[4], (hidden, hidden)).astype(BF16),
                "b_o": jnp.zeros((1, hidden), F32),
            },
            "w1": rnd(ks[5], (hidden, dff)).astype(BF16),
            "b1": jnp.zeros((1, dff), F32),
            "w2": rnd(jax.random.fold_in(ks[5], 1), (dff, hidden)).astype(BF16),
            "b2": jnp.zeros((1, hidden), F32),
            "g1": jnp.ones((1, hidden), F32), "be1": jnp.zeros((1, hidden), F32),
            "g2": jnp.ones((1, hidden), F32), "be2": jnp.zeros((1, hidden), F32),
            "g3": jnp.ones((1, hidden), F32), "be3": jnp.zeros((1, hidden), F32),
        })
    return params


def transformer_decoder_forward(params, src, tgt, nhead):
    """
    src : (B, S, hidden)      -- encoder memory
    tgt : (B, T, input_size)  -- decoder input
    out : (B, T, hidden)
    Post-norm nn.TransformerDecoderLayer semantics (no masks, inference).
    """
    # TODO(synk): dropout (p=0.1) in Positional_Encoding / decoder layers omitted — inference identity.
    B, T, _ = tgt.shape
    _, S, H = src.shape

    pe_tiled = jnp.tile(params["pe"][:T], (B, 1))            # (B*T, H), tiny
    x = input_proj_pe(tgt.reshape(B * T, -1),
                      params["tgt_fc_w"], params["tgt_fc_b"], pe_tiled)
    src2d = src.reshape(B * S, H).astype(BF16)               # cast once, reused per layer

    n_layers = len(params["layers"])
    for li, lp in enumerate(params["layers"]):
        last = li == n_layers - 1
        # fused self-attn + cross-attn (QKV, softmax, out-proj, residual, LN x2)
        x = dual_attn_block(x, src2d, lp, B, T, S, nhead)
        # fused FFN (+ fused final decoder LayerNorm on the last layer)
        x = ffn_block(x, lp, params["final_g"], params["final_b"],
                      final_ln=last, out_dtype=F32 if last else BF16)

    return x.reshape(B, T, H)


if __name__ == "__main__":
    B, S, T = 2, 8, 8
    input_size, hidden, nhead, num_layers = 16, 32, 4, 2
    dff = 2048  # PyTorch TransformerDecoderLayer default dim_feedforward

    key = jax.random.PRNGKey(0)
    k_src, k_tgt, k_par = jax.random.split(key, 3)
    src = jax.random.normal(k_src, (B, S, hidden), F32)
    tgt = jax.random.normal(k_tgt, (B, T, input_size), F32)
    params = init_params(k_par, input_size, hidden, num_layers, nhead, dff)

    fwd = jax.jit(partial(transformer_decoder_forward, nhead=nhead))
    out = fwd(params, src, tgt)
    jax.block_until_ready(out)
    assert out.shape == (B, T, hidden)
    assert bool(jnp.all(jnp.isfinite(out)))
    print("KERNEL_OK")
</pallas_src>

<mosaic_0001>
module attributes {stable_mosaic.version = 11 : i64} {
  func.func @_input_proj_kernel(%arg0: i32, %arg1: memref<16x16xf32, #tpu.memory_space<vmem>>, %arg2: memref<16x32xbf16, #tpu.memory_space<vmem>>, %arg3: memref<1x32xf32, #tpu.memory_space<vmem>>, %arg4: memref<16x32xf32, #tpu.memory_space<vmem>>, %arg5: memref<16x32xbf16, #tpu.memory_space<vmem>>) attributes {dimension_semantics = [#tpu.dimension_semantics<arbitrary>], iteration_bounds = array<i64: 1>, scalar_prefetch = 0 : i64, scratch_operands = 0 : i64, tpu.core_type = #tpu.core_type<tc>, window_params = [{pipeline_mode = #tpu.pipeline_mode<synchronous>, transform_indices = @transform_0, window_bounds = array<i64: 16, 16>}, {pipeline_mode = #tpu.pipeline_mode<synchronous>, transform_indices = @transform_1, window_bounds = array<i64: 16, 32>}, {pipeline_mode = #tpu.pipeline_mode<synchronous>, transform_indices = @transform_2, window_bounds = array<i64: 1, 32>}, {pipeline_mode = #tpu.pipeline_mode<synchronous>, transform_indices = @transform_3, window_bounds = array<i64: 16, 32>}, {pipeline_mode = #tpu.pipeline_mode<synchronous>, transform_indices = @transform_4, window_bounds = array<i64: 16, 32>}]} {
    %c0 = arith.constant 0 : index
    %c0_0 = arith.constant 0 : index
    %0 = vector.load %arg1[%c0, %c0_0] : memref<16x16xf32, #tpu.memory_space<vmem>>, vector<16x16xf32>
    %1 = arith.truncf %0 : vector<16x16xf32> to vector<16x16xbf16>
    %c0_1 = arith.constant 0 : index
    %c0_2 = arith.constant 0 : index
    %2 = vector.load %arg2[%c0_1, %c0_2] : memref<16x32xbf16, #tpu.memory_space<vmem>>, vector<16x32xbf16>
    %cst = arith.constant dense<0.000000e+00> : vector<16x32xf32>
    %3 = tpu.matmul %1, %2, %cst {dimension_numbers = #tpu.dot_dimension_numbers<[1], [0], [0], [1], [0, 0, 1, 1], [], []>} : vector<16x16xbf16>, vector<16x32xbf16>, vector<16x32xf32> -> vector<16x32xf32>
    %c0_3 = arith.constant 0 : index
    %c0_4 = arith.constant 0 : index
    %4 = vector.load %arg3[%c0_3, %c0_4] : memref<1x32xf32, #tpu.memory_space<vmem>>, vector<1x32xf32>
    %5 = vector.broadcast %4 : vector<1x32xf32> to vector<16x32xf32>
    %6 = arith.addf %3, %5 : vector<16x32xf32>
    %c0_5 = arith.constant 0 : index
    %c0_6 = arith.constant 0 : index
    %7 = vector.load %arg4[%c0_5, %c0_6] : memref<16x32xf32, #tpu.memory_space<vmem>>, vector<16x32xf32>
    %8 = arith.addf %6, %7 : vector<16x32xf32>
    %9 = arith.truncf %8 : vector<16x32xf32> to vector<16x32xbf16>
    %c0_7 = arith.constant 0 : index
    %c0_8 = arith.constant 0 : index
    %10 = vector.load %arg5[%c0_7, %c0_8] : memref<16x32xbf16, #tpu.memory_space<vmem>>, vector<16x32xbf16>
    tpu.vector_store %arg5[%c0_7, %c0_8], %9 {strides = array<i32>} : memref<16x32xbf16, #tpu.memory_space<vmem>>, vector<16x32xbf16>,
    return
  }
  func.func @transform_0(%arg0: i32) -> (i32, i32) {
    %c0_i32 = arith.constant 0 : i32
    %c0_i32_0 = arith.constant 0 : i32
    %c0_i32_1 = arith.constant 0 : i32
    return %c0_i32, %c0_i32_0 : i32, i32
  }
  func.func @transform_1(%arg0: i32) -> (i32, i32) {
    %c0_i32 = arith.constant 0 : i32
    %c0_i32_0 = arith.constant 0 : i32
    %c0_i32_1 = arith.constant 0 : i32
    return %c0_i32, %c0_i32_0 : i32, i32
  }
  func.func @transform_2(%arg0: i32) -> (i32, i32) {
    %c0_i32 = arith.constant 0 : i32
    %c0_i32_0 = arith.constant 0 : i32
    %c0_i32_1 = arith.constant 0 : i32
    return %c0_i32, %c0_i32_0 : i32, i32
  }
  func.func @transform_3(%arg0: i32) -> (i32, i32) {
    %c0_i32 = arith.constant 0 : i32
    %c0_i32_0 = arith.constant 0 : i32
    %c0_i32_1 = arith.constant 0 : i32
    return %c0_i32, %c0_i32_0 : i32, i32
  }
  func.func @transform_4(%arg0: i32) -> (i32, i32) {
    %c0_i32 = arith.constant 0 : i32
    %c0_i32_0 = arith.constant 0 : i32
    %c0_i32_1 = arith.constant 0 : i32
    return %c0_i32, %c0_i32_0 : i32, i32
  }
}

module attributes {stable_mosaic.version = 11 : i64} {
  func.func @_ffn_kernel(%arg0: i32, %arg1: memref<16x32xbf16, #tpu.memory_space<vmem>>, %arg2: memref<32x512xbf16, #tpu.memory_space<vmem>>, %arg3: memref<1x512xf32, #tpu.memory_space<vmem>>, %arg4: memref<512x32xbf16, #tpu.memory_space<vmem>>, %arg5: memref<1x32xf32, #tpu.memory_space<vmem>>, %arg6: memref<1x32xf32, #tpu.memory_space<vmem>>, %arg7: memref<1x32xf32, #tpu.memory_space<vmem>>, %arg8: memref<1x32xf32, #tpu.memory_space<vmem>>, %arg9: memref<1x32xf32, #tpu.memory_space<vmem>>, %arg10: memref<16x32xbf16, #tpu.memory_space<vmem>>, %arg11: memref<16x32xf32, #tpu.memory_space<vmem>>) attributes {dimension_semantics = [#tpu.dimension_semantics<arbitrary>], iteration_bounds = array<i64: 4>, scalar_prefetch = 0 : i64, scratch_operands = 1 : i64, tpu.core_type = #tpu.core_type<tc>, window_params = [{pipeline_mode = #tpu.pipeline_mode<synchronous>, transform_indices = @transform_0, window_bounds = array<i64: 16, 32>}, {transform_indices = @transform_1, window_bounds = array<i64: 32, 512>}, {transform_indices = @transform_2, window_bounds = array<i64: 1, 512>}, {transform_indices = @transform_3, window_bounds = array<i64: 512, 32>}, {pipeline_mode = #tpu.pipeline_mode<synchronous>, transform_indices = @transform_4, window_bounds = array<i64: 1, 32>}, {pipeline_mode = #tpu.pipeline_mode<synchronous>, transform_indices = @transform_5, window_bounds = array<i64: 1, 32>}, {pipeline_mode = #tpu.pipeline_mode<synchronous>, transform_indices = @transform_6, window_bounds = array<i64: 1, 32>}, {pipeline_mode = #tpu.pipeline_mode<synchronous>, transform_indices = @transform_7, window_bounds = array<i64: 1, 32>}, {pipeline_mode = #tpu.pipeline_mode<synchronous>, transform_indices = @transform_8, window_bounds = array<i64: 1, 32>}, {pipeline_mode = #tpu.pipeline_mode<synchronous>, transform_indices = @transform_9, window_bounds = array<i64: 16, 32>}]} {
    %c0_i32 = arith.constant 0 : i32
    %0 = arith.cmpi eq, %arg0, %c0_i32 : i32
    %1 = arith.extui %0 : i1 to i32
    %c0_i32_0 = arith.constant 0 : i32
    %2 = arith.cmpi ne, %1, %c0_i32_0 : i32
    scf.if %2 {
      %cst_15 = arith.constant 0.000000e+00 : f32
      %20 = vector.broadcast %cst_15 : f32 to vector<16x32xf32>
      %c0_16 = arith.constant 0 : index
      %c0_17 = arith.constant 0 : index
      %21 = vector.load %arg11[%c0_16, %c0_17] : memref<16x32xf32, #tpu.memory_space<vmem>>, vector<16x32xf32>
      tpu.vector_store %arg11[%c0_16, %c0_17], %20 {strides = array<i32>} : memref<16x32xf32, #tpu.memory_space<vmem>>, vector<16x32xf32>,
    } else {
    }
    %c0 = arith.constant 0 : index
    %c0_1 = arith.constant 0 : index
    %3 = vector.load %arg1[%c0, %c0_1] : memref<16x32xbf16, #tpu.memory_space<vmem>>, vector<16x32xbf16>
    %c0_2 = arith.constant 0 : index
    %c0_3 = arith.constant 0 : index
    %4 = vector.load %arg2[%c0_2, %c0_3] : memref<32x512xbf16, #tpu.memory_space<vmem>>, vector<32x512xbf16>
    %cst = arith.constant dense<0.000000e+00> : vector<16x512xf32>
    %5 = tpu.matmul %3, %4, %cst {dimension_numbers = #tpu.dot_dimension_numbers<[1], [0], [0], [1], [0, 0, 1, 1], [], []>} : vector<16x32xbf16>, vector<32x512xbf16>, vector<16x512xf32> -> vector<16x512xf32>
    %c0_4 = arith.constant 0 : index
    %c0_5 = arith.constant 0 : index
    %6 = vector.load %arg3[%c0_4, %c0_5] : memref<1x512xf32, #tpu.memory_space<vmem>>, vector<1x512xf32>
    %7 = vector.broadcast %6 : vector<1x512xf32> to vector<16x512xf32>
    %8 = arith.addf %5, %7 : vector<16x512xf32>
    %cst_6 = arith.constant 0.000000e+00 : f32
    %9 = vector.broadcast %cst_6 : f32 to vector<16x512xf32>
    %10 = arith.maximumf %8, %9 : vector<16x512xf32>
    %c0_7 = arith.constant 0 : index
    %c0_8 = arith.constant 0 : index
    %11 = vector.load %arg11[%c0_7, %c0_8] : memref<16x32xf32, #tpu.memory_space<vmem>>, vector<16x32xf32>
    %12 = arith.truncf %10 : vector<16x512xf32> to vector<16x512xbf16>
    %c0_9 = arith.constant 0 : index
    %c0_10 = arith.constant 0 : index
    %13 = vector.load %arg4[%c0_9, %c0_10] : memref<512x32xbf16, #tpu.memory_space<vmem>>, vector<512x32xbf16>
    %cst_11 = arith.constant dense<0.000000e+00> : vector<16x32xf32>
    %14 = tpu.matmul %12, %13, %cst_11 {dimension_numbers = #tpu.dot_dimension_numbers<[1], [0], [0], [1], [0, 0, 1, 1], [], []>} : vector<16x512xbf16>, vector<512x32xbf16>, vector<16x32xf32> -> vector<16x32xf32>
    %15 = arith.addf %11, %14 : vector<16x32xf32>
    %c0_12 = arith.constant 0 : index
    %c0_13 = arith.constant 0 : index
    %16 = vector.load %arg11[%c0_12, %c0_13] : memref<16x32xf32, #tpu.memory_space<vmem>>, vector<16x32xf32>
    tpu.vector_store %arg11[%c0_12, %c0_13], %15 {strides = array<i32>} : memref<16x32xf32, #tpu.memory_space<vmem>>, vector<16x32xf32>,
    %c3_i32 = arith.constant 3 : i32
    %17 = arith.cmpi eq, %arg0, %c3_i32 : i32
    %18 = arith.extui %17 : i1 to i32
    %c0_i32_14 = arith.constant 0 : i32
    %19 = arith.cmpi ne, %18, %c0_i32_14 : i32
    scf.if %19 {
      %c0_15 = arith.constant 0 : index
      %c0_16 = arith.constant 0 : index
      %20 = vector.load %arg11[%c0_15, %c0_16] : memref<16x32xf32, #tpu.memory_space<vmem>>, vector<16x32xf32>
      %c0_17 = arith.constant 0 : index
      %c0_18 = arith.constant 0 : index
      %21 = vector.load %arg5[%c0_17, %c0_18] : memref<1x32xf32, #tpu.memory_space<vmem>>, vector<1x32xf32>
      %22 = vector.broadcast %21 : vector<1x32xf32> to vector<16x32xf32>
      %23 = arith.addf %20, %22 : vector<16x32xf32>
      %c0_19 = arith.constant 0 : index
      %c0_20 = arith.constant 0 : index
      %24 = vector.load %arg1[%c0_19, %c0_20] : memref<16x32xbf16, #tpu.memory_space<vmem>>, vector<16x32xbf16>
      %25 = arith.extf %24 : vector<16x32xbf16> to vector<16x32xf32>
      %26 = arith.addf %23, %25 : vector<16x32xf32>
      %cst_21 = arith.constant dense<0.000000e+00> : vector<16xf32>
      %27 = vector.multi_reduction <add>, %26, %cst_21 [1] : vector<16x32xf32> to vector<16xf32>
      %28 = vector.shape_cast %27 : vector<16xf32> to vector<16x1xf32>
      %cst_22 = arith.constant 3.200000e+01 : f32
      %29 = vector.broadcast %cst_22 : f32 to vector<16x1xf32>
      %30 = arith.divf %28, %29 : vector<16x1xf32>
      %31 = vector.broadcast %30 : vector<16x1xf32> to vector<16x32xf32>
      %32 = arith.subf %26, %31 : vector<16x32xf32>
      %33 = arith.mulf %32, %32 : vector<16x32xf32>
      %cst_23 = arith.constant dense<0.000000e+00> : vector<16xf32>
      %34 = vector.multi_reduction <add>, %33, %cst_23 [1] : vector<16x32xf32> to vector<16xf32>
      %35 = vector.shape_cast %34 : vector<16xf32> to vector<16x1xf32>
      %cst_24 = arith.constant 3.200000e+01 : f32
      %36 = vector.broadcast %cst_24 : f32 to vector<16x1xf32>
      %37 = arith.divf %35, %36 : vector<16x1xf32>
      %cst_25 = arith.constant 9.99999974E-6 : f32
      %38 = vector.broadcast %cst_25 : f32 to vector<16x1xf32>
      %39 = arith.addf %37, %38 : vector<16x1xf32>
      %40 = math.rsqrt %39 : vector<16x1xf32>
      %41 = vector.broadcast %40 : vector<16x1xf32> to vector<16x32xf32>
      %42 = arith.mulf %32, %41 : vector<16x32xf32>
      %c0_26 = arith.constant 0 : index
      %c0_27 = arith.constant 0 : index
      %43 = vector.load %arg6[%c0_26, %c0_27] : memref<1x32xf32, #tpu.memory_space<vmem>>, vector<1x32xf32>
      %44 = vector.broadcast %43 : vector<1x32xf32> to vector<16x32xf32>
      %45 = arith.mulf %42, %44 : vector<16x32xf32>
      %c0_28 = arith.constant 0 : index
      %c0_29 = arith.constant 0 : index
      %46 = vector.load %arg7[%c0_28, %c0_29] : memref<1x32xf32, #tpu.memory_space<vmem>>, vector<1x32xf32>
      %47 = vector.broadcast %46 : vector<1x32xf32> to vector<16x32xf32>
      %48 = arith.addf %45, %47 : vector<16x32xf32>
      %49 = arith.truncf %48 : vector<16x32xf32> to vector<16x32xbf16>
      %c0_30 = arith.constant 0 : index
      %c0_31 = arith.constant 0 : index
      %50 = vector.load %arg10[%c0_30, %c0_31] : memref<16x32xbf16, #tpu.memory_space<vmem>>, vector<16x32xbf16>
      tpu.vector_store %arg10[%c0_30, %c0_31], %49 {strides = array<i32>} : memref<16x32xbf16, #tpu.memory_space<vmem>>, vector<16x32xbf16>,
    } else {
    }
    return
  }
  func.func @transform_0(%arg0: i32) -> (i32, i32) {
    %c0_i32 = arith.constant 0 : i32
    %c0_i32_0 = arith.constant 0 : i32
    %c0_i32_1 = arith.constant 0 : i32
    return %c0_i32, %c0_i32_0 : i32, i32
  }
  func.func @transform_1(%arg0: i32) -> (i32, i32) {
    %c0_i32 = arith.constant 0 : i32
    %c0_i32_0 = arith.constant 0 : i32
    return %c0_i32, %arg0 : i32, i32
  }
  func.func @transform_2(%arg0: i32) -> (i32, i32) {
    %c0_i32 = arith.constant 0 : i32
    %c0_i32_0 = arith.constant 0 : i32
    return %c0_i32, %arg0 : i32, i32
  }
  func.func @transform_3(%arg0: i32) -> (i32, i32) {
    %c0_i32 = arith.constant 0 : i32
    %c0_i32_0 = arith.constant 0 : i32
    return %arg0, %c0_i32 : i32, i32
  }
  func.func @transform_4(%arg0: i32) -> (i32, i32) {
    %c0_i32 = arith.constant 0 : i32
    %c0_i32_0 = arith.constant 0 : i32
    %c0_i32_1 = arith.constant 0 : i32
    return %c0_i32, %c0_i32_0 : i32, i32
  }
  func.func @transform_5(%arg0: i32) -> (i32, i32) {
    %c0_i32 = arith.constant 0 : i32
    %c0_i32_0 = arith.constant 0 : i32
    %c0_i32_1 = arith.constant 0 : i32
    return %c0_i32, %c0_i32_0 : i32, i32
  }
  func.func @transform_6(%arg0: i32) -> (i32, i32) {
    %c0_i32 = arith.constant 0 : i32
    %c0_i32_0 = arith.constant 0 : i32
    %c0_i32_1 = arith.constant 0 : i32
    return %c0_i32, %c0_i32_0 : i32, i32
  }
  func.func @transform_7(%arg0: i32) -> (i32, i32) {
    %c0_i32 = arith.constant 0 : i32
    %c0_i32_0 = arith.constant 0 : i32
    %c0_i32_1 = arith.constant 0 : i32
    return %c0_i32, %c0_i32_0 : i32, i32
  }
  func.func @transform_8(%arg0: i32) -> (i32, i32) {
    %c0_i32 = arith.constant 0 : i32
    %c0_i32_0 = arith.constant 0 : i32
    %c0_i32_1 = arith.constant 0 : i32
    return %c0_i32, %c0_i32_0 : i32, i32
  }
  func.func @transform_9(%arg0: i32) -> (i32, i32) {
    %c0_i32 = arith.constant 0 : i32
    %c0_i32_0 = arith.constant 0 : i32
    %c0_i32_1 = arith.constant 0 : i32
    return %c0_i32, %c0_i32_0 : i32, i32
  }
}

module attributes {stable_mosaic.version = 11 : i64} {
  func.func @_dual_attn_kernel(%arg0: i32, %arg1: memref<8x32xbf16, #tpu.memory_space<vmem>>, %arg2: memref<8x32xbf16, #tpu.memory_space<vmem>>, %arg3: memref<32x96xbf16, #tpu.memory_space<vmem>>, %arg4: memref<1x96xf32, #tpu.memory_space<vmem>>, %arg5: memref<32x32xbf16, #tpu.memory_space<vmem>>, %arg6: memref<1x32xf32, #tpu.memory_space<vmem>>, %arg7: memref<1x32xf32, #tpu.memory_space<vmem>>, %arg8: memref<1x32xf32, #tpu.memory_space<vmem>>, %arg9: memref<32x32xbf16, #tpu.memory_space<vmem>>, %arg10: memref<1x32xf32, #tpu.memory_space<vmem>>, %arg11: memref<32x64xbf16, #tpu.memory_space<vmem>>, %arg12: memref<1x64xf32, #tpu.memory_space<vmem>>, %arg13: memref<32x32xbf16, #tpu.memory_space<vmem>>, %arg14: memref<1x32xf32, #tpu.memory_space<vmem>>, %arg15: memref<1x32xf32, #tpu.memory_space<vmem>>, %arg16: memref<1x32xf32, #tpu.memory_space<vmem>>, %arg17: memref<8x32xbf16, #tpu.memory_space<vmem>>) attributes {dimension_semantics = [#tpu.dimension_semantics<parallel>], iteration_bounds = array<i64: 2>, scalar_prefetch = 0 : i64, scratch_operands = 0 : i64, tpu.core_type = #tpu.core_type<tc>, window_params = [{transform_indices = @transform_0, window_bounds = array<i64: 8, 32>}, {transform_indices = @transform_1, window_bounds = array<i64: 8, 32>}, {pipeline_mode = #tpu.pipeline_mode<synchronous>, transform_indices = @transform_2, window_bounds = array<i64: 32, 96>}, {pipeline_mode = #tpu.pipeline_mode<synchronous>, transform_indices = @transform_3, window_bounds = array<i64: 1, 96>}, {pipeline_mode = #tpu.pipeline_mode<synchronous>, transform_indices = @transform_4, window_bounds = array<i64: 32, 32>}, {pipeline_mode = #tpu.pipeline_mode<synchronous>, transform_indices = @transform_5, window_bounds = array<i64: 1, 32>}, {pipeline_mode = #tpu.pipeline_mode<synchronous>, transform_indices = @transform_6, window_bounds = array<i64: 1, 32>}, {pipeline_mode = #tpu.pipeline_mode<synchronous>, transform_indices = @transform_7, window_bounds = array<i64: 1, 32>}, {pipeline_mode = #tpu.pipeline_mode<synchronous>, transform_indices = @transform_8, window_bounds = array<i64: 32, 32>}, {pipeline_mode = #tpu.pipeline_mode<synchronous>, transform_indices = @transform_9, window_bounds = array<i64: 1, 32>}, {pipeline_mode = #tpu.pipeline_mode<synchronous>, transform_indices = @transform_10, window_bounds = array<i64: 32, 64>}, {pipeline_mode = #tpu.pipeline_mode<synchronous>, transform_indices = @transform_11, window_bounds = array<i64: 1, 64>}, {pipeline_mode = #tpu.pipeline_mode<synchronous>, transform_indices = @transform_12, window_bounds = array<i64: 32, 32>}, {pipeline_mode = #tpu.pipeline_mode<synchronous>, transform_indices = @transform_13, window_bounds = array<i64: 1, 32>}, {pipeline_mode = #tpu.pipeline_mode<synchronous>, transform_indices = @transform_14, window_bounds = array<i64: 1, 32>}, {pipeline_mode = #tpu.pipeline_mode<synchronous>, transform_indices = @transform_15, window_bounds = array<i64: 1, 32>}, {transform_indices = @transform_16, window_bounds = array<i64: 8, 32>}]} {
    %c0 = arith.constant 0 : index
    %c0_0 = arith.constant 0 : index
    %0 = vector.load %arg1[%c0, %c0_0] : memref<8x32xbf16, #tpu.memory_space<vmem>>, vector<8x32xbf16>
    %1 = arith.extf %0 : vector<8x32xbf16> to vector<8x32xf32>
    %c0_1 = arith.constant 0 : index
    %c0_2 = arith.constant 0 : index
    %2 = vector.load %arg2[%c0_1, %c0_2] : memref<8x32xbf16, #tpu.memory_space<vmem>>, vector<8x32xbf16>
    %c0_3 = arith.constant 0 : index
    %c0_4 = arith.constant 0 : index
    %3 = vector.load %arg1[%c0_3, %c0_4] : memref<8x32xbf16, #tpu.memory_space<vmem>>, vector<8x32xbf16>
    %c0_5 = arith.constant 0 : index
    %c0_6 = arith.constant 0 : index
    %4 = vector.load %arg3[%c0_5, %c0_6] : memref<32x96xbf16, #tpu.memory_space<vmem>>, vector<32x96xbf16>
    %cst = arith.constant dense<0.000000e+00> : vector<8x96xf32>
    %5 = tpu.matmul %3, %4, %cst {dimension_numbers = #tpu.dot_dimension_numbers<[1], [0], [0], [1], [0, 0, 1, 1], [], []>} : vector<8x32xbf16>, vector<32x96xbf16>, vector<8x96xf32> -> vector<8x96xf32>
    %c0_7 = arith.constant 0 : index
    %c0_8 = arith.constant 0 : index
    %6 = vector.load %arg4[%c0_7, %c0_8] : memref<1x96xf32, #tpu.memory_space<vmem>>, vector<1x96xf32>
    %7 = vector.broadcast %6 : vector<1x96xf32> to vector<8x96xf32>
    %8 = arith.addf %5, %7 : vector<8x96xf32>
    %9 = vector.extract_strided_slice %8 {offsets = [0, 0], sizes = [8, 32], strides = [1, 1]} : vector<8x96xf32> to vector<8x32xf32>
    %10 = vector.extract_strided_slice %8 {offsets = [0, 32], sizes = [8, 32], strides = [1, 1]} : vector<8x96xf32> to vector<8x32xf32>
    %11 = vector.extract_strided_slice %8 {offsets = [0, 64], sizes = [8, 32], strides = [1, 1]} : vector<8x96xf32> to vector<8x32xf32>
    %12 = vector.extract_strided_slice %9 {offsets = [0, 0], sizes = [8, 8], strides = [1, 1]} : vector<8x32xf32> to vector<8x8xf32>
    %13 = arith.truncf %12 : vector<8x8xf32> to vector<8x8xbf16>
    %14 = vector.extract_strided_slice %10 {offsets = [0, 0], sizes = [8, 8], strides = [1, 1]} : vector<8x32xf32> to vector<8x8xf32>
    %15 = arith.truncf %14 : vector<8x8xf32> to vector<8x8xbf16>
    %16 = vector.extract_strided_slice %11 {offsets = [0, 0], sizes = [8, 8], strides = [1, 1]} : vector<8x32xf32> to vector<8x8xf32>
    %17 = arith.truncf %16 : vector<8x8xf32> to vector<8x8xbf16>
    %cst_9 = arith.constant dense<0.000000e+00> : vector<8x8xf32>
    %18 = tpu.matmul %13, %15, %cst_9 {dimension_numbers = #tpu.dot_dimension_numbers<[1], [1], [0], [0], [0, 0, 1, 0], [], []>} : vector<8x8xbf16>, vector<8x8xbf16>, vector<8x8xf32> -> vector<8x8xf32>
    %cst_10 = arith.constant dense<0xFF800000> : vector<8xf32>
    %19 = vector.multi_reduction <maximumf>, %18, %cst_10 [1] : vector<8x8xf32> to vector<8xf32>
    %20 = vector.shape_cast %19 : vector<8xf32> to vector<8x1xf32>
    %21 = vector.broadcast %20 : vector<8x1xf32> to vector<8x8xf32>
    %22 = arith.subf %18, %21 : vector<8x8xf32>
    %23 = math.exp %22 : vector<8x8xf32>
    %cst_11 = arith.constant dense<0.000000e+00> : vector<8xf32>
    %24 = vector.multi_reduction <add>, %23, %cst_11 [1] : vector<8x8xf32> to vector<8xf32>
    %25 = vector.shape_cast %24 : vector<8xf32> to vector<8x1xf32>
    %26 = tpu.reciprocal %25 {approx = true} : vector<8x1xf32> -> vector<8x1xf32>
    %27 = vector.broadcast %26 : vector<8x1xf32> to vector<8x8xf32>
    %28 = arith.mulf %23, %27 : vector<8x8xf32>
    %29 = arith.truncf %28 : vector<8x8xf32> to vector<8x8xbf16>
    %cst_12 = arith.constant dense<0.000000e+00> : vector<8x8xf32>
    %30 = tpu.matmul %29, %17, %cst_12 {dimension_numbers = #tpu.dot_dimension_numbers<[1], [0], [0], [1], [0, 0, 1, 1], [], []>} : vector<8x8xbf16>, vector<8x8xbf16>, vector<8x8xf32> -> vector<8x8xf32>
    %31 = vector.extract_strided_slice %9 {offsets = [0, 8], sizes = [8, 8], strides = [1, 1]} : vector<8x32xf32> to vector<8x8xf32>
    %32 = arith.truncf %31 : vector<8x8xf32> to vector<8x8xbf16>
    %33 = vector.extract_strided_slice %10 {offsets = [0, 8], sizes = [8, 8], strides = [1, 1]} : vector<8x32xf32> to vector<8x8xf32>
    %34 = arith.truncf %33 : vector<8x8xf32> to vector<8x8xbf16>
    %35 = vector.extract_strided_slice %11 {offsets = [0, 8], sizes = [8, 8], strides = [1, 1]} : vector<8x32xf32> to vector<8x8xf32>
    %36 = arith.truncf %35 : vector<8x8xf32> to vector<8x8xbf16>
    %cst_13 = arith.constant dense<0.000000e+00> : vector<8x8xf32>
    %37 = tpu.matmul %32, %34, %cst_13 {dimension_numbers = #tpu.dot_dimension_numbers<[1], [1], [0], [0], [0, 0, 1, 0], [], []>} : vector<8x8xbf16>, vector<8x8xbf16>, vector<8x8xf32> -> vector<8x8xf32>
    %cst_14 = arith.constant dense<0xFF800000> : vector<8xf32>
    %38 = vector.multi_reduction <maximumf>, %37, %cst_14 [1] : vector<8x8xf32> to vector<8xf32>
    %39 = vector.shape_cast %38 : vector<8xf32> to vector<8x1xf32>
    %40 = vector.broadcast %39 : vector<8x1xf32> to vector<8x8xf32>
    %41 = arith.subf %37, %40 : vector<8x8xf32>
    %42 = math.exp %41 : vector<8x8xf32>
    %cst_15 = arith.constant dense<0.000000e+00> : vector<8xf32>
    %43 = vector.multi_reduction <add>, %42, %cst_15 [1] : vector<8x8xf32> to vector<8xf32>
    %44 = vector.shape_cast %43 : vector<8xf32> to vector<8x1xf32>
    %45 = tpu.reciprocal %44 {approx = true} : vector<8x1xf32> -> vector<8x1xf32>
    %46 = vector.broadcast %45 : vector<8x1xf32> to vector<8x8xf32>
    %47 = arith.mulf %42, %46 : vector<8x8xf32>
    %48 = arith.truncf %47 : vector<8x8xf32> to vector<8x8xbf16>
    %cst_16 = arith.constant dense<0.000000e+00> : vector<8x8xf32>
    %49 = tpu.matmul %48, %36, %cst_16 {dimension_numbers = #tpu.dot_dimension_numbers<[1], [0], [0], [1], [0, 0, 1, 1], [], []>} : vector<8x8xbf16>, vector<8x8xbf16>, vector<8x8xf32> -> vector<8x8xf32>
    %50 = vector.extract_strided_slice %9 {offsets = [0, 16], sizes = [8, 8], strides = [1, 1]} : vector<8x32xf32> to vector<8x8xf32>
    %51 = arith.truncf %50 : vector<8x8xf32> to vector<8x8xbf16>
    %52 = vector.extract_strided_slice %10 {offsets = [0, 16], sizes = [8, 8], strides = [1, 1]} : vector<8x32xf32> to vector<8x8xf32>
    %53 = arith.truncf %52 : vector<8x8xf32> to vector<8x8xbf16>
    %54 = vector.extract_strided_slice %11 {offsets = [0, 16], sizes = [8, 8], strides = [1, 1]} : vector<8x32xf32> to vector<8x8xf32>
    %55 = arith.truncf %54 : vector<8x8xf32> to vector<8x8xbf16>
    %cst_17 = arith.constant dense<0.000000e+00> : vector<8x8xf32>
    %56 = tpu.matmul %51, %53, %cst_17 {dimension_numbers = #tpu.dot_dimension_numbers<[1], [1], [0], [0], [0, 0, 1, 0], [], []>} : vector<8x8xbf16>, vector<8x8xbf16>, vector<8x8xf32> -> vector<8x8xf32>
    %cst_18 = arith.constant dense<0xFF800000> : vector<8xf32>
    %57 = vector.multi_reduction <maximumf>, %56, %cst_18 [1] : vector<8x8xf32> to vector<8xf32>
    %58 = vector.shape_cast %57 : vector<8xf32> to vector<8x1xf32>
    %59 = vector.broadcast %58 : vector<8x1xf32> to vector<8x8xf32>
    %60 = arith.subf %56, %59 : vector<8x8xf32>
    %61 = math.exp %60 : vector<8x8xf32>
    %cst_19 = arith.constant dense<0.000000e+00> : vector<8xf32>
    %62 = vector.multi_reduction <add>, %61, %cst_19 [1] : vector<8x8xf32> to vector<8xf32>
    %63 = vector.shape_cast %62 : vector<8xf32> to vector<8x1xf32>
    %64 = tpu.reciprocal %63 {approx = true} : vector<8x1xf32> -> vector<8x1xf32>
    %65 = vector.broadcast %64 : vector<8x1xf32> to vector<8x8xf32>
    %66 = arith.mulf %61, %65 : vector<8x8xf32>
    %67 = arith.truncf %66 : vector<8x8xf32> to vector<8x8xbf16>
    %cst_20 = arith.constant dense<0.000000e+00> : vector<8x8xf32>
    %68 = tpu.matmul %67, %55, %cst_20 {dimension_numbers = #tpu.dot_dimension_numbers<[1], [0], [0], [1], [0, 0, 1, 1], [], []>} : vector<8x8xbf16>, vector<8x8xbf16>, vector<8x8xf32> -> vector<8x8xf32>
    %69 = vector.extract_strided_slice %9 {offsets = [0, 24], sizes = [8, 8], strides = [1, 1]} : vector<8x32xf32> to vector<8x8xf32>
    %70 = arith.truncf %69 : vector<8x8xf32> to vector<8x8xbf16>
    %71 = vector.extract_strided_slice %10 {offsets = [0, 24], sizes = [8, 8], strides = [1, 1]} : vector<8x32xf32> to vector<8x8xf32>
    %72 = arith.truncf %71 : vector<8x8xf32> to vector<8x8xbf16>
    %73 = vector.extract_strided_slice %11 {offsets = [0, 24], sizes = [8, 8], strides = [1, 1]} : vector<8x32xf32> to vector<8x8xf32>
    %74 = arith.truncf %73 : vector<8x8xf32> to vector<8x8xbf16>
    %cst_21 = arith.constant dense<0.000000e+00> : vector<8x8xf32>
    %75 = tpu.matmul %70, %72, %cst_21 {dimension_numbers = #tpu.dot_dimension_numbers<[1], [1], [0], [0], [0, 0, 1, 0], [], []>} : vector<8x8xbf16>, vector<8x8xbf16>, vector<8x8xf32> -> vector<8x8xf32>
    %cst_22 = arith.constant dense<0xFF800000> : vector<8xf32>
    %76 = vector.multi_reduction <maximumf>, %75, %cst_22 [1] : vector<8x8xf32> to vector<8xf32>
    %77 = vector.shape_cast %76 : vector<8xf32> to vector<8x1xf32>
    %78 = vector.broadcast %77 : vector<8x1xf32> to vector<8x8xf32>
    %79 = arith.subf %75, %78 : vector<8x8xf32>
    %80 = math.exp %79 : vector<8x8xf32>
    %cst_23 = arith.constant dense<0.000000e+00> : vector<8xf32>
    %81 = vector.multi_reduction <add>, %80, %cst_23 [1] : vector<8x8xf32> to vector<8xf32>
    %82 = vector.shape_cast %81 : vector<8xf32> to vector<8x1xf32>
    %83 = tpu.reciprocal %82 {approx = true} : vector<8x1xf32> -> vector<8x1xf32>
    %84 = vector.broadcast %83 : vector<8x1xf32> to vector<8x8xf32>
    %85 = arith.mulf %80, %84 : vector<8x8xf32>
    %86 = arith.truncf %85 : vector<8x8xf32> to vector<8x8xbf16>
    %cst_24 = arith.constant dense<0.000000e+00> : vector<8x8xf32>
    %87 = tpu.matmul %86, %74, %cst_24 {dimension_numbers = #tpu.dot_dimension_numbers<[1], [0], [0], [1], [0, 0, 1, 1], [], []>} : vector<8x8xbf16>, vector<8x8xbf16>, vector<8x8xf32> -> vector<8x8xf32>
    %88 = tpu.concatenate %30, %49, %68, %87 in 1 : vector<8x8xf32>, vector<8x8xf32>, vector<8x8xf32>, vector<8x8xf32> -> vector<8x32xf32>
    %89 = arith.truncf %88 : vector<8x32xf32> to vector<8x32xbf16>
    %c0_25 = arith.constant 0 : index
    %c0_26 = arith.constant 0 : index
    %90 = vector.load %arg5[%c0_25, %c0_26] : memref<32x32xbf16, #tpu.memory_space<vmem>>, vector<32x32xbf16>
    %cst_27 = arith.constant dense<0.000000e+00> : vector<8x32xf32>
    %91 = tpu.matmul %89, %90, %cst_27 {dimension_numbers = #tpu.dot_dimension_numbers<[1], [0], [0], [1], [0, 0, 1, 1], [], []>} : vector<8x32xbf16>, vector<32x32xbf16>, vector<8x32xf32> -> vector<8x32xf32>
    %c0_28 = arith.constant 0 : index
    %c0_29 = arith.constant 0 : index
    %92 = vector.load %arg6[%c0_28, %c0_29] : memref<1x32xf32, #tpu.memory_space<vmem>>, vector<1x32xf32>
    %93 = vector.broadcast %92 : vector<1x32xf32> to vector<8x32xf32>
    %94 = arith.addf %91, %93 : vector<8x32xf32>
    %95 = arith.addf %94, %1 : vector<8x32xf32>
    %cst_30 = arith.constant dense<0.000000e+00> : vector<8xf32>
    %96 = vector.multi_reduction <add>, %95, %cst_30 [1] : vector<8x32xf32> to vector<8xf32>
    %97 = vector.shape_cast %96 : vector<8xf32> to vector<8x1xf32>
    %cst_31 = arith.constant 3.200000e+01 : f32
    %98 = vector.broadcast %cst_31 : f32 to vector<8x1xf32>
    %99 = arith.divf %97, %98 : vector<8x1xf32>
    %100 = vector.broadcast %99 : vector<8x1xf32> to vector<8x32xf32>
    %101 = arith.subf %95, %100 : vector<8x32xf32>
    %102 = arith.mulf %101, %101 : vector<8x32xf32>
    %cst_32 = arith.constant dense<0.000000e+00> : vector<8xf32>
    %103 = vector.multi_reduction <add>, %102, %cst_32 [1] : vector<8x32xf32> to vector<8xf32>
    %104 = vector.shape_cast %103 : vector<8xf32> to vector<8x1xf32>
    %cst_33 = arith.constant 3.200000e+01 : f32
    %105 = vector.broadcast %cst_33 : f32 to vector<8x1xf32>
    %106 = arith.divf %104, %105 : vector<8x1xf32>
    %cst_34 = arith.constant 9.99999974E-6 : f32
    %107 = vector.broadcast %cst_34 : f32 to vector<8x1xf32>
    %108 = arith.addf %106, %107 : vector<8x1xf32>
    %109 = math.rsqrt %108 : vector<8x1xf32>
    %110 = vector.broadcast %109 : vector<8x1xf32> to vector<8x32xf32>
    %111 = arith.mulf %101, %110 : vector<8x32xf32>
    %c0_35 = arith.constant 0 : index
    %c0_36 = arith.constant 0 : index
    %112 = vector.load %arg7[%c0_35, %c0_36] : memref<1x32xf32, #tpu.memory_space<vmem>>, vector<1x32xf32>
    %113 = vector.broadcast %112 : vector<1x32xf32> to vector<8x32xf32>
    %114 = arith.mulf %111, %113 : vector<8x32xf32>
    %c0_37 = arith.constant 0 : index
    %c0_38 = arith.constant 0 : index
    %115 = vector.load %arg8[%c0_37, %c0_38] : memref<1x32xf32, #tpu.memory_space<vmem>>, vector<1x32xf32>
    %116 = vector.broadcast %115 : vector<1x32xf32> to vector<8x32xf32>
    %117 = arith.addf %114, %116 : vector<8x32xf32>
    %118 = arith.truncf %117 : vector<8x32xf32> to vector<8x32xbf16>
    %c0_39 = arith.constant 0 : index
    %c0_40 = arith.constant 0 : index
    %119 = vector.load %arg9[%c0_39, %c0_40] : memref<32x32xbf16, #tpu.memory_space<vmem>>, vector<32x32xbf16>
    %cst_41 = arith.constant dense<0.000000e+00> : vector<8x32xf32>
    %120 = tpu.matmul %118, %119, %cst_41 {dimension_numbers = #tpu.dot_dimension_numbers<[1], [0], [0], [1], [0, 0, 1, 1], [], []>} : vector<8x32xbf16>, vector<32x32xbf16>, vector<8x32xf32> -> vector<8x32xf32>
    %c0_42 = arith.constant 0 : index
    %c0_43 = arith.constant 0 : index
    %121 = vector.load %arg10[%c0_42, %c0_43] : memref<1x32xf32, #tpu.memory_space<vmem>>, vector<1x32xf32>
    %122 = vector.broadcast %121 : vector<1x32xf32> to vector<8x32xf32>
    %123 = arith.addf %120, %122 : vector<8x32xf32>
    %c0_44 = arith.constant 0 : index
    %c0_45 = arith.constant 0 : index
    %124 = vector.load %arg11[%c0_44, %c0_45] : memref<32x64xbf16, #tpu.memory_space<vmem>>, vector<32x64xbf16>
    %cst_46 = arith.constant dense<0.000000e+00> : vector<8x64xf32>
    %125 = tpu.matmul %2, %124, %cst_46 {dimension_numbers = #tpu.dot_dimension_numbers<[1], [0], [0], [1], [0, 0, 1, 1], [], []>} : vector<8x32xbf16>, vector<32x64xbf16>, vector<8x64xf32> -> vector<8x64xf32>
    %c0_47 = arith.constant 0 : index
    %c0_48 = arith.constant 0 : index
    %126 = vector.load %arg12[%c0_47, %c0_48] : memref<1x64xf32, #tpu.memory_space<vmem>>, vector<1x64xf32>
    %127 = vector.broadcast %126 : vector<1x64xf32> to vector<8x64xf32>
    %128 = arith.addf %125, %127 : vector<8x64xf32>
    %129 = vector.extract_strided_slice %128 {offsets = [0, 0], sizes = [8, 32], strides = [1, 1]} : vector<8x64xf32> to vector<8x32xf32>
    %130 = vector.extract_strided_slice %128 {offsets = [0, 32], sizes = [8, 32], strides = [1, 1]} : vector<8x64xf32> to vector<8x32xf32>
    %131 = vector.extract_strided_slice %123 {offsets = [0, 0], sizes = [8, 8], strides = [1, 1]} : vector<8x32xf32> to vector<8x8xf32>
    %132 = arith.truncf %131 : vector<8x8xf32> to vector<8x8xbf16>
    %133 = vector.extract_strided_slice %129 {offsets = [0, 0], sizes = [8, 8], strides = [1, 1]} : vector<8x32xf32> to vector<8x8xf32>
    %134 = arith.truncf %133 : vector<8x8xf32> to vector<8x8xbf16>
    %135 = vector.extract_strided_slice %130 {offsets = [0, 0], sizes = [8, 8], strides = [1, 1]} : vector<8x32xf32> to vector<8x8xf32>
    %136 = arith.truncf %135 : vector<8x8xf32> to vector<8x8xbf16>
    %cst_49 = arith.constant dense<0.000000e+00> : vector<8x8xf32>
    %137 = tpu.matmul %132, %134, %cst_49 {dimension_numbers = #tpu.dot_dimension_numbers<[1], [1], [0], [0], [0, 0, 1, 0], [], []>} : vector<8x8xbf16>, vector<8x8xbf16>, vector<8x8xf32> -> vector<8x8xf32>
    %cst_50 = arith.constant dense<0xFF800000> : vector<8xf32>
    %138 = vector.multi_reduction <maximumf>, %137, %cst_50 [1] : vector<8x8xf32> to vector<8xf32>
    %139 = vector.shape_cast %138 : vector<8xf32> to vector<8x1xf32>
    %140 = vector.broadcast %139 : vector<8x1xf32> to vector<8x8xf32>
    %141 = arith.subf %137, %140 : vector<8x8xf32>
    %142 = math.exp %141 : vector<8x8xf32>
    %cst_51 = arith.constant dense<0.000000e+00> : vector<8xf32>
    %143 = vector.multi_reduction <add>, %142, %cst_51 [1] : vector<8x8xf32> to vector<8xf32>
    %144 = vector.shape_cast %143 : vector<8xf32> to vector<8x1xf32>
    %145 = tpu.reciprocal %144 {approx = true} : vector<8x1xf32> -> vector<8x1xf32>
    %146 = vector.broadcast %145 : vector<8x1xf32> to vector<8x8xf32>
    %147 = arith.mulf %142, %146 : vector<8x8xf32>
    %148 = arith.truncf %147 : vector<8x8xf32> to vector<8x8xbf16>
    %cst_52 = arith.constant dense<0.000000e+00> : vector<8x8xf32>
    %149 = tpu.matmul %148, %136, %cst_52 {dimension_numbers = #tpu.dot_dimension_numbers<[1], [0], [0], [1], [0, 0, 1, 1], [], []>} : vector<8x8xbf16>, vector<8x8xbf16>, vector<8x8xf32> -> vector<8x8xf32>
    %150 = vector.extract_strided_slice %123 {offsets = [0, 8], sizes = [8, 8], strides = [1, 1]} : vector<8x32xf32> to vector<8x8xf32>
    %151 = arith.truncf %150 : vector<8x8xf32> to vector<8x8xbf16>
    %152 = vector.extract_strided_slice %129 {offsets = [0, 8], sizes = [8, 8], strides = [1, 1]} : vector<8x32xf32> to vector<8x8xf32>
    %153 = arith.truncf %152 : vector<8x8xf32> to vector<8x8xbf16>
    %154 = vector.extract_strided_slice %130 {offsets = [0, 8], sizes = [8, 8], strides = [1, 1]} : vector<8x32xf32> to vector<8x8xf32>
    %155 = arith.truncf %154 : vector<8x8xf32> to vector<8x8xbf16>
    %cst_53 = arith.constant dense<0.000000e+00> : vector<8x8xf32>
    %156 = tpu.matmul %151, %153, %cst_53 {dimension_numbers = #tpu.dot_dimension_numbers<[1], [1], [0], [0], [0, 0, 1, 0], [], []>} : vector<8x8xbf16>, vector<8x8xbf16>, vector<8x8xf32> -> vector<8x8xf32>
    %cst_54 = arith.constant dense<0xFF800000> : vector<8xf32>
    %157 = vector.multi_reduction <maximumf>, %156, %cst_54 [1] : vector<8x8xf32> to vector<8xf32>
    %158 = vector.shape_cast %157 : vector<8xf32> to vector<8x1xf32>
    %159 = vector.broadcast %158 : vector<8x1xf32> to vector<8x8xf32>
    %160 = arith.subf %156, %159 : vector<8x8xf32>
    %161 = math.exp %160 : vector<8x8xf32>
    %cst_55 = arith.constant dense<0.000000e+00> : vector<8xf32>
    %162 = vector.multi_reduction <add>, %161, %cst_55 [1] : vector<8x8xf32> to vector<8xf32>
    %163 = vector.shape_cast %162 : vector<8xf32> to vector<8x1xf32>
    %164 = tpu.reciprocal %163 {approx = true} : vector<8x1xf32> -> vector<8x1xf32>
    %165 = vector.broadcast %164 : vector<8x1xf32> to vector<8x8xf32>
    %166 = arith.mulf %161, %165 : vector<8x8xf32>
    %167 = arith.truncf %166 : vector<8x8xf32> to vector<8x8xbf16>
    %cst_56 = arith.constant dense<0.000000e+00> : vector<8x8xf32>
    %168 = tpu.matmul %167, %155, %cst_56 {dimension_numbers = #tpu.dot_dimension_numbers<[1], [0], [0], [1], [0, 0, 1, 1], [], []>} : vector<8x8xbf16>, vector<8x8xbf16>, vector<8x8xf32> -> vector<8x8xf32>
    %169 = vector.extract_strided_slice %123 {offsets = [0, 16], sizes = [8, 8], strides = [1, 1]} : vector<8x32xf32> to vector<8x8xf32>
    %170 = arith.truncf %169 : vector<8x8xf32> to vector<8x8xbf16>
    %171 = vector.extract_strided_slice %129 {offsets = [0, 16], sizes = [8, 8], strides = [1, 1]} : vector<8x32xf32> to vector<8x8xf32>
    %172 = arith.truncf %171 : vector<8x8xf32> to vector<8x8xbf16>
    %173 = vector.extract_strided_slice %130 {offsets = [0, 16], sizes = [8, 8], strides = [1, 1]} : vector<8x32xf32> to vector<8x8xf32>
    %174 = arith.truncf %173 : vector<8x8xf32> to vector<8x8xbf16>
    %cst_57 = arith.constant dense<0.000000e+00> : vector<8x8xf32>
    %175 = tpu.matmul %170, %172, %cst_57 {dimension_numbers = #tpu.dot_dimension_numbers<[1], [1], [0], [0], [0, 0, 1, 0], [], []>} : vector<8x8xbf16>, vector<8x8xbf16>, vector<8x8xf32> -> vector<8x8xf32>
    %cst_58 = arith.constant dense<0xFF800000> : vector<8xf32>
    %176 = vector.multi_reduction <maximumf>, %175, %cst_58 [1] : vector<8x8xf32> to vector<8xf32>
    %177 = vector.shape_cast %176 : vector<8xf32> to vector<8x1xf32>
    %178 = vector.broadcast %177 : vector<8x1xf32> to vector<8x8xf32>
    %179 = arith.subf %175, %178 : vector<8x8xf32>
    %180 = math.exp %179 : vector<8x8xf32>
    %cst_59 = arith.constant dense<0.000000e+00> : vector<8xf32>
    %181 = vector.multi_reduction <add>, %180, %cst_59 [1] : vector<8x8xf32> to vector<8xf32>
    %182 = vector.shape_cast %181 : vector<8xf32> to vector<8x1xf32>
    %183 = tpu.reciprocal %182 {approx = true} : vector<8x1xf32> -> vector<8x1xf32>
    %184 = vector.broadcast %183 : vector<8x1xf32> to vector<8x8xf32>
    %185 = arith.mulf %180, %184 : vector<8x8xf32>
    %186 = arith.truncf %185 : vector<8x8xf32> to vector<8x8xbf16>
    %cst_60 = arith.constant dense<0.000000e+00> : vector<8x8xf32>
    %187 = tpu.matmul %186, %174, %cst_60 {dimension_numbers = #tpu.dot_dimension_numbers<[1], [0], [0], [1], [0, 0, 1, 1], [], []>} : vector<8x8xbf16>, vector<8x8xbf16>, vector<8x8xf32> -> vector<8x8xf32>
    %188 = vector.extract_strided_slice %123 {offsets = [0, 24], sizes = [8, 8], strides = [1, 1]} : vector<8x32xf32> to vector<8x8xf32>
    %189 = arith.truncf %188 : vector<8x8xf32> to vector<8x8xbf16>
    %190 = vector.extract_strided_slice %129 {offsets = [0, 24], sizes = [8, 8], strides = [1, 1]} : vector<8x32xf32> to vector<8x8xf32>
    %191 = arith.truncf %190 : vector<8x8xf32> to vector<8x8xbf16>
    %192 = vector.extract_strided_slice %130 {offsets = [0, 24], sizes = [8, 8], strides = [1, 1]} : vector<8x32xf32> to vector<8x8xf32>
    %193 = arith.truncf %192 : vector<8x8xf32> to vector<8x8xbf16>
    %cst_61 = arith.constant dense<0.000000e+00> : vector<8x8xf32>
    %194 = tpu.matmul %189, %191, %cst_61 {dimension_numbers = #tpu.dot_dimension_numbers<[1], [1], [0], [0], [0, 0, 1, 0], [], []>} : vector<8x8xbf16>, vector<8x8xbf16>, vector<8x8xf32> -> vector<8x8xf32>
    %cst_62 = arith.constant dense<0xFF800000> : vector<8xf32>
    %195 = vector.multi_reduction <maximumf>, %194, %cst_62 [1] : vector<8x8xf32> to vector<8xf32>
    %196 = vector.shape_cast %195 : vector<8xf32> to vector<8x1xf32>
    %197 = vector.broadcast %196 : vector<8x1xf32> to vector<8x8xf32>
    %198 = arith.subf %194, %197 : vector<8x8xf32>
    %199 = math.exp %198 : vector<8x8xf32>
    %cst_63 = arith.constant dense<0.000000e+00> : vector<8xf32>
    %200 = vector.multi_reduction <add>, %199, %cst_63 [1] : vector<8x8xf32> to vector<8xf32>
    %201 = vector.shape_cast %200 : vector<8xf32> to vector<8x1xf32>
    %202 = tpu.reciprocal %201 {approx = true} : vector<8x1xf32> -> vector<8x1xf32>
    %203 = vector.broadcast %202 : vector<8x1xf32> to vector<8x8xf32>
    %204 = arith.mulf %199, %203 : vector<8x8xf32>
    %205 = arith.truncf %204 : vector<8x8xf32> to vector<8x8xbf16>
    %cst_64 = arith.constant dense<0.000000e+00> : vector<8x8xf32>
    %206 = tpu.matmul %205, %193, %cst_64 {dimension_numbers = #tpu.dot_dimension_numbers<[1], [0], [0], [1], [0, 0, 1, 1], [], []>} : vector<8x8xbf16>, vector<8x8xbf16>, vector<8x8xf32> -> vector<8x8xf32>
    %207 = tpu.concatenate %149, %168, %187, %206 in 1 : vector<8x8xf32>, vector<8x8xf32>, vector<8x8xf32>, vector<8x8xf32> -> vector<8x32xf32>
    %208 = arith.truncf %207 : vector<8x32xf32> to vector<8x32xbf16>
    %c0_65 = arith.constant 0 : index
    %c0_66 = arith.constant 0 : index
    %209 = vector.load %arg13[%c0_65, %c0_66] : memref<32x32xbf16, #tpu.memory_space<vmem>>, vector<32x32xbf16>
    %cst_67 = arith.constant dense<0.000000e+00> : vector<8x32xf32>
    %210 = tpu.matmul %208, %209, %cst_67 {dimension_numbers = #tpu.dot_dimension_numbers<[1], [0], [0], [1], [0, 0, 1, 1], [], []>} : vector<8x32xbf16>, vector<32x32xbf16>, vector<8x32xf32> -> vector<8x32xf32>
    %c0_68 = arith.constant 0 : index
    %c0_69 = arith.constant 0 : index
    %211 = vector.load %arg14[%c0_68, %c0_69] : memref<1x32xf32, #tpu.memory_space<vmem>>, vector<1x32xf32>
    %212 = vector.broadcast %211 : vector<1x32xf32> to vector<8x32xf32>
    %213 = arith.addf %210, %212 : vector<8x32xf32>
    %214 = arith.addf %213, %117 : vector<8x32xf32>
    %cst_70 = arith.constant dense<0.000000e+00> : vector<8xf32>
    %215 = vector.multi_reduction <add>, %214, %cst_70 [1] : vector<8x32xf32> to vector<8xf32>
    %216 = vector.shape_cast %215 : vector<8xf32> to vector<8x1xf32>
    %cst_71 = arith.constant 3.200000e+01 : f32
    %217 = vector.broadcast %cst_71 : f32 to vector<8x1xf32>
    %218 = arith.divf %216, %217 : vector<8x1xf32>
    %219 = vector.broadcast %218 : vector<8x1xf32> to vector<8x32xf32>
    %220 = arith.subf %214, %219 : vector<8x32xf32>
    %221 = arith.mulf %220, %220 : vector<8x32xf32>
    %cst_72 = arith.constant dense<0.000000e+00> : vector<8xf32>
    %222 = vector.multi_reduction <add>, %221, %cst_72 [1] : vector<8x32xf32> to vector<8xf32>
    %223 = vector.shape_cast %222 : vector<8xf32> to vector<8x1xf32>
    %cst_73 = arith.constant 3.200000e+01 : f32
    %224 = vector.broadcast %cst_73 : f32 to vector<8x1xf32>
    %225 = arith.divf %223, %224 : vector<8x1xf32>
    %cst_74 = arith.constant 9.99999974E-6 : f32
    %226 = vector.broadcast %cst_74 : f32 to vector<8x1xf32>
    %227 = arith.addf %225, %226 : vector<8x1xf32>
    %228 = math.rsqrt %227 : vector<8x1xf32>
    %229 = vector.broadcast %228 : vector<8x1xf32> to vector<8x32xf32>
    %230 = arith.mulf %220, %229 : vector<8x32xf32>
    %c0_75 = arith.constant 0 : index
    %c0_76 = arith.constant 0 : index
    %231 = vector.load %arg15[%c0_75, %c0_76] : memref<1x32xf32, #tpu.memory_space<vmem>>, vector<1x32xf32>
    %232 = vector.broadcast %231 : vector<1x32xf32> to vector<8x32xf32>
    %233 = arith.mulf %230, %232 : vector<8x32xf32>
    %c0_77 = arith.constant 0 : index
    %c0_78 = arith.constant 0 : index
    %234 = vector.load %arg16[%c0_77, %c0_78] : memref<1x32xf32, #tpu.memory_space<vmem>>, vector<1x32xf32>
    %235 = vector.broadcast %234 : vector<1x32xf32> to vector<8x32xf32>
    %236 = arith.addf %233, %235 : vector<8x32xf32>
    %237 = arith.truncf %236 : vector<8x32xf32> to vector<8x32xbf16>
    %c0_79 = arith.constant 0 : index
    %c0_80 = arith.constant 0 : index
    %238 = vector.load %arg17[%c0_79, %c0_80] : memref<8x32xbf16, #tpu.memory_space<vmem>>, vector<8x32xbf16>
    tpu.vector_store %arg17[%c0_79, %c0_80], %237 {strides = array<i32>} : memref<8x32xbf16, #tpu.memory_space<vmem>>, vector<8x32xbf16>,
    return
  }
  func.func @transform_0(%arg0: i32) -> (i32, i32) {
    %c0_i32 = arith.constant 0 : i32
    %c0_i32_0 = arith.constant 0 : i32
    return %arg0, %c0_i32 : i32, i32
  }
  func.func @transform_1(%arg0: i32) -> (i32, i32) {
    %c0_i32 = arith.constant 0 : i32
    %c0_i32_0 = arith.constant 0 : i32
    return %arg0, %c0_i32 : i32, i32
  }
  func.func @transform_2(%arg0: i32) -> (i32, i32) {
    %c0_i32 = arith.constant 0 : i32
    %c0_i32_0 = arith.constant 0 : i32
    %c0_i32_1 = arith.constant 0 : i32
    return %c0_i32, %c0_i32_0 : i32, i32
  }
  func.func @transform_3(%arg0: i32) -> (i32, i32) {
    %c0_i32 = arith.constant 0 : i32
    %c0_i32_0 = arith.constant 0 : i32
    %c0_i32_1 = arith.constant 0 : i32
    return %c0_i32, %c0_i32_0 : i32, i32
  }
  func.func @transform_4(%arg0: i32) -> (i32, i32) {
    %c0_i32 = arith.constant 0 : i32
    %c0_i32_0 = arith.constant 0 : i32
    %c0_i32_1 = arith.constant 0 : i32
    return %c0_i32, %c0_i32_0 : i32, i32
  }
  func.func @transform_5(%arg0: i32) -> (i32, i32) {
    %c0_i32 = arith.constant 0 : i32
    %c0_i32_0 = arith.constant 0 : i32
    %c0_i32_1 = arith.constant 0 : i32
    return %c0_i32, %c0_i32_0 : i32, i32
  }
  func.func @transform_6(%arg0: i32) -> (i32, i32) {
    %c0_i32 = arith.constant 0 : i32
    %c0_i32_0 = arith.constant 0 : i32
    %c0_i32_1 = arith.constant 0 : i32
    return %c0_i32, %c0_i32_0 : i32, i32
  }
  func.func @transform_7(%arg0: i32) -> (i32, i32) {
    %c0_i32 = arith.constant 0 : i32
    %c0_i32_0 = arith.constant 0 : i32
    %c0_i32_1 = arith.constant 0 : i32
    return %c0_i32, %c0_i32_0 : i32, i32
  }
  func.func @transform_8(%arg0: i32) -> (i32, i32) {
    %c0_i32 = arith.constant 0 : i32
    %c0_i32_0 = arith.constant 0 : i32
    %c0_i32_1 = arith.constant 0 : i32
    return %c0_i32, %c0_i32_0 : i32, i32
  }
  func.func @transform_9(%arg0: i32) -> (i32, i32) {
    %c0_i32 = arith.constant 0 : i32
    %c0_i32_0 = arith.constant 0 : i32
    %c0_i32_1 = arith.constant 0 : i32
    return %c0_i32, %c0_i32_0 : i32, i32
  }
  func.func @transform_10(%arg0: i32) -> (i32, i32) {
    %c0_i32 = arith.constant 0 : i32
    %c0_i32_0 = arith.constant 0 : i32
    %c0_i32_1 = arith.constant 0 : i32
    return %c0_i32, %c0_i32_0 : i32, i32
  }
  func.func @transform_11(%arg0: i32) -> (i32, i32) {
    %c0_i32 = arith.constant 0 : i32
    %c0_i32_0 = arith.constant 0 : i32
    %c0_i32_1 = arith.constant 0 : i32
    return %c0_i32, %c0_i32_0 : i32, i32
  }
  func.func @transform_12(%arg0: i32) -> (i32, i32) {
    %c0_i32 = arith.constant 0 : i32
    %c0_i32_0 = arith.constant 0 : i32
    %c0_i32_1 = arith.constant 0 : i32
    return %c0_i32, %c0_i32_0 : i32, i32
  }
  func.func @transform_13(%arg0: i32) -> (i32, i32) {
    %c0_i32 = arith.constant 0 : i32
    %c0_i32_0 = arith.constant 0 : i32
    %c0_i32_1 = arith.constant 0 : i32
    return %c0_i32, %c0_i32_0 : i32, i32
  }
  func.func @transform_14(%arg0: i32) -> (i32, i32) {
    %c0_i32 = arith.constant 0 : i32
    %c0_i32_0 = arith.constant 0 : i32
    %c0_i32_1 = arith.constant 0 : i32
    return %c0_i32, %c0_i32_0 : i32, i32
  }
  func.func @transform_15(%arg0: i32) -> (i32, i32) {
    %c0_i32 = arith.constant 0 : i32
    %c0_i32_0 = arith.constant 0 : i32
    %c0_i32_1 = arith.constant 0 : i32
    return %c0_i32, %c0_i32_0 : i32, i32
  }
  func.func @transform_16(%arg0: i32) -> (i32, i32) {
    %c0_i32 = arith.constant 0 : i32
    %c0_i32_0 = arith.constant 0 : i32
    return %arg0, %c0_i32 : i32, i32
  }
}

module attributes {stable_mosaic.version = 11 : i64} {
  func.func @_dual_attn_kernel(%arg0: i32, %arg1: memref<8x32xbf16, #tpu.memory_space<vmem>>, %arg2: memref<8x32xbf16, #tpu.memory_space<vmem>>, %arg3: memref<32x96xbf16, #tpu.memory_space<vmem>>, %arg4: memref<1x96xf32, #tpu.memory_space<vmem>>, %arg5: memref<32x32xbf16, #tpu.memory_space<vmem>>, %arg6: memref<1x32xf32, #tpu.memory_space<vmem>>, %arg7: memref<1x32xf32, #tpu.memory_space<vmem>>, %arg8: memref<1x32xf32, #tpu.memory_space<vmem>>, %arg9: memref<32x32xbf16, #tpu.memory_space<vmem>>, %arg10: memref<1x32xf32, #tpu.memory_space<vmem>>, %arg11: memref<32x64xbf16, #tpu.memory_space<vmem>>, %arg12: memref<1x64xf32, #tpu.memory_space<vmem>>, %arg13: memref<32x32xbf16, #tpu.memory_space<vmem>>, %arg14: memref<1x32xf32, #tpu.memory_space<vmem>>, %arg15: memref<1x32xf32, #tpu.memory_space<vmem>>, %arg16: memref<1x32xf32, #tpu.memory_space<vmem>>, %arg17: memref<8x32xbf16, #tpu.memory_space<vmem>>) attributes {dimension_semantics = [#tpu.dimension_semantics<parallel>], iteration_bounds = array<i64: 2>, scalar_prefetch = 0 : i64, scratch_operands = 0 : i64, tpu.core_type = #tpu.core_type<tc>, window_params = [{transform_indices = @transform_0, window_bounds = array<i64: 8, 32>}, {transform_indices = @transform_1, window_bounds = array<i64: 8, 32>}, {pipeline_mode = #tpu.pipeline_mode<synchronous>, transform_indices = @transform_2, window_bounds = array<i64: 32, 96>}, {pipeline_mode = #tpu.pipeline_mode<synchronous>, transform_indices = @transform_3, window_bounds = array<i64: 1, 96>}, {pipeline_mode = #tpu.pipeline_mode<synchronous>, transform_indices = @transform_4, window_bounds = array<i64: 32, 32>}, {pipeline_mode = #tpu.pipeline_mode<synchronous>, transform_indices = @transform_5, window_bounds = array<i64: 1, 32>}, {pipeline_mode = #tpu.pipeline_mode<synchronous>, transform_indices = @transform_6, window_bounds = array<i64: 1, 32>}, {pipeline_mode = #tpu.pipeline_mode<synchronous>, transform_indices = @transform_7, window_bounds = array<i64: 1, 32>}, {pipeline_mode = #tpu.pipeline_mode<synchronous>, transform_indices = @transform_8, window_bounds = array<i64: 32, 32>}, {pipeline_mode = #tpu.pipeline_mode<synchronous>, transform_indices = @transform_9, window_bounds = array<i64: 1, 32>}, {pipeline_mode = #tpu.pipeline_mode<synchronous>, transform_indices = @transform_10, window_bounds = array<i64: 32, 64>}, {pipeline_mode = #tpu.pipeline_mode<synchronous>, transform_indices = @transform_11, window_bounds = array<i64: 1, 64>}, {pipeline_mode = #tpu.pipeline_mode<synchronous>, transform_indices = @transform_12, window_bounds = array<i64: 32, 32>}, {pipeline_mode = #tpu.pipeline_mode<synchronous>, transform_indices = @transform_13, window_bounds = array<i64: 1, 32>}, {pipeline_mode = #tpu.pipeline_mode<synchronous>, transform_indices = @transform_14, window_bounds = array<i64: 1, 32>}, {pipeline_mode = #tpu.pipeline_mode<synchronous>, transform_indices = @transform_15, window_bounds = array<i64: 1, 32>}, {transform_indices = @transform_16, window_bounds = array<i64: 8, 32>}]} {
    %c0 = arith.constant 0 : index
    %c0_0 = arith.constant 0 : index
    %0 = vector.load %arg1[%c0, %c0_0] : memref<8x32xbf16, #tpu.memory_space<vmem>>, vector<8x32xbf16>
    %1 = arith.extf %0 : vector<8x32xbf16> to vector<8x32xf32>
    %c0_1 = arith.constant 0 : index
    %c0_2 = arith.constant 0 : index
    %2 = vector.load %arg2[%c0_1, %c0_2] : memref<8x32xbf16, #tpu.memory_space<vmem>>, vector<8x32xbf16>
    %c0_3 = arith.constant 0 : index
    %c0_4 = arith.constant 0 : index
    %3 = vector.load %arg1[%c0_3, %c0_4] : memref<8x32xbf16, #tpu.memory_space<vmem>>, vector<8x32xbf16>
    %c0_5 = arith.constant 0 : index
    %c0_6 = arith.constant 0 : index
    %4 = vector.load %arg3[%c0_5, %c0_6] : memref<32x96xbf16, #tpu.memory_space<vmem>>, vector<32x96xbf16>
    %cst = arith.constant dense<0.000000e+00> : vector<8x96xf32>
    %5 = tpu.matmul %3, %4, %cst {dimension_numbers = #tpu.dot_dimension_numbers<[1], [0], [0], [1], [0, 0, 1, 1], [], []>} : vector<8x32xbf16>, vector<32x96xbf16>, vector<8x96xf32> -> vector<8x96xf32>
    %c0_7 = arith.constant 0 : index
    %c0_8 = arith.constant 0 : index
    %6 = vector.load %arg4[%c0_7, %c0_8] : memref<1x96xf32, #tpu.memory_space<vmem>>, vector<1x96xf32>
    %7 = vector.broadcast %6 : vector<1x96xf32> to vector<8x96xf32>
    %8 = arith.addf %5, %7 : vector<8x96xf32>
    %9 = vector.extract_strided_slice %8 {offsets = [0, 0], sizes = [8, 32], strides = [1, 1]} : vector<8x96xf32> to vector<8x32xf32>
    %10 = vector.extract_strided_slice %8 {offsets = [0, 32], sizes = [8, 32], strides = [1, 1]} : vector<8x96xf32> to vector<8x32xf32>
    %11 = vector.extract_strided_slice %8 {offsets = [0, 64], sizes = [8, 32], strides = [1, 1]} : vector<8x96xf32> to vector<8x32xf32>
    %12 = vector.extract_strided_slice %9 {offsets = [0, 0], sizes = [8, 8], strides = [1, 1]} : vector<8x32xf32> to vector<8x8xf32>
    %13 = arith.truncf %12 : vector<8x8xf32> to vector<8x8xbf16>
    %14 = vector.extract_strided_slice %10 {offsets = [0, 0], sizes = [8, 8], strides = [1, 1]} : vector<8x32xf32> to vector<8x8xf32>
    %15 = arith.truncf %14 : vector<8x8xf32> to vector<8x8xbf16>
    %16 = vector.extract_strided_slice %11 {offsets = [0, 0], sizes = [8, 8], strides = [1, 1]} : vector<8x32xf32> to vector<8x8xf32>
    %17 = arith.truncf %16 : vector<8x8xf32> to vector<8x8xbf16>
    %cst_9 = arith.constant dense<0.000000e+00> : vector<8x8xf32>
    %18 = tpu.matmul %13, %15, %cst_9 {dimension_numbers = #tpu.dot_dimension_numbers<[1], [1], [0], [0], [0, 0, 1, 0], [], []>} : vector<8x8xbf16>, vector<8x8xbf16>, vector<8x8xf32> -> vector<8x8xf32>
    %cst_10 = arith.constant dense<0xFF800000> : vector<8xf32>
    %19 = vector.multi_reduction <maximumf>, %18, %cst_10 [1] : vector<8x8xf32> to vector<8xf32>
    %20 = vector.shape_cast %19 : vector<8xf32> to vector<8x1xf32>
    %21 = vector.broadcast %20 : vector<8x1xf32> to vector<8x8xf32>
    %22 = arith.subf %18, %21 : vector<8x8xf32>
    %23 = math.exp %22 : vector<8x8xf32>
    %cst_11 = arith.constant dense<0.000000e+00> : vector<8xf32>
    %24 = vector.multi_reduction <add>, %23, %cst_11 [1] : vector<8x8xf32> to vector<8xf32>
    %25 = vector.shape_cast %24 : vector<8xf32> to vector<8x1xf32>
    %26 = tpu.reciprocal %25 {approx = true} : vector<8x1xf32> -> vector<8x1xf32>
    %27 = vector.broadcast %26 : vector<8x1xf32> to vector<8x8xf32>
    %28 = arith.mulf %23, %27 : vector<8x8xf32>
    %29 = arith.truncf %28 : vector<8x8xf32> to vector<8x8xbf16>
    %cst_12 = arith.constant dense<0.000000e+00> : vector<8x8xf32>
    %30 = tpu.matmul %29, %17, %cst_12 {dimension_numbers = #tpu.dot_dimension_numbers<[1], [0], [0], [1], [0, 0, 1, 1], [], []>} : vector<8x8xbf16>, vector<8x8xbf16>, vector<8x8xf32> -> vector<8x8xf32>
    %31 = vector.extract_strided_slice %9 {offsets = [0, 8], sizes = [8, 8], strides = [1, 1]} : vector<8x32xf32> to vector<8x8xf32>
    %32 = arith.truncf %31 : vector<8x8xf32> to vector<8x8xbf16>
    %33 = vector.extract_strided_slice %10 {offsets = [0, 8], sizes = [8, 8], strides = [1, 1]} : vector<8x32xf32> to vector<8x8xf32>
    %34 = arith.truncf %33 : vector<8x8xf32> to vector<8x8xbf16>
    %35 = vector.extract_strided_slice %11 {offsets = [0, 8], sizes = [8, 8], strides = [1, 1]} : vector<8x32xf32> to vector<8x8xf32>
    %36 = arith.truncf %35 : vector<8x8xf32> to vector<8x8xbf16>
    %cst_13 = arith.constant dense<0.000000e+00> : vector<8x8xf32>
    %37 = tpu.matmul %32, %34, %cst_13 {dimension_numbers = #tpu.dot_dimension_numbers<[1], [1], [0], [0], [0, 0, 1, 0], [], []>} : vector<8x8xbf16>, vector<8x8xbf16>, vector<8x8xf32> -> vector<8x8xf32>
    %cst_14 = arith.constant dense<0xFF800000> : vector<8xf32>
    %38 = vector.multi_reduction <maximumf>, %37, %cst_14 [1] : vector<8x8xf32> to vector<8xf32>
    %39 = vector.shape_cast %38 : vector<8xf32> to vector<8x1xf32>
    %40 = vector.broadcast %39 : vector<8x1xf32> to vector<8x8xf32>
    %41 = arith.subf %37, %40 : vector<8x8xf32>
    %42 = math.exp %41 : vector<8x8xf32>
    %cst_15 = arith.constant dense<0.000000e+00> : vector<8xf32>
    %43 = vector.multi_reduction <add>, %42, %cst_15 [1] : vector<8x8xf32> to vector<8xf32>
    %44 = vector.shape_cast %43 : vector<8xf32> to vector<8x1xf32>
    %45 = tpu.reciprocal %44 {approx = true} : vector<8x1xf32> -> vector<8x1xf32>
    %46 = vector.broadcast %45 : vector<8x1xf32> to vector<8x8xf32>
    %47 = arith.mulf %42, %46 : vector<8x8xf32>
    %48 = arith.truncf %47 : vector<8x8xf32> to vector<8x8xbf16>
    %cst_16 = arith.constant dense<0.000000e+00> : vector<8x8xf32>
    %49 = tpu.matmul %48, %36, %cst_16 {dimension_numbers = #tpu.dot_dimension_numbers<[1], [0], [0], [1], [0, 0, 1, 1], [], []>} : vector<8x8xbf16>, vector<8x8xbf16>, vector<8x8xf32> -> vector<8x8xf32>
    %50 = vector.extract_strided_slice %9 {offsets = [0, 16], sizes = [8, 8], strides = [1, 1]} : vector<8x32xf32> to vector<8x8xf32>
    %51 = arith.truncf %50 : vector<8x8xf32> to vector<8x8xbf16>
    %52 = vector.extract_strided_slice %10 {offsets = [0, 16], sizes = [8, 8], strides = [1, 1]} : vector<8x32xf32> to vector<8x8xf32>
    %53 = arith.truncf %52 : vector<8x8xf32> to vector<8x8xbf16>
    %54 = vector.extract_strided_slice %11 {offsets = [0, 16], sizes = [8, 8], strides = [1, 1]} : vector<8x32xf32> to vector<8x8xf32>
    %55 = arith.truncf %54 : vector<8x8xf32> to vector<8x8xbf16>
    %cst_17 = arith.constant dense<0.000000e+00> : vector<8x8xf32>
    %56 = tpu.matmul %51, %53, %cst_17 {dimension_numbers = #tpu.dot_dimension_numbers<[1], [1], [0], [0], [0, 0, 1, 0], [], []>} : vector<8x8xbf16>, vector<8x8xbf16>, vector<8x8xf32> -> vector<8x8xf32>
    %cst_18 = arith.constant dense<0xFF800000> : vector<8xf32>
    %57 = vector.multi_reduction <maximumf>, %56, %cst_18 [1] : vector<8x8xf32> to vector<8xf32>
    %58 = vector.shape_cast %57 : vector<8xf32> to vector<8x1xf32>
    %59 = vector.broadcast %58 : vector<8x1xf32> to vector<8x8xf32>
    %60 = arith.subf %56, %59 : vector<8x8xf32>
    %61 = math.exp %60 : vector<8x8xf32>
    %cst_19 = arith.constant dense<0.000000e+00> : vector<8xf32>
    %62 = vector.multi_reduction <add>, %61, %cst_19 [1] : vector<8x8xf32> to vector<8xf32>
    %63 = vector.shape_cast %62 : vector<8xf32> to vector<8x1xf32>
    %64 = tpu.reciprocal %63 {approx = true} : vector<8x1xf32> -> vector<8x1xf32>
    %65 = vector.broadcast %64 : vector<8x1xf32> to vector<8x8xf32>
    %66 = arith.mulf %61, %65 : vector<8x8xf32>
    %67 = arith.truncf %66 : vector<8x8xf32> to vector<8x8xbf16>
    %cst_20 = arith.constant dense<0.000000e+00> : vector<8x8xf32>
    %68 = tpu.matmul %67, %55, %cst_20 {dimension_numbers = #tpu.dot_dimension_numbers<[1], [0], [0], [1], [0, 0, 1, 1], [], []>} : vector<8x8xbf16>, vector<8x8xbf16>, vector<8x8xf32> -> vector<8x8xf32>
    %69 = vector.extract_strided_slice %9 {offsets = [0, 24], sizes = [8, 8], strides = [1, 1]} : vector<8x32xf32> to vector<8x8xf32>
    %70 = arith.truncf %69 : vector<8x8xf32> to vector<8x8xbf16>
    %71 = vector.extract_strided_slice %10 {offsets = [0, 24], sizes = [8, 8], strides = [1, 1]} : vector<8x32xf32> to vector<8x8xf32>
    %72 = arith.truncf %71 : vector<8x8xf32> to vector<8x8xbf16>
    %73 = vector.extract_strided_slice %11 {offsets = [0, 24], sizes = [8, 8], strides = [1, 1]} : vector<8x32xf32> to vector<8x8xf32>
    %74 = arith.truncf %73 : vector<8x8xf32> to vector<8x8xbf16>
    %cst_21 = arith.constant dense<0.000000e+00> : vector<8x8xf32>
    %75 = tpu.matmul %70, %72, %cst_21 {dimension_numbers = #tpu.dot_dimension_numbers<[1], [1], [0], [0], [0, 0, 1, 0], [], []>} : vector<8x8xbf16>, vector<8x8xbf16>, vector<8x8xf32> -> vector<8x8xf32>
    %cst_22 = arith.constant dense<0xFF800000> : vector<8xf32>
    %76 = vector.multi_reduction <maximumf>, %75, %cst_22 [1] : vector<8x8xf32> to vector<8xf32>
    %77 = vector.shape_cast %76 : vector<8xf32> to vector<8x1xf32>
    %78 = vector.broadcast %77 : vector<8x1xf32> to vector<8x8xf32>
    %79 = arith.subf %75, %78 : vector<8x8xf32>
    %80 = math.exp %79 : vector<8x8xf32>
    %cst_23 = arith.constant dense<0.000000e+00> : vector<8xf32>
    %81 = vector.multi_reduction <add>, %80, %cst_23 [1] : vector<8x8xf32> to vector<8xf32>
    %82 = vector.shape_cast %81 : vector<8xf32> to vector<8x1xf32>
    %83 = tpu.reciprocal %82 {approx = true} : vector<8x1xf32> -> vector<8x1xf32>
    %84 = vector.broadcast %83 : vector<8x1xf32> to vector<8x8xf32>
    %85 = arith.mulf %80, %84 : vector<8x8xf32>
    %86 = arith.truncf %85 : vector<8x8xf32> to vector<8x8xbf16>
    %cst_24 = arith.constant dense<0.000000e+00> : vector<8x8xf32>
    %87 = tpu.matmul %86, %74, %cst_24 {dimension_numbers = #tpu.dot_dimension_numbers<[1], [0], [0], [1], [0, 0, 1, 1], [], []>} : vector<8x8xbf16>, vector<8x8xbf16>, vector<8x8xf32> -> vector<8x8xf32>
    %88 = tpu.concatenate %30, %49, %68, %87 in 1 : vector<8x8xf32>, vector<8x8xf32>, vector<8x8xf32>, vector<8x8xf32> -> vector<8x32xf32>
    %89 = arith.truncf %88 : vector<8x32xf32> to vector<8x32xbf16>
    %c0_25 = arith.constant 0 : index
    %c0_26 = arith.constant 0 : index
    %90 = vector.load %arg5[%c0_25, %c0_26] : memref<32x32xbf16, #tpu.memory_space<vmem>>, vector<32x32xbf16>
    %cst_27 = arith.constant dense<0.000000e+00> : vector<8x32xf32>
    %91 = tpu.matmul %89, %90, %cst_27 {dimension_numbers = #tpu.dot_dimension_numbers<[1], [0], [0], [1], [0, 0, 1, 1], [], []>} : vector<8x32xbf16>, vector<32x32xbf16>, vector<8x32xf32> -> vector<8x32xf32>
    %c0_28 = arith.constant 0 : index
    %c0_29 = arith.constant 0 : index
    %92 = vector.load %arg6[%c0_28, %c0_29] : memref<1x32xf32, #tpu.memory_space<vmem>>, vector<1x32xf32>
    %93 = vector.broadcast %92 : vector<1x32xf32> to vector<8x32xf32>
    %94 = arith.addf %91, %93 : vector<8x32xf32>
    %95 = arith.addf %94, %1 : vector<8x32xf32>
    %cst_30 = arith.constant dense<0.000000e+00> : vector<8xf32>
    %96 = vector.multi_reduction <add>, %95, %cst_30 [1] : vector<8x32xf32> to vector<8xf32>
    %97 = vector.shape_cast %96 : vector<8xf32> to vector<8x1xf32>
    %cst_31 = arith.constant 3.200000e+01 : f32
    %98 = vector.broadcast %cst_31 : f32 to vector<8x1xf32>
    %99 = arith.divf %97, %98 : vector<8x1xf32>
    %100 = vector.broadcast %99 : vector<8x1xf32> to vector<8x32xf32>
    %101 = arith.subf %95, %100 : vector<8x32xf32>
    %102 = arith.mulf %101, %101 : vector<8x32xf32>
    %cst_32 = arith.constant dense<0.000000e+00> : vector<8xf32>
    %103 = vector.multi_reduction <add>, %102, %cst_32 [1] : vector<8x32xf32> to vector<8xf32>
    %104 = vector.shape_cast %103 : vector<8xf32> to vector<8x1xf32>
    %cst_33 = arith.constant 3.200000e+01 : f32
    %105 = vector.broadcast %cst_33 : f32 to vector<8x1xf32>
    %106 = arith.divf %104, %105 : vector<8x1xf32>
    %cst_34 = arith.constant 9.99999974E-6 : f32
    %107 = vector.broadcast %cst_34 : f32 to vector<8x1xf32>
    %108 = arith.addf %106, %107 : vector<8x1xf32>
    %109 = math.rsqrt %108 : vector<8x1xf32>
    %110 = vector.broadcast %109 : vector<8x1xf32> to vector<8x32xf32>
    %111 = arith.mulf %101, %110 : vector<8x32xf32>
    %c0_35 = arith.constant 0 : index
    %c0_36 = arith.constant 0 : index
    %112 = vector.load %arg7[%c0_35, %c0_36] : memref<1x32xf32, #tpu.memory_space<vmem>>, vector<1x32xf32>
    %113 = vector.broadcast %112 : vector<1x32xf32> to vector<8x32xf32>
    %114 = arith.mulf %111, %113 : vector<8x32xf32>
    %c0_37 = arith.constant 0 : index
    %c0_38 = arith.constant 0 : index
    %115 = vector.load %arg8[%c0_37, %c0_38] : memref<1x32xf32, #tpu.memory_space<vmem>>, vector<1x32xf32>
    %116 = vector.broadcast %115 : vector<1x32xf32> to vector<8x32xf32>
    %117 = arith.addf %114, %116 : vector<8x32xf32>
    %118 = arith.truncf %117 : vector<8x32xf32> to vector<8x32xbf16>
    %c0_39 = arith.constant 0 : index
    %c0_40 = arith.constant 0 : index
    %119 = vector.load %arg9[%c0_39, %c0_40] : memref<32x32xbf16, #tpu.memory_space<vmem>>, vector<32x32xbf16>
    %cst_41 = arith.constant dense<0.000000e+00> : vector<8x32xf32>
    %120 = tpu.matmul %118, %119, %cst_41 {dimension_numbers = #tpu.dot_dimension_numbers<[1], [0], [0], [1], [0, 0, 1, 1], [], []>} : vector<8x32xbf16>, vector<32x32xbf16>, vector<8x32xf32> -> vector<8x32xf32>
    %c0_42 = arith.constant 0 : index
    %c0_43 = arith.constant 0 : index
    %121 = vector.load %arg10[%c0_42, %c0_43] : memref<1x32xf32, #tpu.memory_space<vmem>>, vector<1x32xf32>
    %122 = vector.broadcast %121 : vector<1x32xf32> to vector<8x32xf32>
    %123 = arith.addf %120, %122 : vector<8x32xf32>
    %c0_44 = arith.constant 0 : index
    %c0_45 = arith.constant 0 : index
    %124 = vector.load %arg11[%c0_44, %c0_45] : memref<32x64xbf16, #tpu.memory_space<vmem>>, vector<32x64xbf16>
    %cst_46 = arith.constant dense<0.000000e+00> : vector<8x64xf32>
    %125 = tpu.matmul %2, %124, %cst_46 {dimension_numbers = #tpu.dot_dimension_numbers<[1], [0], [0], [1], [0, 0, 1, 1], [], []>} : vector<8x32xbf16>, vector<32x64xbf16>, vector<8x64xf32> -> vector<8x64xf32>
    %c0_47 = arith.constant 0 : index
    %c0_48 = arith.constant 0 : index
    %126 = vector.load %arg12[%c0_47, %c0_48] : memref<1x64xf32, #tpu.memory_space<vmem>>, vector<1x64xf32>
    %127 = vector.broadcast %126 : vector<1x64xf32> to vector<8x64xf32>
    %128 = arith.addf %125, %127 : vector<8x64xf32>
    %129 = vector.extract_strided_slice %128 {offsets = [0, 0], sizes = [8, 32], strides = [1, 1]} : vector<8x64xf32> to vector<8x32xf32>
    %130 = vector.extract_strided_slice %128 {offsets = [0, 32], sizes = [8, 32], strides = [1, 1]} : vector<8x64xf32> to vector<8x32xf32>
    %131 = vector.extract_strided_slice %123 {offsets = [0, 0], sizes = [8, 8], strides = [1, 1]} : vector<8x32xf32> to vector<8x8xf32>
    %132 = arith.truncf %131 : vector<8x8xf32> to vector<8x8xbf16>
    %133 = vector.extract_strided_slice %129 {offsets = [0, 0], sizes = [8, 8], strides = [1, 1]} : vector<8x32xf32> to vector<8x8xf32>
    %134 = arith.truncf %133 : vector<8x8xf32> to vector<8x8xbf16>
    %135 = vector.extract_strided_slice %130 {offsets = [0, 0], sizes = [8, 8], strides = [1, 1]} : vector<8x32xf32> to vector<8x8xf32>
    %136 = arith.truncf %135 : vector<8x8xf32> to vector<8x8xbf16>
    %cst_49 = arith.constant dense<0.000000e+00> : vector<8x8xf32>
    %137 = tpu.matmul %132, %134, %cst_49 {dimension_numbers = #tpu.dot_dimension_numbers<[1], [1], [0], [0], [0, 0, 1, 0], [], []>} : vector<8x8xbf16>, vector<8x8xbf16>, vector<8x8xf32> -> vector<8x8xf32>
    %cst_50 = arith.constant dense<0xFF800000> : vector<8xf32>
    %138 = vector.multi_reduction <maximumf>, %137, %cst_50 [1] : vector<8x8xf32> to vector<8xf32>
    %139 = vector.shape_cast %138 : vector<8xf32> to vector<8x1xf32>
    %140 = vector.broadcast %139 : vector<8x1xf32> to vector<8x8xf32>
    %141 = arith.subf %137, %140 : vector<8x8xf32>
    %142 = math.exp %141 : vector<8x8xf32>
    %cst_51 = arith.constant dense<0.000000e+00> : vector<8xf32>
    %143 = vector.multi_reduction <add>, %142, %cst_51 [1] : vector<8x8xf32> to vector<8xf32>
    %144 = vector.shape_cast %143 : vector<8xf32> to vector<8x1xf32>
    %145 = tpu.reciprocal %144 {approx = true} : vector<8x1xf32> -> vector<8x1xf32>
    %146 = vector.broadcast %145 : vector<8x1xf32> to vector<8x8xf32>
    %147 = arith.mulf %142, %146 : vector<8x8xf32>
    %148 = arith.truncf %147 : vector<8x8xf32> to vector<8x8xbf16>
    %cst_52 = arith.constant dense<0.000000e+00> : vector<8x8xf32>
    %149 = tpu.matmul %148, %136, %cst_52 {dimension_numbers = #tpu.dot_dimension_numbers<[1], [0], [0], [1], [0, 0, 1, 1], [], []>} : vector<8x8xbf16>, vector<8x8xbf16>, vector<8x8xf32> -> vector<8x8xf32>
    %150 = vector.extract_strided_slice %123 {offsets = [0, 8], sizes = [8, 8], strides = [1, 1]} : vector<8x32xf32> to vector<8x8xf32>
    %151 = arith.truncf %150 : vector<8x8xf32> to vector<8x8xbf16>
    %152 = vector.extract_strided_slice %129 {offsets = [0, 8], sizes = [8, 8], strides = [1, 1]} : vector<8x32xf32> to vector<8x8xf32>
    %153 = arith.truncf %152 : vector<8x8xf32> to vector<8x8xbf16>
    %154 = vector.extract_strided_slice %130 {offsets = [0, 8], sizes = [8, 8], strides = [1, 1]} : vector<8x32xf32> to vector<8x8xf32>
    %155 = arith.truncf %154 : vector<8x8xf32> to vector<8x8xbf16>
    %cst_53 = arith.constant dense<0.000000e+00> : vector<8x8xf32>
    %156 = tpu.matmul %151, %153, %cst_53 {dimension_numbers = #tpu.dot_dimension_numbers<[1], [1], [0], [0], [0, 0, 1, 0], [], []>} : vector<8x8xbf16>, vector<8x8xbf16>, vector<8x8xf32> -> vector<8x8xf32>
    %cst_54 = arith.constant dense<0xFF800000> : vector<8xf32>
    %157 = vector.multi_reduction <maximumf>, %156, %cst_54 [1] : vector<8x8xf32> to vector<8xf32>
    %158 = vector.shape_cast %157 : vector<8xf32> to vector<8x1xf32>
    %159 = vector.broadcast %158 : vector<8x1xf32> to vector<8x8xf32>
    %160 = arith.subf %156, %159 : vector<8x8xf32>
    %161 = math.exp %160 : vector<8x8xf32>
    %cst_55 = arith.constant dense<0.000000e+00> : vector<8xf32>
    %162 = vector.multi_reduction <add>, %161, %cst_55 [1] : vector<8x8xf32> to vector<8xf32>
    %163 = vector.shape_cast %162 : vector<8xf32> to vector<8x1xf32>
    %164 = tpu.reciprocal %163 {approx = true} : vector<8x1xf32> -> vector<8x1xf32>
    %165 = vector.broadcast %164 : vector<8x1xf32> to vector<8x8xf32>
    %166 = arith.mulf %161, %165 : vector<8x8xf32>
    %167 = arith.truncf %166 : vector<8x8xf32> to vector<8x8xbf16>
    %cst_56 = arith.constant dense<0.000000e+00> : vector<8x8xf32>
    %168 = tpu.matmul %167, %155, %cst_56 {dimension_numbers = #tpu.dot_dimension_numbers<[1], [0], [0], [1], [0, 0, 1, 1], [], []>} : vector<8x8xbf16>, vector<8x8xbf16>, vector<8x8xf32> -> vector<8x8xf32>
    %169 = vector.extract_strided_slice %123 {offsets = [0, 16], sizes = [8, 8], strides = [1, 1]} : vector<8x32xf32> to vector<8x8xf32>
    %170 = arith.truncf %169 : vector<8x8xf32> to vector<8x8xbf16>
    %171 = vector.extract_strided_slice %129 {offsets = [0, 16], sizes = [8, 8], strides = [1, 1]} : vector<8x32xf32> to vector<8x8xf32>
    %172 = arith.truncf %171 : vector<8x8xf32> to vector<8x8xbf16>
    %173 = vector.extract_strided_slice %130 {offsets = [0, 16], sizes = [8, 8], strides = [1, 1]} : vector<8x32xf32> to vector<8x8xf32>
    %174 = arith.truncf %173 : vector<8x8xf32> to vector<8x8xbf16>
    %cst_57 = arith.constant dense<0.000000e+00> : vector<8x8xf32>
    %175 = tpu.matmul %170, %172, %cst_57 {dimension_numbers = #tpu.dot_dimension_numbers<[1], [1], [0], [0], [0, 0, 1, 0], [], []>} : vector<8x8xbf16>, vector<8x8xbf16>, vector<8x8xf32> -> vector<8x8xf32>
    %cst_58 = arith.constant dense<0xFF800000> : vector<8xf32>
    %176 = vector.multi_reduction <maximumf>, %175, %cst_58 [1] : vector<8x8xf32> to vector<8xf32>
    %177 = vector.shape_cast %176 : vector<8xf32> to vector<8x1xf32>
    %178 = vector.broadcast %177 : vector<8x1xf32> to vector<8x8xf32>
    %179 = arith.subf %175, %178 : vector<8x8xf32>
    %180 = math.exp %179 : vector<8x8xf32>
    %cst_59 = arith.constant dense<0.000000e+00> : vector<8xf32>
    %181 = vector.multi_reduction <add>, %180, %cst_59 [1] : vector<8x8xf32> to vector<8xf32>
    %182 = vector.shape_cast %181 : vector<8xf32> to vector<8x1xf32>
    %183 = tpu.reciprocal %182 {approx = true} : vector<8x1xf32> -> vector<8x1xf32>
    %184 = vector.broadcast %183 : vector<8x1xf32> to vector<8x8xf32>
    %185 = arith.mulf %180, %184 : vector<8x8xf32>
    %186 = arith.truncf %185 : vector<8x8xf32> to vector<8x8xbf16>
    %cst_60 = arith.constant dense<0.000000e+00> : vector<8x8xf32>
    %187 = tpu.matmul %186, %174, %cst_60 {dimension_numbers = #tpu.dot_dimension_numbers<[1], [0], [0], [1], [0, 0, 1, 1], [], []>} : vector<8x8xbf16>, vector<8x8xbf16>, vector<8x8xf32> -> vector<8x8xf32>
    %188 = vector.extract_strided_slice %123 {offsets = [0, 24], sizes = [8, 8], strides = [1, 1]} : vector<8x32xf32> to vector<8x8xf32>
    %189 = arith.truncf %188 : vector<8x8xf32> to vector<8x8xbf16>
    %190 = vector.extract_strided_slice %129 {offsets = [0, 24], sizes = [8, 8], strides = [1, 1]} : vector<8x32xf32> to vector<8x8xf32>
    %191 = arith.truncf %190 : vector<8x8xf32> to vector<8x8xbf16>
    %192 = vector.extract_strided_slice %130 {offsets = [0, 24], sizes = [8, 8], strides = [1, 1]} : vector<8x32xf32> to vector<8x8xf32>
    %193 = arith.truncf %192 : vector<8x8xf32> to vector<8x8xbf16>
    %cst_61 = arith.constant dense<0.000000e+00> : vector<8x8xf32>
    %194 = tpu.matmul %189, %191, %cst_61 {dimension_numbers = #tpu.dot_dimension_numbers<[1], [1], [0], [0], [0, 0, 1, 0], [], []>} : vector<8x8xbf16>, vector<8x8xbf16>, vector<8x8xf32> -> vector<8x8xf32>
    %cst_62 = arith.constant dense<0xFF800000> : vector<8xf32>
    %195 = vector.multi_reduction <maximumf>, %194, %cst_62 [1] : vector<8x8xf32> to vector<8xf32>
    %196 = vector.shape_cast %195 : vector<8xf32> to vector<8x1xf32>
    %197 = vector.broadcast %196 : vector<8x1xf32> to vector<8x8xf32>
    %198 = arith.subf %194, %197 : vector<8x8xf32>
    %199 = math.exp %198 : vector<8x8xf32>
    %cst_63 = arith.constant dense<0.000000e+00> : vector<8xf32>
    %200 = vector.multi_reduction <add>, %199, %cst_63 [1] : vector<8x8xf32> to vector<8xf32>
    %201 = vector.shape_cast %200 : vector<8xf32> to vector<8x1xf32>
    %202 = tpu.reciprocal %201 {approx = true} : vector<8x1xf32> -> vector<8x1xf32>
    %203 = vector.broadcast %202 : vector<8x1xf32> to vector<8x8xf32>
    %204 = arith.mulf %199, %203 : vector<8x8xf32>
    %205 = arith.truncf %204 : vector<8x8xf32> to vector<8x8xbf16>
    %cst_64 = arith.constant dense<0.000000e+00> : vector<8x8xf32>
    %206 = tpu.matmul %205, %193, %cst_64 {dimension_numbers = #tpu.dot_dimension_numbers<[1], [0], [0], [1], [0, 0, 1, 1], [], []>} : vector<8x8xbf16>, vector<8x8xbf16>, vector<8x8xf32> -> vector<8x8xf32>
    %207 = tpu.concatenate %149, %168, %187, %206 in 1 : vector<8x8xf32>, vector<8x8xf32>, vector<8x8xf32>, vector<8x8xf32> -> vector<8x32xf32>
    %208 = arith.truncf %207 : vector<8x32xf32> to vector<8x32xbf16>
    %c0_65 = arith.constant 0 : index
    %c0_66 = arith.constant 0 : index
    %209 = vector.load %arg13[%c0_65, %c0_66] : memref<32x32xbf16, #tpu.memory_space<vmem>>, vector<32x32xbf16>
    %cst_67 = arith.constant dense<0.000000e+00> : vector<8x32xf32>
    %210 = tpu.matmul %208, %209, %cst_67 {dimension_numbers = #tpu.dot_dimension_numbers<[1], [0], [0], [1], [0, 0, 1, 1], [], []>} : vector<8x32xbf16>, vector<32x32xbf16>, vector<8x32xf32> -> vector<8x32xf32>
    %c0_68 = arith.constant 0 : index
    %c0_69 = arith.constant 0 : index
    %211 = vector.load %arg14[%c0_68, %c0_69] : memref<1x32xf32, #tpu.memory_space<vmem>>, vector<1x32xf32>
    %212 = vector.broadcast %211 : vector<1x32xf32> to vector<8x32xf32>
    %213 = arith.addf %210, %212 : vector<8x32xf32>
    %214 = arith.addf %213, %117 : vector<8x32xf32>
    %cst_70 = arith.constant dense<0.000000e+00> : vector<8xf32>
    %215 = vector.multi_reduction <add>, %214, %cst_70 [1] : vector<8x32xf32> to vector<8xf32>
    %216 = vector.shape_cast %215 : vector<8xf32> to vector<8x1xf32>
    %cst_71 = arith.constant 3.200000e+01 : f32
    %217 = vector.broadcast %cst_71 : f32 to vector<8x1xf32>
    %218 = arith.divf %216, %217 : vector<8x1xf32>
    %219 = vector.broadcast %218 : vector<8x1xf32> to vector<8x32xf32>
    %220 = arith.subf %214, %219 : vector<8x32xf32>
    %221 = arith.mulf %220, %220 : vector<8x32xf32>
    %cst_72 = arith.constant dense<0.000000e+00> : vector<8xf32>
    %222 = vector.multi_reduction <add>, %221, %cst_72 [1] : vector<8x32xf32> to vector<8xf32>
    %223 = vector.shape_cast %222 : vector<8xf32> to vector<8x1xf32>
    %cst_73 = arith.constant 3.200000e+01 : f32
    %224 = vector.broadcast %cst_73 : f32 to vector<8x1xf32>
    %225 = arith.divf %223, %224 : vector<8x1xf32>
    %cst_74 = arith.constant 9.99999974E-6 : f32
    %226 = vector.broadcast %cst_74 : f32 to vector<8x1xf32>
    %227 = arith.addf %225, %226 : vector<8x1xf32>
    %228 = math.rsqrt %227 : vector<8x1xf32>
    %229 = vector.broadcast %228 : vector<8x1xf32> to vector<8x32xf32>
    %230 = arith.mulf %220, %229 : vector<8x32xf32>
    %c0_75 = arith.constant 0 : index
    %c0_76 = arith.constant 0 : index
    %231 = vector.load %arg15[%c0_75, %c0_76] : memref<1x32xf32, #tpu.memory_space<vmem>>, vector<1x32xf32>
    %232 = vector.broadcast %231 : vector<1x32xf32> to vector<8x32xf32>
    %233 = arith.mulf %230, %232 : vector<8x32xf32>
    %c0_77 = arith.constant 0 : index
    %c0_78 = arith.constant 0 : index
    %234 = vector.load %arg16[%c0_77, %c0_78] : memref<1x32xf32, #tpu.memory_space<vmem>>, vector<1x32xf32>
    %235 = vector.broadcast %234 : vector<1x32xf32> to vector<8x32xf32>
    %236 = arith.addf %233, %235 : vector<8x32xf32>
    %237 = arith.truncf %236 : vector<8x32xf32> to vector<8x32xbf16>
    %c0_79 = arith.constant 0 : index
    %c0_80 = arith.constant 0 : index
    %238 = vector.load %arg17[%c0_79, %c0_80] : memref<8x32xbf16, #tpu.memory_space<vmem>>, vector<8x32xbf16>
    tpu.vector_store %arg17[%c0_79, %c0_80], %237 {strides = array<i32>} : memref<8x32xbf16, #tpu.memory_space<vmem>>, vector<8x32xbf16>,
    return
  }
  func.func @transform_0(%arg0: i32) -> (i32, i32) {
    %c0_i32 = arith.constant 0 : i32
    %c0_i32_0 = arith.constant 0 : i32
    return %arg0, %c0_i32 : i32, i32
  }
  func.func @transform_1(%arg0: i32) -> (i32, i32) {
    %c0_i32 = arith.constant 0 : i32
    %c0_i32_0 = arith.constant 0 : i32
    return %arg0, %c0_i32 : i32, i32
  }
  func.func @transform_2(%arg0: i32) -> (i32, i32) {
    %c0_i32 = arith.constant 0 : i32
    %c0_i32_0 = arith.constant 0 : i32
    %c0_i32_1 = arith.constant 0 : i32
    return %c0_i32, %c0_i32_0 : i32, i32
  }
  func.func @transform_3(%arg0: i32) -> (i32, i32) {
    %c0_i32 = arith.constant 0 : i32
    %c0_i32_0 = arith.constant 0 : i32
    %c0_i32_1 = arith.constant 0 : i32
    return %c0_i32, %c0_i32_0 : i32, i32
  }
  func.func @transform_4(%arg0: i32) -> (i32, i32) {
    %c0_i32 = arith.constant 0 : i32
    %c0_i32_0 = arith.constant 0 : i32
    %c0_i32_1 = arith.constant 0 : i32
    return %c0_i32, %c0_i32_0 : i32, i32
  }
  func.func @transform_5(%arg0: i32) -> (i32, i32) {
    %c0_i32 = arith.constant 0 : i32
    %c0_i32_0 = arith.constant 0 : i32
    %c0_i32_1 = arith.constant 0 : i32
    return %c0_i32, %c0_i32_0 : i32, i32
  }
  func.func @transform_6(%arg0: i32) -> (i32, i32) {
    %c0_i32 = arith.constant 0 : i32
    %c0_i32_0 = arith.constant 0 : i32
    %c0_i32_1 = arith.constant 0 : i32
    return %c0_i32, %c0_i32_0 : i32, i32
  }
  func.func @transform_7(%arg0: i32) -> (i32, i32) {
    %c0_i32 = arith.constant 0 : i32
    %c0_i32_0 = arith.constant 0 : i32
    %c0_i32_1 = arith.constant 0 : i32
    return %c0_i32, %c0_i32_0 : i32, i32
  }
  func.func @transform_8(%arg0: i32) -> (i32, i32) {
    %c0_i32 = arith.constant 0 : i32
    %c0_i32_0 = arith.constant 0 : i32
    %c0_i32_1 = arith.constant 0 : i32
    return %c0_i32, %c0_i32_0 : i32, i32
  }
  func.func @transform_9(%arg0: i32) -> (i32, i32) {
    %c0_i32 = arith.constant 0 : i32
    %c0_i32_0 = arith.constant 0 : i32
    %c0_i32_1 = arith.constant 0 : i32
    return %c0_i32, %c0_i32_0 : i32, i32
  }
  func.func @transform_10(%arg0: i32) -> (i32, i32) {
    %c0_i32 = arith.constant 0 : i32
    %c0_i32_0 = arith.constant 0 : i32
    %c0_i32_1 = arith.constant 0 : i32
    return %c0_i32, %c0_i32_0 : i32, i32
  }
  func.func @transform_11(%arg0: i32) -> (i32, i32) {
    %c0_i32 = arith.constant 0 : i32
    %c0_i32_0 = arith.constant 0 : i32
    %c0_i32_1 = arith.constant 0 : i32
    return %c0_i32, %c0_i32_0 : i32, i32
  }
  func.func @transform_12(%arg0: i32) -> (i32, i32) {
    %c0_i32 = arith.constant 0 : i32
    %c0_i32_0 = arith.constant 0 : i32
    %c0_i32_1 = arith.constant 0 : i32
    return %c0_i32, %c0_i32_0 : i32, i32
  }
  func.func @transform_13(%arg0: i32) -> (i32, i32) {
    %c0_i32 = arith.constant 0 : i32
    %c0_i32_0 = arith.constant 0 : i32
    %c0_i32_1 = arith.constant 0 : i32
    return %c0_i32, %c0_i32_0 : i32, i32
  }
  func.func @transform_14(%arg0: i32) -> (i32, i32) {
    %c0_i32 = arith.constant 0 : i32
    %c0_i32_0 = arith.constant 0 : i32
    %c0_i32_1 = arith.constant 0 : i32
    return %c0_i32, %c0_i32_0 : i32, i32
  }
  func.func @transform_15(%arg0: i32) -> (i32, i32) {
    %c0_i32 = arith.constant 0 : i32
    %c0_i32_0 = arith.constant 0 : i32
    %c0_i32_1 = arith.constant 0 : i32
    return %c0_i32, %c0_i32_0 : i32, i32
  }
  func.func @transform_16(%arg0: i32) -> (i32, i32) {
    %c0_i32 = arith.constant 0 : i32
    %c0_i32_0 = arith.constant 0 : i32
    return %arg0, %c0_i32 : i32, i32
  }
}

module attributes {stable_mosaic.version = 11 : i64} {
  func.func @_ffn_kernel(%arg0: i32, %arg1: memref<16x32xbf16, #tpu.memory_space<vmem>>, %arg2: memref<32x512xbf16, #tpu.memory_space<vmem>>, %arg3: memref<1x512xf32, #tpu.memory_space<vmem>>, %arg4: memref<512x32xbf16, #tpu.memory_space<vmem>>, %arg5: memref<1x32xf32, #tpu.memory_space<vmem>>, %arg6: memref<1x32xf32, #tpu.memory_space<vmem>>, %arg7: memref<1x32xf32, #tpu.memory_space<vmem>>, %arg8: memref<1x32xf32, #tpu.memory_space<vmem>>, %arg9: memref<1x32xf32, #tpu.memory_space<vmem>>, %arg10: memref<16x32xf32, #tpu.memory_space<vmem>>, %arg11: memref<16x32xf32, #tpu.memory_space<vmem>>) attributes {dimension_semantics = [#tpu.dimension_semantics<arbitrary>], iteration_bounds = array<i64: 4>, scalar_prefetch = 0 : i64, scratch_operands = 1 : i64, tpu.core_type = #tpu.core_type<tc>, window_params = [{pipeline_mode = #tpu.pipeline_mode<synchronous>, transform_indices = @transform_0, window_bounds = array<i64: 16, 32>}, {transform_indices = @transform_1, window_bounds = array<i64: 32, 512>}, {transform_indices = @transform_2, window_bounds = array<i64: 1, 512>}, {transform_indices = @transform_3, window_bounds = array<i64: 512, 32>}, {pipeline_mode = #tpu.pipeline_mode<synchronous>, transform_indices = @transform_4, window_bounds = array<i64: 1, 32>}, {pipeline_mode = #tpu.pipeline_mode<synchronous>, transform_indices = @transform_5, window_bounds = array<i64: 1, 32>}, {pipeline_mode = #tpu.pipeline_mode<synchronous>, transform_indices = @transform_6, window_bounds = array<i64: 1, 32>}, {pipeline_mode = #tpu.pipeline_mode<synchronous>, transform_indices = @transform_7, window_bounds = array<i64: 1, 32>}, {pipeline_mode = #tpu.pipeline_mode<synchronous>, transform_indices = @transform_8, window_bounds = array<i64: 1, 32>}, {pipeline_mode = #tpu.pipeline_mode<synchronous>, transform_indices = @transform_9, window_bounds = array<i64: 16, 32>}]} {
    %c0_i32 = arith.constant 0 : i32
    %0 = arith.cmpi eq, %arg0, %c0_i32 : i32
    %1 = arith.extui %0 : i1 to i32
    %c0_i32_0 = arith.constant 0 : i32
    %2 = arith.cmpi ne, %1, %c0_i32_0 : i32
    scf.if %2 {
      %cst_15 = arith.constant 0.000000e+00 : f32
      %20 = vector.broadcast %cst_15 : f32 to vector<16x32xf32>
      %c0_16 = arith.constant 0 : index
      %c0_17 = arith.constant 0 : index
      %21 = vector.load %arg11[%c0_16, %c0_17] : memref<16x32xf32, #tpu.memory_space<vmem>>, vector<16x32xf32>
      tpu.vector_store %arg11[%c0_16, %c0_17], %20 {strides = array<i32>} : memref<16x32xf32, #tpu.memory_space<vmem>>, vector<16x32xf32>,
    } else {
    }
    %c0 = arith.constant 0 : index
    %c0_1 = arith.constant 0 : index
    %3 = vector.load %arg1[%c0, %c0_1] : memref<16x32xbf16, #tpu.memory_space<vmem>>, vector<16x32xbf16>
    %c0_2 = arith.constant 0 : index
    %c0_3 = arith.constant 0 : index
    %4 = vector.load %arg2[%c0_2, %c0_3] : memref<32x512xbf16, #tpu.memory_space<vmem>>, vector<32x512xbf16>
    %cst = arith.constant dense<0.000000e+00> : vector<16x512xf32>
    %5 = tpu.matmul %3, %4, %cst {dimension_numbers = #tpu.dot_dimension_numbers<[1], [0], [0], [1], [0, 0, 1, 1], [], []>} : vector<16x32xbf16>, vector<32x512xbf16>, vector<16x512xf32> -> vector<16x512xf32>
    %c0_4 = arith.constant 0 : index
    %c0_5 = arith.constant 0 : index
    %6 = vector.load %arg3[%c0_4, %c0_5] : memref<1x512xf32, #tpu.memory_space<vmem>>, vector<1x512xf32>
    %7 = vector.broadcast %6 : vector<1x512xf32> to vector<16x512xf32>
    %8 = arith.addf %5, %7 : vector<16x512xf32>
    %cst_6 = arith.constant 0.000000e+00 : f32
    %9 = vector.broadcast %cst_6 : f32 to vector<16x512xf32>
    %10 = arith.maximumf %8, %9 : vector<16x512xf32>
    %c0_7 = arith.constant 0 : index
    %c0_8 = arith.constant 0 : index
    %11 = vector.load %arg11[%c0_7, %c0_8] : memref<16x32xf32, #tpu.memory_space<vmem>>, vector<16x32xf32>
    %12 = arith.truncf %10 : vector<16x512xf32> to vector<16x512xbf16>
    %c0_9 = arith.constant 0 : index
    %c0_10 = arith.constant 0 : index
    %13 = vector.load %arg4[%c0_9, %c0_10] : memref<512x32xbf16, #tpu.memory_space<vmem>>, vector<512x32xbf16>
    %cst_11 = arith.constant dense<0.000000e+00> : vector<16x32xf32>
    %14 = tpu.matmul %12, %13, %cst_11 {dimension_numbers = #tpu.dot_dimension_numbers<[1], [0], [0], [1], [0, 0, 1, 1], [], []>} : vector<16x512xbf16>, vector<512x32xbf16>, vector<16x32xf32> -> vector<16x32xf32>
    %15 = arith.addf %11, %14 : vector<16x32xf32>
    %c0_12 = arith.constant 0 : index
    %c0_13 = arith.constant 0 : index
    %16 = vector.load %arg11[%c0_12, %c0_13] : memref<16x32xf32, #tpu.memory_space<vmem>>, vector<16x32xf32>
    tpu.vector_store %arg11[%c0_12, %c0_13], %15 {strides = array<i32>} : memref<16x32xf32, #tpu.memory_space<vmem>>, vector<16x32xf32>,
    %c3_i32 = arith.constant 3 : i32
    %17 = arith.cmpi eq, %arg0, %c3_i32 : i32
    %18 = arith.extui %17 : i1 to i32
    %c0_i32_14 = arith.constant 0 : i32
    %19 = arith.cmpi ne, %18, %c0_i32_14 : i32
    scf.if %19 {
      %c0_15 = arith.constant 0 : index
      %c0_16 = arith.constant 0 : index
      %20 = vector.load %arg11[%c0_15, %c0_16] : memref<16x32xf32, #tpu.memory_space<vmem>>, vector<16x32xf32>
      %c0_17 = arith.constant 0 : index
      %c0_18 = arith.constant 0 : index
      %21 = vector.load %arg5[%c0_17, %c0_18] : memref<1x32xf32, #tpu.memory_space<vmem>>, vector<1x32xf32>
      %22 = vector.broadcast %21 : vector<1x32xf32> to vector<16x32xf32>
      %23 = arith.addf %20, %22 : vector<16x32xf32>
      %c0_19 = arith.constant 0 : index
      %c0_20 = arith.constant 0 : index
      %24 = vector.load %arg1[%c0_19, %c0_20] : memref<16x32xbf16, #tpu.memory_space<vmem>>, vector<16x32xbf16>
      %25 = arith.extf %24 : vector<16x32xbf16> to vector<16x32xf32>
      %26 = arith.addf %23, %25 : vector<16x32xf32>
      %cst_21 = arith.constant dense<0.000000e+00> : vector<16xf32>
      %27 = vector.multi_reduction <add>, %26, %cst_21 [1] : vector<16x32xf32> to vector<16xf32>
      %28 = vector.shape_cast %27 : vector<16xf32> to vector<16x1xf32>
      %cst_22 = arith.constant 3.200000e+01 : f32
      %29 = vector.broadcast %cst_22 : f32 to vector<16x1xf32>
      %30 = arith.divf %28, %29 : vector<16x1xf32>
      %31 = vector.broadcast %30 : vector<16x1xf32> to vector<16x32xf32>
      %32 = arith.subf %26, %31 : vector<16x32xf32>
      %33 = arith.mulf %32, %32 : vector<16x32xf32>
      %cst_23 = arith.constant dense<0.000000e+00> : vector<16xf32>
      %34 = vector.multi_reduction <add>, %33, %cst_23 [1] : vector<16x32xf32> to vector<16xf32>
      %35 = vector.shape_cast %34 : vector<16xf32> to vector<16x1xf32>
      %cst_24 = arith.constant 3.200000e+01 : f32
      %36 = vector.broadcast %cst_24 : f32 to vector<16x1xf32>
      %37 = arith.divf %35, %36 : vector<16x1xf32>
      %cst_25 = arith.constant 9.99999974E-6 : f32
      %38 = vector.broadcast %cst_25 : f32 to vector<16x1xf32>
      %39 = arith.addf %37, %38 : vector<16x1xf32>
      %40 = math.rsqrt %39 : vector<16x1xf32>
      %41 = vector.broadcast %40 : vector<16x1xf32> to vector<16x32xf32>
      %42 = arith.mulf %32, %41 : vector<16x32xf32>
      %c0_26 = arith.constant 0 : index
      %c0_27 = arith.constant 0 : index
      %43 = vector.load %arg6[%c0_26, %c0_27] : memref<1x32xf32, #tpu.memory_space<vmem>>, vector<1x32xf32>
      %44 = vector.broadcast %43 : vector<1x32xf32> to vector<16x32xf32>
      %45 = arith.mulf %42, %44 : vector<16x32xf32>
      %c0_28 = arith.constant 0 : index
      %c0_29 = arith.constant 0 : index
      %46 = vector.load %arg7[%c0_28, %c0_29] : memref<1x32xf32, #tpu.memory_space<vmem>>, vector<1x32xf32>
      %47 = vector.broadcast %46 : vector<1x32xf32> to vector<16x32xf32>
      %48 = arith.addf %45, %47 : vector<16x32xf32>
      %cst_30 = arith.constant dense<0.000000e+00> : vector<16xf32>
      %49 = vector.multi_reduction <add>, %48, %cst_30 [1] : vector<16x32xf32> to vector<16xf32>
      %50 = vector.shape_cast %49 : vector<16xf32> to vector<16x1xf32>
      %cst_31 = arith.constant 3.200000e+01 : f32
      %51 = vector.broadcast %cst_31 : f32 to vector<16x1xf32>
      %52 = arith.divf %50, %51 : vector<16x1xf32>
      %53 = vector.broadcast %52 : vector<16x1xf32> to vector<16x32xf32>
      %54 = arith.subf %48, %53 : vector<16x32xf32>
      %55 = arith.mulf %54, %54 : vector<16x32xf32>
      %cst_32 = arith.constant dense<0.000000e+00> : vector<16xf32>
      %56 = vector.multi_reduction <add>, %55, %cst_32 [1] : vector<16x32xf32> to vector<16xf32>
      %57 = vector.shape_cast %56 : vector<16xf32> to vector<16x1xf32>
      %cst_33 = arith.constant 3.200000e+01 : f32
      %58 = vector.broadcast %cst_33 : f32 to vector<16x1xf32>
      %59 = arith.divf %57, %58 : vector<16x1xf32>
      %cst_34 = arith.constant 9.99999974E-6 : f32
      %60 = vector.broadcast %cst_34 : f32 to vector<16x1xf32>
      %61 = arith.addf %59, %60 : vector<16x1xf32>
      %62 = math.rsqrt %61 : vector<16x1xf32>
      %63 = vector.broadcast %62 : vector<16x1xf32> to vector<16x32xf32>
      %64 = arith.mulf %54, %63 : vector<16x32xf32>
      %c0_35 = arith.constant 0 : index
      %c0_36 = arith.constant 0 : index
      %65 = vector.load %arg8[%c0_35, %c0_36] : memref<1x32xf32, #tpu.memory_space<vmem>>, vector<1x32xf32>
      %66 = vector.broadcast %65 : vector<1x32xf32> to vector<16x32xf32>
      %67 = arith.mulf %64, %66 : vector<16x32xf32>
      %c0_37 = arith.constant 0 : index
      %c0_38 = arith.constant 0 : index
      %68 = vector.load %arg9[%c0_37, %c0_38] : memref<1x32xf32, #tpu.memory_space<vmem>>, vector<1x32xf32>
      %69 = vector.broadcast %68 : vector<1x32xf32> to vector<16x32xf32>
      %70 = arith.addf %67, %69 : vector<16x32xf32>
      %c0_39 = arith.constant 0 : index
      %c0_40 = arith.constant 0 : index
      %71 = vector.load %arg10[%c0_39, %c0_40] : memref<16x32xf32, #tpu.memory_space<vmem>>, vector<16x32xf32>
      tpu.vector_store %arg10[%c0_39, %c0_40], %70 {strides = array<i32>} : memref<16x32xf32, #tpu.memory_space<vmem>>, vector<16x32xf32>,
    } else {
    }
    return
  }
  func.func @transform_0(%arg0: i32) -> (i32, i32) {
    %c0_i32 = arith.constant 0 : i32
    %c0_i32_0 = arith.constant 0 : i32
    %c0_i32_1 = arith.constant 0 : i32
    return %c0_i32, %c0_i32_0 : i32, i32
  }
  func.func @transform_1(%arg0: i32) -> (i32, i32) {
    %c0_i32 = arith.constant 0 : i32
    %c0_i32_0 = arith.constant 0 : i32
    return %c0_i32, %arg0 : i32, i32
  }
  func.func @transform_2(%arg0: i32) -> (i32, i32) {
    %c0_i32 = arith.constant 0 : i32
    %c0_i32_0 = arith.constant 0 : i32
    return %c0_i32, %arg0 : i32, i32
  }
  func.func @transform_3(%arg0: i32) -> (i32, i32) {
    %c0_i32 = arith.constant 0 : i32
    %c0_i32_0 = arith.constant 0 : i32
    return %arg0, %c0_i32 : i32, i32
  }
  func.func @transform_4(%arg0: i32) -> (i32, i32) {
    %c0_i32 = arith.constant 0 : i32
    %c0_i32_0 = arith.constant 0 : i32
    %c0_i32_1 = arith.constant 0 : i32
    return %c0_i32, %c0_i32_0 : i32, i32
  }
  func.func @transform_5(%arg0: i32) -> (i32, i32) {
    %c0_i32 = arith.constant 0 : i32
    %c0_i32_0 = arith.constant 0 : i32
    %c0_i32_1 = arith.constant 0 : i32
    return %c0_i32, %c0_i32_0 : i32, i32
  }
  func.func @transform_6(%arg0: i32) -> (i32, i32) {
    %c0_i32 = arith.constant 0 : i32
    %c0_i32_0 = arith.constant 0 : i32
    %c0_i32_1 = arith.constant 0 : i32
    return %c0_i32, %c0_i32_0 : i32, i32
  }
  func.func @transform_7(%arg0: i32) -> (i32, i32) {
    %c0_i32 = arith.constant 0 : i32
    %c0_i32_0 = arith.constant 0 : i32
    %c0_i32_1 = arith.constant 0 : i32
    return %c0_i32, %c0_i32_0 : i32, i32
  }
  func.func @transform_8(%arg0: i32) -> (i32, i32) {
    %c0_i32 = arith.constant 0 : i32
    %c0_i32_0 = arith.constant 0 : i32
    %c0_i32_1 = arith.constant 0 : i32
    return %c0_i32, %c0_i32_0 : i32, i32
  }
  func.func @transform_9(%arg0: i32) -> (i32, i32) {
    %c0_i32 = arith.constant 0 : i32
    %c0_i32_0 = arith.constant 0 : i32
    %c0_i32_1 = arith.constant 0 : i32
    return %c0_i32, %c0_i32_0 : i32, i32
  }
}

</mosaic_0001>

<llo_original>
// kernel: transformer_decoder_forward.5
$region0: #{transformer_decoder_forward.5}
  #allocation0 [shape = 'u32[]', space=smem, size = 0x4, offset = 0x4, fixed_abs, tag = 'smem constant byte address 0x4 - core index']
  #allocation1 [shape = 'u32[144,128]{1,0:T(1,128)}', space=vmem, size = 0x12000, scoped, tag = 'internal scratch']
  %s0 = inlined_call_operand.vmem [shape: f32[16,16], index: 0, kind: input, shape index: {}]
  %s1 = inlined_call_operand.vmem [shape: bf16[16,32], index: 1, kind: input, shape index: {}]
  %s2 = inlined_call_operand.vmem [shape: f32[1,32], index: 2, kind: input, shape index: {}]
  %s3 = inlined_call_operand.vmem [shape: f32[16,32], index: 3, kind: input, shape index: {}]
  %s4 = inlined_call_operand.vmem [shape: bf16[16,32], index: 4, kind: output, shape index: {}]
  %s5 = sld [smem:[#allocation0]]
  $region26: #{transformer_decoder_forward.5} parent=0
    _
  %s7 = ssub.s32 1, %s5
  %s8 = scalar_select 0, %s7, %s5
  // Predicated region
  $region2: #{transformer_decoder_forward.5} parent=0 // pred_check
    _
  $region3: #{transformer_decoder_forward.5} parent=0 // pred_check_branch
    %10 = sbr.rel (0) target = $region5
  $region4: #{transformer_decoder_forward.5} parent=0 // pred_region
    _
  $region5: #{transformer_decoder_forward.5} parent=0 // pred_fallthru
    _
  // Predicated region
  $region6: #{transformer_decoder_forward.5} parent=0 // pred_check
    _
  $region7: #{transformer_decoder_forward.5} parent=0 // pred_check_branch
    %12 = sbr.rel (0) target = $region9
  $region8: #{transformer_decoder_forward.5} parent=0 // pred_region
    _
  $region9: #{transformer_decoder_forward.5} parent=0 // pred_fallthru
    _
  // Predicated region
  $region10: #{transformer_decoder_forward.5} parent=0 // pred_check
    _
  $region11: #{transformer_decoder_forward.5} parent=0 // pred_check_branch
    %14 = sbr.rel (0) target = $region13
  $region12: #{transformer_decoder_forward.5} parent=0 // pred_region
    _
  $region13: #{transformer_decoder_forward.5} parent=0 // pred_fallthru
    _
  // Predicated region
  $region14: #{transformer_decoder_forward.5} parent=0 // pred_check
    _
  $region15: #{transformer_decoder_forward.5} parent=0 // pred_check_branch
    %16 = sbr.rel (0) target = $region17
  $region16: #{transformer_decoder_forward.5} parent=0 // pred_region
    _
  $region17: #{transformer_decoder_forward.5} parent=0 // pred_fallthru
    _
  %v18 = vld [vmem:[%s0] sm:$0xff]
  %v19 = vld [vmem:[%s0 + $0x8] sm:$0xff]
  %v20 = vpack.c.bf16 %v19, %v18
  %v21 = vld [vmem:[%s1] sm:$0xf]
  %v22 = vld [vmem:[%s1 + $0x4] sm:$0xf]
  %v23 = vld [vmem:[%s2] sm:$0x1]
  %v25 = vlaneseq
  %v26 = vshrl.u32 %v25, 7
  %v27 = vsub.s32 0, %v26
  %v28 = vrot.slane %v23, %v27
  %v32 = vunpack.c.l.b16 %v21
  %v33 = vunpack.c.l.b16 %v22
  %v34 = vpack.c.b16 %v33, %v32
  %vm36 = vcmask 130048
  %v38 = vsel %vm36, %v20, 0
  %40 = vmatprep.subr.bf16.mxu0 0
  %41 = vmatpush1.bf16.msra.mxu0 %v34
  %42 = vmatprep.subr.bf16.mxu0 0
  %43 = vmatpush1.bf16.msra.mxu0 0
  %44 = vmatprep.subr.bf16.mxu0 0
  %45 = vmatpush1.bf16.msra.mxu0 0
  %46 = vmatprep.subr.bf16.mxu0 0
  %47 = vmatpush1.bf16.msra.mxu0 0
  %48 = vmatprep.subr.bf16.mxu0 0
  %49 = vmatpush1.bf16.msra.mxu0 0
  %50 = vmatprep.subr.bf16.mxu0 0
  %51 = vmatpush1.bf16.msra.mxu0 0
  %52 = vmatprep.subr.bf16.mxu0 0
  %53 = vmatpush1.bf16.msra.mxu0 0
  %54 = vmatprep.subr.bf16.mxu0 0
  %55 = vmatpush1.bf16.msra.mxu0 0
  %56 = vmatprep.subr.bf16.mxu0 0
  %57 = vmatpush1.bf16.msra.mxu0 0
  %58 = vmatprep.subr.bf16.mxu0 0
  %59 = vmatpush1.bf16.msra.mxu0 0
  %60 = vmatprep.subr.bf16.mxu0 0
  %61 = vmatpush1.bf16.msra.mxu0 0
  %62 = vmatprep.subr.bf16.mxu0 0
  %63 = vmatpush1.bf16.msra.mxu0 0
  %64 = vmatprep.subr.bf16.mxu0 0
  %65 = vmatpush1.bf16.msra.mxu0 0
  %66 = vmatprep.subr.bf16.mxu0 0
  %67 = vmatpush1.bf16.msra.mxu0 0
  %68 = vmatprep.subr.bf16.mxu0 0
  %69 = vmatpush1.bf16.msra.mxu0 0
  %70 = vmatprep.subr.bf16.mxu0 0
  %71 = vmatpush1.bf16.msra.mxu0 0
  %72 = vmatprep.mubr.bf16.mxu0 0
  %73 = vmatmul.mubr.bf16.gmra.mrb[0].mxu0 %v38
  %v74 = vpop.f32.mrb[0].mxu0
  %v75 = vadd.f32 %v28, %v74
  %v76 = vpop.f32.mrb[0].mxu0
  %v77 = vpop.f32.mrb[0].mxu0
  %v78 = vadd.f32 %v28, %v77
  %v79 = vpop.f32.mrb[0].mxu0
  %80 = vdwg.mxu0
  %v81 = vld [vmem:[%s3] sm:$0xff]
  %v82 = vld [vmem:[%s3 + $0x8] sm:$0xff]
  %v83 = vadd.f32 %v75, %v81
  %v84 = vadd.f32 %v78, %v82
  %v85 = vpack.c.bf16 %v84, %v83
  %v87 = vunpack.c.l.b16 %v85
  %v88 = vunpack.c.h.b16 %v85
  %v89 = vpack.c.b16 %v87, %v87
  %v90 = vpack.c.b16 %v88, %v88
  %vm93 = vcmask 257024
  %94 = vst.msk [vmem:[%s4] sm:$0xf] %vm93, %v89
  %95 = vst.msk [vmem:[%s4 + $0x4] sm:$0xf] %vm93, %v90
  // Predicated region
  $region18: #{transformer_decoder_forward.5} parent=0 // pred_check
    _
  $region19: #{transformer_decoder_forward.5} parent=0 // pred_check_branch
    %97 = sbr.rel (0) target = $region21
  $region20: #{transformer_decoder_forward.5} parent=0 // pred_region
    _
  $region21: #{transformer_decoder_forward.5} parent=0 // pred_fallthru
    _
  // Predicated region
  $region22: #{transformer_decoder_forward.5} parent=0 // pred_check
    _
  $region23: #{transformer_decoder_forward.5} parent=0 // pred_check_branch
    %99 = sbr.rel (0) target = $region25
  $region24: #{transformer_decoder_forward.5} parent=0 // pred_region
    _
  $region25: #{transformer_decoder_forward.5} parent=0 // pred_fallthru
    _

// kernel: transformer_decoder_forward.7
$region0: #{transformer_decoder_forward.7}
  #allocation0 [shape = 'u32[]', space=smem, size = 0x4, offset = 0x4, fixed_abs, tag = 'smem constant byte address 0x4 - core index']
  #allocation1 [shape = 'u32[144,128]{1,0:T(1,128)}', space=vmem, size = 0x12000, scoped, tag = 'internal scratch']
  #allocation2 [shape = 'f32[16,32]{1,0:T(8,128)}', space=vmem, size = 0x2000, scoped, tag = 'scratch operand']
  %s0 = inlined_call_operand.vmem [shape: bf16[16,32], index: 0, kind: input, shape index: {}]
  %s1 = inlined_call_operand.vmem [shape: bf16[32,2048], index: 1, kind: input, shape index: {}]
  %s2 = inlined_call_operand.vmem [shape: f32[1,2048], index: 2, kind: input, shape index: {}]
  %s3 = inlined_call_operand.vmem [shape: bf16[2048,32], index: 3, kind: input, shape index: {}]
  %s4 = inlined_call_operand.vmem [shape: f32[1,32], index: 4, kind: input, shape index: {}]
  %s5 = inlined_call_operand.vmem [shape: f32[1,32], index: 5, kind: input, shape index: {}]
  %s6 = inlined_call_operand.vmem [shape: f32[1,32], index: 6, kind: input, shape index: {}]
  %s7 = inlined_call_operand.vmem [shape: f32[1,32], index: 7, kind: input, shape index: {}]
  %s8 = inlined_call_operand.vmem [shape: f32[1,32], index: 8, kind: input, shape index: {}]
  %s9 = inlined_call_operand.vmem [shape: bf16[16,32], index: 9, kind: output, shape index: {}]
  %s10 = sld [smem:[#allocation0]]
  $region100: #{transformer_decoder_forward.7} parent=0
    _
  %s12 = ssub.s32 1, %s10
  %s13 = scalar_select 0, %s12, %s10
  $region1: #{transformer_decoder_forward.7} parent=0
    #allocation3 [shape = 'u8[65536]{0}', space=vmem, size = 0x10000, scoped, tag = 'input window, operand 1']
    loop: start=0, step=1, limit=6
    $region2: #{transformer_decoder_forward.7} parent=1 // loop_pre_header
      _
    $region3: #{transformer_decoder_forward.7} parent=1 // loop_header
      %s15 = sphi 0, %s19
      %p16 = scmp.ge.s32.totalorder %s15, 6
      %s23 = sphi 0, %s23
      %s25 = sphi 0, %s23
      %s26 = sphi 0, %s25
      %s40 = sphi 0, %s26
      %s46 = sphi 0, %s48
      %s49 = sphi 0, %s46
      %s50 = sphi 0, %s49
      %s66 = sphi 0, %s50
      %s72 = sphi 0, %s74
      %s75 = sphi 0, %s72
      %s76 = sphi 0, %s75
      %s92 = sphi 0, %s76
      %s98 = sphi 0, %s100
      %s101 = sphi 0, %s98
      %s102 = sphi 0, %s101
      %s118 = sphi 0, %s102
      %s122 = sphi 0, %s122
      %s124 = sphi 0, %s122
      %s125 = sphi 0, %s124
      %s139 = sphi 0, %s125
      %s143 = sphi 0, %s143
      %s145 = sphi 0, %s143
      %s146 = sphi 0, %s145
      %s160 = sphi 0, %s146
      %s164 = sphi 0, %s164
      %s166 = sphi 0, %s164
      %s167 = sphi 0, %s166
      %s181 = sphi 0, %s167
      %s185 = sphi 0, %s185
      %s187 = sphi 0, %s185
      %s188 = sphi 0, %s187
      %s202 = sphi 0, %s188
      %s206 = sphi 0, %s206
      %s208 = sphi 0, %s206
      %s209 = sphi 0, %s208
      %s223 = sphi 0, %s209
      %s227 = sphi 0, %s227
      %s229 = sphi 0, %s227
      %s230 = sphi 0, %s229
      %s244 = sphi 0, %s230
    $region4: #{transformer_decoder_forward.7} parent=1 // loop_header_branch
      %18 = sbr.rel (%p16) target = $region8
    $region5: #{transformer_decoder_forward.7} parent=1 // loop_body
      %s20 = ssub.s32 %s15, 1
      %s21 = ssub.s32 %s15, 2
      %s22 = sadd.s32 %s15, 1
      %s24 = sadd.s32 %s23, 1
      %p27 = scmp.eq.s32.totalorder %s15, 3
      %p28 = scmp.ne.s32.totalorder %s23, %s25
      %p29 = scmp.eq.s32.totalorder %s15, 0
      %p30 = por %p28, %p29
      %p31 = scmp.ne.s32.totalorder %s23, %s25
      %p32 = scmp.eq.s32.totalorder %s20, 3
      %p33 = por %p31, %p32
      %p34 = scmp.ne.s32.totalorder %s25, %s26
      %p35 = scmp.eq.s32.totalorder %s20, 0
      %p36 = por %p34, %p35
      %p37 = scmp.ne.s32.totalorder %s25, %s26
      %p38 = scmp.eq.s32.totalorder %s21, 3
      %p39 = por %p37, %p38
      %p41 = scmp.ne.s32.totalorder %s26, %s40
      %p42 = scmp.eq.s32.totalorder %s21, 0
      %p43 = por %p41, %p42
      %s44 = ssub.s32 %s15, %s22
      %p45 = scmp.eq.s32.totalorder %s44, 0
      %s47 = sadd.s32 %s46, 1
      %s48 = scalar_select %p45, %s46, %s47
      %p51 = pneg %p45
      %p52 = scmp.eq.s32.totalorder %s15, 3
      %p53 = por %p51, %p52
      %p54 = scmp.ne.s32.totalorder %s46, %s49
      %p55 = scmp.eq.s32.totalorder %s15, 0
      %p56 = por %p54, %p55
      %p57 = scmp.ne.s32.totalorder %s46, %s49
      %p58 = scmp.eq.s32.totalorder %s20, 3
      %p59 = por %p57, %p58
      %p60 = scmp.ne.s32.totalorder %s49, %s50
      %p61 = scmp.eq.s32.totalorder %s20, 0
      %p62 = por %p60, %p61
      %p63 = scmp.ne.s32.totalorder %s49, %s50
      %p64 = scmp.eq.s32.totalorder %s21, 3
      %p65 = por %p63, %p64
      %p67 = scmp.ne.s32.totalorder %s50, %s66
      %p68 = scmp.eq.s32.totalorder %s21, 0
      %p69 = por %p67, %p68
      %s70 = ssub.s32 %s15, %s22
      %p71 = scmp.eq.s32.totalorder %s70, 0
      %s73 = sadd.s32 %s72, 1
      %s74 = scalar_select %p71, %s72, %s73
      %p77 = pneg %p71
      %p78 = scmp.eq.s32.totalorder %s15, 3
      %p79 = por %p77, %p78
      %p80 = scmp.ne.s32.totalorder %s72, %s75
      %p81 = scmp.eq.s32.totalorder %s15, 0
      %p82 = por %p80, %p81
      %p83 = scmp.ne.s32.totalorder %s72, %s75
      %p84 = scmp.eq.s32.totalorder %s20, 3
      %p85 = por %p83, %p84
      %p86 = scmp.ne.s32.totalorder %s75, %s76
      %p87 = scmp.eq.s32.totalorder %s20, 0
      %p88 = por %p86, %p87
      %p89 = scmp.ne.s32.totalorder %s75, %s76
      %p90 = scmp.eq.s32.totalorder %s21, 3
      %p91 = por %p89, %p90
      %p93 = scmp.ne.s32.totalorder %s76, %s92
      %p94 = scmp.eq.s32.totalorder %s21, 0
      %p95 = por %p93, %p94
      %s96 = ssub.s32 %s15, %s22
      %p97 = scmp.eq.s32.totalorder %s96, 0
      %s99 = sadd.s32 %s98, 1
      %s100 = scalar_select %p97, %s98, %s99
      %p103 = pneg %p97
      %p104 = scmp.eq.s32.totalorder %s15, 3
      %p105 = por %p103, %p104
      %p106 = scmp.ne.s32.totalorder %s98, %s101
      %p107 = scmp.eq.s32.totalorder %s15, 0
      %p108 = por %p106, %p107
      %p109 = scmp.ne.s32.totalorder %s98, %s101
      %p110 = scmp.eq.s32.totalorder %s20, 3
      %p111 = por %p109, %p110
      %p112 = scmp.ne.s32.totalorder %s101, %s102
      %p113 = scmp.eq.s32.totalorder %s20, 0
      %p114 = por %p112, %p113
      %p115 = scmp.ne.s32.totalorder %s101, %s102
      %p116 = scmp.eq.s32.totalorder %s21, 3
      %p117 = por %p115, %p116
      %p119 = scmp.ne.s32.totalorder %s102, %s118
      %p120 = scmp.eq.s32.totalorder %s21, 0
      %p121 = por %p119, %p120
      %s123 = sadd.s32 %s122, 1
      %p126 = scmp.eq.s32.totalorder %s15, 3
      %p127 = scmp.ne.s32.totalorder %s122, %s124
      %p128 = scmp.eq.s32.totalorder %s15, 0
      %p129 = por %p127, %p128
      %p130 = scmp.ne.s32.totalorder %s122, %s124
      %p131 = scmp.eq.s32.totalorder %s20, 3
      %p132 = por %p130, %p131
      %p133 = scmp.ne.s32.totalorder %s124, %s125
      %p134 = scmp.eq.s32.totalorder %s20, 0
      %p135 = por %p133, %p134
      %p136 = scmp.ne.s32.totalorder %s124, %s125
      %p137 = scmp.eq.s32.totalorder %s21, 3
      %p138 = por %p136, %p137
      %p140 = scmp.ne.s32.totalorder %s125, %s139
      %p141 = scmp.eq.s32.totalorder %s21, 0
      %p142 = por %p140, %p141
      %s144 = sadd.s32 %s143, 1
      %p147 = scmp.eq.s32.totalorder %s15, 3
      %p148 = scmp.ne.s32.totalorder %s143, %s145
      %p149 = scmp.eq.s32.totalorder %s15, 0
      %p150 = por %p148, %p149
      %p151 = scmp.ne.s32.totalorder %s143, %s145
      %p152 = scmp.eq.s32.totalorder %s20, 3
      %p153 = por %p151, %p152
      %p154 = scmp.ne.s32.totalorder %s145, %s146
      %p155 = scmp.eq.s32.totalorder %s20, 0
      %p156 = por %p154, %p155
      %p157 = scmp.ne.s32.totalorder %s145, %s146
      %p158 = scmp.eq.s32.totalorder %s21, 3
      %p159 = por %p157, %p158
      %p161 = scmp.ne.s32.totalorder %s146, %s160
      %p162 = scmp.eq.s32.totalorder %s21, 0
      %p163 = por %p161, %p162
      %s165 = sadd.s32 %s164, 1
      %p168 = scmp.eq.s32.totalorder %s15, 3
      %p169 = scmp.ne.s32.totalorder %s164, %s166
      %p170 = scmp.eq.s32.totalorder %s15, 0
      %p171 = por %p169, %p170
      %p172 = scmp.ne.s32.totalorder %s164, %s166
      %p173 = scmp.eq.s32.totalorder %s20, 3
      %p174 = por %p172, %p173
      %p175 = scmp.ne.s32.totalorder %s166, %s167
      %p176 = scmp.eq.s32.totalorder %s20, 0
      %p177 = por %p175, %p176
      %p178 = scmp.ne.s32.totalorder %s166, %s167
      %p179 = scmp.eq.s32.totalorder %s21, 3
      %p180 = por %p178, %p179
      %p182 = scmp.ne.s32.totalorder %s167, %s181
      %p183 = scmp.eq.s32.totalorder %s21, 0
      %p184 = por %p182, %p183
      %s186 = sadd.s32 %s185, 1
      %p189 = scmp.eq.s32.totalorder %s15, 3
      %p190 = scmp.ne.s32.totalorder %s185, %s187
      %p191 = scmp.eq.s32.totalorder %s15, 0
      %p192 = por %p190, %p191
      %p193 = scmp.ne.s32.totalorder %s185, %s187
      %p194 = scmp.eq.s32.totalorder %s20, 3
      %p195 = por %p193, %p194
      %p196 = scmp.ne.s32.totalorder %s187, %s188
      %p197 = scmp.eq.s32.totalorder %s20, 0
      %p198 = por %p196, %p197
      %p199 = scmp.ne.s32.totalorder %s187, %s188
      %p200 = scmp.eq.s32.totalorder %s21, 3
      %p201 = por %p199, %p200
      %p203 = scmp.ne.s32.totalorder %s188, %s202
      %p204 = scmp.eq.s32.totalorder %s21, 0
      %p205 = por %p203, %p204
      %s207 = sadd.s32 %s206, 1
      %p210 = scmp.eq.s32.totalorder %s15, 3
      %p211 = scmp.ne.s32.totalorder %s206, %s208
      %p212 = scmp.eq.s32.totalorder %s15, 0
      %p213 = por %p211, %p212
      %p214 = scmp.ne.s32.totalorder %s206, %s208
      %p215 = scmp.eq.s32.totalorder %s20, 3
      %p216 = por %p214, %p215
      %p217 = scmp.ne.s32.totalorder %s208, %s209
      %p218 = scmp.eq.s32.totalorder %s20, 0
      %p219 = por %p217, %p218
      %p220 = scmp.ne.s32.totalorder %s208, %s209
      %p221 = scmp.eq.s32.totalorder %s21, 3
      %p222 = por %p220, %p221
      %p224 = scmp.ne.s32.totalorder %s209, %s223
      %p225 = scmp.eq.s32.totalorder %s21, 0
      %p226 = por %p224, %p225
      %s228 = sadd.s32 %s227, 1
      %p231 = scmp.eq.s32.totalorder %s15, 3
      %p232 = scmp.ne.s32.totalorder %s227, %s229
      %p233 = scmp.eq.s32.totalorder %s15, 0
      %p234 = por %p232, %p233
      %p235 = scmp.ne.s32.totalorder %s227, %s229
      %p236 = scmp.eq.s32.totalorder %s20, 3
      %p237 = por %p235, %p236
      %p238 = scmp.ne.s32.totalorder %s229, %s230
      %p239 = scmp.eq.s32.totalorder %s20, 0
      %p240 = por %p238, %p239
      %p241 = scmp.ne.s32.totalorder %s229, %s230
      %p242 = scmp.eq.s32.totalorder %s21, 3
      %p243 = por %p241, %p242
      %p245 = scmp.ne.s32.totalorder %s230, %s244
      %p246 = scmp.eq.s32.totalorder %s21, 0
      %p247 = por %p245, %p246
      %p248 = scmp.le.s32.totalorder 1, %s15
      %p249 = scmp.lt.s32.totalorder %s15, 5
      %p250 = pnand %p248, %p249
      %p251 = pneg %p250
      // Predicated region
      $region9: #{transformer_decoder_forward.7} parent=5 // pred_check
        _
      $region10: #{transformer_decoder_forward.7} parent=5 // pred_check_branch
        %253 = sbr.rel (%p250) target = $region12
      $region11: #{transformer_decoder_forward.7} parent=5 // pred_region
        %s254 = ssub.s32 %s15, 1
        // Predicated region
        $region13: #{transformer_decoder_forward.7} parent=11 // pred_check
          %p255 = pneg %p36
        $region14: #{transformer_decoder_forward.7} parent=11 // pred_check_branch
          %257 = sbr.rel (%p255) target = $region16
        $region15: #{transformer_decoder_forward.7} parent=11 // pred_region
          _
        $region16: #{transformer_decoder_forward.7} parent=11 // pred_fallthru
          _
        // Predicated region
        $region17: #{transformer_decoder_forward.7} parent=11 // pred_check
          %p258 = pneg %p135
        $region18: #{transformer_decoder_forward.7} parent=11 // pred_check_branch
          %260 = sbr.rel (%p258) target = $region20
        $region19: #{transformer_decoder_forward.7} parent=11 // pred_region
          _
        $region20: #{transformer_decoder_forward.7} parent=11 // pred_fallthru
          _
        // Predicated region
        $region21: #{transformer_decoder_forward.7} parent=11 // pred_check
          %p261 = pneg %p156
        $region22: #{transformer_decoder_forward.7} parent=11 // pred_check_branch
          %263 = sbr.rel (%p261) target = $region24
        $region23: #{transformer_decoder_forward.7} parent=11 // pred_region
          _
        $region24: #{transformer_decoder_forward.7} parent=11 // pred_fallthru
          _
        // Predicated region
        $region25: #{transformer_decoder_forward.7} parent=11 // pred_check
          %p264 = pneg %p177
        $region26: #{transformer_decoder_forward.7} parent=11 // pred_check_branch
          %266 = sbr.rel (%p264) target = $region28
        $region27: #{transformer_decoder_forward.7} parent=11 // pred_region
          _
        $region28: #{transformer_decoder_forward.7} parent=11 // pred_fallthru
          _
        // Predicated region
        $region29: #{transformer_decoder_forward.7} parent=11 // pred_check
          %p267 = pneg %p198
        $region30: #{transformer_decoder_forward.7} parent=11 // pred_check_branch
          %269 = sbr.rel (%p267) target = $region32
        $region31: #{transformer_decoder_forward.7} parent=11 // pred_region
          _
        $region32: #{transformer_decoder_forward.7} parent=11 // pred_fallthru
          _
        // Predicated region
        $region33: #{transformer_decoder_forward.7} parent=11 // pred_check
          %p270 = pneg %p219
        $region34: #{transformer_decoder_forward.7} parent=11 // pred_check_branch
          %272 = sbr.rel (%p270) target = $region36
        $region35: #{transformer_decoder_forward.7} parent=11 // pred_region
          _
        $region36: #{transformer_decoder_forward.7} parent=11 // pred_fallthru
          _
      $region12: #{transformer_decoder_forward.7} parent=5 // pred_fallthru
        _
      %p273 = scmp.lt.s32.totalorder %s15, 4
      // Predicated region
      $region37: #{transformer_decoder_forward.7} parent=5 // pred_check
        %p274 = pneg %p273
      $region38: #{transformer_decoder_forward.7} parent=5 // pred_check_branch
        %276 = sbr.rel (%p274) target = $region40
      $region39: #{transformer_decoder_forward.7} parent=5 // pred_region
        // Predicated region
        $region41: #{transformer_decoder_forward.7} parent=39 // pred_check
          %p277 = pneg %p56
        $region42: #{transformer_decoder_forward.7} parent=39 // pred_check_branch
          %279 = sbr.rel (%p277) target = $region44
        $region43: #{transformer_decoder_forward.7} parent=39 // pred_region
          %s280 = sand.u32 %s46, 1
          %s281 = sand.u32 %s46, 1
          %s282 = smul.addr %s281, 64
          %s283 = scalar_lea.vmem [#allocation3], %s282
          %s284 = smul.u32 4, %s15
          %s285 = smul.addr %s284, 4
          %s286 = scalar_lea.vmem %s1, %s285
          // Predicated region
          $region45: #{transformer_decoder_forward.7} parent=43 // pred_check
            _
          $region46: #{transformer_decoder_forward.7} parent=43 // pred_check_branch
            %288 = sbr.rel (0) target = $region48
          $region47: #{transformer_decoder_forward.7} parent=43 // pred_region
            // Predicated region
            $region49: #{transformer_decoder_forward.7} parent=47 // pred_check
              _
            $region50: #{transformer_decoder_forward.7} parent=47 // pred_check_branch
              %290 = sbr.rel (0) target = $region52
            $region51: #{transformer_decoder_forward.7} parent=47 // pred_region
              loop: start=0, step=1, limit=1
              $region53: #{transformer_decoder_forward.7} parent=51 // loop_pre_header
                _
              $region54: #{transformer_decoder_forward.7} parent=51 // loop_header
                %s292 = sphi 0, %s296
                %p293 = scmp.ge.s32.totalorder %s292, 1
                %s297 = sphi %s286, %s286
                %s298 = sphi %s283, %s283
              $region55: #{transformer_decoder_forward.7} parent=51 // loop_header_branch
                %295 = sbr.rel (%p293) target = $region59
              $region56: #{transformer_decoder_forward.7} parent=51 // loop_body
                %v299 = vld [vmem:[%s297] sm:$0xff]
                %300 = vst [vmem:[%s298] sm:$0xff] %v299
                %v301 = vld [vmem:[%s297 + $0x8] sm:$0xff]
                %302 = vst [vmem:[%s298 + $0x8] sm:$0xff] %v301
                %v303 = vld [vmem:[%s297 + $0x40] sm:$0xff]
                %304 = vst [vmem:[%s298 + $0x10] sm:$0xff] %v303
                %v305 = vld [vmem:[%s297 + $0x48] sm:$0xff]
                %306 = vst [vmem:[%s298 + $0x18] sm:$0xff] %v305
                %v307 = vld [vmem:[%s297 + $0x80] sm:$0xff]
                %308 = vst [vmem:[%s298 + $0x20] sm:$0xff] %v307
                %v309 = vld [vmem:[%s297 + $0x88] sm:$0xff]
                %310 = vst [vmem:[%s298 + $0x28] sm:$0xff] %v309
                %v311 = vld [vmem:[%s297 + $0xc0] sm:$0xff]
                %312 = vst [vmem:[%s298 + $0x30] sm:$0xff] %v311
                %v313 = vld [vmem:[%s297 + $0xc8] sm:$0xff]
                %314 = vst [vmem:[%s298 + $0x38] sm:$0xff] %v313
              $region57: #{transformer_decoder_forward.7} parent=51 // loop_footer
                %s296 = sadd.s32 1, %s292
              $region58: #{transformer_decoder_forward.7} parent=51 // loop_footer_branch
                %291 = sbr.rel target = $region54
              $region59: #{transformer_decoder_forward.7} parent=51 // loop_exit
                _
            $region52: #{transformer_decoder_forward.7} parent=47 // pred_fallthru
              _
            // Predicated region
            $region60: #{transformer_decoder_forward.7} parent=47 // pred_check
              _
            $region61: #{transformer_decoder_forward.7} parent=47 // pred_check_branch
              %316 = sbr.rel target = $region63
            $region62: #{transformer_decoder_forward.7} parent=47 // pred_region
              _
            $region63: #{transformer_decoder_forward.7} parent=47 // pred_fallthru
              _
          $region48: #{transformer_decoder_forward.7} parent=43 // pred_fallthru
            _
          %317 = vnop
        $region44: #{transformer_decoder_forward.7} parent=39 // pred_fallthru
          _
        // Predicated region
        $region64: #{transformer_decoder_forward.7} parent=39 // pred_check
          %p318 = pneg %p82
        $region65: #{transformer_decoder_forward.7} parent=39 // pred_check_branch
          %320 = sbr.rel (%p318) target = $region67
        $region66: #{transformer_decoder_forward.7} parent=39 // pred_region
          %s321 = smul.u32 4, %s15
          %p322 = scmp.lt.s32.totalorder %s321, 15
          %s323 = scalar_select %p322, %s321, 15
          %s324 = scalar_lea.vmem %s2, %s323
          %s325 = smul.u32 4, %s15
        $region67: #{transformer_decoder_forward.7} parent=39 // pred_fallthru
          _
        // Predicated region
        $region68: #{transformer_decoder_forward.7} parent=39 // pred_check
          %p326 = pneg %p108
        $region69: #{transformer_decoder_forward.7} parent=39 // pred_check_branch
          %328 = sbr.rel (%p326) target = $region71
        $region70: #{transformer_decoder_forward.7} parent=39 // pred_region
          %s329 = smul.u32 64, %s15
          %p330 = scmp.lt.s32.totalorder %s329, 255
          %s331 = scalar_select %p330, %s329, 255
          %s332 = smul.addr %s331, 4
          %s333 = scalar_lea.vmem %s3, %s332
          %s334 = smul.u32 64, %s15
        $region71: #{transformer_decoder_forward.7} parent=39 // pred_fallthru
          _
      $region40: #{transformer_decoder_forward.7} parent=5 // pred_fallthru
        _
      %p335 = scmp.le.s32.totalorder 1, %s15
      %p336 = scmp.lt.s32.totalorder %s15, 5
      %p337 = pnand %p335, %p336
      %p338 = pneg %p337
      // Predicated region
      $region72: #{transformer_decoder_forward.7} parent=5 // pred_check
        _
      $region73: #{transformer_decoder_forward.7} parent=5 // pred_check_branch
        %340 = sbr.rel (%p337) target = $region75
      $region74: #{transformer_decoder_forward.7} parent=5 // pred_region
        %s341 = ssub.s32 %s15, 1
        %s342 = sand.u32 %s49, 1
        %s343 = sand.u32 %s49, 1
        %s344 = smul.addr %s343, 64
        %s345 = scalar_lea.vmem [#allocation3], %s344
        // Predicated region
        $region76: #{transformer_decoder_forward.7} parent=74 // pred_check
          %p346 = pneg %p62
        $region77: #{transformer_decoder_forward.7} parent=74 // pred_check_branch
          %348 = sbr.rel (%p346) target = $region79
        $region78: #{transformer_decoder_forward.7} parent=74 // pred_region
          _
        $region79: #{transformer_decoder_forward.7} parent=74 // pred_fallthru
          _
        %p349 = pneg %p36
        %p350 = pneg %p33
        %s351 = sand.u32 %s49, 1
        %s352 = sand.u32 %s49, 1
        %s353 = smul.addr %s352, 64
        %s354 = scalar_lea.vmem [#allocation3], %s353
        %p355 = pneg %p62
        %p356 = pneg %p59
        %s357 = smul.u32 4, %s20
        %p358 = scmp.lt.s32.totalorder %s357, 15
        %s359 = scalar_select %p358, %s357, 15
        %s360 = scalar_lea.vmem %s2, %s359
        %p361 = pneg %p88
        %p362 = pneg %p85
        %s363 = smul.u32 64, %s20
        %p364 = scmp.lt.s32.totalorder %s363, 255
        %s365 = scalar_select %p364, %s363, 255
        %s366 = smul.addr %s365, 4
        %s367 = scalar_lea.vmem %s3, %s366
        %p368 = pneg %p114
        %p369 = pneg %p111
        %p370 = pneg %p135
        %p371 = pneg %p132
        %p372 = pneg %p156
        %p373 = pneg %p153
        %p374 = pneg %p177
        %p375 = pneg %p174
        %p376 = pneg %p198
        %p377 = pneg %p195
        %p378 = pneg %p219
        %p379 = pneg %p216
        %p380 = pneg %p240
        %p381 = pneg %p237
        %s382 = smul.u32 4, %s20
        %s383 = smul.u32 4, %s20
        %p384 = scmp.lt.s32.totalorder %s383, 15
        %s385 = scalar_select %p384, %s383, 15
        %s386 = scalar_lea.vmem %s2, %s385
        %s387 = smul.u32 4, %s20
        %s388 = smul.u32 64, %s20
        %p389 = scmp.lt.s32.totalorder %s388, 255
        %s390 = scalar_select %p389, %s388, 255
        %s391 = smul.addr %s390, 4
        %s392 = scalar_lea.vmem %s3, %s391
        %s393 = smul.u32 64, %s20
        %p395 = scmp.eq.s32.totalorder %s20, 0
        // Predicated region
        $region80: #{transformer_decoder_forward.7} parent=74 // pred_check
          %p396 = pneg %p395
        $region81: #{transformer_decoder_forward.7} parent=74 // pred_check_branch
          %398 = sbr.rel (%p396) target = $region83
        $region82: #{transformer_decoder_forward.7} parent=74 // pred_region
          %vm399 = vcmask 261120
          %400 = vst.msk [vmem:[#allocation2] sm:$0xff] %vm399, 0.0
          %401 = vst.msk [vmem:[#allocation2 + $0x8] sm:$0xff] %vm399, 0.0
        $region83: #{transformer_decoder_forward.7} parent=74 // pred_fallthru
          _
        %v402 = vld [vmem:[%s0] sm:$0xf]
        %v403 = vld [vmem:[%s0 + $0x4] sm:$0xf]
        %v404 = vld [vmem:[%s345] sm:$0xff]
        %v405 = vld [vmem:[%s345 + $0x8] sm:$0xff]
        %v406 = vld [vmem:[%s345 + $0x10] sm:$0xff]
        %v407 = vld [vmem:[%s345 + $0x18] sm:$0xff]
        %v408 = vld [vmem:[%s345 + $0x20] sm:$0xff]
        %v409 = vld [vmem:[%s345 + $0x28] sm:$0xff]
        %v410 = vld [vmem:[%s345 + $0x30] sm:$0xff]
        %v411 = vld [vmem:[%s345 + $0x38] sm:$0xff]
        %v412 = vld [vmem:[%s386] sm:$0xf]
        %v414 = vlaneseq
        %v415 = vshrl.u32 %v414, 7
        %v416 = vsub.s32 0, %v415
        %v417 = vrot.slane %v412, %v416
        %v418 = vlaneseq
        %v419 = vshrl.u32 %v418, 7
        %v420 = vsub.s32 1, %v419
        %v421 = vrot.slane %v412, %v420
        %v422 = vlaneseq
        %v423 = vshrl.u32 %v422, 7
        %v424 = vsub.s32 2, %v423
        %v425 = vrot.slane %v412, %v424
        %v426 = vlaneseq
        %v427 = vshrl.u32 %v426, 7
        %v428 = vsub.s32 3, %v427
        %v429 = vrot.slane %v412, %v428
        %v436 = vunpack.c.l.b16 %v402
        %v437 = vunpack.c.l.b16 %v403
        %v438 = vpack.c.b16 %v437, %v436
        %v447 = vunpack.c.l.b16 %v404
        %v448 = vunpack.c.h.b16 %v404
        %v449 = vunpack.c.l.b16 %v405
        %v450 = vunpack.c.h.b16 %v405
        %v451 = vunpack.c.l.b16 %v406
        %v452 = vunpack.c.h.b16 %v406
        %v453 = vunpack.c.l.b16 %v407
        %v454 = vunpack.c.h.b16 %v407
        %v455 = vunpack.c.l.b16 %v408
        %v456 = vunpack.c.h.b16 %v408
        %v457 = vunpack.c.l.b16 %v409
        %v458 = vunpack.c.h.b16 %v409
        %v459 = vunpack.c.l.b16 %v410
        %v460 = vunpack.c.h.b16 %v410
        %v461 = vunpack.c.l.b16 %v411
        %v462 = vunpack.c.h.b16 %v411
        %v463 = vpack.c.b16 %v451, %v447
        %v464 = vpack.c.b16 %v452, %v448
        %v465 = vpack.c.b16 %v453, %v449
        %v466 = vpack.c.b16 %v454, %v450
        %v467 = vpack.c.b16 %v459, %v455
        %v468 = vpack.c.b16 %v460, %v456
        %v469 = vpack.c.b16 %v461, %v457
        %v470 = vpack.c.b16 %v462, %v458
        %vm479 = vcmask 261120
        %v481 = vsel %vm479, %v438, 0
        %483 = vmatprep.subr.bf16.mxu0 %v464
        %484 = vmatpush1.bf16.msra.mxu0 %v463
        %485 = vmatprep.subr.bf16.mxu0 %v468
        %486 = vmatpush1.bf16.msra.mxu0 %v467
        %487 = vmatprep.subr.bf16.mxu0 0
        %488 = vmatpush1.bf16.msra.mxu0 0
        %489 = vmatprep.subr.bf16.mxu0 0
        %490 = vmatpush1.bf16.msra.mxu0 0
        %491 = vmatprep.subr.bf16.mxu0 0
        %492 = vmatpush1.bf16.msra.mxu0 0
        %493 = vmatprep.subr.bf16.mxu0 0
        %494 = vmatpush1.bf16.msra.mxu0 0
        %495 = vmatprep.subr.bf16.mxu0 0
        %496 = vmatpush1.bf16.msra.mxu0 0
        %497 = vmatprep.subr.bf16.mxu0 0
        %498 = vmatpush1.bf16.msra.mxu0 0
        %499 = vmatprep.subr.bf16.mxu0 0
        %500 = vmatpush1.bf16.msra.mxu0 0
        %501 = vmatprep.subr.bf16.mxu0 0
        %502 = vmatpush1.bf16.msra.mxu0 0
        %503 = vmatprep.subr.bf16.mxu0 0
        %504 = vmatpush1.bf16.msra.mxu0 0
        %505 = vmatprep.subr.bf16.mxu0 0
        %506 = vmatpush1.bf16.msra.mxu0 0
        %507 = vmatprep.subr.bf16.mxu0 0
        %508 = vmatpush1.bf16.msra.mxu0 0
        %509 = vmatprep.subr.bf16.mxu0 0
        %510 = vmatpush1.bf16.msra.mxu0 0
        %511 = vmatprep.subr.bf16.mxu0 0
        %512 = vmatpush1.bf16.msra.mxu0 0
        %513 = vmatprep.subr.bf16.mxu0 0
        %514 = vmatpush1.bf16.msra.mxu0 0
        %515 = vmatprep.mubr.bf16.mxu0 0
        %516 = vmatmul.mubr.bf16.gmra.mrb[0].mxu0 %v481
        %v517 = vpop.f32.mrb[0].mxu0
        %v518 = vadd.f32 %v417, %v517
        %v519 = vpop.f32.mrb[0].mxu0
        %v520 = vadd.f32 %v421, %v519
        %v521 = vpop.f32.mrb[0].mxu0
        %v522 = vadd.f32 %v417, %v521
        %v523 = vpop.f32.mrb[0].mxu0
        %v524 = vadd.f32 %v421, %v523
        %525 = vdwg.mxu0
        %526 = vmatprep.subr.bf16.mxu0 %v466
        %527 = vmatpush1.bf16.msra.mxu0 %v465
        %528 = vmatprep.subr.bf16.mxu0 %v470
        %529 = vmatpush1.bf16.msra.mxu0 %v469
        %530 = vmatprep.subr.bf16.mxu0 0
        %531 = vmatpush1.bf16.msra.mxu0 0
        %532 = vmatprep.subr.bf16.mxu0 0
        %533 = vmatpush1.bf16.msra.mxu0 0
        %534 = vmatprep.subr.bf16.mxu0 0
        %535 = vmatpush1.bf16.msra.mxu0 0
        %536 = vmatprep.subr.bf16.mxu0 0
        %537 = vmatpush1.bf16.msra.mxu0 0
        %538 = vmatprep.subr.bf16.mxu0 0
        %539 = vmatpush1.bf16.msra.mxu0 0
        %540 = vmatprep.subr.bf16.mxu0 0
        %541 = vmatpush1.bf16.msra.mxu0 0
        %542 = vmatprep.subr.bf16.mxu0 0
        %543 = vmatpush1.bf16.msra.mxu0 0
        %544 = vmatprep.subr.bf16.mxu0 0
        %545 = vmatpush1.bf16.msra.mxu0 0
        %546 = vmatprep.subr.bf16.mxu0 0
        %547 = vmatpush1.bf16.msra.mxu0 0
        %548 = vmatprep.subr.bf16.mxu0 0
        %549 = vmatpush1.bf16.msra.mxu0 0
        %550 = vmatprep.subr.bf16.mxu0 0
        %551 = vmatpush1.bf16.msra.mxu0 0
        %552 = vmatprep.subr.bf16.mxu0 0
        %553 = vmatpush1.bf16.msra.mxu0 0
        %554 = vmatprep.subr.bf16.mxu0 0
        %555 = vmatpush1.bf16.msra.mxu0 0
        %556 = vmatprep.subr.bf16.mxu0 0
        %557 = vmatpush1.bf16.msra.mxu0 0
        %558 = vmatprep.mubr.bf16.mxu0 0
        %559 = vmatmul.mubr.bf16.gmra.mrb[0].mxu0 %v481
        %v560 = vpop.f32.mrb[0].mxu0
        %v561 = vadd.f32 %v425, %v560
        %v562 = vpop.f32.mrb[0].mxu0
        %v563 = vadd.f32 %v429, %v562
        %v564 = vpop.f32.mrb[0].mxu0
        %v565 = vadd.f32 %v425, %v564
        %v566 = vpop.f32.mrb[0].mxu0
        %v567 = vadd.f32 %v429, %v566
        %568 = vdwg.mxu0
        %v569 = vmax.f32 %v518, 0.0
        %v570 = vmax.f32 %v520, 0.0
        %v571 = vmax.f32 %v561, 0.0
        %v572 = vmax.f32 %v563, 0.0
        %v573 = vmax.f32 %v522, 0.0
        %v574 = vmax.f32 %v524, 0.0
        %v575 = vmax.f32 %v565, 0.0
        %v576 = vmax.f32 %v567, 0.0
        %v577 = vld [vmem:[#allocation2] sm:$0xff]
        %v578 = vld [vmem:[#allocation2 + $0x8] sm:$0xff]
        %v579 = vpack.c.bf16 %v573, %v569
        %v580 = vpack.c.bf16 %v574, %v570
        %v581 = vpack.c.bf16 %v575, %v571
        %v582 = vpack.c.bf16 %v576, %v572
        %v583 = vld [vmem:[%s392] sm:$0xf]
        %v584 = vld [vmem:[%s392 + $0x4] sm:$0xf]
        %v585 = vld [vmem:[%s392 + $0x8] sm:$0xf]
        %v586 = vld [vmem:[%s392 + $0xc] sm:$0xf]
        %v587 = vld [vmem:[%s392 + $0x10] sm:$0xf]
        %v588 = vld [vmem:[%s392 + $0x14] sm:$0xf]
        %v589 = vld [vmem:[%s392 + $0x18] sm:$0xf]
        %v590 = vld [vmem:[%s392 + $0x1c] sm:$0xf]
        %v591 = vld [vmem:[%s392 + $0x20] sm:$0xf]
        %v592 = vld [vmem:[%s392 + $0x24] sm:$0xf]
        %v593 = vld [vmem:[%s392 + $0x28] sm:$0xf]
        %v594 = vld [vmem:[%s392 + $0x2c] sm:$0xf]
        %v595 = vld [vmem:[%s392 + $0x30] sm:$0xf]
        %v596 = vld [vmem:[%s392 + $0x34] sm:$0xf]
        %v597 = vld [vmem:[%s392 + $0x38] sm:$0xf]
        %v598 = vld [vmem:[%s392 + $0x3c] sm:$0xf]
        %v599 = vld [vmem:[%s392 + $0x40] sm:$0xf]
        %v600 = vld [vmem:[%s392 + $0x44] sm:$0xf]
        %v601 = vld [vmem:[%s392 + $0x48] sm:$0xf]
        %v602 = vld [vmem:[%s392 + $0x4c] sm:$0xf]
        %v603 = vld [vmem:[%s392 + $0x50] sm:$0xf]
        %v604 = vld [vmem:[%s392 + $0x54] sm:$0xf]
        %v605 = vld [vmem:[%s392 + $0x58] sm:$0xf]
        %v606 = vld [vmem:[%s392 + $0x5c] sm:$0xf]
        %v607 = vld [vmem:[%s392 + $0x60] sm:$0xf]
        %v608 = vld [vmem:[%s392 + $0x64] sm:$0xf]
        %v609 = vld [vmem:[%s392 + $0x68] sm:$0xf]
        %v610 = vld [vmem:[%s392 + $0x6c] sm:$0xf]
        %v611 = vld [vmem:[%s392 + $0x70] sm:$0xf]
        %v612 = vld [vmem:[%s392 + $0x74] sm:$0xf]
        %v613 = vld [vmem:[%s392 + $0x78] sm:$0xf]
        %v614 = vld [vmem:[%s392 + $0x7c] sm:$0xf]
        %v615 = vld [vmem:[%s392 + $0x80] sm:$0xf]
        %v616 = vld [vmem:[%s392 + $0x84] sm:$0xf]
        %v617 = vld [vmem:[%s392 + $0x88] sm:$0xf]
        %v618 = vld [vmem:[%s392 + $0x8c] sm:$0xf]
        %v619 = vld [vmem:[%s392 + $0x90] sm:$0xf]
        %v620 = vld [vmem:[%s392 + $0x94] sm:$0xf]
        %v621 = vld [vmem:[%s392 + $0x98] sm:$0xf]
        %v622 = vld [vmem:[%s392 + $0x9c] sm:$0xf]
        %v623 = vld [vmem:[%s392 + $0xa0] sm:$0xf]
        %v624 = vld [vmem:[%s392 + $0xa4] sm:$0xf]
        %v625 = vld [vmem:[%s392 + $0xa8] sm:$0xf]
        %v626 = vld [vmem:[%s392 + $0xac] sm:$0xf]
        %v627 = vld [vmem:[%s392 + $0xb0] sm:$0xf]
        %v628 = vld [vmem:[%s392 + $0xb4] sm:$0xf]
        %v629 = vld [vmem:[%s392 + $0xb8] sm:$0xf]
        %v630 = vld [vmem:[%s392 + $0xbc] sm:$0xf]
        %v631 = vld [vmem:[%s392 + $0xc0] sm:$0xf]
        %v632 = vld [vmem:[%s392 + $0xc4] sm:$0xf]
        %v633 = vld [vmem:[%s392 + $0xc8] sm:$0xf]
        %v634 = vld [vmem:[%s392 + $0xcc] sm:$0xf]
        %v635 = vld [vmem:[%s392 + $0xd0] sm:$0xf]
        %v636 = vld [vmem:[%s392 + $0xd4] sm:$0xf]
        %v637 = vld [vmem:[%s392 + $0xd8] sm:$0xf]
        %v638 = vld [vmem:[%s392 + $0xdc] sm:$0xf]
        %v639 = vld [vmem:[%s392 + $0xe0] sm:$0xf]
        %v640 = vld [vmem:[%s392 + $0xe4] sm:$0xf]
        %v641 = vld [vmem:[%s392 + $0xe8] sm:$0xf]
        %v642 = vld [vmem:[%s392 + $0xec] sm:$0xf]
        %v643 = vld [vmem:[%s392 + $0xf0] sm:$0xf]
        %v644 = vld [vmem:[%s392 + $0xf4] sm:$0xf]
        %v645 = vld [vmem:[%s392 + $0xf8] sm:$0xf]
        %v646 = vld [vmem:[%s392 + $0xfc] sm:$0xf]
        %v711 = vunpack.c.l.b16 %v583
        %v712 = vunpack.c.l.b16 %v584
        %v713 = vunpack.c.l.b16 %v585
        %v714 = vunpack.c.l.b16 %v586
        %v715 = vunpack.c.l.b16 %v587
        %v716 = vunpack.c.l.b16 %v588
        %v717 = vunpack.c.l.b16 %v589
        %v718 = vunpack.c.l.b16 %v590
        %v719 = vunpack.c.l.b16 %v591
        %v720 = vunpack.c.l.b16 %v592
        %v721 = vunpack.c.l.b16 %v593
        %v722 = vunpack.c.l.b16 %v594
        %v723 = vunpack.c.l.b16 %v595
        %v724 = vunpack.c.l.b16 %v596
        %v725 = vunpack.c.l.b16 %v597
        %v726 = vunpack.c.l.b16 %v598
        %v727 = vunpack.c.l.b16 %v599
        %v728 = vunpack.c.l.b16 %v600
        %v729 = vunpack.c.l.b16 %v601
        %v730 = vunpack.c.l.b16 %v602
        %v731 = vunpack.c.l.b16 %v603
        %v732 = vunpack.c.l.b16 %v604
        %v733 = vunpack.c.l.b16 %v605
        %v734 = vunpack.c.l.b16 %v606
        %v735 = vunpack.c.l.b16 %v607
        %v736 = vunpack.c.l.b16 %v608
        %v737 = vunpack.c.l.b16 %v609
        %v738 = vunpack.c.l.b16 %v610
        %v739 = vunpack.c.l.b16 %v611
        %v740 = vunpack.c.l.b16 %v612
        %v741 = vunpack.c.l.b16 %v613
        %v742 = vunpack.c.l.b16 %v614
        %v743 = vunpack.c.l.b16 %v615
        %v744 = vunpack.c.l.b16 %v616
        %v745 = vunpack.c.l.b16 %v617
        %v746 = vunpack.c.l.b16 %v618
        %v747 = vunpack.c.l.b16 %v619
        %v748 = vunpack.c.l.b16 %v620
        %v749 = vunpack.c.l.b16 %v621
        %v750 = vunpack.c.l.b16 %v622
        %v751 = vunpack.c.l.b16 %v623
        %v752 = vunpack.c.l.b16 %v624
        %v753 = vunpack.c.l.b16 %v625
        %v754 = vunpack.c.l.b16 %v626
        %v755 = vunpack.c.l.b16 %v627
        %v756 = vunpack.c.l.b16 %v628
        %v757 = vunpack.c.l.b16 %v629
        %v758 = vunpack.c.l.b16 %v630
        %v759 = vunpack.c.l.b16 %v631
        %v760 = vunpack.c.l.b16 %v632
        %v761 = vunpack.c.l.b16 %v633
        %v762 = vunpack.c.l.b16 %v634
        %v763 = vunpack.c.l.b16 %v635
        %v764 = vunpack.c.l.b16 %v636
        %v765 = vunpack.c.l.b16 %v637
        %v766 = vunpack.c.l.b16 %v638
        %v767 = vunpack.c.l.b16 %v639
        %v768 = vunpack.c.l.b16 %v640
        %v769 = vunpack.c.l.b16 %v641
        %v770 = vunpack.c.l.b16 %v642
        %v771 = vunpack.c.l.b16 %v643
        %v772 = vunpack.c.l.b16 %v644
        %v773 = vunpack.c.l.b16 %v645
        %v774 = vunpack.c.l.b16 %v646
        %v775 = vpack.c.b16 %v712, %v711
        %v776 = vpack.c.b16 %v714, %v713
        %v777 = vpack.c.b16 %v716, %v715
        %v778 = vpack.c.b16 %v718, %v717
        %v779 = vpack.c.b16 %v720, %v719
        %v780 = vpack.c.b16 %v722, %v721
        %v781 = vpack.c.b16 %v724, %v723
        %v782 = vpack.c.b16 %v726, %v725
        %v783 = vpack.c.b16 %v728, %v727
        %v784 = vpack.c.b16 %v730, %v729
        %v785 = vpack.c.b16 %v732, %v731
        %v786 = vpack.c.b16 %v734, %v733
        %v787 = vpack.c.b16 %v736, %v735
        %v788 = vpack.c.b16 %v738, %v737
        %v789 = vpack.c.b16 %v740, %v739
        %v790 = vpack.c.b16 %v742, %v741
        %v791 = vpack.c.b16 %v744, %v743
        %v792 = vpack.c.b16 %v746, %v745
        %v793 = vpack.c.b16 %v748, %v747
        %v794 = vpack.c.b16 %v750, %v749
        %v795 = vpack.c.b16 %v752, %v751
        %v796 = vpack.c.b16 %v754, %v753
        %v797 = vpack.c.b16 %v756, %v755
        %v798 = vpack.c.b16 %v758, %v757
        %v799 = vpack.c.b16 %v760, %v759
        %v800 = vpack.c.b16 %v762, %v761
        %v801 = vpack.c.b16 %v764, %v763
        %v802 = vpack.c.b16 %v766, %v765
        %v803 = vpack.c.b16 %v768, %v767
        %v804 = vpack.c.b16 %v770, %v769
        %v805 = vpack.c.b16 %v772, %v771
        %v806 = vpack.c.b16 %v774, %v773
        %839 = vmatprep.subr.bf16.mxu0 0
        %840 = vmatpush1.bf16.msra.mxu0 %v775
        %841 = vmatprep.subr.bf16.mxu0 0
        %842 = vmatpush1.bf16.msra.mxu0 %v776
        %843 = vmatprep.subr.bf16.mxu0 0
        %844 = vmatpush1.bf16.msra.mxu0 %v777
        %845 = vmatprep.subr.bf16.mxu0 0
        %846 = vmatpush1.bf16.msra.mxu0 %v778
        %847 = vmatprep.subr.bf16.mxu0 0
        %848 = vmatpush1.bf16.msra.mxu0 %v779
        %849 = vmatprep.subr.bf16.mxu0 0
        %850 = vmatpush1.bf16.msra.mxu0 %v780
        %851 = vmatprep.subr.bf16.mxu0 0
        %852 = vmatpush1.bf16.msra.mxu0 %v781
        %853 = vmatprep.subr.bf16.mxu0 0
        %854 = vmatpush1.bf16.msra.mxu0 %v782
        %855 = vmatprep.subr.bf16.mxu0 0
        %856 = vmatpush1.bf16.msra.mxu0 %v783
        %857 = vmatprep.subr.bf16.mxu0 0
        %858 = vmatpush1.bf16.msra.mxu0 %v784
        %859 = vmatprep.subr.bf16.mxu0 0
        %860 = vmatpush1.bf16.msra.mxu0 %v785
        %861 = vmatprep.subr.bf16.mxu0 0
        %862 = vmatpush1.bf16.msra.mxu0 %v786
        %863 = vmatprep.subr.bf16.mxu0 0
        %864 = vmatpush1.bf16.msra.mxu0 %v787
        %865 = vmatprep.subr.bf16.mxu0 0
        %866 = vmatpush1.bf16.msra.mxu0 %v788
        %867 = vmatprep.subr.bf16.mxu0 0
        %868 = vmatpush1.bf16.msra.mxu0 %v789
        %869 = vmatprep.subr.bf16.mxu0 0
        %870 = vmatpush1.bf16.msra.mxu0 %v790
        %871 = vmatprep.mubr.bf16.mxu0 %v580
        %872 = vmatmul.mubr.bf16.gmra.mrb[0].mxu0 %v579
        %v873 = vpop.f32.mrb[0].mxu0
        %v874 = vadd.f32 0.0, %v873
        %v875 = vpop.f32.mrb[0].mxu0
        %v876 = vpop.f32.mrb[0].mxu0
        %v877 = vadd.f32 0.0, %v876
        %v878 = vpop.f32.mrb[0].mxu0
        %879 = vdwg.mxu0
        %880 = vmatprep.subr.bf16.mxu0 0
        %881 = vmatpush1.bf16.msra.mxu0 %v791
        %882 = vmatprep.subr.bf16.mxu0 0
        %883 = vmatpush1.bf16.msra.mxu0 %v792
        %884 = vmatprep.subr.bf16.mxu0 0
        %885 = vmatpush1.bf16.msra.mxu0 %v793
        %886 = vmatprep.subr.bf16.mxu0 0
        %887 = vmatpush1.bf16.msra.mxu0 %v794
        %888 = vmatprep.subr.bf16.mxu0 0
        %889 = vmatpush1.bf16.msra.mxu0 %v795
        %890 = vmatprep.subr.bf16.mxu0 0
        %891 = vmatpush1.bf16.msra.mxu0 %v796
        %892 = vmatprep.subr.bf16.mxu0 0
        %893 = vmatpush1.bf16.msra.mxu0 %v797
        %894 = vmatprep.subr.bf16.mxu0 0
        %895 = vmatpush1.bf16.msra.mxu0 %v798
        %896 = vmatprep.subr.bf16.mxu0 0
        %897 = vmatpush1.bf16.msra.mxu0 %v799
        %898 = vmatprep.subr.bf16.mxu0 0
        %899 = vmatpush1.bf16.msra.mxu0 %v800
        %900 = vmatprep.subr.bf16.mxu0 0
        %901 = vmatpush1.bf16.msra.mxu0 %v801
        %902 = vmatprep.subr.bf16.mxu0 0
        %903 = vmatpush1.bf16.msra.mxu0 %v802
        %904 = vmatprep.subr.bf16.mxu0 0
        %905 = vmatpush1.bf16.msra.mxu0 %v803
        %906 = vmatprep.subr.bf16.mxu0 0
        %907 = vmatpush1.bf16.msra.mxu0 %v804
        %908 = vmatprep.subr.bf16.mxu0 0
        %909 = vmatpush1.bf16.msra.mxu0 %v805
        %910 = vmatprep.subr.bf16.mxu0 0
        %911 = vmatpush1.bf16.msra.mxu0 %v806
        %912 = vmatprep.mubr.bf16.mxu0 %v582
        %913 = vmatmul.mubr.bf16.gmra.mrb[0].mxu0 %v581
        %v914 = vpop.f32.mrb[0].mxu0
        %v915 = vadd.f32 %v874, %v914
        %v916 = vpop.f32.mrb[0].mxu0
        %v917 = vpop.f32.mrb[0].mxu0
        %v918 = vadd.f32 %v877, %v917
        %v919 = vpop.f32.mrb[0].mxu0
        %920 = vdwg.mxu0
        %v921 = vadd.f32 %v577, %v915
        %v922 = vadd.f32 %v578, %v918
        %923 = vst.msk [vmem:[#allocation2] sm:$0xff] %vm479, %v921
        %924 = vst.msk [vmem:[#allocation2 + $0x8] sm:$0xff] %vm479, %v922
        %p925 = scmp.eq.s32.totalorder %s20, 3
        // Predicated region
        $region84: #{transformer_decoder_forward.7} parent=74 // pred_check
          %p926 = pneg %p925
        $region85: #{transformer_decoder_forward.7} parent=74 // pred_check_branch
          %928 = sbr.rel (%p926) target = $region87
        $region86: #{transformer_decoder_forward.7} parent=74 // pred_region
          %v929 = vld [vmem:[#allocation2] sm:$0xff]
          %v930 = vld [vmem:[#allocation2 + $0x8] sm:$0xff]
          %v931 = vld [vmem:[%s4] sm:$0x1]
          %v933 = vlaneseq
          %v934 = vshrl.u32 %v933, 7
          %v935 = vsub.s32 0, %v934
          %v936 = vrot.slane %v931, %v935
          %v938 = vadd.f32 %v929, %v936
          %v939 = vadd.f32 %v930, %v936
          %v940 = vld [vmem:[%s0] sm:$0xf]
          %v941 = vld [vmem:[%s0 + $0x4] sm:$0xf]
          %v942 = vunpack.c.l.bf16 %v940
          %v943 = vunpack.c.l.bf16 %v941
          %v944 = vadd.f32 %v938, %v942
          %v945 = vadd.f32 %v939, %v943
          %v946 = vsel %vm479, %v944, 0.0
          %947 = vadd.xlane.f32.xlu0 %v946
          %v948 = vpop.xlane.xlu0 %947
          %v949 = vsel %vm479, %v945, 0.0
          %950 = vadd.xlane.f32.xlu0 %v949
          %v951 = vpop.xlane.xlu0 %950
          %v952 = vrcp.pop 32.0
          %v953 = vmul.f32 %v948, %v952
          %v954 = vmul.f32 %v951, %v952
          %v955 = vsub.f32 %v944, %v953
          %v956 = vsub.f32 %v945, %v954
          %v957 = vmul.f32 %v955, %v955
          %v958 = vmul.f32 %v956, %v956
          %v959 = vsel %vm479, %v957, 0.0
          %960 = vadd.xlane.f32.xlu0 %v959
          %v961 = vpop.xlane.xlu0 %960
          %v962 = vsel %vm479, %v958, 0.0
          %963 = vadd.xlane.f32.xlu0 %v962
          %v964 = vpop.xlane.xlu0 %963
          %v965 = vmul.f32 %v961, %v952
          %v966 = vmul.f32 %v964, %v952
          %v967 = vadd.f32 %v965, 1e-05
          %v968 = vadd.f32 %v966, 1e-05
          %v969 = vrsqrt.pop %v967
          %v970 = vrsqrt.pop %v968
          %v971 = vmul.f32 %v955, %v969
          %v972 = vmul.f32 %v956, %v970
          %v973 = vld [vmem:[%s5] sm:$0x1]
          %v975 = vlaneseq
          %v976 = vshrl.u32 %v975, 7
          %v977 = vsub.s32 0, %v976
          %v978 = vrot.slane %v973, %v977
          %v980 = vmul.f32 %v971, %v978
          %v981 = vmul.f32 %v972, %v978
          %v982 = vld [vmem:[%s6] sm:$0x1]
          %v984 = vlaneseq
          %v985 = vshrl.u32 %v984, 7
          %v986 = vsub.s32 0, %v985
          %v987 = vrot.slane %v982, %v986
          %v989 = vadd.f32 %v980, %v987
          %v990 = vadd.f32 %v981, %v987
          %v991 = vpack.c.bf16 %v990, %v989
          %v993 = vunpack.c.l.b16 %v991
          %v994 = vunpack.c.h.b16 %v991
          %v995 = vpack.c.b16 %v993, %v993
          %v996 = vpack.c.b16 %v994, %v994
          %vm999 = vcmask 257024
          %1000 = vst.msk [vmem:[%s9] sm:$0xf] %vm999, %v995
          %1001 = vst.msk [vmem:[%s9 + $0x4] sm:$0xf] %vm999, %v996
        $region87: #{transformer_decoder_forward.7} parent=74 // pred_fallthru
          _
        // Predicated region
        $region88: #{transformer_decoder_forward.7} parent=74 // pred_check
          %p1002 = pneg %p237
        $region89: #{transformer_decoder_forward.7} parent=74 // pred_check_branch
          %1004 = sbr.rel (%p1002) target = $region91
        $region90: #{transformer_decoder_forward.7} parent=74 // pred_region
          _
        $region91: #{transformer_decoder_forward.7} parent=74 // pred_fallthru
          _
        // Predicated region
        $region92: #{transformer_decoder_forward.7} parent=74 // pred_check
          %p1005 = pneg %p237
        $region93: #{transformer_decoder_forward.7} parent=74 // pred_check_branch
          %1007 = sbr.rel (%p1005) target = $region95
        $region94: #{transformer_decoder_forward.7} parent=74 // pred_region
          _
        $region95: #{transformer_decoder_forward.7} parent=74 // pred_fallthru
          _
      $region75: #{transformer_decoder_forward.7} parent=5 // pred_fallthru
        _
      %p1008 = scmp.le.s32.totalorder 2, %s15
      // Predicated region
      $region96: #{transformer_decoder_forward.7} parent=5 // pred_check
        %p1009 = pneg %p1008
      $region97: #{transformer_decoder_forward.7} parent=5 // pred_check_branch
        %1011 = sbr.rel (%p1009) target = $region99
      $region98: #{transformer_decoder_forward.7} parent=5 // pred_region
        %s1012 = ssub.s32 %s15, 2
      $region99: #{transformer_decoder_forward.7} parent=5 // pred_fallthru
        _
    $region6: #{transformer_decoder_forward.7} parent=1 // loop_footer
      %s19 = sadd.s32 1, %s15
    $region7: #{transformer_decoder_forward.7} parent=1 // loop_footer_branch
      %14 = sbr.rel target = $region3
    $region8: #{transformer_decoder_forward.7} parent=1 // loop_exit
      _

// kernel: transformer_decoder_forward.6
$region0: #{transformer_decoder_forward.6}
  #allocation0 [shape = 'u32[]', space=smem, size = 0x4, offset = 0x4, fixed_abs, tag = 'smem constant byte address 0x4 - core index']
  #allocation1 [shape = 'u32[144,128]{1,0:T(1,128)}', space=vmem, size = 0x12000, scoped, tag = 'internal scratch']
  %s0 = inlined_call_operand.vmem [shape: bf16[16,32], index: 0, kind: input, shape index: {}]
  %s1 = inlined_call_operand.vmem [shape: bf16[16,32], index: 1, kind: input, shape index: {}]
  %s2 = inlined_call_operand.hbm [shape: bf16[32,96], index: 2, kind: input, shape index: {}]
  %s3 = inlined_call_operand.hbm [shape: f32[1,96], index: 3, kind: input, shape index: {}]
  %s4 = inlined_call_operand.hbm [shape: bf16[32,32], index: 4, kind: input, shape index: {}]
  %s5 = inlined_call_operand.hbm [shape: f32[1,32], index: 5, kind: input, shape index: {}]
  %s6 = inlined_call_operand.hbm [shape: f32[1,32], index: 6, kind: input, shape index: {}]
  %s7 = inlined_call_operand.hbm [shape: f32[1,32], index: 7, kind: input, shape index: {}]
  %s8 = inlined_call_operand.hbm [shape: bf16[32,32], index: 8, kind: input, shape index: {}]
  %s9 = inlined_call_operand.hbm [shape: f32[1,32], index: 9, kind: input, shape index: {}]
  %s10 = inlined_call_operand.hbm [shape: bf16[32,64], index: 10, kind: input, shape index: {}]
  %s11 = inlined_call_operand.hbm [shape: f32[1,64], index: 11, kind: input, shape index: {}]
  %s12 = inlined_call_operand.hbm [shape: bf16[32,32], index: 12, kind: input, shape index: {}]
  %s13 = inlined_call_operand.hbm [shape: f32[1,32], index: 13, kind: input, shape index: {}]
  %s14 = inlined_call_operand.hbm [shape: f32[1,32], index: 14, kind: input, shape index: {}]
  %s15 = inlined_call_operand.hbm [shape: f32[1,32], index: 15, kind: input, shape index: {}]
  %s16 = inlined_call_operand.vmem [shape: bf16[16,32], index: 16, kind: output, shape index: {}]
  %s17 = sld [smem:[#allocation0]]
  $region153: #{transformer_decoder_forward.6} parent=0
    _
  %s19 = ssub.s32 1, %s17
  %s20 = scalar_select 0, %s19, %s17
  $region1: #{transformer_decoder_forward.6} parent=0
    #allocation2 [shape = 'u8[8192]{0}', space=vmem, size = 0x2000, scoped, tag = 'input window, operand 2, single buffered']
    #allocation3 [shape = 's32[2]{0}', space=sflag, size = 0x8, scoped, tag = 'scoped memory for transformer_decoder_forward.6']
    #allocation4 [shape = 'u8[512]{0}', space=vmem, size = 0x400, scoped, tag = 'input window, operand 3, single buffered']
    #allocation5 [shape = 's32[1]{0}', space=sflag, size = 0x4, scoped, tag = 'scoped memory for transformer_decoder_forward.6']
    #allocation6 [shape = 'u8[8192]{0}', space=vmem, size = 0x2000, scoped, tag = 'input window, operand 4, single buffered']
    #allocation7 [shape = 'u8[512]{0}', space=vmem, size = 0x400, scoped, tag = 'input window, operand 5, single buffered']
    #allocation8 [shape = 's32[1]{0}', space=sflag, size = 0x4, scoped, tag = 'scoped memory for transformer_decoder_forward.6']
    #allocation9 [shape = 'u8[512]{0}', space=vmem, size = 0x400, scoped, tag = 'input window, operand 6, single buffered']
    #allocation10 [shape = 'u8[512]{0}', space=vmem, size = 0x400, scoped, tag = 'input window, operand 7, single buffered']
    #allocation11 [shape = 's32[1]{0}', space=sflag, size = 0x4, scoped, tag = 'scoped memory for transformer_decoder_forward.6']
    #allocation12 [shape = 'u8[8192]{0}', space=vmem, size = 0x2000, scoped, tag = 'input window, operand 8, single buffered']
    #allocation13 [shape = 'u8[512]{0}', space=vmem, size = 0x400, scoped, tag = 'input window, operand 9, single buffered']
    #allocation14 [shape = 's32[1]{0}', space=sflag, size = 0x4, scoped, tag = 'scoped memory for transformer_decoder_forward.6']
    #allocation15 [shape = 'u8[8192]{0}', space=vmem, size = 0x2000, scoped, tag = 'input window, operand 10, single buffered']
    #allocation16 [shape = 'u8[512]{0}', space=vmem, size = 0x400, scoped, tag = 'input window, operand 11, single buffered']
    #allocation17 [shape = 's32[1]{0}', space=sflag, size = 0x4, scoped, tag = 'scoped memory for transformer_decoder_forward.6']
    #allocation18 [shape = 'u8[8192]{0}', space=vmem, size = 0x2000, scoped, tag = 'input window, operand 12, single buffered']
    #allocation19 [shape = 'u8[512]{0}', space=vmem, size = 0x400, scoped, tag = 'input window, operand 13, single buffered']
    #allocation20 [shape = 's32[1]{0}', space=sflag, size = 0x4, scoped, tag = 'scoped memory for transformer_decoder_forward.6']
    #allocation21 [shape = 'u8[512]{0}', space=vmem, size = 0x400, scoped, tag = 'input window, operand 14, single buffered']
    #allocation22 [shape = 'u8[512]{0}', space=vmem, size = 0x400, scoped, tag = 'input window, operand 15, single buffered']
    #allocation23 [shape = 's32[1]{0}', space=sflag, size = 0x4, scoped, tag = 'scoped memory for transformer_decoder_forward.6']
    %21 = vsyncpa [#allocation3], 0
    %22 = vsyncpa [#allocation5], 0
    %23 = vsyncpa [#allocation8], 0
    %24 = vsyncpa [#allocation11], 0
    %25 = vsyncpa [#allocation14], 0
    %26 = vsyncpa [#allocation17], 0
    %27 = vsyncpa [#allocation20], 0
    %28 = vsyncpa [#allocation23], 0
    loop: start=0, step=1, limit=4
    $region2: #{transformer_decoder_forward.6} parent=1 // loop_pre_header
      _
    $region3: #{transformer_decoder_forward.6} parent=1 // loop_header
      %s30 = sphi 0, %s34
      %p31 = scmp.ge.s32.totalorder %s30, 4
      %s40 = sphi 0, %s42
      %s43 = sphi 0, %s40
      %s44 = sphi 0, %s43
      %s60 = sphi 0, %s44
      %s66 = sphi 0, %s68
      %s69 = sphi 0, %s66
      %s70 = sphi 0, %s69
      %s86 = sphi 0, %s70
      %s90 = sphi 0, %s90
      %s92 = sphi 0, %s90
      %s93 = sphi 0, %s92
      %s107 = sphi 0, %s93
      %s111 = sphi 0, %s111
      %s113 = sphi 0, %s111
      %s114 = sphi 0, %s113
      %s128 = sphi 0, %s114
      %s132 = sphi 0, %s132
      %s134 = sphi 0, %s132
      %s135 = sphi 0, %s134
      %s149 = sphi 0, %s135
      %s153 = sphi 0, %s153
      %s155 = sphi 0, %s153
      %s156 = sphi 0, %s155
      %s170 = sphi 0, %s156
      %s174 = sphi 0, %s174
      %s176 = sphi 0, %s174
      %s177 = sphi 0, %s176
      %s191 = sphi 0, %s177
      %s195 = sphi 0, %s195
      %s197 = sphi 0, %s195
      %s198 = sphi 0, %s197
      %s212 = sphi 0, %s198
      %s216 = sphi 0, %s216
      %s218 = sphi 0, %s216
      %s219 = sphi 0, %s218
      %s233 = sphi 0, %s219
      %s237 = sphi 0, %s237
      %s239 = sphi 0, %s237
      %s240 = sphi 0, %s239
      %s254 = sphi 0, %s240
      %s258 = sphi 0, %s258
      %s260 = sphi 0, %s258
      %s261 = sphi 0, %s260
      %s275 = sphi 0, %s261
      %s279 = sphi 0, %s279
      %s281 = sphi 0, %s279
      %s282 = sphi 0, %s281
      %s296 = sphi 0, %s282
      %s300 = sphi 0, %s300
      %s302 = sphi 0, %s300
      %s303 = sphi 0, %s302
      %s317 = sphi 0, %s303
      %s321 = sphi 0, %s321
      %s323 = sphi 0, %s321
      %s324 = sphi 0, %s323
      %s338 = sphi 0, %s324
      %s342 = sphi 0, %s342
      %s344 = sphi 0, %s342
      %s345 = sphi 0, %s344
      %s359 = sphi 0, %s345
      %s363 = sphi 0, %s363
      %s365 = sphi 0, %s363
      %s366 = sphi 0, %s365
      %s380 = sphi 0, %s366
      %s386 = sphi 0, %s388
      %s389 = sphi 0, %s386
      %s390 = sphi 0, %s389
      %s406 = sphi 0, %s390
    $region4: #{transformer_decoder_forward.6} parent=1 // loop_header_branch
      %33 = sbr.rel (%p31) target = $region8
    $region5: #{transformer_decoder_forward.6} parent=1 // loop_body
      %s35 = ssub.s32 %s30, 1
      %s36 = ssub.s32 %s30, 2
      %s37 = sadd.s32 %s30, 1
      %s38 = ssub.s32 %s30, %s37
      %p39 = scmp.eq.s32.totalorder %s38, 0
      %s41 = sadd.s32 %s40, 1
      %s42 = scalar_select %p39, %s40, %s41
      %p45 = pneg %p39
      %p46 = scmp.eq.s32.totalorder %s30, 1
      %p47 = por %p45, %p46
      %p48 = scmp.ne.s32.totalorder %s40, %s43
      %p49 = scmp.eq.s32.totalorder %s30, 0
      %p50 = por %p48, %p49
      %p51 = scmp.ne.s32.totalorder %s40, %s43
      %p52 = scmp.eq.s32.totalorder %s35, 1
      %p53 = por %p51, %p52
      %p54 = scmp.ne.s32.totalorder %s43, %s44
      %p55 = scmp.eq.s32.totalorder %s35, 0
      %p56 = por %p54, %p55
      %p57 = scmp.ne.s32.totalorder %s43, %s44
      %p58 = scmp.eq.s32.totalorder %s36, 1
      %p59 = por %p57, %p58
      %p61 = scmp.ne.s32.totalorder %s44, %s60
      %p62 = scmp.eq.s32.totalorder %s36, 0
      %p63 = por %p61, %p62
      %s64 = ssub.s32 %s30, %s37
      %p65 = scmp.eq.s32.totalorder %s64, 0
      %s67 = sadd.s32 %s66, 1
      %s68 = scalar_select %p65, %s66, %s67
      %p71 = pneg %p65
      %p72 = scmp.eq.s32.totalorder %s30, 1
      %p73 = por %p71, %p72
      %p74 = scmp.ne.s32.totalorder %s66, %s69
      %p75 = scmp.eq.s32.totalorder %s30, 0
      %p76 = por %p74, %p75
      %p77 = scmp.ne.s32.totalorder %s66, %s69
      %p78 = scmp.eq.s32.totalorder %s35, 1
      %p79 = por %p77, %p78
      %p80 = scmp.ne.s32.totalorder %s69, %s70
      %p81 = scmp.eq.s32.totalorder %s35, 0
      %p82 = por %p80, %p81
      %p83 = scmp.ne.s32.totalorder %s69, %s70
      %p84 = scmp.eq.s32.totalorder %s36, 1
      %p85 = por %p83, %p84
      %p87 = scmp.ne.s32.totalorder %s70, %s86
      %p88 = scmp.eq.s32.totalorder %s36, 0
      %p89 = por %p87, %p88
      %s91 = sadd.s32 %s90, 1
      %p94 = scmp.eq.s32.totalorder %s30, 1
      %p95 = scmp.ne.s32.totalorder %s90, %s92
      %p96 = scmp.eq.s32.totalorder %s30, 0
      %p97 = por %p95, %p96
      %p98 = scmp.ne.s32.totalorder %s90, %s92
      %p99 = scmp.eq.s32.totalorder %s35, 1
      %p100 = por %p98, %p99
      %p101 = scmp.ne.s32.totalorder %s92, %s93
      %p102 = scmp.eq.s32.totalorder %s35, 0
      %p103 = por %p101, %p102
      %p104 = scmp.ne.s32.totalorder %s92, %s93
      %p105 = scmp.eq.s32.totalorder %s36, 1
      %p106 = por %p104, %p105
      %p108 = scmp.ne.s32.totalorder %s93, %s107
      %p109 = scmp.eq.s32.totalorder %s36, 0
      %p110 = por %p108, %p109
      %s112 = sadd.s32 %s111, 1
      %p115 = scmp.eq.s32.totalorder %s30, 1
      %p116 = scmp.ne.s32.totalorder %s111, %s113
      %p117 = scmp.eq.s32.totalorder %s30, 0
      %p118 = por %p116, %p117
      %p119 = scmp.ne.s32.totalorder %s111, %s113
      %p120 = scmp.eq.s32.totalorder %s35, 1
      %p121 = por %p119, %p120
      %p122 = scmp.ne.s32.totalorder %s113, %s114
      %p123 = scmp.eq.s32.totalorder %s35, 0
      %p124 = por %p122, %p123
      %p125 = scmp.ne.s32.totalorder %s113, %s114
      %p126 = scmp.eq.s32.totalorder %s36, 1
      %p127 = por %p125, %p126
      %p129 = scmp.ne.s32.totalorder %s114, %s128
      %p130 = scmp.eq.s32.totalorder %s36, 0
      %p131 = por %p129, %p130
      %s133 = sadd.s32 %s132, 1
      %p136 = scmp.eq.s32.totalorder %s30, 1
      %p137 = scmp.ne.s32.totalorder %s132, %s134
      %p138 = scmp.eq.s32.totalorder %s30, 0
      %p139 = por %p137, %p138
      %p140 = scmp.ne.s32.totalorder %s132, %s134
      %p141 = scmp.eq.s32.totalorder %s35, 1
      %p142 = por %p140, %p141
      %p143 = scmp.ne.s32.totalorder %s134, %s135
      %p144 = scmp.eq.s32.totalorder %s35, 0
      %p145 = por %p143, %p144
      %p146 = scmp.ne.s32.totalorder %s134, %s135
      %p147 = scmp.eq.s32.totalorder %s36, 1
      %p148 = por %p146, %p147
      %p150 = scmp.ne.s32.totalorder %s135, %s149
      %p151 = scmp.eq.s32.totalorder %s36, 0
      %p152 = por %p150, %p151
      %s154 = sadd.s32 %s153, 1
      %p157 = scmp.eq.s32.totalorder %s30, 1
      %p158 = scmp.ne.s32.totalorder %s153, %s155
      %p159 = scmp.eq.s32.totalorder %s30, 0
      %p160 = por %p158, %p159
      %p161 = scmp.ne.s32.totalorder %s153, %s155
      %p162 = scmp.eq.s32.totalorder %s35, 1
      %p163 = por %p161, %p162
      %p164 = scmp.ne.s32.totalorder %s155, %s156
      %p165 = scmp.eq.s32.totalorder %s35, 0
      %p166 = por %p164, %p165
      %p167 = scmp.ne.s32.totalorder %s155, %s156
      %p168 = scmp.eq.s32.totalorder %s36, 1
      %p169 = por %p167, %p168
      %p171 = scmp.ne.s32.totalorder %s156, %s170
      %p172 = scmp.eq.s32.totalorder %s36, 0
      %p173 = por %p171, %p172
      %s175 = sadd.s32 %s174, 1
      %p178 = scmp.eq.s32.totalorder %s30, 1
      %p179 = scmp.ne.s32.totalorder %s174, %s176
      %p180 = scmp.eq.s32.totalorder %s30, 0
      %p181 = por %p179, %p180
      %p182 = scmp.ne.s32.totalorder %s174, %s176
      %p183 = scmp.eq.s32.totalorder %s35, 1
      %p184 = por %p182, %p183
      %p185 = scmp.ne.s32.totalorder %s176, %s177
      %p186 = scmp.eq.s32.totalorder %s35, 0
      %p187 = por %p185, %p186
      %p188 = scmp.ne.s32.totalorder %s176, %s177
      %p189 = scmp.eq.s32.totalorder %s36, 1
      %p190 = por %p188, %p189
      %p192 = scmp.ne.s32.totalorder %s177, %s191
      %p193 = scmp.eq.s32.totalorder %s36, 0
      %p194 = por %p192, %p193
      %s196 = sadd.s32 %s195, 1
      %p199 = scmp.eq.s32.totalorder %s30, 1
      %p200 = scmp.ne.s32.totalorder %s195, %s197
      %p201 = scmp.eq.s32.totalorder %s30, 0
      %p202 = por %p200, %p201
      %p203 = scmp.ne.s32.totalorder %s195, %s197
      %p204 = scmp.eq.s32.totalorder %s35, 1
      %p205 = por %p203, %p204
      %p206 = scmp.ne.s32.totalorder %s197, %s198
      %p207 = scmp.eq.s32.totalorder %s35, 0
      %p208 = por %p206, %p207
      %p209 = scmp.ne.s32.totalorder %s197, %s198
      %p210 = scmp.eq.s32.totalorder %s36, 1
      %p211 = por %p209, %p210
      %p213 = scmp.ne.s32.totalorder %s198, %s212
      %p214 = scmp.eq.s32.totalorder %s36, 0
      %p215 = por %p213, %p214
      %s217 = sadd.s32 %s216, 1
      %p220 = scmp.eq.s32.totalorder %s30, 1
      %p221 = scmp.ne.s32.totalorder %s216, %s218
      %p222 = scmp.eq.s32.totalorder %s30, 0
      %p223 = por %p221, %p222
      %p224 = scmp.ne.s32.totalorder %s216, %s218
      %p225 = scmp.eq.s32.totalorder %s35, 1
      %p226 = por %p224, %p225
      %p227 = scmp.ne.s32.totalorder %s218, %s219
      %p228 = scmp.eq.s32.totalorder %s35, 0
      %p229 = por %p227, %p228
      %p230 = scmp.ne.s32.totalorder %s218, %s219
      %p231 = scmp.eq.s32.totalorder %s36, 1
      %p232 = por %p230, %p231
      %p234 = scmp.ne.s32.totalorder %s219, %s233
      %p235 = scmp.eq.s32.totalorder %s36, 0
      %p236 = por %p234, %p235
      %s238 = sadd.s32 %s237, 1
      %p241 = scmp.eq.s32.totalorder %s30, 1
      %p242 = scmp.ne.s32.totalorder %s237, %s239
      %p243 = scmp.eq.s32.totalorder %s30, 0
      %p244 = por %p242, %p243
      %p245 = scmp.ne.s32.totalorder %s237, %s239
      %p246 = scmp.eq.s32.totalorder %s35, 1
      %p247 = por %p245, %p246
      %p248 = scmp.ne.s32.totalorder %s239, %s240
      %p249 = scmp.eq.s32.totalorder %s35, 0
      %p250 = por %p248, %p249
      %p251 = scmp.ne.s32.totalorder %s239, %s240
      %p252 = scmp.eq.s32.totalorder %s36, 1
      %p253 = por %p251, %p252
      %p255 = scmp.ne.s32.totalorder %s240, %s254
      %p256 = scmp.eq.s32.totalorder %s36, 0
      %p257 = por %p255, %p256
      %s259 = sadd.s32 %s258, 1
      %p262 = scmp.eq.s32.totalorder %s30, 1
      %p263 = scmp.ne.s32.totalorder %s258, %s260
      %p264 = scmp.eq.s32.totalorder %s30, 0
      %p265 = por %p263, %p264
      %p266 = scmp.ne.s32.totalorder %s258, %s260
      %p267 = scmp.eq.s32.totalorder %s35, 1
      %p268 = por %p266, %p267
      %p269 = scmp.ne.s32.totalorder %s260, %s261
      %p270 = scmp.eq.s32.totalorder %s35, 0
      %p271 = por %p269, %p270
      %p272 = scmp.ne.s32.totalorder %s260, %s261
      %p273 = scmp.eq.s32.totalorder %s36, 1
      %p274 = por %p272, %p273
      %p276 = scmp.ne.s32.totalorder %s261, %s275
      %p277 = scmp.eq.s32.totalorder %s36, 0
      %p278 = por %p276, %p277
      %s280 = sadd.s32 %s279, 1
      %p283 = scmp.eq.s32.totalorder %s30, 1
      %p284 = scmp.ne.s32.totalorder %s279, %s281
      %p285 = scmp.eq.s32.totalorder %s30, 0
      %p286 = por %p284, %p285
      %p287 = scmp.ne.s32.totalorder %s279, %s281
      %p288 = scmp.eq.s32.totalorder %s35, 1
      %p289 = por %p287, %p288
      %p290 = scmp.ne.s32.totalorder %s281, %s282
      %p291 = scmp.eq.s32.totalorder %s35, 0
      %p292 = por %p290, %p291
      %p293 = scmp.ne.s32.totalorder %s281, %s282
      %p294 = scmp.eq.s32.totalorder %s36, 1
      %p295 = por %p293, %p294
      %p297 = scmp.ne.s32.totalorder %s282, %s296
      %p298 = scmp.eq.s32.totalorder %s36, 0
      %p299 = por %p297, %p298
      %s301 = sadd.s32 %s300, 1
      %p304 = scmp.eq.s32.totalorder %s30, 1
      %p305 = scmp.ne.s32.totalorder %s300, %s302
      %p306 = scmp.eq.s32.totalorder %s30, 0
      %p307 = por %p305, %p306
      %p308 = scmp.ne.s32.totalorder %s300, %s302
      %p309 = scmp.eq.s32.totalorder %s35, 1
      %p310 = por %p308, %p309
      %p311 = scmp.ne.s32.totalorder %s302, %s303
      %p312 = scmp.eq.s32.totalorder %s35, 0
      %p313 = por %p311, %p312
      %p314 = scmp.ne.s32.totalorder %s302, %s303
      %p315 = scmp.eq.s32.totalorder %s36, 1
      %p316 = por %p314, %p315
      %p318 = scmp.ne.s32.totalorder %s303, %s317
      %p319 = scmp.eq.s32.totalorder %s36, 0
      %p320 = por %p318, %p319
      %s322 = sadd.s32 %s321, 1
      %p325 = scmp.eq.s32.totalorder %s30, 1
      %p326 = scmp.ne.s32.totalorder %s321, %s323
      %p327 = scmp.eq.s32.totalorder %s30, 0
      %p328 = por %p326, %p327
      %p329 = scmp.ne.s32.totalorder %s321, %s323
      %p330 = scmp.eq.s32.totalorder %s35, 1
      %p331 = por %p329, %p330
      %p332 = scmp.ne.s32.totalorder %s323, %s324
      %p333 = scmp.eq.s32.totalorder %s35, 0
      %p334 = por %p332, %p333
      %p335 = scmp.ne.s32.totalorder %s323, %s324
      %p336 = scmp.eq.s32.totalorder %s36, 1
      %p337 = por %p335, %p336
      %p339 = scmp.ne.s32.totalorder %s324, %s338
      %p340 = scmp.eq.s32.totalorder %s36, 0
      %p341 = por %p339, %p340
      %s343 = sadd.s32 %s342, 1
      %p346 = scmp.eq.s32.totalorder %s30, 1
      %p347 = scmp.ne.s32.totalorder %s342, %s344
      %p348 = scmp.eq.s32.totalorder %s30, 0
      %p349 = por %p347, %p348
      %p350 = scmp.ne.s32.totalorder %s342, %s344
      %p351 = scmp.eq.s32.totalorder %s35, 1
      %p352 = por %p350, %p351
      %p353 = scmp.ne.s32.totalorder %s344, %s345
      %p354 = scmp.eq.s32.totalorder %s35, 0
      %p355 = por %p353, %p354
      %p356 = scmp.ne.s32.totalorder %s344, %s345
      %p357 = scmp.eq.s32.totalorder %s36, 1
      %p358 = por %p356, %p357
      %p360 = scmp.ne.s32.totalorder %s345, %s359
      %p361 = scmp.eq.s32.totalorder %s36, 0
      %p362 = por %p360, %p361
      %s364 = sadd.s32 %s363, 1
      %p367 = scmp.eq.s32.totalorder %s30, 1
      %p368 = scmp.ne.s32.totalorder %s363, %s365
      %p369 = scmp.eq.s32.totalorder %s30, 0
      %p370 = por %p368, %p369
      %p371 = scmp.ne.s32.totalorder %s363, %s365
      %p372 = scmp.eq.s32.totalorder %s35, 1
      %p373 = por %p371, %p372
      %p374 = scmp.ne.s32.totalorder %s365, %s366
      %p375 = scmp.eq.s32.totalorder %s35, 0
      %p376 = por %p374, %p375
      %p377 = scmp.ne.s32.totalorder %s365, %s366
      %p378 = scmp.eq.s32.totalorder %s36, 1
      %p379 = por %p377, %p378
      %p381 = scmp.ne.s32.totalorder %s366, %s380
      %p382 = scmp.eq.s32.totalorder %s36, 0
      %p383 = por %p381, %p382
      %s384 = ssub.s32 %s30, %s37
      %p385 = scmp.eq.s32.totalorder %s384, 0
      %s387 = sadd.s32 %s386, 1
      %s388 = scalar_select %p385, %s386, %s387
      %p391 = pneg %p385
      %p392 = scmp.eq.s32.totalorder %s30, 1
      %p393 = por %p391, %p392
      %p394 = scmp.ne.s32.totalorder %s386, %s389
      %p395 = scmp.eq.s32.totalorder %s30, 0
      %p396 = por %p394, %p395
      %p397 = scmp.ne.s32.totalorder %s386, %s389
      %p398 = scmp.eq.s32.totalorder %s35, 1
      %p399 = por %p397, %p398
      %p400 = scmp.ne.s32.totalorder %s389, %s390
      %p401 = scmp.eq.s32.totalorder %s35, 0
      %p402 = por %p400, %p401
      %p403 = scmp.ne.s32.totalorder %s389, %s390
      %p404 = scmp.eq.s32.totalorder %s36, 1
      %p405 = por %p403, %p404
      %p407 = scmp.ne.s32.totalorder %s390, %s406
      %p408 = scmp.eq.s32.totalorder %s36, 0
      %p409 = por %p407, %p408
      %p410 = scmp.le.s32.totalorder 1, %s30
      %p411 = scmp.lt.s32.totalorder %s30, 3
      %p412 = pnand %p410, %p411
      %p413 = pneg %p412
      // Predicated region
      $region9: #{transformer_decoder_forward.6} parent=5 // pred_check
        _
      $region10: #{transformer_decoder_forward.6} parent=5 // pred_check_branch
        %415 = sbr.rel (%p412) target = $region12
      $region11: #{transformer_decoder_forward.6} parent=5 // pred_region
        %s416 = ssub.s32 %s30, 1
        // Predicated region
        $region13: #{transformer_decoder_forward.6} parent=11 // pred_check
          %p417 = pneg %p103
        $region14: #{transformer_decoder_forward.6} parent=11 // pred_check_branch
          %419 = sbr.rel (%p417) target = $region16
        $region15: #{transformer_decoder_forward.6} parent=11 // pred_region
          %s421 = ssub.s32 256, 256
          %422 = vsyncadd [#allocation3], %s421
          %s423 = sshll.u32 [#allocation2], 4
          %s424 = int_to_ptr.vmem [resolvable:$true] %s423
          %429 = dma.hbm_to_vmem [thread:$0]  %s2, 256, %s424, [#allocation3], 64, 64, 4
        $region16: #{transformer_decoder_forward.6} parent=11 // pred_fallthru
          _
        // Predicated region
        $region17: #{transformer_decoder_forward.6} parent=11 // pred_check
          %p430 = pneg %p124
        $region18: #{transformer_decoder_forward.6} parent=11 // pred_check_branch
          %432 = sbr.rel (%p430) target = $region20
        $region19: #{transformer_decoder_forward.6} parent=11 // pred_region
          %s434 = ssub.s32 16, 16
          %435 = vsyncadd [#allocation5], %s434
          %s437 = sshll.u32 [#allocation4], 4
          %s438 = int_to_ptr.vmem [resolvable:$true] %s437
          %440 = dma.hbm_to_vmem [thread:$0]  %s3, 16, %s438, [#allocation5]
        $region20: #{transformer_decoder_forward.6} parent=11 // pred_fallthru
          _
        // Predicated region
        $region21: #{transformer_decoder_forward.6} parent=11 // pred_check
          %p441 = pneg %p145
        $region22: #{transformer_decoder_forward.6} parent=11 // pred_check_branch
          %443 = sbr.rel (%p441) target = $region24
        $region23: #{transformer_decoder_forward.6} parent=11 // pred_region
          %s445 = ssub.s32 256, 256
          %446 = vsyncadd [#allocation5], %s445
          %s447 = sshll.u32 [#allocation6], 4
          %s448 = int_to_ptr.vmem [resolvable:$true] %s447
          %453 = dma.hbm_to_vmem [thread:$0]  %s4, 256, %s448, [#allocation5], 64, 64, 4
        $region24: #{transformer_decoder_forward.6} parent=11 // pred_fallthru
          _
        // Predicated region
        $region25: #{transformer_decoder_forward.6} parent=11 // pred_check
          %p454 = pneg %p166
        $region26: #{transformer_decoder_forward.6} parent=11 // pred_check_branch
          %456 = sbr.rel (%p454) target = $region28
        $region27: #{transformer_decoder_forward.6} parent=11 // pred_region
          %s458 = ssub.s32 16, 16
          %459 = vsyncadd [#allocation8], %s458
          %s461 = sshll.u32 [#allocation7], 4
          %s462 = int_to_ptr.vmem [resolvable:$true] %s461
          %464 = dma.hbm_to_vmem [thread:$0]  %s5, 16, %s462, [#allocation8]
        $region28: #{transformer_decoder_forward.6} parent=11 // pred_fallthru
          _
        // Predicated region
        $region29: #{transformer_decoder_forward.6} parent=11 // pred_check
          %p465 = pneg %p187
        $region30: #{transformer_decoder_forward.6} parent=11 // pred_check_branch
          %467 = sbr.rel (%p465) target = $region32
        $region31: #{transformer_decoder_forward.6} parent=11 // pred_region
          %s469 = ssub.s32 16, 16
          %470 = vsyncadd [#allocation8], %s469
          %s472 = sshll.u32 [#allocation9], 4
          %s473 = int_to_ptr.vmem [resolvable:$true] %s472
          %475 = dma.hbm_to_vmem [thread:$0]  %s6, 16, %s473, [#allocation8]
        $region32: #{transformer_decoder_forward.6} parent=11 // pred_fallthru
          _
        // Predicated region
        $region33: #{transformer_decoder_forward.6} parent=11 // pred_check
          %p476 = pneg %p208
        $region34: #{transformer_decoder_forward.6} parent=11 // pred_check_branch
          %478 = sbr.rel (%p476) target = $region36
        $region35: #{transformer_decoder_forward.6} parent=11 // pred_region
          %s480 = ssub.s32 16, 16
          %481 = vsyncadd [#allocation11], %s480
          %s483 = sshll.u32 [#allocation10], 4
          %s484 = int_to_ptr.vmem [resolvable:$true] %s483
          %486 = dma.hbm_to_vmem [thread:$0]  %s7, 16, %s484, [#allocation11]
        $region36: #{transformer_decoder_forward.6} parent=11 // pred_fallthru
          _
        // Predicated region
        $region37: #{transformer_decoder_forward.6} parent=11 // pred_check
          %p487 = pneg %p229
        $region38: #{transformer_decoder_forward.6} parent=11 // pred_check_branch
          %489 = sbr.rel (%p487) target = $region40
        $region39: #{transformer_decoder_forward.6} parent=11 // pred_region
          %s491 = ssub.s32 256, 256
          %492 = vsyncadd [#allocation11], %s491
          %s493 = sshll.u32 [#allocation12], 4
          %s494 = int_to_ptr.vmem [resolvable:$true] %s493
          %499 = dma.hbm_to_vmem [thread:$0]  %s8, 256, %s494, [#allocation11], 64, 64, 4
        $region40: #{transformer_decoder_forward.6} parent=11 // pred_fallthru
          _
        // Predicated region
        $region41: #{transformer_decoder_forward.6} parent=11 // pred_check
          %p500 = pneg %p250
        $region42: #{transformer_decoder_forward.6} parent=11 // pred_check_branch
          %502 = sbr.rel (%p500) target = $region44
        $region43: #{transformer_decoder_forward.6} parent=11 // pred_region
          %s504 = ssub.s32 16, 16
          %505 = vsyncadd [#allocation14], %s504
          %s507 = sshll.u32 [#allocation13], 4
          %s508 = int_to_ptr.vmem [resolvable:$true] %s507
          %510 = dma.hbm_to_vmem [thread:$0]  %s9, 16, %s508, [#allocation14]
        $region44: #{transformer_decoder_forward.6} parent=11 // pred_fallthru
          _
        // Predicated region
        $region45: #{transformer_decoder_forward.6} parent=11 // pred_check
          %p511 = pneg %p271
        $region46: #{transformer_decoder_forward.6} parent=11 // pred_check_branch
          %513 = sbr.rel (%p511) target = $region48
        $region47: #{transformer_decoder_forward.6} parent=11 // pred_region
          %s515 = ssub.s32 256, 256
          %516 = vsyncadd [#allocation14], %s515
          %s517 = sshll.u32 [#allocation15], 4
          %s518 = int_to_ptr.vmem [resolvable:$true] %s517
          %523 = dma.hbm_to_vmem [thread:$0]  %s10, 256, %s518, [#allocation14], 64, 64, 4
        $region48: #{transformer_decoder_forward.6} parent=11 // pred_fallthru
          _
        // Predicated region
        $region49: #{transformer_decoder_forward.6} parent=11 // pred_check
          %p524 = pneg %p292
        $region50: #{transformer_decoder_forward.6} parent=11 // pred_check_branch
          %526 = sbr.rel (%p524) target = $region52
        $region51: #{transformer_decoder_forward.6} parent=11 // pred_region
          %s528 = ssub.s32 16, 16
          %529 = vsyncadd [#allocation17], %s528
          %s531 = sshll.u32 [#allocation16], 4
          %s532 = int_to_ptr.vmem [resolvable:$true] %s531
          %534 = dma.hbm_to_vmem [thread:$0]  %s11, 16, %s532, [#allocation17]
        $region52: #{transformer_decoder_forward.6} parent=11 // pred_fallthru
          _
        // Predicated region
        $region53: #{transformer_decoder_forward.6} parent=11 // pred_check
          %p535 = pneg %p313
        $region54: #{transformer_decoder_forward.6} parent=11 // pred_check_branch
          %537 = sbr.rel (%p535) target = $region56
        $region55: #{transformer_decoder_forward.6} parent=11 // pred_region
          %s539 = ssub.s32 256, 256
          %540 = vsyncadd [#allocation17], %s539
          %s541 = sshll.u32 [#allocation18], 4
          %s542 = int_to_ptr.vmem [resolvable:$true] %s541
          %547 = dma.hbm_to_vmem [thread:$0]  %s12, 256, %s542, [#allocation17], 64, 64, 4
        $region56: #{transformer_decoder_forward.6} parent=11 // pred_fallthru
          _
        // Predicated region
        $region57: #{transformer_decoder_forward.6} parent=11 // pred_check
          %p548 = pneg %p334
        $region58: #{transformer_decoder_forward.6} parent=11 // pred_check_branch
          %550 = sbr.rel (%p548) target = $region60
        $region59: #{transformer_decoder_forward.6} parent=11 // pred_region
          %s552 = ssub.s32 16, 16
          %553 = vsyncadd [#allocation20], %s552
          %s555 = sshll.u32 [#allocation19], 4
          %s556 = int_to_ptr.vmem [resolvable:$true] %s555
          %558 = dma.hbm_to_vmem [thread:$0]  %s13, 16, %s556, [#allocation20]
        $region60: #{transformer_decoder_forward.6} parent=11 // pred_fallthru
          _
        // Predicated region
        $region61: #{transformer_decoder_forward.6} parent=11 // pred_check
          %p559 = pneg %p355
        $region62: #{transformer_decoder_forward.6} parent=11 // pred_check_branch
          %561 = sbr.rel (%p559) target = $region64
        $region63: #{transformer_decoder_forward.6} parent=11 // pred_region
          %s563 = ssub.s32 16, 16
          %564 = vsyncadd [#allocation20], %s563
          %s566 = sshll.u32 [#allocation21], 4
          %s567 = int_to_ptr.vmem [resolvable:$true] %s566
          %569 = dma.hbm_to_vmem [thread:$0]  %s14, 16, %s567, [#allocation20]
        $region64: #{transformer_decoder_forward.6} parent=11 // pred_fallthru
          _
        // Predicated region
        $region65: #{transformer_decoder_forward.6} parent=11 // pred_check
          %p570 = pneg %p376
        $region66: #{transformer_decoder_forward.6} parent=11 // pred_check_branch
          %572 = sbr.rel (%p570) target = $region68
        $region67: #{transformer_decoder_forward.6} parent=11 // pred_region
          %s574 = ssub.s32 16, 16
          %575 = vsyncadd [#allocation23], %s574
          %s577 = sshll.u32 [#allocation22], 4
          %s578 = int_to_ptr.vmem [resolvable:$true] %s577
          %580 = dma.hbm_to_vmem [thread:$0]  %s15, 16, %s578, [#allocation23]
        $region68: #{transformer_decoder_forward.6} parent=11 // pred_fallthru
          _
      $region12: #{transformer_decoder_forward.6} parent=5 // pred_fallthru
        _
      %p581 = scmp.lt.s32.totalorder %s30, 2
      // Predicated region
      $region69: #{transformer_decoder_forward.6} parent=5 // pred_check
        %p582 = pneg %p581
      $region70: #{transformer_decoder_forward.6} parent=5 // pred_check_branch
        %584 = sbr.rel (%p582) target = $region72
      $region71: #{transformer_decoder_forward.6} parent=5 // pred_region
        // Predicated region
        $region73: #{transformer_decoder_forward.6} parent=71 // pred_check
          %p585 = pneg %p50
        $region74: #{transformer_decoder_forward.6} parent=71 // pred_check_branch
          %587 = sbr.rel (%p585) target = $region76
        $region75: #{transformer_decoder_forward.6} parent=71 // pred_region
          %p588 = scmp.lt.s32.totalorder %s30, 1
          %s589 = scalar_select %p588, %s30, 1
          %s590 = smul.addr %s589, 4
          %s591 = scalar_lea.vmem %s0, %s590
        $region76: #{transformer_decoder_forward.6} parent=71 // pred_fallthru
          _
        // Predicated region
        $region77: #{transformer_decoder_forward.6} parent=71 // pred_check
          %p592 = pneg %p76
        $region78: #{transformer_decoder_forward.6} parent=71 // pred_check_branch
          %594 = sbr.rel (%p592) target = $region80
        $region79: #{transformer_decoder_forward.6} parent=71 // pred_region
          %p595 = scmp.lt.s32.totalorder %s30, 1
          %s596 = scalar_select %p595, %s30, 1
          %s597 = smul.addr %s596, 4
          %s598 = scalar_lea.vmem %s1, %s597
        $region80: #{transformer_decoder_forward.6} parent=71 // pred_fallthru
          _
      $region72: #{transformer_decoder_forward.6} parent=5 // pred_fallthru
        _
      %p599 = scmp.le.s32.totalorder 1, %s30
      %p600 = scmp.lt.s32.totalorder %s30, 3
      %p601 = pnand %p599, %p600
      %p602 = pneg %p601
      // Predicated region
      $region81: #{transformer_decoder_forward.6} parent=5 // pred_check
        _
      $region82: #{transformer_decoder_forward.6} parent=5 // pred_check_branch
        %604 = sbr.rel (%p601) target = $region84
      $region83: #{transformer_decoder_forward.6} parent=5 // pred_region
        %s605 = ssub.s32 %s30, 1
        // Predicated region
        $region85: #{transformer_decoder_forward.6} parent=83 // pred_check
          %p606 = pneg %p103
        $region86: #{transformer_decoder_forward.6} parent=83 // pred_check_branch
          %608 = sbr.rel (%p606) target = $region88
        $region87: #{transformer_decoder_forward.6} parent=83 // pred_region
          %609 = dma.done [#allocation3], 256
        $region88: #{transformer_decoder_forward.6} parent=83 // pred_fallthru
          _
        // Predicated region
        $region89: #{transformer_decoder_forward.6} parent=83 // pred_check
          %p610 = pneg %p124
        $region90: #{transformer_decoder_forward.6} parent=83 // pred_check_branch
          %612 = sbr.rel (%p610) target = $region92
        $region91: #{transformer_decoder_forward.6} parent=83 // pred_region
          %613 = dma.done [#allocation5], 16
        $region92: #{transformer_decoder_forward.6} parent=83 // pred_fallthru
          _
        // Predicated region
        $region93: #{transformer_decoder_forward.6} parent=83 // pred_check
          %p614 = pneg %p145
        $region94: #{transformer_decoder_forward.6} parent=83 // pred_check_branch
          %616 = sbr.rel (%p614) target = $region96
        $region95: #{transformer_decoder_forward.6} parent=83 // pred_region
          %617 = dma.done [#allocation5], 256
        $region96: #{transformer_decoder_forward.6} parent=83 // pred_fallthru
          _
        // Predicated region
        $region97: #{transformer_decoder_forward.6} parent=83 // pred_check
          %p618 = pneg %p166
        $region98: #{transformer_decoder_forward.6} parent=83 // pred_check_branch
          %620 = sbr.rel (%p618) target = $region100
        $region99: #{transformer_decoder_forward.6} parent=83 // pred_region
          %621 = dma.done [#allocation8], 16
        $region100: #{transformer_decoder_forward.6} parent=83 // pred_fallthru
          _
        // Predicated region
        $region101: #{transformer_decoder_forward.6} parent=83 // pred_check
          %p622 = pneg %p187
        $region102: #{transformer_decoder_forward.6} parent=83 // pred_check_branch
          %624 = sbr.rel (%p622) target = $region104
        $region103: #{transformer_decoder_forward.6} parent=83 // pred_region
          %625 = dma.done [#allocation8], 16
        $region104: #{transformer_decoder_forward.6} parent=83 // pred_fallthru
          _
        // Predicated region
        $region105: #{transformer_decoder_forward.6} parent=83 // pred_check
          %p626 = pneg %p208
        $region106: #{transformer_decoder_forward.6} parent=83 // pred_check_branch
          %628 = sbr.rel (%p626) target = $region108
        $region107: #{transformer_decoder_forward.6} parent=83 // pred_region
          %629 = dma.done [#allocation11], 16
        $region108: #{transformer_decoder_forward.6} parent=83 // pred_fallthru
          _
        // Predicated region
        $region109: #{transformer_decoder_forward.6} parent=83 // pred_check
          %p630 = pneg %p229
        $region110: #{transformer_decoder_forward.6} parent=83 // pred_check_branch
          %632 = sbr.rel (%p630) target = $region112
        $region111: #{transformer_decoder_forward.6} parent=83 // pred_region
          %633 = dma.done [#allocation11], 256
        $region112: #{transformer_decoder_forward.6} parent=83 // pred_fallthru
          _
        // Predicated region
        $region113: #{transformer_decoder_forward.6} parent=83 // pred_check
          %p634 = pneg %p250
        $region114: #{transformer_decoder_forward.6} parent=83 // pred_check_branch
          %636 = sbr.rel (%p634) target = $region116
        $region115: #{transformer_decoder_forward.6} parent=83 // pred_region
          %637 = dma.done [#allocation14], 16
        $region116: #{transformer_decoder_forward.6} parent=83 // pred_fallthru
          _
        // Predicated region
        $region117: #{transformer_decoder_forward.6} parent=83 // pred_check
          %p638 = pneg %p271
        $region118: #{transformer_decoder_forward.6} parent=83 // pred_check_branch
          %640 = sbr.rel (%p638) target = $region120
        $region119: #{transformer_decoder_forward.6} parent=83 // pred_region
          %641 = dma.done [#allocation14], 256
        $region120: #{transformer_decoder_forward.6} parent=83 // pred_fallthru
          _
        // Predicated region
        $region121: #{transformer_decoder_forward.6} parent=83 // pred_check
          %p642 = pneg %p292
        $region122: #{transformer_decoder_forward.6} parent=83 // pred_check_branch
          %644 = sbr.rel (%p642) target = $region124
        $region123: #{transformer_decoder_forward.6} parent=83 // pred_region
          %645 = dma.done [#allocation17], 16
        $region124: #{transformer_decoder_forward.6} parent=83 // pred_fallthru
          _
        // Predicated region
        $region125: #{transformer_decoder_forward.6} parent=83 // pred_check
          %p646 = pneg %p313
        $region126: #{transformer_decoder_forward.6} parent=83 // pred_check_branch
          %648 = sbr.rel (%p646) target = $region128
        $region127: #{transformer_decoder_forward.6} parent=83 // pred_region
          %649 = dma.done [#allocation17], 256
        $region128: #{transformer_decoder_forward.6} parent=83 // pred_fallthru
          _
        // Predicated region
        $region129: #{transformer_decoder_forward.6} parent=83 // pred_check
          %p650 = pneg %p334
        $region130: #{transformer_decoder_forward.6} parent=83 // pred_check_branch
          %652 = sbr.rel (%p650) target = $region132
        $region131: #{transformer_decoder_forward.6} parent=83 // pred_region
          %653 = dma.done [#allocation20], 16
        $region132: #{transformer_decoder_forward.6} parent=83 // pred_fallthru
          _
        // Predicated region
        $region133: #{transformer_decoder_forward.6} parent=83 // pred_check
          %p654 = pneg %p355
        $region134: #{transformer_decoder_forward.6} parent=83 // pred_check_branch
          %656 = sbr.rel (%p654) target = $region136
        $region135: #{transformer_decoder_forward.6} parent=83 // pred_region
          %657 = dma.done [#allocation20], 16
        $region136: #{transformer_decoder_forward.6} parent=83 // pred_fallthru
          _
        // Predicated region
        $region137: #{transformer_decoder_forward.6} parent=83 // pred_check
          %p658 = pneg %p376
        $region138: #{transformer_decoder_forward.6} parent=83 // pred_check_branch
          %660 = sbr.rel (%p658) target = $region140
        $region139: #{transformer_decoder_forward.6} parent=83 // pred_region
          %661 = dma.done [#allocation23], 16
        $region140: #{transformer_decoder_forward.6} parent=83 // pred_fallthru
          _
        %p662 = scmp.lt.s32.totalorder %s35, 1
        %s663 = scalar_select %p662, %s35, 1
        %s664 = smul.addr %s663, 4
        %s665 = scalar_lea.vmem %s0, %s664
        %p666 = pneg %p56
        %p667 = pneg %p53
        %p668 = scmp.lt.s32.totalorder %s35, 1
        %s669 = scalar_select %p668, %s35, 1
        %s670 = smul.addr %s669, 4
        %s671 = scalar_lea.vmem %s1, %s670
        %p672 = pneg %p82
        %p673 = pneg %p79
        %p674 = pneg %p103
        %p675 = pneg %p100
        %p676 = pneg %p124
        %p677 = pneg %p121
        %p678 = pneg %p145
        %p679 = pneg %p142
        %p680 = pneg %p166
        %p681 = pneg %p163
        %p682 = pneg %p187
        %p683 = pneg %p184
        %p684 = pneg %p208
        %p685 = pneg %p205
        %p686 = pneg %p229
        %p687 = pneg %p226
        %p688 = pneg %p250
        %p689 = pneg %p247
        %p690 = pneg %p271
        %p691 = pneg %p268
        %p692 = pneg %p292
        %p693 = pneg %p289
        %p694 = pneg %p313
        %p695 = pneg %p310
        %p696 = pneg %p334
        %p697 = pneg %p331
        %p698 = pneg %p355
        %p699 = pneg %p352
        %p700 = pneg %p376
        %p701 = pneg %p373
        %p702 = pneg %p402
        %p703 = pneg %p399
        %p704 = scmp.lt.s32.totalorder %s35, 1
        %s705 = scalar_select %p704, %s35, 1
        %s706 = smul.addr %s705, 4
        %s707 = scalar_lea.vmem %s16, %s706
        %p708 = scmp.lt.s32.totalorder %s35, 1
        %s709 = scalar_select %p708, %s35, 1
        %s710 = smul.addr %s709, 4
        %s711 = scalar_lea.vmem %s0, %s710
        %p712 = scmp.lt.s32.totalorder %s35, 1
        %s713 = scalar_select %p712, %s35, 1
        %s714 = smul.addr %s713, 4
        %s715 = scalar_lea.vmem %s1, %s714
        %p716 = scmp.lt.s32.totalorder %s35, 1
        %s717 = scalar_select %p716, %s35, 1
        %s718 = smul.addr %s717, 4
        %s719 = scalar_lea.vmem %s16, %s718
        %v721 = vld [vmem:[%s711] sm:$0xf]
        %v722 = vunpack.c.l.bf16 %v721
        %v723 = vld [vmem:[%s715] sm:$0xf]
        %v724 = vld [vmem:[#allocation2] sm:$0xf]
        %v725 = vld [vmem:[#allocation2 + $0x4] sm:$0xf]
        %v726 = vld [vmem:[#allocation2 + $0x8] sm:$0xf]
        %v727 = vld [vmem:[#allocation2 + $0xc] sm:$0xf]
        %v728 = vld [vmem:[#allocation4] sm:$0x1]
        %v730 = vlaneseq
        %v731 = vshrl.u32 %v730, 7
        %v732 = vsub.s32 0, %v731
        %v733 = vrot.slane %v728, %v732
        %v739 = vunpack.c.l.b16 %v724
        %v740 = vunpack.c.l.b16 %v725
        %v741 = vunpack.c.l.b16 %v726
        %v742 = vunpack.c.l.b16 %v727
        %v743 = vpack.c.b16 %v740, %v739
        %v744 = vpack.c.b16 %v742, %v741
        %vm747 = vcmask 261120
        %v749 = vsel %vm747, %v721, 0
        %751 = vmatprep.subr.bf16.mxu0 0
        %752 = vmatpush1.bf16.msra.mxu0 %v743
        %753 = vmatprep.subr.bf16.mxu0 0
        %754 = vmatpush1.bf16.msra.mxu0 %v744
        %755 = vmatprep.subr.bf16.mxu0 0
        %756 = vmatpush1.bf16.msra.mxu0 0
        %757 = vmatprep.subr.bf16.mxu0 0
        %758 = vmatpush1.bf16.msra.mxu0 0
        %759 = vmatprep.subr.bf16.mxu0 0
        %760 = vmatpush1.bf16.msra.mxu0 0
        %761 = vmatprep.subr.bf16.mxu0 0
        %762 = vmatpush1.bf16.msra.mxu0 0
        %763 = vmatprep.subr.bf16.mxu0 0
        %764 = vmatpush1.bf16.msra.mxu0 0
        %765 = vmatprep.subr.bf16.mxu0 0
        %766 = vmatpush1.bf16.msra.mxu0 0
        %767 = vmatprep.subr.bf16.mxu0 0
        %768 = vmatpush1.bf16.msra.mxu0 0
        %769 = vmatprep.subr.bf16.mxu0 0
        %770 = vmatpush1.bf16.msra.mxu0 0
        %771 = vmatprep.subr.bf16.mxu0 0
        %772 = vmatpush1.bf16.msra.mxu0 0
        %773 = vmatprep.subr.bf16.mxu0 0
        %774 = vmatpush1.bf16.msra.mxu0 0
        %775 = vmatprep.subr.bf16.mxu0 0
        %776 = vmatpush1.bf16.msra.mxu0 0
        %777 = vmatprep.subr.bf16.mxu0 0
        %778 = vmatpush1.bf16.msra.mxu0 0
        %779 = vmatprep.subr.bf16.mxu0 0
        %780 = vmatpush1.bf16.msra.mxu0 0
        %781 = vmatprep.subr.bf16.mxu0 0
        %782 = vmatpush1.bf16.msra.mxu0 0
        %783 = vmatprep.mubr.bf16.mxu0 0
        %784 = vmatmul.mubr.bf16.gmra.mrb[0].mxu0 %v749
        %v785 = vpop.f32.mrb[0].mxu0
        %v786 = vadd.f32 %v733, %v785
        %v787 = vpop.f32.mrb[0].mxu0
        %v788 = vpop.f32.mrb[0].mxu0
        %v789 = vpop.f32.mrb[0].mxu0
        %790 = vdwg.mxu0
        %v791 = vpack.c.bf16 %v786, %v786
        %793 = vrot.lane.b32.xlu0 %v791, 96
        %v794 = vpop.permute.xlu0 %793
        %vm795 = vcmask 64512
        %v797 = vsel %vm795, %v791, 0
        %v800 = vsel %vm795, %v794, 0
        %802 = vmatprep.subr.bf16.mxu0 0
        %803 = vmatpush1.bf16.xpose.msra.mxu0 %v800
        %804 = vmatprep.subr.bf16.mxu0 0
        %805 = vmatpush1.bf16.xpose.msra.mxu0 0
        %806 = vmatprep.subr.bf16.mxu0 0
        %807 = vmatpush1.bf16.xpose.msra.mxu0 0
        %808 = vmatprep.subr.bf16.mxu0 0
        %809 = vmatpush1.bf16.xpose.msra.mxu0 0
        %810 = vmatprep.subr.bf16.mxu0 0
        %811 = vmatpush1.bf16.xpose.msra.mxu0 0
        %812 = vmatprep.subr.bf16.mxu0 0
        %813 = vmatpush1.bf16.xpose.msra.mxu0 0
        %814 = vmatprep.subr.bf16.mxu0 0
        %815 = vmatpush1.bf16.xpose.msra.mxu0 0
        %816 = vmatprep.subr.bf16.mxu0 0
        %817 = vmatpush1.bf16.xpose.msra.mxu0 0
        %818 = vmatprep.subr.bf16.mxu0 0
        %819 = vmatpush1.bf16.xpose.msra.mxu0 0
        %820 = vmatprep.subr.bf16.mxu0 0
        %821 = vmatpush1.bf16.xpose.msra.mxu0 0
        %822 = vmatprep.subr.bf16.mxu0 0
        %823 = vmatpush1.bf16.xpose.msra.mxu0 0
        %824 = vmatprep.subr.bf16.mxu0 0
        %825 = vmatpush1.bf16.xpose.msra.mxu0 0
        %826 = vmatprep.subr.bf16.mxu0 0
        %827 = vmatpush1.bf16.xpose.msra.mxu0 0
        %828 = vmatprep.subr.bf16.mxu0 0
        %829 = vmatpush1.bf16.xpose.msra.mxu0 0
        %830 = vmatprep.subr.bf16.mxu0 0
        %831 = vmatpush1.bf16.xpose.msra.mxu0 0
        %832 = vmatprep.subr.bf16.mxu0 0
        %833 = vmatpush1.bf16.xpose.msra.mxu0 0
        %834 = vmatprep.mubr.bf16.mxu0 0
        %835 = vmatmul.mubr.bf16.gmra.mrb[0].mxu0 %v797
        %v836 = vpop.f32.mrb[0].mxu0
        %v837 = vadd.f32 0.0, %v836
        %v838 = vpop.f32.mrb[0].mxu0
        %v839 = vpop.f32.mrb[0].mxu0
        %v840 = vpop.f32.mrb[0].mxu0
        %841 = vdwg.mxu0
        %v842 = vsel %vm795, %v837, -inf
        %843 = vmax.xlane.f32.xlu0 %v842
        %v844 = vpop.xlane.xlu0 %843
        %v845 = vsub.f32 %v837, %v844
        %v846 = vmul.f32 %v845, 1.442695
        %v847 = vpow.pop %v846
        %v848 = vsel %vm795, %v847, 0.0
        %849 = vadd.xlane.f32.xlu0 %v848
        %v850 = vpop.xlane.xlu0 %849
        %v851 = vrcp.pop %v850
        %v852 = vmul.f32 %v847, %v851
        %v853 = vpack.c.bf16 %v852, %v852
        %854 = vrot.lane.b32.xlu0 %v791, 64
        %v855 = vpop.permute.xlu0 %854
        %v857 = vsel %vm795, %v853, 0
        %vm859 = vcmask 1043456
        %v861 = vsel %vm859, %v855, 0
        %863 = vmatprep.subr.bf16.mxu0 0
        %864 = vmatpush1.bf16.msra.mxu0 %v861
        %865 = vmatprep.subr.bf16.mxu0 0
        %866 = vmatpush1.bf16.msra.mxu0 0
        %867 = vmatprep.subr.bf16.mxu0 0
        %868 = vmatpush1.bf16.msra.mxu0 0
        %869 = vmatprep.subr.bf16.mxu0 0
        %870 = vmatpush1.bf16.msra.mxu0 0
        %871 = vmatprep.subr.bf16.mxu0 0
        %872 = vmatpush1.bf16.msra.mxu0 0
        %873 = vmatprep.subr.bf16.mxu0 0
        %874 = vmatpush1.bf16.msra.mxu0 0
        %875 = vmatprep.subr.bf16.mxu0 0
        %876 = vmatpush1.bf16.msra.mxu0 0
        %877 = vmatprep.subr.bf16.mxu0 0
        %878 = vmatpush1.bf16.msra.mxu0 0
        %879 = vmatprep.subr.bf16.mxu0 0
        %880 = vmatpush1.bf16.msra.mxu0 0
        %881 = vmatprep.subr.bf16.mxu0 0
        %882 = vmatpush1.bf16.msra.mxu0 0
        %883 = vmatprep.subr.bf16.mxu0 0
        %884 = vmatpush1.bf16.msra.mxu0 0
        %885 = vmatprep.subr.bf16.mxu0 0
        %886 = vmatpush1.bf16.msra.mxu0 0
        %887 = vmatprep.subr.bf16.mxu0 0
        %888 = vmatpush1.bf16.msra.mxu0 0
        %889 = vmatprep.subr.bf16.mxu0 0
        %890 = vmatpush1.bf16.msra.mxu0 0
        %891 = vmatprep.subr.bf16.mxu0 0
        %892 = vmatpush1.bf16.msra.mxu0 0
        %893 = vmatprep.subr.bf16.mxu0 0
        %894 = vmatpush1.bf16.msra.mxu0 0
        %895 = vmatprep.mubr.bf16.mxu0 0
        %896 = vmatmul.mubr.bf16.gmra.mrb[0].mxu0 %v857
        %v897 = vpop.f32.mrb[0].mxu0
        %v898 = vadd.f32 0.0, %v897
        %v899 = vpop.f32.mrb[0].mxu0
        %v900 = vpop.f32.mrb[0].mxu0
        %v901 = vpop.f32.mrb[0].mxu0
        %902 = vdwg.mxu0
        %903 = vrot.lane.b32.xlu0 %v791, 120
        %v904 = vpop.permute.xlu0 %903
        %905 = vrot.lane.b32.xlu0 %v791, 88
        %v906 = vpop.permute.xlu0 %905
        %v908 = vsel %vm795, %v904, 0
        %v911 = vsel %vm795, %v906, 0
        %913 = vmatprep.subr.bf16.mxu0 0
        %914 = vmatpush1.bf16.xpose.msra.mxu0 %v911
        %915 = vmatprep.subr.bf16.mxu0 0
        %916 = vmatpush1.bf16.xpose.msra.mxu0 0
        %917 = vmatprep.subr.bf16.mxu0 0
        %918 = vmatpush1.bf16.xpose.msra.mxu0 0
        %919 = vmatprep.subr.bf16.mxu0 0
        %920 = vmatpush1.bf16.xpose.msra.mxu0 0
        %921 = vmatprep.subr.bf16.mxu0 0
        %922 = vmatpush1.bf16.xpose.msra.mxu0 0
        %923 = vmatprep.subr.bf16.mxu0 0
        %924 = vmatpush1.bf16.xpose.msra.mxu0 0
        %925 = vmatprep.subr.bf16.mxu0 0
        %926 = vmatpush1.bf16.xpose.msra.mxu0 0
        %927 = vmatprep.subr.bf16.mxu0 0
        %928 = vmatpush1.bf16.xpose.msra.mxu0 0
        %929 = vmatprep.subr.bf16.mxu0 0
        %930 = vmatpush1.bf16.xpose.msra.mxu0 0
        %931 = vmatprep.subr.bf16.mxu0 0
        %932 = vmatpush1.bf16.xpose.msra.mxu0 0
        %933 = vmatprep.subr.bf16.mxu0 0
        %934 = vmatpush1.bf16.xpose.msra.mxu0 0
        %935 = vmatprep.subr.bf16.mxu0 0
        %936 = vmatpush1.bf16.xpose.msra.mxu0 0
        %937 = vmatprep.subr.bf16.mxu0 0
        %938 = vmatpush1.bf16.xpose.msra.mxu0 0
        %939 = vmatprep.subr.bf16.mxu0 0
        %940 = vmatpush1.bf16.xpose.msra.mxu0 0
        %941 = vmatprep.subr.bf16.mxu0 0
        %942 = vmatpush1.bf16.xpose.msra.mxu0 0
        %943 = vmatprep.subr.bf16.mxu0 0
        %944 = vmatpush1.bf16.xpose.msra.mxu0 0
        %945 = vmatprep.mubr.bf16.mxu0 0
        %946 = vmatmul.mubr.bf16.gmra.mrb[0].mxu0 %v908
        %v947 = vpop.f32.mrb[0].mxu0
        %v948 = vadd.f32 0.0, %v947
        %v949 = vpop.f32.mrb[0].mxu0
        %v950 = vpop.f32.mrb[0].mxu0
        %v951 = vpop.f32.mrb[0].mxu0
        %952 = vdwg.mxu0
        %v953 = vsel %vm795, %v948, -inf
        %954 = vmax.xlane.f32.xlu0 %v953
        %v955 = vpop.xlane.xlu0 %954
        %v956 = vsub.f32 %v948, %v955
        %v957 = vmul.f32 %v956, 1.442695
        %v958 = vpow.pop %v957
        %v959 = vsel %vm795, %v958, 0.0
        %960 = vadd.xlane.f32.xlu0 %v959
        %v961 = vpop.xlane.xlu0 %960
        %v962 = vrcp.pop %v961
        %v963 = vmul.f32 %v958, %v962
        %v964 = vpack.c.bf16 %v963, %v963
        %965 = vrot.lane.b32.xlu0 %v791, 56
        %v966 = vpop.permute.xlu0 %965
        %v968 = vsel %vm795, %v964, 0
        %v971 = vsel %vm859, %v966, 0
        %973 = vmatprep.subr.bf16.mxu0 0
        %974 = vmatpush1.bf16.msra.mxu0 %v971
        %975 = vmatprep.subr.bf16.mxu0 0
        %976 = vmatpush1.bf16.msra.mxu0 0
        %977 = vmatprep.subr.bf16.mxu0 0
        %978 = vmatpush1.bf16.msra.mxu0 0
        %979 = vmatprep.subr.bf16.mxu0 0
        %980 = vmatpush1.bf16.msra.mxu0 0
        %981 = vmatprep.subr.bf16.mxu0 0
        %982 = vmatpush1.bf16.msra.mxu0 0
        %983 = vmatprep.subr.bf16.mxu0 0
        %984 = vmatpush1.bf16.msra.mxu0 0
        %985 = vmatprep.subr.bf16.mxu0 0
        %986 = vmatpush1.bf16.msra.mxu0 0
        %987 = vmatprep.subr.bf16.mxu0 0
        %988 = vmatpush1.bf16.msra.mxu0 0
        %989 = vmatprep.subr.bf16.mxu0 0
        %990 = vmatpush1.bf16.msra.mxu0 0
        %991 = vmatprep.subr.bf16.mxu0 0
        %992 = vmatpush1.bf16.msra.mxu0 0
        %993 = vmatprep.subr.bf16.mxu0 0
        %994 = vmatpush1.bf16.msra.mxu0 0
        %995 = vmatprep.subr.bf16.mxu0 0
        %996 = vmatpush1.bf16.msra.mxu0 0
        %997 = vmatprep.subr.bf16.mxu0 0
        %998 = vmatpush1.bf16.msra.mxu0 0
        %999 = vmatprep.subr.bf16.mxu0 0
        %1000 = vmatpush1.bf16.msra.mxu0 0
        %1001 = vmatprep.subr.bf16.mxu0 0
        %1002 = vmatpush1.bf16.msra.mxu0 0
        %1003 = vmatprep.subr.bf16.mxu0 0
        %1004 = vmatpush1.bf16.msra.mxu0 0
        %1005 = vmatprep.mubr.bf16.mxu0 0
        %1006 = vmatmul.mubr.bf16.gmra.mrb[0].mxu0 %v968
        %v1007 = vpop.f32.mrb[0].mxu0
        %v1008 = vadd.f32 0.0, %v1007
        %v1009 = vpop.f32.mrb[0].mxu0
        %v1010 = vpop.f32.mrb[0].mxu0
        %v1011 = vpop.f32.mrb[0].mxu0
        %1012 = vdwg.mxu0
        %1013 = vrot.lane.b32.xlu0 %v791, 112
        %v1014 = vpop.permute.xlu0 %1013
        %1015 = vrot.lane.b32.xlu0 %v791, 80
        %v1016 = vpop.permute.xlu0 %1015
        %v1018 = vsel %vm795, %v1014, 0
        %v1021 = vsel %vm795, %v1016, 0
        %1023 = vmatprep.subr.bf16.mxu0 0
        %1024 = vmatpush1.bf16.xpose.msra.mxu0 %v1021
        %1025 = vmatprep.subr.bf16.mxu0 0
        %1026 = vmatpush1.bf16.xpose.msra.mxu0 0
        %1027 = vmatprep.subr.bf16.mxu0 0
        %1028 = vmatpush1.bf16.xpose.msra.mxu0 0
        %1029 = vmatprep.subr.bf16.mxu0 0
        %1030 = vmatpush1.bf16.xpose.msra.mxu0 0
        %1031 = vmatprep.subr.bf16.mxu0 0
        %1032 = vmatpush1.bf16.xpose.msra.mxu0 0
        %1033 = vmatprep.subr.bf16.mxu0 0
        %1034 = vmatpush1.bf16.xpose.msra.mxu0 0
        %1035 = vmatprep.subr.bf16.mxu0 0
        %1036 = vmatpush1.bf16.xpose.msra.mxu0 0
        %1037 = vmatprep.subr.bf16.mxu0 0
        %1038 = vmatpush1.bf16.xpose.msra.mxu0 0
        %1039 = vmatprep.subr.bf16.mxu0 0
        %1040 = vmatpush1.bf16.xpose.msra.mxu0 0
        %1041 = vmatprep.subr.bf16.mxu0 0
        %1042 = vmatpush1.bf16.xpose.msra.mxu0 0
        %1043 = vmatprep.subr.bf16.mxu0 0
        %1044 = vmatpush1.bf16.xpose.msra.mxu0 0
        %1045 = vmatprep.subr.bf16.mxu0 0
        %1046 = vmatpush1.bf16.xpose.msra.mxu0 0
        %1047 = vmatprep.subr.bf16.mxu0 0
        %1048 = vmatpush1.bf16.xpose.msra.mxu0 0
        %1049 = vmatprep.subr.bf16.mxu0 0
        %1050 = vmatpush1.bf16.xpose.msra.mxu0 0
        %1051 = vmatprep.subr.bf16.mxu0 0
        %1052 = vmatpush1.bf16.xpose.msra.mxu0 0
        %1053 = vmatprep.subr.bf16.mxu0 0
        %1054 = vmatpush1.bf16.xpose.msra.mxu0 0
        %1055 = vmatprep.mubr.bf16.mxu0 0
        %1056 = vmatmul.mubr.bf16.gmra.mrb[0].mxu0 %v1018
        %v1057 = vpop.f32.mrb[0].mxu0
        %v1058 = vadd.f32 0.0, %v1057
        %v1059 = vpop.f32.mrb[0].mxu0
        %v1060 = vpop.f32.mrb[0].mxu0
        %v1061 = vpop.f32.mrb[0].mxu0
        %1062 = vdwg.mxu0
        %v1063 = vsel %vm795, %v1058, -inf
        %1064 = vmax.xlane.f32.xlu0 %v1063
        %v1065 = vpop.xlane.xlu0 %1064
        %v1066 = vsub.f32 %v1058, %v1065
        %v1067 = vmul.f32 %v1066, 1.442695
        %v1068 = vpow.pop %v1067
        %v1069 = vsel %vm795, %v1068, 0.0
        %1070 = vadd.xlane.f32.xlu0 %v1069
        %v1071 = vpop.xlane.xlu0 %1070
        %v1072 = vrcp.pop %v1071
        %v1073 = vmul.f32 %v1068, %v1072
        %v1074 = vpack.c.bf16 %v1073, %v1073
        %1075 = vrot.lane.b32.xlu0 %v791, 48
        %v1076 = vpop.permute.xlu0 %1075
        %v1078 = vsel %vm795, %v1074, 0
        %v1081 = vsel %vm859, %v1076, 0
        %1083 = vmatprep.subr.bf16.mxu0 0
        %1084 = vmatpush1.bf16.msra.mxu0 %v1081
        %1085 = vmatprep.subr.bf16.mxu0 0
        %1086 = vmatpush1.bf16.msra.mxu0 0
        %1087 = vmatprep.subr.bf16.mxu0 0
        %1088 = vmatpush1.bf16.msra.mxu0 0
        %1089 = vmatprep.subr.bf16.mxu0 0
        %1090 = vmatpush1.bf16.msra.mxu0 0
        %1091 = vmatprep.subr.bf16.mxu0 0
        %1092 = vmatpush1.bf16.msra.mxu0 0
        %1093 = vmatprep.subr.bf16.mxu0 0
        %1094 = vmatpush1.bf16.msra.mxu0 0
        %1095 = vmatprep.subr.bf16.mxu0 0
        %1096 = vmatpush1.bf16.msra.mxu0 0
        %1097 = vmatprep.subr.bf16.mxu0 0
        %1098 = vmatpush1.bf16.msra.mxu0 0
        %1099 = vmatprep.subr.bf16.mxu0 0
        %1100 = vmatpush1.bf16.msra.mxu0 0
        %1101 = vmatprep.subr.bf16.mxu0 0
        %1102 = vmatpush1.bf16.msra.mxu0 0
        %1103 = vmatprep.subr.bf16.mxu0 0
        %1104 = vmatpush1.bf16.msra.mxu0 0
        %1105 = vmatprep.subr.bf16.mxu0 0
        %1106 = vmatpush1.bf16.msra.mxu0 0
        %1107 = vmatprep.subr.bf16.mxu0 0
        %1108 = vmatpush1.bf16.msra.mxu0 0
        %1109 = vmatprep.subr.bf16.mxu0 0
        %1110 = vmatpush1.bf16.msra.mxu0 0
        %1111 = vmatprep.subr.bf16.mxu0 0
        %1112 = vmatpush1.bf16.msra.mxu0 0
        %1113 = vmatprep.subr.bf16.mxu0 0
        %1114 = vmatpush1.bf16.msra.mxu0 0
        %1115 = vmatprep.mubr.bf16.mxu0 0
        %1116 = vmatmul.mubr.bf16.gmra.mrb[0].mxu0 %v1078
        %v1117 = vpop.f32.mrb[0].mxu0
        %v1118 = vadd.f32 0.0, %v1117
        %v1119 = vpop.f32.mrb[0].mxu0
        %v1120 = vpop.f32.mrb[0].mxu0
        %v1121 = vpop.f32.mrb[0].mxu0
        %1122 = vdwg.mxu0
        %1123 = vrot.lane.b32.xlu0 %v791, 104
        %v1124 = vpop.permute.xlu0 %1123
        %1125 = vrot.lane.b32.xlu0 %v791, 72
        %v1126 = vpop.permute.xlu0 %1125
        %v1128 = vsel %vm795, %v1124, 0
        %v1131 = vsel %vm795, %v1126, 0
        %1133 = vmatprep.subr.bf16.mxu0 0
        %1134 = vmatpush1.bf16.xpose.msra.mxu0 %v1131
        %1135 = vmatprep.subr.bf16.mxu0 0
        %1136 = vmatpush1.bf16.xpose.msra.mxu0 0
        %1137 = vmatprep.subr.bf16.mxu0 0
        %1138 = vmatpush1.bf16.xpose.msra.mxu0 0
        %1139 = vmatprep.subr.bf16.mxu0 0
        %1140 = vmatpush1.bf16.xpose.msra.mxu0 0
        %1141 = vmatprep.subr.bf16.mxu0 0
        %1142 = vmatpush1.bf16.xpose.msra.mxu0 0
        %1143 = vmatprep.subr.bf16.mxu0 0
        %1144 = vmatpush1.bf16.xpose.msra.mxu0 0
        %1145 = vmatprep.subr.bf16.mxu0 0
        %1146 = vmatpush1.bf16.xpose.msra.mxu0 0
        %1147 = vmatprep.subr.bf16.mxu0 0
        %1148 = vmatpush1.bf16.xpose.msra.mxu0 0
        %1149 = vmatprep.subr.bf16.mxu0 0
        %1150 = vmatpush1.bf16.xpose.msra.mxu0 0
        %1151 = vmatprep.subr.bf16.mxu0 0
        %1152 = vmatpush1.bf16.xpose.msra.mxu0 0
        %1153 = vmatprep.subr.bf16.mxu0 0
        %1154 = vmatpush1.bf16.xpose.msra.mxu0 0
        %1155 = vmatprep.subr.bf16.mxu0 0
        %1156 = vmatpush1.bf16.xpose.msra.mxu0 0
        %1157 = vmatprep.subr.bf16.mxu0 0
        %1158 = vmatpush1.bf16.xpose.msra.mxu0 0
        %1159 = vmatprep.subr.bf16.mxu0 0
        %1160 = vmatpush1.bf16.xpose.msra.mxu0 0
        %1161 = vmatprep.subr.bf16.mxu0 0
        %1162 = vmatpush1.bf16.xpose.msra.mxu0 0
        %1163 = vmatprep.subr.bf16.mxu0 0
        %1164 = vmatpush1.bf16.xpose.msra.mxu0 0
        %1165 = vmatprep.mubr.bf16.mxu0 0
        %1166 = vmatmul.mubr.bf16.gmra.mrb[0].mxu0 %v1128
        %v1167 = vpop.f32.mrb[0].mxu0
        %v1168 = vadd.f32 0.0, %v1167
        %v1169 = vpop.f32.mrb[0].mxu0
        %v1170 = vpop.f32.mrb[0].mxu0
        %v1171 = vpop.f32.mrb[0].mxu0
        %1172 = vdwg.mxu0
        %v1173 = vsel %vm795, %v1168, -inf
        %1174 = vmax.xlane.f32.xlu0 %v1173
        %v1175 = vpop.xlane.xlu0 %1174
        %v1176 = vsub.f32 %v1168, %v1175
        %v1177 = vmul.f32 %v1176, 1.442695
        %v1178 = vpow.pop %v1177
        %v1179 = vsel %vm795, %v1178, 0.0
        %1180 = vadd.xlane.f32.xlu0 %v1179
        %v1181 = vpop.xlane.xlu0 %1180
        %v1182 = vrcp.pop %v1181
        %v1183 = vmul.f32 %v1178, %v1182
        %v1184 = vpack.c.bf16 %v1183, %v1183
        %1185 = vrot.lane.b32.xlu0 %v791, 40
        %v1186 = vpop.permute.xlu0 %1185
        %v1188 = vsel %vm795, %v1184, 0
        %v1191 = vsel %vm859, %v1186, 0
        %1193 = vmatprep.subr.bf16.mxu0 0
        %1194 = vmatpush1.bf16.msra.mxu0 %v1191
        %1195 = vmatprep.subr.bf16.mxu0 0
        %1196 = vmatpush1.bf16.msra.mxu0 0
        %1197 = vmatprep.subr.bf16.mxu0 0
        %1198 = vmatpush1.bf16.msra.mxu0 0
        %1199 = vmatprep.subr.bf16.mxu0 0
        %1200 = vmatpush1.bf16.msra.mxu0 0
        %1201 = vmatprep.subr.bf16.mxu0 0
        %1202 = vmatpush1.bf16.msra.mxu0 0
        %1203 = vmatprep.subr.bf16.mxu0 0
        %1204 = vmatpush1.bf16.msra.mxu0 0
        %1205 = vmatprep.subr.bf16.mxu0 0
        %1206 = vmatpush1.bf16.msra.mxu0 0
        %1207 = vmatprep.subr.bf16.mxu0 0
        %1208 = vmatpush1.bf16.msra.mxu0 0
        %1209 = vmatprep.subr.bf16.mxu0 0
        %1210 = vmatpush1.bf16.msra.mxu0 0
        %1211 = vmatprep.subr.bf16.mxu0 0
        %1212 = vmatpush1.bf16.msra.mxu0 0
        %1213 = vmatprep.subr.bf16.mxu0 0
        %1214 = vmatpush1.bf16.msra.mxu0 0
        %1215 = vmatprep.subr.bf16.mxu0 0
        %1216 = vmatpush1.bf16.msra.mxu0 0
        %1217 = vmatprep.subr.bf16.mxu0 0
        %1218 = vmatpush1.bf16.msra.mxu0 0
        %1219 = vmatprep.subr.bf16.mxu0 0
        %1220 = vmatpush1.bf16.msra.mxu0 0
        %1221 = vmatprep.subr.bf16.mxu0 0
        %1222 = vmatpush1.bf16.msra.mxu0 0
        %1223 = vmatprep.subr.bf16.mxu0 0
        %1224 = vmatpush1.bf16.msra.mxu0 0
        %1225 = vmatprep.mubr.bf16.mxu0 0
        %1226 = vmatmul.mubr.bf16.gmra.mrb[0].mxu0 %v1188
        %v1227 = vpop.f32.mrb[0].mxu0
        %v1228 = vadd.f32 0.0, %v1227
        %v1229 = vpop.f32.mrb[0].mxu0
        %v1230 = vpop.f32.mrb[0].mxu0
        %v1231 = vpop.f32.mrb[0].mxu0
        %1232 = vdwg.mxu0
        %1234 = vrot.lane.b32.xlu0 %v1008, 8
        %v1235 = vpop.permute.xlu0 %1234
        %1238 = vrot.lane.b32.xlu0 %v1118, 16
        %v1239 = vpop.permute.xlu0 %1238
        %1242 = vrot.lane.b32.xlu0 %v1228, 24
        %v1243 = vpop.permute.xlu0 %1242
        %v1245 = vsel %vm795, %v898, %v1235
        %vm1246 = vcmask 130048
        %v1247 = vsel %vm1246, %v1245, %v1239
        %vm1248 = vcmask 195584
        %v1249 = vsel %vm1248, %v1247, %v1243
        %v1250 = vpack.c.bf16 %v1249, %v1249
        %v1251 = vld [vmem:[#allocation6] sm:$0xf]
        %v1252 = vld [vmem:[#allocation6 + $0x4] sm:$0xf]
        %v1253 = vld [vmem:[#allocation6 + $0x8] sm:$0xf]
        %v1254 = vld [vmem:[#allocation6 + $0xc] sm:$0xf]
        %v1255 = vld [vmem:[#allocation7] sm:$0x1]
        %v1257 = vlaneseq
        %v1258 = vshrl.u32 %v1257, 7
        %v1259 = vsub.s32 0, %v1258
        %v1260 = vrot.slane %v1255, %v1259
        %v1266 = vunpack.c.l.b16 %v1251
        %v1267 = vunpack.c.l.b16 %v1252
        %v1268 = vunpack.c.l.b16 %v1253
        %v1269 = vunpack.c.l.b16 %v1254
        %v1270 = vpack.c.b16 %v1267, %v1266
        %v1271 = vpack.c.b16 %v1269, %v1268
        %v1275 = vsel %vm747, %v1250, 0
        %1277 = vmatprep.subr.bf16.mxu0 0
        %1278 = vmatpush1.bf16.msra.mxu0 %v1270
        %1279 = vmatprep.subr.bf16.mxu0 0
        %1280 = vmatpush1.bf16.msra.mxu0 %v1271
        %1281 = vmatprep.subr.bf16.mxu0 0
        %1282 = vmatpush1.bf16.msra.mxu0 0
        %1283 = vmatprep.subr.bf16.mxu0 0
        %1284 = vmatpush1.bf16.msra.mxu0 0
        %1285 = vmatprep.subr.bf16.mxu0 0
        %1286 = vmatpush1.bf16.msra.mxu0 0
        %1287 = vmatprep.subr.bf16.mxu0 0
        %1288 = vmatpush1.bf16.msra.mxu0 0
        %1289 = vmatprep.subr.bf16.mxu0 0
        %1290 = vmatpush1.bf16.msra.mxu0 0
        %1291 = vmatprep.subr.bf16.mxu0 0
        %1292 = vmatpush1.bf16.msra.mxu0 0
        %1293 = vmatprep.subr.bf16.mxu0 0
        %1294 = vmatpush1.bf16.msra.mxu0 0
        %1295 = vmatprep.subr.bf16.mxu0 0
        %1296 = vmatpush1.bf16.msra.mxu0 0
        %1297 = vmatprep.subr.bf16.mxu0 0
        %1298 = vmatpush1.bf16.msra.mxu0 0
        %1299 = vmatprep.subr.bf16.mxu0 0
        %1300 = vmatpush1.bf16.msra.mxu0 0
        %1301 = vmatprep.subr.bf16.mxu0 0
        %1302 = vmatpush1.bf16.msra.mxu0 0
        %1303 = vmatprep.subr.bf16.mxu0 0
        %1304 = vmatpush1.bf16.msra.mxu0 0
        %1305 = vmatprep.subr.bf16.mxu0 0
        %1306 = vmatpush1.bf16.msra.mxu0 0
        %1307 = vmatprep.subr.bf16.mxu0 0
        %1308 = vmatpush1.bf16.msra.mxu0 0
        %1309 = vmatprep.mubr.bf16.mxu0 0
        %1310 = vmatmul.mubr.bf16.gmra.mrb[0].mxu0 %v1275
        %v1311 = vpop.f32.mrb[0].mxu0
        %v1312 = vadd.f32 %v1260, %v1311
        %v1313 = vpop.f32.mrb[0].mxu0
        %v1314 = vpop.f32.mrb[0].mxu0
        %v1315 = vpop.f32.mrb[0].mxu0
        %1316 = vdwg.mxu0
        %v1317 = vadd.f32 %v1312, %v722
        %v1318 = vsel %vm747, %v1317, 0.0
        %1319 = vadd.xlane.f32.xlu0 %v1318
        %v1320 = vpop.xlane.xlu0 %1319
        %v1321 = vrcp.pop 32.0
        %v1322 = vmul.f32 %v1320, %v1321
        %v1323 = vsub.f32 %v1317, %v1322
        %v1324 = vmul.f32 %v1323, %v1323
        %v1325 = vsel %vm747, %v1324, 0.0
        %1326 = vadd.xlane.f32.xlu0 %v1325
        %v1327 = vpop.xlane.xlu0 %1326
        %v1328 = vmul.f32 %v1327, %v1321
        %v1329 = vadd.f32 %v1328, 1e-05
        %v1330 = vrsqrt.pop %v1329
        %v1331 = vmul.f32 %v1323, %v1330
        %v1332 = vld [vmem:[#allocation9] sm:$0x1]
        %v1334 = vlaneseq
        %v1335 = vshrl.u32 %v1334, 7
        %v1336 = vsub.s32 0, %v1335
        %v1337 = vrot.slane %v1332, %v1336
        %v1339 = vmul.f32 %v1331, %v1337
        %v1340 = vld [vmem:[#allocation10] sm:$0x1]
        %v1342 = vlaneseq
        %v1343 = vshrl.u32 %v1342, 7
        %v1344 = vsub.s32 0, %v1343
        %v1345 = vrot.slane %v1340, %v1344
        %v1347 = vadd.f32 %v1339, %v1345
        %v1348 = vpack.c.bf16 %v1347, %v1347
        %v1349 = vld [vmem:[#allocation12] sm:$0xf]
        %v1350 = vld [vmem:[#allocation12 + $0x4] sm:$0xf]
        %v1351 = vld [vmem:[#allocation12 + $0x8] sm:$0xf]
        %v1352 = vld [vmem:[#allocation12 + $0xc] sm:$0xf]
        %v1353 = vld [vmem:[#allocation13] sm:$0x1]
        %v1355 = vlaneseq
        %v1356 = vshrl.u32 %v1355, 7
        %v1357 = vsub.s32 0, %v1356
        %v1358 = vrot.slane %v1353, %v1357
        %v1364 = vunpack.c.l.b16 %v1349
        %v1365 = vunpack.c.l.b16 %v1350
        %v1366 = vunpack.c.l.b16 %v1351
        %v1367 = vunpack.c.l.b16 %v1352
        %v1368 = vpack.c.b16 %v1365, %v1364
        %v1369 = vpack.c.b16 %v1367, %v1366
        %v1373 = vsel %vm747, %v1348, 0
        %1375 = vmatprep.subr.bf16.mxu0 0
        %1376 = vmatpush1.bf16.msra.mxu0 %v1368
        %1377 = vmatprep.subr.bf16.mxu0 0
        %1378 = vmatpush1.bf16.msra.mxu0 %v1369
        %1379 = vmatprep.subr.bf16.mxu0 0
        %1380 = vmatpush1.bf16.msra.mxu0 0
        %1381 = vmatprep.subr.bf16.mxu0 0
        %1382 = vmatpush1.bf16.msra.mxu0 0
        %1383 = vmatprep.subr.bf16.mxu0 0
        %1384 = vmatpush1.bf16.msra.mxu0 0
        %1385 = vmatprep.subr.bf16.mxu0 0
        %1386 = vmatpush1.bf16.msra.mxu0 0
        %1387 = vmatprep.subr.bf16.mxu0 0
        %1388 = vmatpush1.bf16.msra.mxu0 0
        %1389 = vmatprep.subr.bf16.mxu0 0
        %1390 = vmatpush1.bf16.msra.mxu0 0
        %1391 = vmatprep.subr.bf16.mxu0 0
        %1392 = vmatpush1.bf16.msra.mxu0 0
        %1393 = vmatprep.subr.bf16.mxu0 0
        %1394 = vmatpush1.bf16.msra.mxu0 0
        %1395 = vmatprep.subr.bf16.mxu0 0
        %1396 = vmatpush1.bf16.msra.mxu0 0
        %1397 = vmatprep.subr.bf16.mxu0 0
        %1398 = vmatpush1.bf16.msra.mxu0 0
        %1399 = vmatprep.subr.bf16.mxu0 0
        %1400 = vmatpush1.bf16.msra.mxu0 0
        %1401 = vmatprep.subr.bf16.mxu0 0
        %1402 = vmatpush1.bf16.msra.mxu0 0
        %1403 = vmatprep.subr.bf16.mxu0 0
        %1404 = vmatpush1.bf16.msra.mxu0 0
        %1405 = vmatprep.subr.bf16.mxu0 0
        %1406 = vmatpush1.bf16.msra.mxu0 0
        %1407 = vmatprep.mubr.bf16.mxu0 0
        %1408 = vmatmul.mubr.bf16.gmra.mrb[0].mxu0 %v1373
        %v1409 = vpop.f32.mrb[0].mxu0
        %v1410 = vadd.f32 %v1358, %v1409
        %v1411 = vpop.f32.mrb[0].mxu0
        %v1412 = vpop.f32.mrb[0].mxu0
        %v1413 = vpop.f32.mrb[0].mxu0
        %1414 = vdwg.mxu0
        %v1415 = vld [vmem:[#allocation15] sm:$0xf]
        %v1416 = vld [vmem:[#allocation15 + $0x4] sm:$0xf]
        %v1417 = vld [vmem:[#allocation15 + $0x8] sm:$0xf]
        %v1418 = vld [vmem:[#allocation15 + $0xc] sm:$0xf]
        %v1419 = vld [vmem:[#allocation16] sm:$0x1]
        %v1421 = vlaneseq
        %v1422 = vshrl.u32 %v1421, 7
        %v1423 = vsub.s32 0, %v1422
        %v1424 = vrot.slane %v1419, %v1423
        %v1430 = vunpack.c.l.b16 %v1415
        %v1431 = vunpack.c.l.b16 %v1416
        %v1432 = vunpack.c.l.b16 %v1417
        %v1433 = vunpack.c.l.b16 %v1418
        %v1434 = vpack.c.b16 %v1431, %v1430
        %v1435 = vpack.c.b16 %v1433, %v1432
        %v1439 = vsel %vm747, %v723, 0
        %1441 = vmatprep.subr.bf16.mxu0 0
        %1442 = vmatpush1.bf16.msra.mxu0 %v1434
        %1443 = vmatprep.subr.bf16.mxu0 0
        %1444 = vmatpush1.bf16.msra.mxu0 %v1435
        %1445 = vmatprep.subr.bf16.mxu0 0
        %1446 = vmatpush1.bf16.msra.mxu0 0
        %1447 = vmatprep.subr.bf16.mxu0 0
        %1448 = vmatpush1.bf16.msra.mxu0 0
        %1449 = vmatprep.subr.bf16.mxu0 0
        %1450 = vmatpush1.bf16.msra.mxu0 0
        %1451 = vmatprep.subr.bf16.mxu0 0
        %1452 = vmatpush1.bf16.msra.mxu0 0
        %1453 = vmatprep.subr.bf16.mxu0 0
        %1454 = vmatpush1.bf16.msra.mxu0 0
        %1455 = vmatprep.subr.bf16.mxu0 0
        %1456 = vmatpush1.bf16.msra.mxu0 0
        %1457 = vmatprep.subr.bf16.mxu0 0
        %1458 = vmatpush1.bf16.msra.mxu0 0
        %1459 = vmatprep.subr.bf16.mxu0 0
        %1460 = vmatpush1.bf16.msra.mxu0 0
        %1461 = vmatprep.subr.bf16.mxu0 0
        %1462 = vmatpush1.bf16.msra.mxu0 0
        %1463 = vmatprep.subr.bf16.mxu0 0
        %1464 = vmatpush1.bf16.msra.mxu0 0
        %1465 = vmatprep.subr.bf16.mxu0 0
        %1466 = vmatpush1.bf16.msra.mxu0 0
        %1467 = vmatprep.subr.bf16.mxu0 0
        %1468 = vmatpush1.bf16.msra.mxu0 0
        %1469 = vmatprep.subr.bf16.mxu0 0
        %1470 = vmatpush1.bf16.msra.mxu0 0
        %1471 = vmatprep.subr.bf16.mxu0 0
        %1472 = vmatpush1.bf16.msra.mxu0 0
        %1473 = vmatprep.mubr.bf16.mxu0 0
        %1474 = vmatmul.mubr.bf16.gmra.mrb[0].mxu0 %v1439
        %v1475 = vpop.f32.mrb[0].mxu0
        %v1476 = vadd.f32 %v1424, %v1475
        %v1477 = vpop.f32.mrb[0].mxu0
        %v1478 = vpop.f32.mrb[0].mxu0
        %v1479 = vpop.f32.mrb[0].mxu0
        %1480 = vdwg.mxu0
        %v1481 = vpack.c.bf16 %v1410, %v1410
        %v1482 = vpack.c.bf16 %v1476, %v1476
        %v1484 = vsel %vm795, %v1481, 0
        %v1487 = vsel %vm795, %v1482, 0
        %1489 = vmatprep.subr.bf16.mxu0 0
        %1490 = vmatpush1.bf16.xpose.msra.mxu0 %v1487
        %1491 = vmatprep.subr.bf16.mxu0 0
        %1492 = vmatpush1.bf16.xpose.msra.mxu0 0
        %1493 = vmatprep.subr.bf16.mxu0 0
        %1494 = vmatpush1.bf16.xpose.msra.mxu0 0
        %1495 = vmatprep.subr.bf16.mxu0 0
        %1496 = vmatpush1.bf16.xpose.msra.mxu0 0
        %1497 = vmatprep.subr.bf16.mxu0 0
        %1498 = vmatpush1.bf16.xpose.msra.mxu0 0
        %1499 = vmatprep.subr.bf16.mxu0 0
        %1500 = vmatpush1.bf16.xpose.msra.mxu0 0
        %1501 = vmatprep.subr.bf16.mxu0 0
        %1502 = vmatpush1.bf16.xpose.msra.mxu0 0
        %1503 = vmatprep.subr.bf16.mxu0 0
        %1504 = vmatpush1.bf16.xpose.msra.mxu0 0
        %1505 = vmatprep.subr.bf16.mxu0 0
        %1506 = vmatpush1.bf16.xpose.msra.mxu0 0
        %1507 = vmatprep.subr.bf16.mxu0 0
        %1508 = vmatpush1.bf16.xpose.msra.mxu0 0
        %1509 = vmatprep.subr.bf16.mxu0 0
        %1510 = vmatpush1.bf16.xpose.msra.mxu0 0
        %1511 = vmatprep.subr.bf16.mxu0 0
        %1512 = vmatpush1.bf16.xpose.msra.mxu0 0
        %1513 = vmatprep.subr.bf16.mxu0 0
        %1514 = vmatpush1.bf16.xpose.msra.mxu0 0
        %1515 = vmatprep.subr.bf16.mxu0 0
        %1516 = vmatpush1.bf16.xpose.msra.mxu0 0
        %1517 = vmatprep.subr.bf16.mxu0 0
        %1518 = vmatpush1.bf16.xpose.msra.mxu0 0
        %1519 = vmatprep.subr.bf16.mxu0 0
        %1520 = vmatpush1.bf16.xpose.msra.mxu0 0
        %1521 = vmatprep.mubr.bf16.mxu0 0
        %1522 = vmatmul.mubr.bf16.gmra.mrb[0].mxu0 %v1484
        %v1523 = vpop.f32.mrb[0].mxu0
        %v1524 = vadd.f32 0.0, %v1523
        %v1525 = vpop.f32.mrb[0].mxu0
        %v1526 = vpop.f32.mrb[0].mxu0
        %v1527 = vpop.f32.mrb[0].mxu0
        %1528 = vdwg.mxu0
        %v1529 = vsel %vm795, %v1524, -inf
        %1530 = vmax.xlane.f32.xlu0 %v1529
        %v1531 = vpop.xlane.xlu0 %1530
        %v1532 = vsub.f32 %v1524, %v1531
        %v1533 = vmul.f32 %v1532, 1.442695
        %v1534 = vpow.pop %v1533
        %v1535 = vsel %vm795, %v1534, 0.0
        %1536 = vadd.xlane.f32.xlu0 %v1535
        %v1537 = vpop.xlane.xlu0 %1536
        %v1538 = vrcp.pop %v1537
        %v1539 = vmul.f32 %v1534, %v1538
        %v1540 = vpack.c.bf16 %v1539, %v1539
        %1542 = vrot.lane.b32.xlu0 %v1482, 96
        %v1543 = vpop.permute.xlu0 %1542
        %v1545 = vsel %vm795, %v1540, 0
        %v1548 = vsel %vm859, %v1543, 0
        %1550 = vmatprep.subr.bf16.mxu0 0
        %1551 = vmatpush1.bf16.msra.mxu0 %v1548
        %1552 = vmatprep.subr.bf16.mxu0 0
        %1553 = vmatpush1.bf16.msra.mxu0 0
        %1554 = vmatprep.subr.bf16.mxu0 0
        %1555 = vmatpush1.bf16.msra.mxu0 0
        %1556 = vmatprep.subr.bf16.mxu0 0
        %1557 = vmatpush1.bf16.msra.mxu0 0
        %1558 = vmatprep.subr.bf16.mxu0 0
        %1559 = vmatpush1.bf16.msra.mxu0 0
        %1560 = vmatprep.subr.bf16.mxu0 0
        %1561 = vmatpush1.bf16.msra.mxu0 0
        %1562 = vmatprep.subr.bf16.mxu0 0
        %1563 = vmatpush1.bf16.msra.mxu0 0
        %1564 = vmatprep.subr.bf16.mxu0 0
        %1565 = vmatpush1.bf16.msra.mxu0 0
        %1566 = vmatprep.subr.bf16.mxu0 0
        %1567 = vmatpush1.bf16.msra.mxu0 0
        %1568 = vmatprep.subr.bf16.mxu0 0
        %1569 = vmatpush1.bf16.msra.mxu0 0
        %1570 = vmatprep.subr.bf16.mxu0 0
        %1571 = vmatpush1.bf16.msra.mxu0 0
        %1572 = vmatprep.subr.bf16.mxu0 0
        %1573 = vmatpush1.bf16.msra.mxu0 0
        %1574 = vmatprep.subr.bf16.mxu0 0
        %1575 = vmatpush1.bf16.msra.mxu0 0
        %1576 = vmatprep.subr.bf16.mxu0 0
        %1577 = vmatpush1.bf16.msra.mxu0 0
        %1578 = vmatprep.subr.bf16.mxu0 0
        %1579 = vmatpush1.bf16.msra.mxu0 0
        %1580 = vmatprep.subr.bf16.mxu0 0
        %1581 = vmatpush1.bf16.msra.mxu0 0
        %1582 = vmatprep.mubr.bf16.mxu0 0
        %1583 = vmatmul.mubr.bf16.gmra.mrb[0].mxu0 %v1545
        %v1584 = vpop.f32.mrb[0].mxu0
        %v1585 = vadd.f32 0.0, %v1584
        %v1586 = vpop.f32.mrb[0].mxu0
        %v1587 = vpop.f32.mrb[0].mxu0
        %v1588 = vpop.f32.mrb[0].mxu0
        %1589 = vdwg.mxu0
        %1591 = vrot.lane.b32.xlu0 %v1481, 120
        %v1592 = vpop.permute.xlu0 %1591
        %1593 = vrot.lane.b32.xlu0 %v1482, 120
        %v1594 = vpop.permute.xlu0 %1593
        %v1596 = vsel %vm795, %v1592, 0
        %v1599 = vsel %vm795, %v1594, 0
        %1601 = vmatprep.subr.bf16.mxu0 0
        %1602 = vmatpush1.bf16.xpose.msra.mxu0 %v1599
        %1603 = vmatprep.subr.bf16.mxu0 0
        %1604 = vmatpush1.bf16.xpose.msra.mxu0 0
        %1605 = vmatprep.subr.bf16.mxu0 0
        %1606 = vmatpush1.bf16.xpose.msra.mxu0 0
        %1607 = vmatprep.subr.bf16.mxu0 0
        %1608 = vmatpush1.bf16.xpose.msra.mxu0 0
        %1609 = vmatprep.subr.bf16.mxu0 0
        %1610 = vmatpush1.bf16.xpose.msra.mxu0 0
        %1611 = vmatprep.subr.bf16.mxu0 0
        %1612 = vmatpush1.bf16.xpose.msra.mxu0 0
        %1613 = vmatprep.subr.bf16.mxu0 0
        %1614 = vmatpush1.bf16.xpose.msra.mxu0 0
        %1615 = vmatprep.subr.bf16.mxu0 0
        %1616 = vmatpush1.bf16.xpose.msra.mxu0 0
        %1617 = vmatprep.subr.bf16.mxu0 0
        %1618 = vmatpush1.bf16.xpose.msra.mxu0 0
        %1619 = vmatprep.subr.bf16.mxu0 0
        %1620 = vmatpush1.bf16.xpose.msra.mxu0 0
        %1621 = vmatprep.subr.bf16.mxu0 0
        %1622 = vmatpush1.bf16.xpose.msra.mxu0 0
        %1623 = vmatprep.subr.bf16.mxu0 0
        %1624 = vmatpush1.bf16.xpose.msra.mxu0 0
        %1625 = vmatprep.subr.bf16.mxu0 0
        %1626 = vmatpush1.bf16.xpose.msra.mxu0 0
        %1627 = vmatprep.subr.bf16.mxu0 0
        %1628 = vmatpush1.bf16.xpose.msra.mxu0 0
        %1629 = vmatprep.subr.bf16.mxu0 0
        %1630 = vmatpush1.bf16.xpose.msra.mxu0 0
        %1631 = vmatprep.subr.bf16.mxu0 0
        %1632 = vmatpush1.bf16.xpose.msra.mxu0 0
        %1633 = vmatprep.mubr.bf16.mxu0 0
        %1634 = vmatmul.mubr.bf16.gmra.mrb[0].mxu0 %v1596
        %v1635 = vpop.f32.mrb[0].mxu0
        %v1636 = vadd.f32 0.0, %v1635
        %v1637 = vpop.f32.mrb[0].mxu0
        %v1638 = vpop.f32.mrb[0].mxu0
        %v1639 = vpop.f32.mrb[0].mxu0
        %1640 = vdwg.mxu0
        %v1641 = vsel %vm795, %v1636, -inf
        %1642 = vmax.xlane.f32.xlu0 %v1641
        %v1643 = vpop.xlane.xlu0 %1642
        %v1644 = vsub.f32 %v1636, %v1643
        %v1645 = vmul.f32 %v1644, 1.442695
        %v1646 = vpow.pop %v1645
        %v1647 = vsel %vm795, %v1646, 0.0
        %1648 = vadd.xlane.f32.xlu0 %v1647
        %v1649 = vpop.xlane.xlu0 %1648
        %v1650 = vrcp.pop %v1649
        %v1651 = vmul.f32 %v1646, %v1650
        %v1652 = vpack.c.bf16 %v1651, %v1651
        %1653 = vrot.lane.b32.xlu0 %v1482, 88
        %v1654 = vpop.permute.xlu0 %1653
        %v1656 = vsel %vm795, %v1652, 0
        %v1659 = vsel %vm859, %v1654, 0
        %1661 = vmatprep.subr.bf16.mxu0 0
        %1662 = vmatpush1.bf16.msra.mxu0 %v1659
        %1663 = vmatprep.subr.bf16.mxu0 0
        %1664 = vmatpush1.bf16.msra.mxu0 0
        %1665 = vmatprep.subr.bf16.mxu0 0
        %1666 = vmatpush1.bf16.msra.mxu0 0
        %1667 = vmatprep.subr.bf16.mxu0 0
        %1668 = vmatpush1.bf16.msra.mxu0 0
        %1669 = vmatprep.subr.bf16.mxu0 0
        %1670 = vmatpush1.bf16.msra.mxu0 0
        %1671 = vmatprep.subr.bf16.mxu0 0
        %1672 = vmatpush1.bf16.msra.mxu0 0
        %1673 = vmatprep.subr.bf16.mxu0 0
        %1674 = vmatpush1.bf16.msra.mxu0 0
        %1675 = vmatprep.subr.bf16.mxu0 0
        %1676 = vmatpush1.bf16.msra.mxu0 0
        %1677 = vmatprep.subr.bf16.mxu0 0
        %1678 = vmatpush1.bf16.msra.mxu0 0
        %1679 = vmatprep.subr.bf16.mxu0 0
        %1680 = vmatpush1.bf16.msra.mxu0 0
        %1681 = vmatprep.subr.bf16.mxu0 0
        %1682 = vmatpush1.bf16.msra.mxu0 0
        %1683 = vmatprep.subr.bf16.mxu0 0
        %1684 = vmatpush1.bf16.msra.mxu0 0
        %1685 = vmatprep.subr.bf16.mxu0 0
        %1686 = vmatpush1.bf16.msra.mxu0 0
        %1687 = vmatprep.subr.bf16.mxu0 0
        %1688 = vmatpush1.bf16.msra.mxu0 0
        %1689 = vmatprep.subr.bf16.mxu0 0
        %1690 = vmatpush1.bf16.msra.mxu0 0
        %1691 = vmatprep.subr.bf16.mxu0 0
        %1692 = vmatpush1.bf16.msra.mxu0 0
        %1693 = vmatprep.mubr.bf16.mxu0 0
        %1694 = vmatmul.mubr.bf16.gmra.mrb[0].mxu0 %v1656
        %v1695 = vpop.f32.mrb[0].mxu0
        %v1696 = vadd.f32 0.0, %v1695
        %v1697 = vpop.f32.mrb[0].mxu0
        %v1698 = vpop.f32.mrb[0].mxu0
        %v1699 = vpop.f32.mrb[0].mxu0
        %1700 = vdwg.mxu0
        %1701 = vrot.lane.b32.xlu0 %v1481, 112
        %v1702 = vpop.permute.xlu0 %1701
        %1703 = vrot.lane.b32.xlu0 %v1482, 112
        %v1704 = vpop.permute.xlu0 %1703
        %v1706 = vsel %vm795, %v1702, 0
        %v1709 = vsel %vm795, %v1704, 0
        %1711 = vmatprep.subr.bf16.mxu0 0
        %1712 = vmatpush1.bf16.xpose.msra.mxu0 %v1709
        %1713 = vmatprep.subr.bf16.mxu0 0
        %1714 = vmatpush1.bf16.xpose.msra.mxu0 0
        %1715 = vmatprep.subr.bf16.mxu0 0
        %1716 = vmatpush1.bf16.xpose.msra.mxu0 0
        %1717 = vmatprep.subr.bf16.mxu0 0
        %1718 = vmatpush1.bf16.xpose.msra.mxu0 0
        %1719 = vmatprep.subr.bf16.mxu0 0
        %1720 = vmatpush1.bf16.xpose.msra.mxu0 0
        %1721 = vmatprep.subr.bf16.mxu0 0
        %1722 = vmatpush1.bf16.xpose.msra.mxu0 0
        %1723 = vmatprep.subr.bf16.mxu0 0
        %1724 = vmatpush1.bf16.xpose.msra.mxu0 0
        %1725 = vmatprep.subr.bf16.mxu0 0
        %1726 = vmatpush1.bf16.xpose.msra.mxu0 0
        %1727 = vmatprep.subr.bf16.mxu0 0
        %1728 = vmatpush1.bf16.xpose.msra.mxu0 0
        %1729 = vmatprep.subr.bf16.mxu0 0
        %1730 = vmatpush1.bf16.xpose.msra.mxu0 0
        %1731 = vmatprep.subr.bf16.mxu0 0
        %1732 = vmatpush1.bf16.xpose.msra.mxu0 0
        %1733 = vmatprep.subr.bf16.mxu0 0
        %1734 = vmatpush1.bf16.xpose.msra.mxu0 0
        %1735 = vmatprep.subr.bf16.mxu0 0
        %1736 = vmatpush1.bf16.xpose.msra.mxu0 0
        %1737 = vmatprep.subr.bf16.mxu0 0
        %1738 = vmatpush1.bf16.xpose.msra.mxu0 0
        %1739 = vmatprep.subr.bf16.mxu0 0
        %1740 = vmatpush1.bf16.xpose.msra.mxu0 0
        %1741 = vmatprep.subr.bf16.mxu0 0
        %1742 = vmatpush1.bf16.xpose.msra.mxu0 0
        %1743 = vmatprep.mubr.bf16.mxu0 0
        %1744 = vmatmul.mubr.bf16.gmra.mrb[0].mxu0 %v1706
        %v1745 = vpop.f32.mrb[0].mxu0
        %v1746 = vadd.f32 0.0, %v1745
        %v1747 = vpop.f32.mrb[0].mxu0
        %v1748 = vpop.f32.mrb[0].mxu0
        %v1749 = vpop.f32.mrb[0].mxu0
        %1750 = vdwg.mxu0
        %v1751 = vsel %vm795, %v1746, -inf
        %1752 = vmax.xlane.f32.xlu0 %v1751
        %v1753 = vpop.xlane.xlu0 %1752
        %v1754 = vsub.f32 %v1746, %v1753
        %v1755 = vmul.f32 %v1754, 1.442695
        %v1756 = vpow.pop %v1755
        %v1757 = vsel %vm795, %v1756, 0.0
        %1758 = vadd.xlane.f32.xlu0 %v1757
        %v1759 = vpop.xlane.xlu0 %1758
        %v1760 = vrcp.pop %v1759
        %v1761 = vmul.f32 %v1756, %v1760
        %v1762 = vpack.c.bf16 %v1761, %v1761
        %1763 = vrot.lane.b32.xlu0 %v1482, 80
        %v1764 = vpop.permute.xlu0 %1763
        %v1766 = vsel %vm795, %v1762, 0
        %v1769 = vsel %vm859, %v1764, 0
        %1771 = vmatprep.subr.bf16.mxu0 0
        %1772 = vmatpush1.bf16.msra.mxu0 %v1769
        %1773 = vmatprep.subr.bf16.mxu0 0
        %1774 = vmatpush1.bf16.msra.mxu0 0
        %1775 = vmatprep.subr.bf16.mxu0 0
        %1776 = vmatpush1.bf16.msra.mxu0 0
        %1777 = vmatprep.subr.bf16.mxu0 0
        %1778 = vmatpush1.bf16.msra.mxu0 0
        %1779 = vmatprep.subr.bf16.mxu0 0
        %1780 = vmatpush1.bf16.msra.mxu0 0
        %1781 = vmatprep.subr.bf16.mxu0 0
        %1782 = vmatpush1.bf16.msra.mxu0 0
        %1783 = vmatprep.subr.bf16.mxu0 0
        %1784 = vmatpush1.bf16.msra.mxu0 0
        %1785 = vmatprep.subr.bf16.mxu0 0
        %1786 = vmatpush1.bf16.msra.mxu0 0
        %1787 = vmatprep.subr.bf16.mxu0 0
        %1788 = vmatpush1.bf16.msra.mxu0 0
        %1789 = vmatprep.subr.bf16.mxu0 0
        %1790 = vmatpush1.bf16.msra.mxu0 0
        %1791 = vmatprep.subr.bf16.mxu0 0
        %1792 = vmatpush1.bf16.msra.mxu0 0
        %1793 = vmatprep.subr.bf16.mxu0 0
        %1794 = vmatpush1.bf16.msra.mxu0 0
        %1795 = vmatprep.subr.bf16.mxu0 0
        %1796 = vmatpush1.bf16.msra.mxu0 0
        %1797 = vmatprep.subr.bf16.mxu0 0
        %1798 = vmatpush1.bf16.msra.mxu0 0
        %1799 = vmatprep.subr.bf16.mxu0 0
        %1800 = vmatpush1.bf16.msra.mxu0 0
        %1801 = vmatprep.subr.bf16.mxu0 0
        %1802 = vmatpush1.bf16.msra.mxu0 0
        %1803 = vmatprep.mubr.bf16.mxu0 0
        %1804 = vmatmul.mubr.bf16.gmra.mrb[0].mxu0 %v1766
        %v1805 = vpop.f32.mrb[0].mxu0
        %v1806 = vadd.f32 0.0, %v1805
        %v1807 = vpop.f32.mrb[0].mxu0
        %v1808 = vpop.f32.mrb[0].mxu0
        %v1809 = vpop.f32.mrb[0].mxu0
        %1810 = vdwg.mxu0
        %1811 = vrot.lane.b32.xlu0 %v1481, 104
        %v1812 = vpop.permute.xlu0 %1811
        %1813 = vrot.lane.b32.xlu0 %v1482, 104
        %v1814 = vpop.permute.xlu0 %1813
        %v1816 = vsel %vm795, %v1812, 0
        %v1819 = vsel %vm795, %v1814, 0
        %1821 = vmatprep.subr.bf16.mxu0 0
        %1822 = vmatpush1.bf16.xpose.msra.mxu0 %v1819
        %1823 = vmatprep.subr.bf16.mxu0 0
        %1824 = vmatpush1.bf16.xpose.msra.mxu0 0
        %1825 = vmatprep.subr.bf16.mxu0 0
        %1826 = vmatpush1.bf16.xpose.msra.mxu0 0
        %1827 = vmatprep.subr.bf16.mxu0 0
        %1828 = vmatpush1.bf16.xpose.msra.mxu0 0
        %1829 = vmatprep.subr.bf16.mxu0 0
        %1830 = vmatpush1.bf16.xpose.msra.mxu0 0
        %1831 = vmatprep.subr.bf16.mxu0 0
        %1832 = vmatpush1.bf16.xpose.msra.mxu0 0
        %1833 = vmatprep.subr.bf16.mxu0 0
        %1834 = vmatpush1.bf16.xpose.msra.mxu0 0
        %1835 = vmatprep.subr.bf16.mxu0 0
        %1836 = vmatpush1.bf16.xpose.msra.mxu0 0
        %1837 = vmatprep.subr.bf16.mxu0 0
        %1838 = vmatpush1.bf16.xpose.msra.mxu0 0
        %1839 = vmatprep.subr.bf16.mxu0 0
        %1840 = vmatpush1.bf16.xpose.msra.mxu0 0
        %1841 = vmatprep.subr.bf16.mxu0 0
        %1842 = vmatpush1.bf16.xpose.msra.mxu0 0
        %1843 = vmatprep.subr.bf16.mxu0 0
        %1844 = vmatpush1.bf16.xpose.msra.mxu0 0
        %1845 = vmatprep.subr.bf16.mxu0 0
        %1846 = vmatpush1.bf16.xpose.msra.mxu0 0
        %1847 = vmatprep.subr.bf16.mxu0 0
        %1848 = vmatpush1.bf16.xpose.msra.mxu0 0
        %1849 = vmatprep.subr.bf16.mxu0 0
        %1850 = vmatpush1.bf16.xpose.msra.mxu0 0
        %1851 = vmatprep.subr.bf16.mxu0 0
        %1852 = vmatpush1.bf16.xpose.msra.mxu0 0
        %1853 = vmatprep.mubr.bf16.mxu0 0
        %1854 = vmatmul.mubr.bf16.gmra.mrb[0].mxu0 %v1816
        %v1855 = vpop.f32.mrb[0].mxu0
        %v1856 = vadd.f32 0.0, %v1855
        %v1857 = vpop.f32.mrb[0].mxu0
        %v1858 = vpop.f32.mrb[0].mxu0
        %v1859 = vpop.f32.mrb[0].mxu0
        %1860 = vdwg.mxu0
        %v1861 = vsel %vm795, %v1856, -inf
        %1862 = vmax.xlane.f32.xlu0 %v1861
        %v1863 = vpop.xlane.xlu0 %1862
        %v1864 = vsub.f32 %v1856, %v1863
        %v1865 = vmul.f32 %v1864, 1.442695
        %v1866 = vpow.pop %v1865
        %v1867 = vsel %vm795, %v1866, 0.0
        %1868 = vadd.xlane.f32.xlu0 %v1867
        %v1869 = vpop.xlane.xlu0 %1868
        %v1870 = vrcp.pop %v1869
        %v1871 = vmul.f32 %v1866, %v1870
        %v1872 = vpack.c.bf16 %v1871, %v1871
        %1873 = vrot.lane.b32.xlu0 %v1482, 72
        %v1874 = vpop.permute.xlu0 %1873
        %v1876 = vsel %vm795, %v1872, 0
        %v1879 = vsel %vm859, %v1874, 0
        %1881 = vmatprep.subr.bf16.mxu0 0
        %1882 = vmatpush1.bf16.msra.mxu0 %v1879
        %1883 = vmatprep.subr.bf16.mxu0 0
        %1884 = vmatpush1.bf16.msra.mxu0 0
        %1885 = vmatprep.subr.bf16.mxu0 0
        %1886 = vmatpush1.bf16.msra.mxu0 0
        %1887 = vmatprep.subr.bf16.mxu0 0
        %1888 = vmatpush1.bf16.msra.mxu0 0
        %1889 = vmatprep.subr.bf16.mxu0 0
        %1890 = vmatpush1.bf16.msra.mxu0 0
        %1891 = vmatprep.subr.bf16.mxu0 0
        %1892 = vmatpush1.bf16.msra.mxu0 0
        %1893 = vmatprep.subr.bf16.mxu0 0
        %1894 = vmatpush1.bf16.msra.mxu0 0
        %1895 = vmatprep.subr.bf16.mxu0 0
        %1896 = vmatpush1.bf16.msra.mxu0 0
        %1897 = vmatprep.subr.bf16.mxu0 0
        %1898 = vmatpush1.bf16.msra.mxu0 0
        %1899 = vmatprep.subr.bf16.mxu0 0
        %1900 = vmatpush1.bf16.msra.mxu0 0
        %1901 = vmatprep.subr.bf16.mxu0 0
        %1902 = vmatpush1.bf16.msra.mxu0 0
        %1903 = vmatprep.subr.bf16.mxu0 0
        %1904 = vmatpush1.bf16.msra.mxu0 0
        %1905 = vmatprep.subr.bf16.mxu0 0
        %1906 = vmatpush1.bf16.msra.mxu0 0
        %1907 = vmatprep.subr.bf16.mxu0 0
        %1908 = vmatpush1.bf16.msra.mxu0 0
        %1909 = vmatprep.subr.bf16.mxu0 0
        %1910 = vmatpush1.bf16.msra.mxu0 0
        %1911 = vmatprep.subr.bf16.mxu0 0
        %1912 = vmatpush1.bf16.msra.mxu0 0
        %1913 = vmatprep.mubr.bf16.mxu0 0
        %1914 = vmatmul.mubr.bf16.gmra.mrb[0].mxu0 %v1876
        %v1915 = vpop.f32.mrb[0].mxu0
        %v1916 = vadd.f32 0.0, %v1915
        %v1917 = vpop.f32.mrb[0].mxu0
        %v1918 = vpop.f32.mrb[0].mxu0
        %v1919 = vpop.f32.mrb[0].mxu0
        %1920 = vdwg.mxu0
        %1922 = vrot.lane.b32.xlu0 %v1696, 8
        %v1923 = vpop.permute.xlu0 %1922
        %1926 = vrot.lane.b32.xlu0 %v1806, 16
        %v1927 = vpop.permute.xlu0 %1926
        %1930 = vrot.lane.b32.xlu0 %v1916, 24
        %v1931 = vpop.permute.xlu0 %1930
        %v1933 = vsel %vm795, %v1585, %v1923
        %v1934 = vsel %vm1246, %v1933, %v1927
        %v1935 = vsel %vm1248, %v1934, %v1931
        %v1936 = vpack.c.bf16 %v1935, %v1935
        %v1937 = vld [vmem:[#allocation18] sm:$0xf]
        %v1938 = vld [vmem:[#allocation18 + $0x4] sm:$0xf]
        %v1939 = vld [vmem:[#allocation18 + $0x8] sm:$0xf]
        %v1940 = vld [vmem:[#allocation18 + $0xc] sm:$0xf]
        %v1941 = vld [vmem:[#allocation19] sm:$0x1]
        %v1943 = vlaneseq
        %v1944 = vshrl.u32 %v1943, 7
        %v1945 = vsub.s32 0, %v1944
        %v1946 = vrot.slane %v1941, %v1945
        %v1952 = vunpack.c.l.b16 %v1937
        %v1953 = vunpack.c.l.b16 %v1938
        %v1954 = vunpack.c.l.b16 %v1939
        %v1955 = vunpack.c.l.b16 %v1940
        %v1956 = vpack.c.b16 %v1953, %v1952
        %v1957 = vpack.c.b16 %v1955, %v1954
        %v1961 = vsel %vm747, %v1936, 0
        %1963 = vmatprep.subr.bf16.mxu0 0
        %1964 = vmatpush1.bf16.msra.mxu0 %v1956
        %1965 = vmatprep.subr.bf16.mxu0 0
        %1966 = vmatpush1.bf16.msra.mxu0 %v1957
        %1967 = vmatprep.subr.bf16.mxu0 0
        %1968 = vmatpush1.bf16.msra.mxu0 0
        %1969 = vmatprep.subr.bf16.mxu0 0
        %1970 = vmatpush1.bf16.msra.mxu0 0
        %1971 = vmatprep.subr.bf16.mxu0 0
        %1972 = vmatpush1.bf16.msra.mxu0 0
        %1973 = vmatprep.subr.bf16.mxu0 0
        %1974 = vmatpush1.bf16.msra.mxu0 0
        %1975 = vmatprep.subr.bf16.mxu0 0
        %1976 = vmatpush1.bf16.msra.mxu0 0
        %1977 = vmatprep.subr.bf16.mxu0 0
        %1978 = vmatpush1.bf16.msra.mxu0 0
        %1979 = vmatprep.subr.bf16.mxu0 0
        %1980 = vmatpush1.bf16.msra.mxu0 0
        %1981 = vmatprep.subr.bf16.mxu0 0
        %1982 = vmatpush1.bf16.msra.mxu0 0
        %1983 = vmatprep.subr.bf16.mxu0 0
        %1984 = vmatpush1.bf16.msra.mxu0 0
        %1985 = vmatprep.subr.bf16.mxu0 0
        %1986 = vmatpush1.bf16.msra.mxu0 0
        %1987 = vmatprep.subr.bf16.mxu0 0
        %1988 = vmatpush1.bf16.msra.mxu0 0
        %1989 = vmatprep.subr.bf16.mxu0 0
        %1990 = vmatpush1.bf16.msra.mxu0 0
        %1991 = vmatprep.subr.bf16.mxu0 0
        %1992 = vmatpush1.bf16.msra.mxu0 0
        %1993 = vmatprep.subr.bf16.mxu0 0
        %1994 = vmatpush1.bf16.msra.mxu0 0
        %1995 = vmatprep.mubr.bf16.mxu0 0
        %1996 = vmatmul.mubr.bf16.gmra.mrb[0].mxu0 %v1961
        %v1997 = vpop.f32.mrb[0].mxu0
        %v1998 = vadd.f32 %v1946, %v1997
        %v1999 = vpop.f32.mrb[0].mxu0
        %v2000 = vpop.f32.mrb[0].mxu0
        %v2001 = vpop.f32.mrb[0].mxu0
        %2002 = vdwg.mxu0
        %v2003 = vadd.f32 %v1998, %v1347
        %v2004 = vsel %vm747, %v2003, 0.0
        %2005 = vadd.xlane.f32.xlu0 %v2004
        %v2006 = vpop.xlane.xlu0 %2005
        %v2007 = vmul.f32 %v2006, %v1321
        %v2008 = vsub.f32 %v2003, %v2007
        %v2009 = vmul.f32 %v2008, %v2008
        %v2010 = vsel %vm747, %v2009, 0.0
        %2011 = vadd.xlane.f32.xlu0 %v2010
        %v2012 = vpop.xlane.xlu0 %2011
        %v2013 = vmul.f32 %v2012, %v1321
        %v2014 = vadd.f32 %v2013, 1e-05
        %v2015 = vrsqrt.pop %v2014
        %v2016 = vmul.f32 %v2008, %v2015
        %v2017 = vld [vmem:[#allocation21] sm:$0x1]
        %v2019 = vlaneseq
        %v2020 = vshrl.u32 %v2019, 7
        %v2021 = vsub.s32 0, %v2020
        %v2022 = vrot.slane %v2017, %v2021
        %v2024 = vmul.f32 %v2016, %v2022
        %v2025 = vld [vmem:[#allocation22] sm:$0x1]
        %v2027 = vlaneseq
        %v2028 = vshrl.u32 %v2027, 7
        %v2029 = vsub.s32 0, %v2028
        %v2030 = vrot.slane %v2025, %v2029
        %v2032 = vadd.f32 %v2024, %v2030
        %v2033 = vpack.c.bf16 %v2032, %v2032
        %vm2034 = vcmask 257024
        %2035 = vst.msk [vmem:[%s719] sm:$0xf] %vm2034, %v2033
        %p2036 = scmp.lt.s32.totalorder %s35, 1
        %s2037 = scalar_select %p2036, %s35, 1
        %s2038 = smul.addr %s2037, 4
        %s2039 = scalar_lea.vmem %s16, %s2038
        // Predicated region
        $region141: #{transformer_decoder_forward.6} parent=83 // pred_check
          %p2040 = pneg %p399
        $region142: #{transformer_decoder_forward.6} parent=83 // pred_check_branch
          %2042 = sbr.rel (%p2040) target = $region144
        $region143: #{transformer_decoder_forward.6} parent=83 // pred_region
          _
        $region144: #{transformer_decoder_forward.6} parent=83 // pred_fallthru
          _
      $region84: #{transformer_decoder_forward.6} parent=5 // pred_fallthru
        _
      %p2043 = scmp.le.s32.totalorder 2, %s30
      // Predicated region
      $region145: #{transformer_decoder_forward.6} parent=5 // pred_check
        %p2044 = pneg %p2043
      $region146: #{transformer_decoder_forward.6} parent=5 // pred_check_branch
        %2046 = sbr.rel (%p2044) target = $region148
      $region147: #{transformer_decoder_forward.6} parent=5 // pred_region
        %s2047 = ssub.s32 %s30, 2
        // Predicated region
        $region149: #{transformer_decoder_forward.6} parent=147 // pred_check
          %p2048 = pneg %p405
        $region150: #{transformer_decoder_forward.6} parent=147 // pred_check_branch
          %2050 = sbr.rel (%p2048) target = $region152
        $region151: #{transformer_decoder_forward.6} parent=147 // pred_region
          %p2051 = scmp.lt.s32.totalorder %s36, 1
          %s2052 = scalar_select %p2051, %s36, 1
          %s2053 = smul.addr %s2052, 4
          %s2054 = scalar_lea.vmem %s16, %s2053
        $region152: #{transformer_decoder_forward.6} parent=147 // pred_fallthru
          _
      $region148: #{transformer_decoder_forward.6} parent=5 // pred_fallthru
        _
    $region6: #{transformer_decoder_forward.6} parent=1 // loop_footer
      %s34 = sadd.s32 1, %s30
    $region7: #{transformer_decoder_forward.6} parent=1 // loop_footer_branch
      %29 = sbr.rel target = $region3
    $region8: #{transformer_decoder_forward.6} parent=1 // loop_exit
      _
    %2055 = vsyncpa [#allocation3], 1
    %s2056 = scalar_lea.sflag [#allocation3], 1
    %2057 = vsyncpa %s2056, 1
    %2058 = vsyncpa [#allocation5], 1
    %2059 = vsyncpa [#allocation8], 1
    %2060 = vsyncpa [#allocation11], 1
    %2061 = vsyncpa [#allocation14], 1
    %2062 = vsyncpa [#allocation17], 1
    %2063 = vsyncpa [#allocation20], 1
    %2064 = vsyncpa [#allocation23], 1

// kernel: transformer_decoder_forward.8
$region0: #{transformer_decoder_forward.8}
  #allocation0 [shape = 'u32[]', space=smem, size = 0x4, offset = 0x4, fixed_abs, tag = 'smem constant byte address 0x4 - core index']
  #allocation1 [shape = 'u32[144,128]{1,0:T(1,128)}', space=vmem, size = 0x12000, scoped, tag = 'internal scratch']
  %s0 = inlined_call_operand.vmem [shape: bf16[16,32], index: 0, kind: input, shape index: {}]
  %s1 = inlined_call_operand.vmem [shape: bf16[16,32], index: 1, kind: input, shape index: {}]
  %s2 = inlined_call_operand.vmem [shape: bf16[32,96], index: 2, kind: input, shape index: {}]
  %s3 = inlined_call_operand.vmem [shape: f32[1,96], index: 3, kind: input, shape index: {}]
  %s4 = inlined_call_operand.vmem [shape: bf16[32,32], index: 4, kind: input, shape index: {}]
  %s5 = inlined_call_operand.vmem [shape: f32[1,32], index: 5, kind: input, shape index: {}]
  %s6 = inlined_call_operand.vmem [shape: f32[1,32], index: 6, kind: input, shape index: {}]
  %s7 = inlined_call_operand.vmem [shape: f32[1,32], index: 7, kind: input, shape index: {}]
  %s8 = inlined_call_operand.vmem [shape: bf16[32,32], index: 8, kind: input, shape index: {}]
  %s9 = inlined_call_operand.vmem [shape: f32[1,32], index: 9, kind: input, shape index: {}]
  %s10 = inlined_call_operand.vmem [shape: bf16[32,64], index: 10, kind: input, shape index: {}]
  %s11 = inlined_call_operand.vmem [shape: f32[1,64], index: 11, kind: input, shape index: {}]
  %s12 = inlined_call_operand.vmem [shape: bf16[32,32], index: 12, kind: input, shape index: {}]
  %s13 = inlined_call_operand.vmem [shape: f32[1,32], index: 13, kind: input, shape index: {}]
  %s14 = inlined_call_operand.vmem [shape: f32[1,32], index: 14, kind: input, shape index: {}]
  %s15 = inlined_call_operand.vmem [shape: f32[1,32], index: 15, kind: input, shape index: {}]
  %s16 = inlined_call_operand.vmem [shape: bf16[16,32], index: 16, kind: output, shape index: {}]
  %s17 = sld [smem:[#allocation0]]
  $region97: #{transformer_decoder_forward.8} parent=0
    _
  %s19 = ssub.s32 1, %s17
  %s20 = scalar_select 0, %s19, %s17
  loop: start=0, step=1, limit=4
  $region2: #{transformer_decoder_forward.8} parent=0 // loop_pre_header
    _
  $region3: #{transformer_decoder_forward.8} parent=0 // loop_header
    %s22 = sphi 0, %s26
    %p23 = scmp.ge.s32.totalorder %s22, 4
    %s32 = sphi 0, %s34
    %s35 = sphi 0, %s32
    %s36 = sphi 0, %s35
    %s52 = sphi 0, %s36
    %s58 = sphi 0, %s60
    %s61 = sphi 0, %s58
    %s62 = sphi 0, %s61
    %s78 = sphi 0, %s62
    %s82 = sphi 0, %s82
    %s84 = sphi 0, %s82
    %s85 = sphi 0, %s84
    %s99 = sphi 0, %s85
    %s103 = sphi 0, %s103
    %s105 = sphi 0, %s103
    %s106 = sphi 0, %s105
    %s120 = sphi 0, %s106
    %s124 = sphi 0, %s124
    %s126 = sphi 0, %s124
    %s127 = sphi 0, %s126
    %s141 = sphi 0, %s127
    %s145 = sphi 0, %s145
    %s147 = sphi 0, %s145
    %s148 = sphi 0, %s147
    %s162 = sphi 0, %s148
    %s166 = sphi 0, %s166
    %s168 = sphi 0, %s166
    %s169 = sphi 0, %s168
    %s183 = sphi 0, %s169
    %s187 = sphi 0, %s187
    %s189 = sphi 0, %s187
    %s190 = sphi 0, %s189
    %s204 = sphi 0, %s190
    %s208 = sphi 0, %s208
    %s210 = sphi 0, %s208
    %s211 = sphi 0, %s210
    %s225 = sphi 0, %s211
    %s229 = sphi 0, %s229
    %s231 = sphi 0, %s229
    %s232 = sphi 0, %s231
    %s246 = sphi 0, %s232
    %s250 = sphi 0, %s250
    %s252 = sphi 0, %s250
    %s253 = sphi 0, %s252
    %s267 = sphi 0, %s253
    %s271 = sphi 0, %s271
    %s273 = sphi 0, %s271
    %s274 = sphi 0, %s273
    %s288 = sphi 0, %s274
    %s292 = sphi 0, %s292
    %s294 = sphi 0, %s292
    %s295 = sphi 0, %s294
    %s309 = sphi 0, %s295
    %s313 = sphi 0, %s313
    %s315 = sphi 0, %s313
    %s316 = sphi 0, %s315
    %s330 = sphi 0, %s316
    %s334 = sphi 0, %s334
    %s336 = sphi 0, %s334
    %s337 = sphi 0, %s336
    %s351 = sphi 0, %s337
    %s355 = sphi 0, %s355
    %s357 = sphi 0, %s355
    %s358 = sphi 0, %s357
    %s372 = sphi 0, %s358
    %s378 = sphi 0, %s380
    %s381 = sphi 0, %s378
    %s382 = sphi 0, %s381
    %s398 = sphi 0, %s382
  $region4: #{transformer_decoder_forward.8} parent=0 // loop_header_branch
    %25 = sbr.rel (%p23) target = $region8
  $region5: #{transformer_decoder_forward.8} parent=0 // loop_body
    %s27 = ssub.s32 %s22, 1
    %s28 = ssub.s32 %s22, 2
    %s29 = sadd.s32 %s22, 1
    %s30 = ssub.s32 %s22, %s29
    %p31 = scmp.eq.s32.totalorder %s30, 0
    %s33 = sadd.s32 %s32, 1
    %s34 = scalar_select %p31, %s32, %s33
    %p37 = pneg %p31
    %p38 = scmp.eq.s32.totalorder %s22, 1
    %p39 = por %p37, %p38
    %p40 = scmp.ne.s32.totalorder %s32, %s35
    %p41 = scmp.eq.s32.totalorder %s22, 0
    %p42 = por %p40, %p41
    %p43 = scmp.ne.s32.totalorder %s32, %s35
    %p44 = scmp.eq.s32.totalorder %s27, 1
    %p45 = por %p43, %p44
    %p46 = scmp.ne.s32.totalorder %s35, %s36
    %p47 = scmp.eq.s32.totalorder %s27, 0
    %p48 = por %p46, %p47
    %p49 = scmp.ne.s32.totalorder %s35, %s36
    %p50 = scmp.eq.s32.totalorder %s28, 1
    %p51 = por %p49, %p50
    %p53 = scmp.ne.s32.totalorder %s36, %s52
    %p54 = scmp.eq.s32.totalorder %s28, 0
    %p55 = por %p53, %p54
    %s56 = ssub.s32 %s22, %s29
    %p57 = scmp.eq.s32.totalorder %s56, 0
    %s59 = sadd.s32 %s58, 1
    %s60 = scalar_select %p57, %s58, %s59
    %p63 = pneg %p57
    %p64 = scmp.eq.s32.totalorder %s22, 1
    %p65 = por %p63, %p64
    %p66 = scmp.ne.s32.totalorder %s58, %s61
    %p67 = scmp.eq.s32.totalorder %s22, 0
    %p68 = por %p66, %p67
    %p69 = scmp.ne.s32.totalorder %s58, %s61
    %p70 = scmp.eq.s32.totalorder %s27, 1
    %p71 = por %p69, %p70
    %p72 = scmp.ne.s32.totalorder %s61, %s62
    %p73 = scmp.eq.s32.totalorder %s27, 0
    %p74 = por %p72, %p73
    %p75 = scmp.ne.s32.totalorder %s61, %s62
    %p76 = scmp.eq.s32.totalorder %s28, 1
    %p77 = por %p75, %p76
    %p79 = scmp.ne.s32.totalorder %s62, %s78
    %p80 = scmp.eq.s32.totalorder %s28, 0
    %p81 = por %p79, %p80
    %s83 = sadd.s32 %s82, 1
    %p86 = scmp.eq.s32.totalorder %s22, 1
    %p87 = scmp.ne.s32.totalorder %s82, %s84
    %p88 = scmp.eq.s32.totalorder %s22, 0
    %p89 = por %p87, %p88
    %p90 = scmp.ne.s32.totalorder %s82, %s84
    %p91 = scmp.eq.s32.totalorder %s27, 1
    %p92 = por %p90, %p91
    %p93 = scmp.ne.s32.totalorder %s84, %s85
    %p94 = scmp.eq.s32.totalorder %s27, 0
    %p95 = por %p93, %p94
    %p96 = scmp.ne.s32.totalorder %s84, %s85
    %p97 = scmp.eq.s32.totalorder %s28, 1
    %p98 = por %p96, %p97
    %p100 = scmp.ne.s32.totalorder %s85, %s99
    %p101 = scmp.eq.s32.totalorder %s28, 0
    %p102 = por %p100, %p101
    %s104 = sadd.s32 %s103, 1
    %p107 = scmp.eq.s32.totalorder %s22, 1
    %p108 = scmp.ne.s32.totalorder %s103, %s105
    %p109 = scmp.eq.s32.totalorder %s22, 0
    %p110 = por %p108, %p109
    %p111 = scmp.ne.s32.totalorder %s103, %s105
    %p112 = scmp.eq.s32.totalorder %s27, 1
    %p113 = por %p111, %p112
    %p114 = scmp.ne.s32.totalorder %s105, %s106
    %p115 = scmp.eq.s32.totalorder %s27, 0
    %p116 = por %p114, %p115
    %p117 = scmp.ne.s32.totalorder %s105, %s106
    %p118 = scmp.eq.s32.totalorder %s28, 1
    %p119 = por %p117, %p118
    %p121 = scmp.ne.s32.totalorder %s106, %s120
    %p122 = scmp.eq.s32.totalorder %s28, 0
    %p123 = por %p121, %p122
    %s125 = sadd.s32 %s124, 1
    %p128 = scmp.eq.s32.totalorder %s22, 1
    %p129 = scmp.ne.s32.totalorder %s124, %s126
    %p130 = scmp.eq.s32.totalorder %s22, 0
    %p131 = por %p129, %p130
    %p132 = scmp.ne.s32.totalorder %s124, %s126
    %p133 = scmp.eq.s32.totalorder %s27, 1
    %p134 = por %p132, %p133
    %p135 = scmp.ne.s32.totalorder %s126, %s127
    %p136 = scmp.eq.s32.totalorder %s27, 0
    %p137 = por %p135, %p136
    %p138 = scmp.ne.s32.totalorder %s126, %s127
    %p139 = scmp.eq.s32.totalorder %s28, 1
    %p140 = por %p138, %p139
    %p142 = scmp.ne.s32.totalorder %s127, %s141
    %p143 = scmp.eq.s32.totalorder %s28, 0
    %p144 = por %p142, %p143
    %s146 = sadd.s32 %s145, 1
    %p149 = scmp.eq.s32.totalorder %s22, 1
    %p150 = scmp.ne.s32.totalorder %s145, %s147
    %p151 = scmp.eq.s32.totalorder %s22, 0
    %p152 = por %p150, %p151
    %p153 = scmp.ne.s32.totalorder %s145, %s147
    %p154 = scmp.eq.s32.totalorder %s27, 1
    %p155 = por %p153, %p154
    %p156 = scmp.ne.s32.totalorder %s147, %s148
    %p157 = scmp.eq.s32.totalorder %s27, 0
    %p158 = por %p156, %p157
    %p159 = scmp.ne.s32.totalorder %s147, %s148
    %p160 = scmp.eq.s32.totalorder %s28, 1
    %p161 = por %p159, %p160
    %p163 = scmp.ne.s32.totalorder %s148, %s162
    %p164 = scmp.eq.s32.totalorder %s28, 0
    %p165 = por %p163, %p164
    %s167 = sadd.s32 %s166, 1
    %p170 = scmp.eq.s32.totalorder %s22, 1
    %p171 = scmp.ne.s32.totalorder %s166, %s168
    %p172 = scmp.eq.s32.totalorder %s22, 0
    %p173 = por %p171, %p172
    %p174 = scmp.ne.s32.totalorder %s166, %s168
    %p175 = scmp.eq.s32.totalorder %s27, 1
    %p176 = por %p174, %p175
    %p177 = scmp.ne.s32.totalorder %s168, %s169
    %p178 = scmp.eq.s32.totalorder %s27, 0
    %p179 = por %p177, %p178
    %p180 = scmp.ne.s32.totalorder %s168, %s169
    %p181 = scmp.eq.s32.totalorder %s28, 1
    %p182 = por %p180, %p181
    %p184 = scmp.ne.s32.totalorder %s169, %s183
    %p185 = scmp.eq.s32.totalorder %s28, 0
    %p186 = por %p184, %p185
    %s188 = sadd.s32 %s187, 1
    %p191 = scmp.eq.s32.totalorder %s22, 1
    %p192 = scmp.ne.s32.totalorder %s187, %s189
    %p193 = scmp.eq.s32.totalorder %s22, 0
    %p194 = por %p192, %p193
    %p195 = scmp.ne.s32.totalorder %s187, %s189
    %p196 = scmp.eq.s32.totalorder %s27, 1
    %p197 = por %p195, %p196
    %p198 = scmp.ne.s32.totalorder %s189, %s190
    %p199 = scmp.eq.s32.totalorder %s27, 0
    %p200 = por %p198, %p199
    %p201 = scmp.ne.s32.totalorder %s189, %s190
    %p202 = scmp.eq.s32.totalorder %s28, 1
    %p203 = por %p201, %p202
    %p205 = scmp.ne.s32.totalorder %s190, %s204
    %p206 = scmp.eq.s32.totalorder %s28, 0
    %p207 = por %p205, %p206
    %s209 = sadd.s32 %s208, 1
    %p212 = scmp.eq.s32.totalorder %s22, 1
    %p213 = scmp.ne.s32.totalorder %s208, %s210
    %p214 = scmp.eq.s32.totalorder %s22, 0
    %p215 = por %p213, %p214
    %p216 = scmp.ne.s32.totalorder %s208, %s210
    %p217 = scmp.eq.s32.totalorder %s27, 1
    %p218 = por %p216, %p217
    %p219 = scmp.ne.s32.totalorder %s210, %s211
    %p220 = scmp.eq.s32.totalorder %s27, 0
    %p221 = por %p219, %p220
    %p222 = scmp.ne.s32.totalorder %s210, %s211
    %p223 = scmp.eq.s32.totalorder %s28, 1
    %p224 = por %p222, %p223
    %p226 = scmp.ne.s32.totalorder %s211, %s225
    %p227 = scmp.eq.s32.totalorder %s28, 0
    %p228 = por %p226, %p227
    %s230 = sadd.s32 %s229, 1
    %p233 = scmp.eq.s32.totalorder %s22, 1
    %p234 = scmp.ne.s32.totalorder %s229, %s231
    %p235 = scmp.eq.s32.totalorder %s22, 0
    %p236 = por %p234, %p235
    %p237 = scmp.ne.s32.totalorder %s229, %s231
    %p238 = scmp.eq.s32.totalorder %s27, 1
    %p239 = por %p237, %p238
    %p240 = scmp.ne.s32.totalorder %s231, %s232
    %p241 = scmp.eq.s32.totalorder %s27, 0
    %p242 = por %p240, %p241
    %p243 = scmp.ne.s32.totalorder %s231, %s232
    %p244 = scmp.eq.s32.totalorder %s28, 1
    %p245 = por %p243, %p244
    %p247 = scmp.ne.s32.totalorder %s232, %s246
    %p248 = scmp.eq.s32.totalorder %s28, 0
    %p249 = por %p247, %p248
    %s251 = sadd.s32 %s250, 1
    %p254 = scmp.eq.s32.totalorder %s22, 1
    %p255 = scmp.ne.s32.totalorder %s250, %s252
    %p256 = scmp.eq.s32.totalorder %s22, 0
    %p257 = por %p255, %p256
    %p258 = scmp.ne.s32.totalorder %s250, %s252
    %p259 = scmp.eq.s32.totalorder %s27, 1
    %p260 = por %p258, %p259
    %p261 = scmp.ne.s32.totalorder %s252, %s253
    %p262 = scmp.eq.s32.totalorder %s27, 0
    %p263 = por %p261, %p262
    %p264 = scmp.ne.s32.totalorder %s252, %s253
    %p265 = scmp.eq.s32.totalorder %s28, 1
    %p266 = por %p264, %p265
    %p268 = scmp.ne.s32.totalorder %s253, %s267
    %p269 = scmp.eq.s32.totalorder %s28, 0
    %p270 = por %p268, %p269
    %s272 = sadd.s32 %s271, 1
    %p275 = scmp.eq.s32.totalorder %s22, 1
    %p276 = scmp.ne.s32.totalorder %s271, %s273
    %p277 = scmp.eq.s32.totalorder %s22, 0
    %p278 = por %p276, %p277
    %p279 = scmp.ne.s32.totalorder %s271, %s273
    %p280 = scmp.eq.s32.totalorder %s27, 1
    %p281 = por %p279, %p280
    %p282 = scmp.ne.s32.totalorder %s273, %s274
    %p283 = scmp.eq.s32.totalorder %s27, 0
    %p284 = por %p282, %p283
    %p285 = scmp.ne.s32.totalorder %s273, %s274
    %p286 = scmp.eq.s32.totalorder %s28, 1
    %p287 = por %p285, %p286
    %p289 = scmp.ne.s32.totalorder %s274, %s288
    %p290 = scmp.eq.s32.totalorder %s28, 0
    %p291 = por %p289, %p290
    %s293 = sadd.s32 %s292, 1
    %p296 = scmp.eq.s32.totalorder %s22, 1
    %p297 = scmp.ne.s32.totalorder %s292, %s294
    %p298 = scmp.eq.s32.totalorder %s22, 0
    %p299 = por %p297, %p298
    %p300 = scmp.ne.s32.totalorder %s292, %s294
    %p301 = scmp.eq.s32.totalorder %s27, 1
    %p302 = por %p300, %p301
    %p303 = scmp.ne.s32.totalorder %s294, %s295
    %p304 = scmp.eq.s32.totalorder %s27, 0
    %p305 = por %p303, %p304
    %p306 = scmp.ne.s32.totalorder %s294, %s295
    %p307 = scmp.eq.s32.totalorder %s28, 1
    %p308 = por %p306, %p307
    %p310 = scmp.ne.s32.totalorder %s295, %s309
    %p311 = scmp.eq.s32.totalorder %s28, 0
    %p312 = por %p310, %p311
    %s314 = sadd.s32 %s313, 1
    %p317 = scmp.eq.s32.totalorder %s22, 1
    %p318 = scmp.ne.s32.totalorder %s313, %s315
    %p319 = scmp.eq.s32.totalorder %s22, 0
    %p320 = por %p318, %p319
    %p321 = scmp.ne.s32.totalorder %s313, %s315
    %p322 = scmp.eq.s32.totalorder %s27, 1
    %p323 = por %p321, %p322
    %p324 = scmp.ne.s32.totalorder %s315, %s316
    %p325 = scmp.eq.s32.totalorder %s27, 0
    %p326 = por %p324, %p325
    %p327 = scmp.ne.s32.totalorder %s315, %s316
    %p328 = scmp.eq.s32.totalorder %s28, 1
    %p329 = por %p327, %p328
    %p331 = scmp.ne.s32.totalorder %s316, %s330
    %p332 = scmp.eq.s32.totalorder %s28, 0
    %p333 = por %p331, %p332
    %s335 = sadd.s32 %s334, 1
    %p338 = scmp.eq.s32.totalorder %s22, 1
    %p339 = scmp.ne.s32.totalorder %s334, %s336
    %p340 = scmp.eq.s32.totalorder %s22, 0
    %p341 = por %p339, %p340
    %p342 = scmp.ne.s32.totalorder %s334, %s336
    %p343 = scmp.eq.s32.totalorder %s27, 1
    %p344 = por %p342, %p343
    %p345 = scmp.ne.s32.totalorder %s336, %s337
    %p346 = scmp.eq.s32.totalorder %s27, 0
    %p347 = por %p345, %p346
    %p348 = scmp.ne.s32.totalorder %s336, %s337
    %p349 = scmp.eq.s32.totalorder %s28, 1
    %p350 = por %p348, %p349
    %p352 = scmp.ne.s32.totalorder %s337, %s351
    %p353 = scmp.eq.s32.totalorder %s28, 0
    %p354 = por %p352, %p353
    %s356 = sadd.s32 %s355, 1
    %p359 = scmp.eq.s32.totalorder %s22, 1
    %p360 = scmp.ne.s32.totalorder %s355, %s357
    %p361 = scmp.eq.s32.totalorder %s22, 0
    %p362 = por %p360, %p361
    %p363 = scmp.ne.s32.totalorder %s355, %s357
    %p364 = scmp.eq.s32.totalorder %s27, 1
    %p365 = por %p363, %p364
    %p366 = scmp.ne.s32.totalorder %s357, %s358
    %p367 = scmp.eq.s32.totalorder %s27, 0
    %p368 = por %p366, %p367
    %p369 = scmp.ne.s32.totalorder %s357, %s358
    %p370 = scmp.eq.s32.totalorder %s28, 1
    %p371 = por %p369, %p370
    %p373 = scmp.ne.s32.totalorder %s358, %s372
    %p374 = scmp.eq.s32.totalorder %s28, 0
    %p375 = por %p373, %p374
    %s376 = ssub.s32 %s22, %s29
    %p377 = scmp.eq.s32.totalorder %s376, 0
    %s379 = sadd.s32 %s378, 1
    %s380 = scalar_select %p377, %s378, %s379
    %p383 = pneg %p377
    %p384 = scmp.eq.s32.totalorder %s22, 1
    %p385 = por %p383, %p384
    %p386 = scmp.ne.s32.totalorder %s378, %s381
    %p387 = scmp.eq.s32.totalorder %s22, 0
    %p388 = por %p386, %p387
    %p389 = scmp.ne.s32.totalorder %s378, %s381
    %p390 = scmp.eq.s32.totalorder %s27, 1
    %p391 = por %p389, %p390
    %p392 = scmp.ne.s32.totalorder %s381, %s382
    %p393 = scmp.eq.s32.totalorder %s27, 0
    %p394 = por %p392, %p393
    %p395 = scmp.ne.s32.totalorder %s381, %s382
    %p396 = scmp.eq.s32.totalorder %s28, 1
    %p397 = por %p395, %p396
    %p399 = scmp.ne.s32.totalorder %s382, %s398
    %p400 = scmp.eq.s32.totalorder %s28, 0
    %p401 = por %p399, %p400
    %p402 = scmp.le.s32.totalorder 1, %s22
    %p403 = scmp.lt.s32.totalorder %s22, 3
    %p404 = pnand %p402, %p403
    %p405 = pneg %p404
    // Predicated region
    $region9: #{transformer_decoder_forward.8} parent=5 // pred_check
      _
    $region10: #{transformer_decoder_forward.8} parent=5 // pred_check_branch
      %407 = sbr.rel (%p404) target = $region12
    $region11: #{transformer_decoder_forward.8} parent=5 // pred_region
      %s408 = ssub.s32 %s22, 1
      // Predicated region
      $region13: #{transformer_decoder_forward.8} parent=11 // pred_check
        %p409 = pneg %p95
      $region14: #{transformer_decoder_forward.8} parent=11 // pred_check_branch
        %411 = sbr.rel (%p409) target = $region16
      $region15: #{transformer_decoder_forward.8} parent=11 // pred_region
        _
      $region16: #{transformer_decoder_forward.8} parent=11 // pred_fallthru
        _
      // Predicated region
      $region17: #{transformer_decoder_forward.8} parent=11 // pred_check
        %p412 = pneg %p116
      $region18: #{transformer_decoder_forward.8} parent=11 // pred_check_branch
        %414 = sbr.rel (%p412) target = $region20
      $region19: #{transformer_decoder_forward.8} parent=11 // pred_region
        _
      $region20: #{transformer_decoder_forward.8} parent=11 // pred_fallthru
        _
      // Predicated region
      $region21: #{transformer_decoder_forward.8} parent=11 // pred_check
        %p415 = pneg %p137
      $region22: #{transformer_decoder_forward.8} parent=11 // pred_check_branch
        %417 = sbr.rel (%p415) target = $region24
      $region23: #{transformer_decoder_forward.8} parent=11 // pred_region
        _
      $region24: #{transformer_decoder_forward.8} parent=11 // pred_fallthru
        _
      // Predicated region
      $region25: #{transformer_decoder_forward.8} parent=11 // pred_check
        %p418 = pneg %p158
      $region26: #{transformer_decoder_forward.8} parent=11 // pred_check_branch
        %420 = sbr.rel (%p418) target = $region28
      $region27: #{transformer_decoder_forward.8} parent=11 // pred_region
        _
      $region28: #{transformer_decoder_forward.8} parent=11 // pred_fallthru
        _
      // Predicated region
      $region29: #{transformer_decoder_forward.8} parent=11 // pred_check
        %p421 = pneg %p179
      $region30: #{transformer_decoder_forward.8} parent=11 // pred_check_branch
        %423 = sbr.rel (%p421) target = $region32
      $region31: #{transformer_decoder_forward.8} parent=11 // pred_region
        _
      $region32: #{transformer_decoder_forward.8} parent=11 // pred_fallthru
        _
      // Predicated region
      $region33: #{transformer_decoder_forward.8} parent=11 // pred_check
        %p424 = pneg %p200
      $region34: #{transformer_decoder_forward.8} parent=11 // pred_check_branch
        %426 = sbr.rel (%p424) target = $region36
      $region35: #{transformer_decoder_forward.8} parent=11 // pred_region
        _
      $region36: #{transformer_decoder_forward.8} parent=11 // pred_fallthru
        _
      // Predicated region
      $region37: #{transformer_decoder_forward.8} parent=11 // pred_check
        %p427 = pneg %p221
      $region38: #{transformer_decoder_forward.8} parent=11 // pred_check_branch
        %429 = sbr.rel (%p427) target = $region40
      $region39: #{transformer_decoder_forward.8} parent=11 // pred_region
        _
      $region40: #{transformer_decoder_forward.8} parent=11 // pred_fallthru
        _
      // Predicated region
      $region41: #{transformer_decoder_forward.8} parent=11 // pred_check
        %p430 = pneg %p242
      $region42: #{transformer_decoder_forward.8} parent=11 // pred_check_branch
        %432 = sbr.rel (%p430) target = $region44
      $region43: #{transformer_decoder_forward.8} parent=11 // pred_region
        _
      $region44: #{transformer_decoder_forward.8} parent=11 // pred_fallthru
        _
      // Predicated region
      $region45: #{transformer_decoder_forward.8} parent=11 // pred_check
        %p433 = pneg %p263
      $region46: #{transformer_decoder_forward.8} parent=11 // pred_check_branch
        %435 = sbr.rel (%p433) target = $region48
      $region47: #{transformer_decoder_forward.8} parent=11 // pred_region
        _
      $region48: #{transformer_decoder_forward.8} parent=11 // pred_fallthru
        _
      // Predicated region
      $region49: #{transformer_decoder_forward.8} parent=11 // pred_check
        %p436 = pneg %p284
      $region50: #{transformer_decoder_forward.8} parent=11 // pred_check_branch
        %438 = sbr.rel (%p436) target = $region52
      $region51: #{transformer_decoder_forward.8} parent=11 // pred_region
        _
      $region52: #{transformer_decoder_forward.8} parent=11 // pred_fallthru
        _
      // Predicated region
      $region53: #{transformer_decoder_forward.8} parent=11 // pred_check
        %p439 = pneg %p305
      $region54: #{transformer_decoder_forward.8} parent=11 // pred_check_branch
        %441 = sbr.rel (%p439) target = $region56
      $region55: #{transformer_decoder_forward.8} parent=11 // pred_region
        _
      $region56: #{transformer_decoder_forward.8} parent=11 // pred_fallthru
        _
      // Predicated region
      $region57: #{transformer_decoder_forward.8} parent=11 // pred_check
        %p442 = pneg %p326
      $region58: #{transformer_decoder_forward.8} parent=11 // pred_check_branch
        %444 = sbr.rel (%p442) target = $region60
      $region59: #{transformer_decoder_forward.8} parent=11 // pred_region
        _
      $region60: #{transformer_decoder_forward.8} parent=11 // pred_fallthru
        _
      // Predicated region
      $region61: #{transformer_decoder_forward.8} parent=11 // pred_check
        %p445 = pneg %p347
      $region62: #{transformer_decoder_forward.8} parent=11 // pred_check_branch
        %447 = sbr.rel (%p445) target = $region64
      $region63: #{transformer_decoder_forward.8} parent=11 // pred_region
        _
      $region64: #{transformer_decoder_forward.8} parent=11 // pred_fallthru
        _
      // Predicated region
      $region65: #{transformer_decoder_forward.8} parent=11 // pred_check
        %p448 = pneg %p368
      $region66: #{transformer_decoder_forward.8} parent=11 // pred_check_branch
        %450 = sbr.rel (%p448) target = $region68
      $region67: #{transformer_decoder_forward.8} parent=11 // pred_region
        _
      $region68: #{transformer_decoder_forward.8} parent=11 // pred_fallthru
        _
    $region12: #{transformer_decoder_forward.8} parent=5 // pred_fallthru
      _
    %p451 = scmp.lt.s32.totalorder %s22, 2
    // Predicated region
    $region69: #{transformer_decoder_forward.8} parent=5 // pred_check
      %p452 = pneg %p451
    $region70: #{transformer_decoder_forward.8} parent=5 // pred_check_branch
      %454 = sbr.rel (%p452) target = $region72
    $region71: #{transformer_decoder_forward.8} parent=5 // pred_region
      // Predicated region
      $region73: #{transformer_decoder_forward.8} parent=71 // pred_check
        %p455 = pneg %p42
      $region74: #{transformer_decoder_forward.8} parent=71 // pred_check_branch
        %457 = sbr.rel (%p455) target = $region76
      $region75: #{transformer_decoder_forward.8} parent=71 // pred_region
        %p458 = scmp.lt.s32.totalorder %s22, 1
        %s459 = scalar_select %p458, %s22, 1
        %s460 = smul.addr %s459, 4
        %s461 = scalar_lea.vmem %s0, %s460
      $region76: #{transformer_decoder_forward.8} parent=71 // pred_fallthru
        _
      // Predicated region
      $region77: #{transformer_decoder_forward.8} parent=71 // pred_check
        %p462 = pneg %p68
      $region78: #{transformer_decoder_forward.8} parent=71 // pred_check_branch
        %464 = sbr.rel (%p462) target = $region80
      $region79: #{transformer_decoder_forward.8} parent=71 // pred_region
        %p465 = scmp.lt.s32.totalorder %s22, 1
        %s466 = scalar_select %p465, %s22, 1
        %s467 = smul.addr %s466, 4
        %s468 = scalar_lea.vmem %s1, %s467
      $region80: #{transformer_decoder_forward.8} parent=71 // pred_fallthru
        _
    $region72: #{transformer_decoder_forward.8} parent=5 // pred_fallthru
      _
    %p469 = scmp.le.s32.totalorder 1, %s22
    %p470 = scmp.lt.s32.totalorder %s22, 3
    %p471 = pnand %p469, %p470
    %p472 = pneg %p471
    // Predicated region
    $region81: #{transformer_decoder_forward.8} parent=5 // pred_check
      _
    $region82: #{transformer_decoder_forward.8} parent=5 // pred_check_branch
      %474 = sbr.rel (%p471) target = $region84
    $region83: #{transformer_decoder_forward.8} parent=5 // pred_region
      %s475 = ssub.s32 %s22, 1
      %p476 = scmp.lt.s32.totalorder %s27, 1
      %s477 = scalar_select %p476, %s27, 1
      %s478 = smul.addr %s477, 4
      %s479 = scalar_lea.vmem %s0, %s478
      %p480 = pneg %p48
      %p481 = pneg %p45
      %p482 = scmp.lt.s32.totalorder %s27, 1
      %s483 = scalar_select %p482, %s27, 1
      %s484 = smul.addr %s483, 4
      %s485 = scalar_lea.vmem %s1, %s484
      %p486 = pneg %p74
      %p487 = pneg %p71
      %p488 = pneg %p95
      %p489 = pneg %p92
      %p490 = pneg %p116
      %p491 = pneg %p113
      %p492 = pneg %p137
      %p493 = pneg %p134
      %p494 = pneg %p158
      %p495 = pneg %p155
      %p496 = pneg %p179
      %p497 = pneg %p176
      %p498 = pneg %p200
      %p499 = pneg %p197
      %p500 = pneg %p221
      %p501 = pneg %p218
      %p502 = pneg %p242
      %p503 = pneg %p239
      %p504 = pneg %p263
      %p505 = pneg %p260
      %p506 = pneg %p284
      %p507 = pneg %p281
      %p508 = pneg %p305
      %p509 = pneg %p302
      %p510 = pneg %p326
      %p511 = pneg %p323
      %p512 = pneg %p347
      %p513 = pneg %p344
      %p514 = pneg %p368
      %p515 = pneg %p365
      %p516 = pneg %p394
      %p517 = pneg %p391
      %p518 = scmp.lt.s32.totalorder %s27, 1
      %s519 = scalar_select %p518, %s27, 1
      %s520 = smul.addr %s519, 4
      %s521 = scalar_lea.vmem %s16, %s520
      %p522 = scmp.lt.s32.totalorder %s27, 1
      %s523 = scalar_select %p522, %s27, 1
      %s524 = smul.addr %s523, 4
      %s525 = scalar_lea.vmem %s0, %s524
      %p526 = scmp.lt.s32.totalorder %s27, 1
      %s527 = scalar_select %p526, %s27, 1
      %s528 = smul.addr %s527, 4
      %s529 = scalar_lea.vmem %s1, %s528
      %p530 = scmp.lt.s32.totalorder %s27, 1
      %s531 = scalar_select %p530, %s27, 1
      %s532 = smul.addr %s531, 4
      %s533 = scalar_lea.vmem %s16, %s532
      %v535 = vld [vmem:[%s525] sm:$0xf]
      %v536 = vunpack.c.l.bf16 %v535
      %v537 = vld [vmem:[%s529] sm:$0xf]
      %v538 = vld [vmem:[%s2] sm:$0xf]
      %v539 = vld [vmem:[%s2 + $0x4] sm:$0xf]
      %v540 = vld [vmem:[%s2 + $0x8] sm:$0xf]
      %v541 = vld [vmem:[%s2 + $0xc] sm:$0xf]
      %v542 = vld [vmem:[%s3] sm:$0x1]
      %v544 = vlaneseq
      %v545 = vshrl.u32 %v544, 7
      %v546 = vsub.s32 0, %v545
      %v547 = vrot.slane %v542, %v546
      %v553 = vunpack.c.l.b16 %v538
      %v554 = vunpack.c.l.b16 %v539
      %v555 = vunpack.c.l.b16 %v540
      %v556 = vunpack.c.l.b16 %v541
      %v557 = vpack.c.b16 %v554, %v553
      %v558 = vpack.c.b16 %v556, %v555
      %vm561 = vcmask 261120
      %v563 = vsel %vm561, %v535, 0
      %565 = vmatprep.subr.bf16.mxu0 0
      %566 = vmatpush1.bf16.msra.mxu0 %v557
      %567 = vmatprep.subr.bf16.mxu0 0
      %568 = vmatpush1.bf16.msra.mxu0 %v558
      %569 = vmatprep.subr.bf16.mxu0 0
      %570 = vmatpush1.bf16.msra.mxu0 0
      %571 = vmatprep.subr.bf16.mxu0 0
      %572 = vmatpush1.bf16.msra.mxu0 0
      %573 = vmatprep.subr.bf16.mxu0 0
      %574 = vmatpush1.bf16.msra.mxu0 0
      %575 = vmatprep.subr.bf16.mxu0 0
      %576 = vmatpush1.bf16.msra.mxu0 0
      %577 = vmatprep.subr.bf16.mxu0 0
      %578 = vmatpush1.bf16.msra.mxu0 0
      %579 = vmatprep.subr.bf16.mxu0 0
      %580 = vmatpush1.bf16.msra.mxu0 0
      %581 = vmatprep.subr.bf16.mxu0 0
      %582 = vmatpush1.bf16.msra.mxu0 0
      %583 = vmatprep.subr.bf16.mxu0 0
      %584 = vmatpush1.bf16.msra.mxu0 0
      %585 = vmatprep.subr.bf16.mxu0 0
      %586 = vmatpush1.bf16.msra.mxu0 0
      %587 = vmatprep.subr.bf16.mxu0 0
      %588 = vmatpush1.bf16.msra.mxu0 0
      %589 = vmatprep.subr.bf16.mxu0 0
      %590 = vmatpush1.bf16.msra.mxu0 0
      %591 = vmatprep.subr.bf16.mxu0 0
      %592 = vmatpush1.bf16.msra.mxu0 0
      %593 = vmatprep.subr.bf16.mxu0 0
      %594 = vmatpush1.bf16.msra.mxu0 0
      %595 = vmatprep.subr.bf16.mxu0 0
      %596 = vmatpush1.bf16.msra.mxu0 0
      %597 = vmatprep.mubr.bf16.mxu0 0
      %598 = vmatmul.mubr.bf16.gmra.mrb[0].mxu0 %v563
      %v599 = vpop.f32.mrb[0].mxu0
      %v600 = vadd.f32 %v547, %v599
      %v601 = vpop.f32.mrb[0].mxu0
      %v602 = vpop.f32.mrb[0].mxu0
      %v603 = vpop.f32.mrb[0].mxu0
      %604 = vdwg.mxu0
      %v605 = vpack.c.bf16 %v600, %v600
      %607 = vrot.lane.b32.xlu0 %v605, 96
      %v608 = vpop.permute.xlu0 %607
      %vm609 = vcmask 64512
      %v611 = vsel %vm609, %v605, 0
      %v614 = vsel %vm609, %v608, 0
      %616 = vmatprep.subr.bf16.mxu0 0
      %617 = vmatpush1.bf16.xpose.msra.mxu0 %v614
      %618 = vmatprep.subr.bf16.mxu0 0
      %619 = vmatpush1.bf16.xpose.msra.mxu0 0
      %620 = vmatprep.subr.bf16.mxu0 0
      %621 = vmatpush1.bf16.xpose.msra.mxu0 0
      %622 = vmatprep.subr.bf16.mxu0 0
      %623 = vmatpush1.bf16.xpose.msra.mxu0 0
      %624 = vmatprep.subr.bf16.mxu0 0
      %625 = vmatpush1.bf16.xpose.msra.mxu0 0
      %626 = vmatprep.subr.bf16.mxu0 0
      %627 = vmatpush1.bf16.xpose.msra.mxu0 0
      %628 = vmatprep.subr.bf16.mxu0 0
      %629 = vmatpush1.bf16.xpose.msra.mxu0 0
      %630 = vmatprep.subr.bf16.mxu0 0
      %631 = vmatpush1.bf16.xpose.msra.mxu0 0
      %632 = vmatprep.subr.bf16.mxu0 0
      %633 = vmatpush1.bf16.xpose.msra.mxu0 0
      %634 = vmatprep.subr.bf16.mxu0 0
      %635 = vmatpush1.bf16.xpose.msra.mxu0 0
      %636 = vmatprep.subr.bf16.mxu0 0
      %637 = vmatpush1.bf16.xpose.msra.mxu0 0
      %638 = vmatprep.subr.bf16.mxu0 0
      %639 = vmatpush1.bf16.xpose.msra.mxu0 0
      %640 = vmatprep.subr.bf16.mxu0 0
      %641 = vmatpush1.bf16.xpose.msra.mxu0 0
      %642 = vmatprep.subr.bf16.mxu0 0
      %643 = vmatpush1.bf16.xpose.msra.mxu0 0
      %644 = vmatprep.subr.bf16.mxu0 0
      %645 = vmatpush1.bf16.xpose.msra.mxu0 0
      %646 = vmatprep.subr.bf16.mxu0 0
      %647 = vmatpush1.bf16.xpose.msra.mxu0 0
      %648 = vmatprep.mubr.bf16.mxu0 0
      %649 = vmatmul.mubr.bf16.gmra.mrb[0].mxu0 %v611
      %v650 = vpop.f32.mrb[0].mxu0
      %v651 = vadd.f32 0.0, %v650
      %v652 = vpop.f32.mrb[0].mxu0
      %v653 = vpop.f32.mrb[0].mxu0
      %v654 = vpop.f32.mrb[0].mxu0
      %655 = vdwg.mxu0
      %v656 = vsel %vm609, %v651, -inf
      %657 = vmax.xlane.f32.xlu0 %v656
      %v658 = vpop.xlane.xlu0 %657
      %v659 = vsub.f32 %v651, %v658
      %v660 = vmul.f32 %v659, 1.442695
      %v661 = vpow.pop %v660
      %v662 = vsel %vm609, %v661, 0.0
      %663 = vadd.xlane.f32.xlu0 %v662
      %v664 = vpop.xlane.xlu0 %663
      %v665 = vrcp.pop %v664
      %v666 = vmul.f32 %v661, %v665
      %v667 = vpack.c.bf16 %v666, %v666
      %668 = vrot.lane.b32.xlu0 %v605, 64
      %v669 = vpop.permute.xlu0 %668
      %v671 = vsel %vm609, %v667, 0
      %vm673 = vcmask 1043456
      %v675 = vsel %vm673, %v669, 0
      %677 = vmatprep.subr.bf16.mxu0 0
      %678 = vmatpush1.bf16.msra.mxu0 %v675
      %679 = vmatprep.subr.bf16.mxu0 0
      %680 = vmatpush1.bf16.msra.mxu0 0
      %681 = vmatprep.subr.bf16.mxu0 0
      %682 = vmatpush1.bf16.msra.mxu0 0
      %683 = vmatprep.subr.bf16.mxu0 0
      %684 = vmatpush1.bf16.msra.mxu0 0
      %685 = vmatprep.subr.bf16.mxu0 0
      %686 = vmatpush1.bf16.msra.mxu0 0
      %687 = vmatprep.subr.bf16.mxu0 0
      %688 = vmatpush1.bf16.msra.mxu0 0
      %689 = vmatprep.subr.bf16.mxu0 0
      %690 = vmatpush1.bf16.msra.mxu0 0
      %691 = vmatprep.subr.bf16.mxu0 0
      %692 = vmatpush1.bf16.msra.mxu0 0
      %693 = vmatprep.subr.bf16.mxu0 0
      %694 = vmatpush1.bf16.msra.mxu0 0
      %695 = vmatprep.subr.bf16.mxu0 0
      %696 = vmatpush1.bf16.msra.mxu0 0
      %697 = vmatprep.subr.bf16.mxu0 0
      %698 = vmatpush1.bf16.msra.mxu0 0
      %699 = vmatprep.subr.bf16.mxu0 0
      %700 = vmatpush1.bf16.msra.mxu0 0
      %701 = vmatprep.subr.bf16.mxu0 0
      %702 = vmatpush1.bf16.msra.mxu0 0
      %703 = vmatprep.subr.bf16.mxu0 0
      %704 = vmatpush1.bf16.msra.mxu0 0
      %705 = vmatprep.subr.bf16.mxu0 0
      %706 = vmatpush1.bf16.msra.mxu0 0
      %707 = vmatprep.subr.bf16.mxu0 0
      %708 = vmatpush1.bf16.msra.mxu0 0
      %709 = vmatprep.mubr.bf16.mxu0 0
      %710 = vmatmul.mubr.bf16.gmra.mrb[0].mxu0 %v671
      %v711 = vpop.f32.mrb[0].mxu0
      %v712 = vadd.f32 0.0, %v711
      %v713 = vpop.f32.mrb[0].mxu0
      %v714 = vpop.f32.mrb[0].mxu0
      %v715 = vpop.f32.mrb[0].mxu0
      %716 = vdwg.mxu0
      %717 = vrot.lane.b32.xlu0 %v605, 120
      %v718 = vpop.permute.xlu0 %717
      %719 = vrot.lane.b32.xlu0 %v605, 88
      %v720 = vpop.permute.xlu0 %719
      %v722 = vsel %vm609, %v718, 0
      %v725 = vsel %vm609, %v720, 0
      %727 = vmatprep.subr.bf16.mxu0 0
      %728 = vmatpush1.bf16.xpose.msra.mxu0 %v725
      %729 = vmatprep.subr.bf16.mxu0 0
      %730 = vmatpush1.bf16.xpose.msra.mxu0 0
      %731 = vmatprep.subr.bf16.mxu0 0
      %732 = vmatpush1.bf16.xpose.msra.mxu0 0
      %733 = vmatprep.subr.bf16.mxu0 0
      %734 = vmatpush1.bf16.xpose.msra.mxu0 0
      %735 = vmatprep.subr.bf16.mxu0 0
      %736 = vmatpush1.bf16.xpose.msra.mxu0 0
      %737 = vmatprep.subr.bf16.mxu0 0
      %738 = vmatpush1.bf16.xpose.msra.mxu0 0
      %739 = vmatprep.subr.bf16.mxu0 0
      %740 = vmatpush1.bf16.xpose.msra.mxu0 0
      %741 = vmatprep.subr.bf16.mxu0 0
      %742 = vmatpush1.bf16.xpose.msra.mxu0 0
      %743 = vmatprep.subr.bf16.mxu0 0
      %744 = vmatpush1.bf16.xpose.msra.mxu0 0
      %745 = vmatprep.subr.bf16.mxu0 0
      %746 = vmatpush1.bf16.xpose.msra.mxu0 0
      %747 = vmatprep.subr.bf16.mxu0 0
      %748 = vmatpush1.bf16.xpose.msra.mxu0 0
      %749 = vmatprep.subr.bf16.mxu0 0
      %750 = vmatpush1.bf16.xpose.msra.mxu0 0
      %751 = vmatprep.subr.bf16.mxu0 0
      %752 = vmatpush1.bf16.xpose.msra.mxu0 0
      %753 = vmatprep.subr.bf16.mxu0 0
      %754 = vmatpush1.bf16.xpose.msra.mxu0 0
      %755 = vmatprep.subr.bf16.mxu0 0
      %756 = vmatpush1.bf16.xpose.msra.mxu0 0
      %757 = vmatprep.subr.bf16.mxu0 0
      %758 = vmatpush1.bf16.xpose.msra.mxu0 0
      %759 = vmatprep.mubr.bf16.mxu0 0
      %760 = vmatmul.mubr.bf16.gmra.mrb[0].mxu0 %v722
      %v761 = vpop.f32.mrb[0].mxu0
      %v762 = vadd.f32 0.0, %v761
      %v763 = vpop.f32.mrb[0].mxu0
      %v764 = vpop.f32.mrb[0].mxu0
      %v765 = vpop.f32.mrb[0].mxu0
      %766 = vdwg.mxu0
      %v767 = vsel %vm609, %v762, -inf
      %768 = vmax.xlane.f32.xlu0 %v767
      %v769 = vpop.xlane.xlu0 %768
      %v770 = vsub.f32 %v762, %v769
      %v771 = vmul.f32 %v770, 1.442695
      %v772 = vpow.pop %v771
      %v773 = vsel %vm609, %v772, 0.0
      %774 = vadd.xlane.f32.xlu0 %v773
      %v775 = vpop.xlane.xlu0 %774
      %v776 = vrcp.pop %v775
      %v777 = vmul.f32 %v772, %v776
      %v778 = vpack.c.bf16 %v777, %v777
      %779 = vrot.lane.b32.xlu0 %v605, 56
      %v780 = vpop.permute.xlu0 %779
      %v782 = vsel %vm609, %v778, 0
      %v785 = vsel %vm673, %v780, 0
      %787 = vmatprep.subr.bf16.mxu0 0
      %788 = vmatpush1.bf16.msra.mxu0 %v785
      %789 = vmatprep.subr.bf16.mxu0 0
      %790 = vmatpush1.bf16.msra.mxu0 0
      %791 = vmatprep.subr.bf16.mxu0 0
      %792 = vmatpush1.bf16.msra.mxu0 0
      %793 = vmatprep.subr.bf16.mxu0 0
      %794 = vmatpush1.bf16.msra.mxu0 0
      %795 = vmatprep.subr.bf16.mxu0 0
      %796 = vmatpush1.bf16.msra.mxu0 0
      %797 = vmatprep.subr.bf16.mxu0 0
      %798 = vmatpush1.bf16.msra.mxu0 0
      %799 = vmatprep.subr.bf16.mxu0 0
      %800 = vmatpush1.bf16.msra.mxu0 0
      %801 = vmatprep.subr.bf16.mxu0 0
      %802 = vmatpush1.bf16.msra.mxu0 0
      %803 = vmatprep.subr.bf16.mxu0 0
      %804 = vmatpush1.bf16.msra.mxu0 0
      %805 = vmatprep.subr.bf16.mxu0 0
      %806 = vmatpush1.bf16.msra.mxu0 0
      %807 = vmatprep.subr.bf16.mxu0 0
      %808 = vmatpush1.bf16.msra.mxu0 0
      %809 = vmatprep.subr.bf16.mxu0 0
      %810 = vmatpush1.bf16.msra.mxu0 0
      %811 = vmatprep.subr.bf16.mxu0 0
      %812 = vmatpush1.bf16.msra.mxu0 0
      %813 = vmatprep.subr.bf16.mxu0 0
      %814 = vmatpush1.bf16.msra.mxu0 0
      %815 = vmatprep.subr.bf16.mxu0 0
      %816 = vmatpush1.bf16.msra.mxu0 0
      %817 = vmatprep.subr.bf16.mxu0 0
      %818 = vmatpush1.bf16.msra.mxu0 0
      %819 = vmatprep.mubr.bf16.mxu0 0
      %820 = vmatmul.mubr.bf16.gmra.mrb[0].mxu0 %v782
      %v821 = vpop.f32.mrb[0].mxu0
      %v822 = vadd.f32 0.0, %v821
      %v823 = vpop.f32.mrb[0].mxu0
      %v824 = vpop.f32.mrb[0].mxu0
      %v825 = vpop.f32.mrb[0].mxu0
      %826 = vdwg.mxu0
      %827 = vrot.lane.b32.xlu0 %v605, 112
      %v828 = vpop.permute.xlu0 %827
      %829 = vrot.lane.b32.xlu0 %v605, 80
      %v830 = vpop.permute.xlu0 %829
      %v832 = vsel %vm609, %v828, 0
      %v835 = vsel %vm609, %v830, 0
      %837 = vmatprep.subr.bf16.mxu0 0
      %838 = vmatpush1.bf16.xpose.msra.mxu0 %v835
      %839 = vmatprep.subr.bf16.mxu0 0
      %840 = vmatpush1.bf16.xpose.msra.mxu0 0
      %841 = vmatprep.subr.bf16.mxu0 0
      %842 = vmatpush1.bf16.xpose.msra.mxu0 0
      %843 = vmatprep.subr.bf16.mxu0 0
      %844 = vmatpush1.bf16.xpose.msra.mxu0 0
      %845 = vmatprep.subr.bf16.mxu0 0
      %846 = vmatpush1.bf16.xpose.msra.mxu0 0
      %847 = vmatprep.subr.bf16.mxu0 0
      %848 = vmatpush1.bf16.xpose.msra.mxu0 0
      %849 = vmatprep.subr.bf16.mxu0 0
      %850 = vmatpush1.bf16.xpose.msra.mxu0 0
      %851 = vmatprep.subr.bf16.mxu0 0
      %852 = vmatpush1.bf16.xpose.msra.mxu0 0
      %853 = vmatprep.subr.bf16.mxu0 0
      %854 = vmatpush1.bf16.xpose.msra.mxu0 0
      %855 = vmatprep.subr.bf16.mxu0 0
      %856 = vmatpush1.bf16.xpose.msra.mxu0 0
      %857 = vmatprep.subr.bf16.mxu0 0
      %858 = vmatpush1.bf16.xpose.msra.mxu0 0
      %859 = vmatprep.subr.bf16.mxu0 0
      %860 = vmatpush1.bf16.xpose.msra.mxu0 0
      %861 = vmatprep.subr.bf16.mxu0 0
      %862 = vmatpush1.bf16.xpose.msra.mxu0 0
      %863 = vmatprep.subr.bf16.mxu0 0
      %864 = vmatpush1.bf16.xpose.msra.mxu0 0
      %865 = vmatprep.subr.bf16.mxu0 0
      %866 = vmatpush1.bf16.xpose.msra.mxu0 0
      %867 = vmatprep.subr.bf16.mxu0 0
      %868 = vmatpush1.bf16.xpose.msra.mxu0 0
      %869 = vmatprep.mubr.bf16.mxu0 0
      %870 = vmatmul.mubr.bf16.gmra.mrb[0].mxu0 %v832
      %v871 = vpop.f32.mrb[0].mxu0
      %v872 = vadd.f32 0.0, %v871
      %v873 = vpop.f32.mrb[0].mxu0
      %v874 = vpop.f32.mrb[0].mxu0
      %v875 = vpop.f32.mrb[0].mxu0
      %876 = vdwg.mxu0
      %v877 = vsel %vm609, %v872, -inf
      %878 = vmax.xlane.f32.xlu0 %v877
      %v879 = vpop.xlane.xlu0 %878
      %v880 = vsub.f32 %v872, %v879
      %v881 = vmul.f32 %v880, 1.442695
      %v882 = vpow.pop %v881
      %v883 = vsel %vm609, %v882, 0.0
      %884 = vadd.xlane.f32.xlu0 %v883
      %v885 = vpop.xlane.xlu0 %884
      %v886 = vrcp.pop %v885
      %v887 = vmul.f32 %v882, %v886
      %v888 = vpack.c.bf16 %v887, %v887
      %889 = vrot.lane.b32.xlu0 %v605, 48
      %v890 = vpop.permute.xlu0 %889
      %v892 = vsel %vm609, %v888, 0
      %v895 = vsel %vm673, %v890, 0
      %897 = vmatprep.subr.bf16.mxu0 0
      %898 = vmatpush1.bf16.msra.mxu0 %v895
      %899 = vmatprep.subr.bf16.mxu0 0
      %900 = vmatpush1.bf16.msra.mxu0 0
      %901 = vmatprep.subr.bf16.mxu0 0
      %902 = vmatpush1.bf16.msra.mxu0 0
      %903 = vmatprep.subr.bf16.mxu0 0
      %904 = vmatpush1.bf16.msra.mxu0 0
      %905 = vmatprep.subr.bf16.mxu0 0
      %906 = vmatpush1.bf16.msra.mxu0 0
      %907 = vmatprep.subr.bf16.mxu0 0
      %908 = vmatpush1.bf16.msra.mxu0 0
      %909 = vmatprep.subr.bf16.mxu0 0
      %910 = vmatpush1.bf16.msra.mxu0 0
      %911 = vmatprep.subr.bf16.mxu0 0
      %912 = vmatpush1.bf16.msra.mxu0 0
      %913 = vmatprep.subr.bf16.mxu0 0
      %914 = vmatpush1.bf16.msra.mxu0 0
      %915 = vmatprep.subr.bf16.mxu0 0
      %916 = vmatpush1.bf16.msra.mxu0 0
      %917 = vmatprep.subr.bf16.mxu0 0
      %918 = vmatpush1.bf16.msra.mxu0 0
      %919 = vmatprep.subr.bf16.mxu0 0
      %920 = vmatpush1.bf16.msra.mxu0 0
      %921 = vmatprep.subr.bf16.mxu0 0
      %922 = vmatpush1.bf16.msra.mxu0 0
      %923 = vmatprep.subr.bf16.mxu0 0
      %924 = vmatpush1.bf16.msra.mxu0 0
      %925 = vmatprep.subr.bf16.mxu0 0
      %926 = vmatpush1.bf16.msra.mxu0 0
      %927 = vmatprep.subr.bf16.mxu0 0
      %928 = vmatpush1.bf16.msra.mxu0 0
      %929 = vmatprep.mubr.bf16.mxu0 0
      %930 = vmatmul.mubr.bf16.gmra.mrb[0].mxu0 %v892
      %v931 = vpop.f32.mrb[0].mxu0
      %v932 = vadd.f32 0.0, %v931
      %v933 = vpop.f32.mrb[0].mxu0
      %v934 = vpop.f32.mrb[0].mxu0
      %v935 = vpop.f32.mrb[0].mxu0
      %936 = vdwg.mxu0
      %937 = vrot.lane.b32.xlu0 %v605, 104
      %v938 = vpop.permute.xlu0 %937
      %939 = vrot.lane.b32.xlu0 %v605, 72
      %v940 = vpop.permute.xlu0 %939
      %v942 = vsel %vm609, %v938, 0
      %v945 = vsel %vm609, %v940, 0
      %947 = vmatprep.subr.bf16.mxu0 0
      %948 = vmatpush1.bf16.xpose.msra.mxu0 %v945
      %949 = vmatprep.subr.bf16.mxu0 0
      %950 = vmatpush1.bf16.xpose.msra.mxu0 0
      %951 = vmatprep.subr.bf16.mxu0 0
      %952 = vmatpush1.bf16.xpose.msra.mxu0 0
      %953 = vmatprep.subr.bf16.mxu0 0
      %954 = vmatpush1.bf16.xpose.msra.mxu0 0
      %955 = vmatprep.subr.bf16.mxu0 0
      %956 = vmatpush1.bf16.xpose.msra.mxu0 0
      %957 = vmatprep.subr.bf16.mxu0 0
      %958 = vmatpush1.bf16.xpose.msra.mxu0 0
      %959 = vmatprep.subr.bf16.mxu0 0
      %960 = vmatpush1.bf16.xpose.msra.mxu0 0
      %961 = vmatprep.subr.bf16.mxu0 0
      %962 = vmatpush1.bf16.xpose.msra.mxu0 0
      %963 = vmatprep.subr.bf16.mxu0 0
      %964 = vmatpush1.bf16.xpose.msra.mxu0 0
      %965 = vmatprep.subr.bf16.mxu0 0
      %966 = vmatpush1.bf16.xpose.msra.mxu0 0
      %967 = vmatprep.subr.bf16.mxu0 0
      %968 = vmatpush1.bf16.xpose.msra.mxu0 0
      %969 = vmatprep.subr.bf16.mxu0 0
      %970 = vmatpush1.bf16.xpose.msra.mxu0 0
      %971 = vmatprep.subr.bf16.mxu0 0
      %972 = vmatpush1.bf16.xpose.msra.mxu0 0
      %973 = vmatprep.subr.bf16.mxu0 0
      %974 = vmatpush1.bf16.xpose.msra.mxu0 0
      %975 = vmatprep.subr.bf16.mxu0 0
      %976 = vmatpush1.bf16.xpose.msra.mxu0 0
      %977 = vmatprep.subr.bf16.mxu0 0
      %978 = vmatpush1.bf16.xpose.msra.mxu0 0
      %979 = vmatprep.mubr.bf16.mxu0 0
      %980 = vmatmul.mubr.bf16.gmra.mrb[0].mxu0 %v942
      %v981 = vpop.f32.mrb[0].mxu0
      %v982 = vadd.f32 0.0, %v981
      %v983 = vpop.f32.mrb[0].mxu0
      %v984 = vpop.f32.mrb[0].mxu0
      %v985 = vpop.f32.mrb[0].mxu0
      %986 = vdwg.mxu0
      %v987 = vsel %vm609, %v982, -inf
      %988 = vmax.xlane.f32.xlu0 %v987
      %v989 = vpop.xlane.xlu0 %988
      %v990 = vsub.f32 %v982, %v989
      %v991 = vmul.f32 %v990, 1.442695
      %v992 = vpow.pop %v991
      %v993 = vsel %vm609, %v992, 0.0
      %994 = vadd.xlane.f32.xlu0 %v993
      %v995 = vpop.xlane.xlu0 %994
      %v996 = vrcp.pop %v995
      %v997 = vmul.f32 %v992, %v996
      %v998 = vpack.c.bf16 %v997, %v997
      %999 = vrot.lane.b32.xlu0 %v605, 40
      %v1000 = vpop.permute.xlu0 %999
      %v1002 = vsel %vm609, %v998, 0
      %v1005 = vsel %vm673, %v1000, 0
      %1007 = vmatprep.subr.bf16.mxu0 0
      %1008 = vmatpush1.bf16.msra.mxu0 %v1005
      %1009 = vmatprep.subr.bf16.mxu0 0
      %1010 = vmatpush1.bf16.msra.mxu0 0
      %1011 = vmatprep.subr.bf16.mxu0 0
      %1012 = vmatpush1.bf16.msra.mxu0 0
      %1013 = vmatprep.subr.bf16.mxu0 0
      %1014 = vmatpush1.bf16.msra.mxu0 0
      %1015 = vmatprep.subr.bf16.mxu0 0
      %1016 = vmatpush1.bf16.msra.mxu0 0
      %1017 = vmatprep.subr.bf16.mxu0 0
      %1018 = vmatpush1.bf16.msra.mxu0 0
      %1019 = vmatprep.subr.bf16.mxu0 0
      %1020 = vmatpush1.bf16.msra.mxu0 0
      %1021 = vmatprep.subr.bf16.mxu0 0
      %1022 = vmatpush1.bf16.msra.mxu0 0
      %1023 = vmatprep.subr.bf16.mxu0 0
      %1024 = vmatpush1.bf16.msra.mxu0 0
      %1025 = vmatprep.subr.bf16.mxu0 0
      %1026 = vmatpush1.bf16.msra.mxu0 0
      %1027 = vmatprep.subr.bf16.mxu0 0
      %1028 = vmatpush1.bf16.msra.mxu0 0
      %1029 = vmatprep.subr.bf16.mxu0 0
      %1030 = vmatpush1.bf16.msra.mxu0 0
      %1031 = vmatprep.subr.bf16.mxu0 0
      %1032 = vmatpush1.bf16.msra.mxu0 0
      %1033 = vmatprep.subr.bf16.mxu0 0
      %1034 = vmatpush1.bf16.msra.mxu0 0
      %1035 = vmatprep.subr.bf16.mxu0 0
      %1036 = vmatpush1.bf16.msra.mxu0 0
      %1037 = vmatprep.subr.bf16.mxu0 0
      %1038 = vmatpush1.bf16.msra.mxu0 0
      %1039 = vmatprep.mubr.bf16.mxu0 0
      %1040 = vmatmul.mubr.bf16.gmra.mrb[0].mxu0 %v1002
      %v1041 = vpop.f32.mrb[0].mxu0
      %v1042 = vadd.f32 0.0, %v1041
      %v1043 = vpop.f32.mrb[0].mxu0
      %v1044 = vpop.f32.mrb[0].mxu0
      %v1045 = vpop.f32.mrb[0].mxu0
      %1046 = vdwg.mxu0
      %1048 = vrot.lane.b32.xlu0 %v822, 8
      %v1049 = vpop.permute.xlu0 %1048
      %1052 = vrot.lane.b32.xlu0 %v932, 16
      %v1053 = vpop.permute.xlu0 %1052
      %1056 = vrot.lane.b32.xlu0 %v1042, 24
      %v1057 = vpop.permute.xlu0 %1056
      %v1059 = vsel %vm609, %v712, %v1049
      %vm1060 = vcmask 130048
      %v1061 = vsel %vm1060, %v1059, %v1053
      %vm1062 = vcmask 195584
      %v1063 = vsel %vm1062, %v1061, %v1057
      %v1064 = vpack.c.bf16 %v1063, %v1063
      %v1065 = vld [vmem:[%s4] sm:$0xf]
      %v1066 = vld [vmem:[%s4 + $0x4] sm:$0xf]
      %v1067 = vld [vmem:[%s4 + $0x8] sm:$0xf]
      %v1068 = vld [vmem:[%s4 + $0xc] sm:$0xf]
      %v1069 = vld [vmem:[%s5] sm:$0x1]
      %v1071 = vlaneseq
      %v1072 = vshrl.u32 %v1071, 7
      %v1073 = vsub.s32 0, %v1072
      %v1074 = vrot.slane %v1069, %v1073
      %v1080 = vunpack.c.l.b16 %v1065
      %v1081 = vunpack.c.l.b16 %v1066
      %v1082 = vunpack.c.l.b16 %v1067
      %v1083 = vunpack.c.l.b16 %v1068
      %v1084 = vpack.c.b16 %v1081, %v1080
      %v1085 = vpack.c.b16 %v1083, %v1082
      %v1089 = vsel %vm561, %v1064, 0
      %1091 = vmatprep.subr.bf16.mxu0 0
      %1092 = vmatpush1.bf16.msra.mxu0 %v1084
      %1093 = vmatprep.subr.bf16.mxu0 0
      %1094 = vmatpush1.bf16.msra.mxu0 %v1085
      %1095 = vmatprep.subr.bf16.mxu0 0
      %1096 = vmatpush1.bf16.msra.mxu0 0
      %1097 = vmatprep.subr.bf16.mxu0 0
      %1098 = vmatpush1.bf16.msra.mxu0 0
      %1099 = vmatprep.subr.bf16.mxu0 0
      %1100 = vmatpush1.bf16.msra.mxu0 0
      %1101 = vmatprep.subr.bf16.mxu0 0
      %1102 = vmatpush1.bf16.msra.mxu0 0
      %1103 = vmatprep.subr.bf16.mxu0 0
      %1104 = vmatpush1.bf16.msra.mxu0 0
      %1105 = vmatprep.subr.bf16.mxu0 0
      %1106 = vmatpush1.bf16.msra.mxu0 0
      %1107 = vmatprep.subr.bf16.mxu0 0
      %1108 = vmatpush1.bf16.msra.mxu0 0
      %1109 = vmatprep.subr.bf16.mxu0 0
      %1110 = vmatpush1.bf16.msra.mxu0 0
      %1111 = vmatprep.subr.bf16.mxu0 0
      %1112 = vmatpush1.bf16.msra.mxu0 0
      %1113 = vmatprep.subr.bf16.mxu0 0
      %1114 = vmatpush1.bf16.msra.mxu0 0
      %1115 = vmatprep.subr.bf16.mxu0 0
      %1116 = vmatpush1.bf16.msra.mxu0 0
      %1117 = vmatprep.subr.bf16.mxu0 0
      %1118 = vmatpush1.bf16.msra.mxu0 0
      %1119 = vmatprep.subr.bf16.mxu0 0
      %1120 = vmatpush1.bf16.msra.mxu0 0
      %1121 = vmatprep.subr.bf16.mxu0 0
      %1122 = vmatpush1.bf16.msra.mxu0 0
      %1123 = vmatprep.mubr.bf16.mxu0 0
      %1124 = vmatmul.mubr.bf16.gmra.mrb[0].mxu0 %v1089
      %v1125 = vpop.f32.mrb[0].mxu0
      %v1126 = vadd.f32 %v1074, %v1125
      %v1127 = vpop.f32.mrb[0].mxu0
      %v1128 = vpop.f32.mrb[0].mxu0
      %v1129 = vpop.f32.mrb[0].mxu0
      %1130 = vdwg.mxu0
      %v1131 = vadd.f32 %v1126, %v536
      %v1132 = vsel %vm561, %v1131, 0.0
      %1133 = vadd.xlane.f32.xlu0 %v1132
      %v1134 = vpop.xlane.xlu0 %1133
      %v1135 = vrcp.pop 32.0
      %v1136 = vmul.f32 %v1134, %v1135
      %v1137 = vsub.f32 %v1131, %v1136
      %v1138 = vmul.f32 %v1137, %v1137
      %v1139 = vsel %vm561, %v1138, 0.0
      %1140 = vadd.xlane.f32.xlu0 %v1139
      %v1141 = vpop.xlane.xlu0 %1140
      %v1142 = vmul.f32 %v1141, %v1135
      %v1143 = vadd.f32 %v1142, 1e-05
      %v1144 = vrsqrt.pop %v1143
      %v1145 = vmul.f32 %v1137, %v1144
      %v1146 = vld [vmem:[%s6] sm:$0x1]
      %v1148 = vlaneseq
      %v1149 = vshrl.u32 %v1148, 7
      %v1150 = vsub.s32 0, %v1149
      %v1151 = vrot.slane %v1146, %v1150
      %v1153 = vmul.f32 %v1145, %v1151
      %v1154 = vld [vmem:[%s7] sm:$0x1]
      %v1156 = vlaneseq
      %v1157 = vshrl.u32 %v1156, 7
      %v1158 = vsub.s32 0, %v1157
      %v1159 = vrot.slane %v1154, %v1158
      %v1161 = vadd.f32 %v1153, %v1159
      %v1162 = vpack.c.bf16 %v1161, %v1161
      %v1163 = vld [vmem:[%s8] sm:$0xf]
      %v1164 = vld [vmem:[%s8 + $0x4] sm:$0xf]
      %v1165 = vld [vmem:[%s8 + $0x8] sm:$0xf]
      %v1166 = vld [vmem:[%s8 + $0xc] sm:$0xf]
      %v1167 = vld [vmem:[%s9] sm:$0x1]
      %v1169 = vlaneseq
      %v1170 = vshrl.u32 %v1169, 7
      %v1171 = vsub.s32 0, %v1170
      %v1172 = vrot.slane %v1167, %v1171
      %v1178 = vunpack.c.l.b16 %v1163
      %v1179 = vunpack.c.l.b16 %v1164
      %v1180 = vunpack.c.l.b16 %v1165
      %v1181 = vunpack.c.l.b16 %v1166
      %v1182 = vpack.c.b16 %v1179, %v1178
      %v1183 = vpack.c.b16 %v1181, %v1180
      %v1187 = vsel %vm561, %v1162, 0
      %1189 = vmatprep.subr.bf16.mxu0 0
      %1190 = vmatpush1.bf16.msra.mxu0 %v1182
      %1191 = vmatprep.subr.bf16.mxu0 0
      %1192 = vmatpush1.bf16.msra.mxu0 %v1183
      %1193 = vmatprep.subr.bf16.mxu0 0
      %1194 = vmatpush1.bf16.msra.mxu0 0
      %1195 = vmatprep.subr.bf16.mxu0 0
      %1196 = vmatpush1.bf16.msra.mxu0 0
      %1197 = vmatprep.subr.bf16.mxu0 0
      %1198 = vmatpush1.bf16.msra.mxu0 0
      %1199 = vmatprep.subr.bf16.mxu0 0
      %1200 = vmatpush1.bf16.msra.mxu0 0
      %1201 = vmatprep.subr.bf16.mxu0 0
      %1202 = vmatpush1.bf16.msra.mxu0 0
      %1203 = vmatprep.subr.bf16.mxu0 0
      %1204 = vmatpush1.bf16.msra.mxu0 0
      %1205 = vmatprep.subr.bf16.mxu0 0
      %1206 = vmatpush1.bf16.msra.mxu0 0
      %1207 = vmatprep.subr.bf16.mxu0 0
      %1208 = vmatpush1.bf16.msra.mxu0 0
      %1209 = vmatprep.subr.bf16.mxu0 0
      %1210 = vmatpush1.bf16.msra.mxu0 0
      %1211 = vmatprep.subr.bf16.mxu0 0
      %1212 = vmatpush1.bf16.msra.mxu0 0
      %1213 = vmatprep.subr.bf16.mxu0 0
      %1214 = vmatpush1.bf16.msra.mxu0 0
      %1215 = vmatprep.subr.bf16.mxu0 0
      %1216 = vmatpush1.bf16.msra.mxu0 0
      %1217 = vmatprep.subr.bf16.mxu0 0
      %1218 = vmatpush1.bf16.msra.mxu0 0
      %1219 = vmatprep.subr.bf16.mxu0 0
      %1220 = vmatpush1.bf16.msra.mxu0 0
      %1221 = vmatprep.mubr.bf16.mxu0 0
      %1222 = vmatmul.mubr.bf16.gmra.mrb[0].mxu0 %v1187
      %v1223 = vpop.f32.mrb[0].mxu0
      %v1224 = vadd.f32 %v1172, %v1223
      %v1225 = vpop.f32.mrb[0].mxu0
      %v1226 = vpop.f32.mrb[0].mxu0
      %v1227 = vpop.f32.mrb[0].mxu0
      %1228 = vdwg.mxu0
      %v1229 = vld [vmem:[%s10] sm:$0xf]
      %v1230 = vld [vmem:[%s10 + $0x4] sm:$0xf]
      %v1231 = vld [vmem:[%s10 + $0x8] sm:$0xf]
      %v1232 = vld [vmem:[%s10 + $0xc] sm:$0xf]
      %v1233 = vld [vmem:[%s11] sm:$0x1]
      %v1235 = vlaneseq
      %v1236 = vshrl.u32 %v1235, 7
      %v1237 = vsub.s32 0, %v1236
      %v1238 = vrot.slane %v1233, %v1237
      %v1244 = vunpack.c.l.b16 %v1229
      %v1245 = vunpack.c.l.b16 %v1230
      %v1246 = vunpack.c.l.b16 %v1231
      %v1247 = vunpack.c.l.b16 %v1232
      %v1248 = vpack.c.b16 %v1245, %v1244
      %v1249 = vpack.c.b16 %v1247, %v1246
      %v1253 = vsel %vm561, %v537, 0
      %1255 = vmatprep.subr.bf16.mxu0 0
      %1256 = vmatpush1.bf16.msra.mxu0 %v1248
      %1257 = vmatprep.subr.bf16.mxu0 0
      %1258 = vmatpush1.bf16.msra.mxu0 %v1249
      %1259 = vmatprep.subr.bf16.mxu0 0
      %1260 = vmatpush1.bf16.msra.mxu0 0
      %1261 = vmatprep.subr.bf16.mxu0 0
      %1262 = vmatpush1.bf16.msra.mxu0 0
      %1263 = vmatprep.subr.bf16.mxu0 0
      %1264 = vmatpush1.bf16.msra.mxu0 0
      %1265 = vmatprep.subr.bf16.mxu0 0
      %1266 = vmatpush1.bf16.msra.mxu0 0
      %1267 = vmatprep.subr.bf16.mxu0 0
      %1268 = vmatpush1.bf16.msra.mxu0 0
      %1269 = vmatprep.subr.bf16.mxu0 0
      %1270 = vmatpush1.bf16.msra.mxu0 0
      %1271 = vmatprep.subr.bf16.mxu0 0
      %1272 = vmatpush1.bf16.msra.mxu0 0
      %1273 = vmatprep.subr.bf16.mxu0 0
      %1274 = vmatpush1.bf16.msra.mxu0 0
      %1275 = vmatprep.subr.bf16.mxu0 0
      %1276 = vmatpush1.bf16.msra.mxu0 0
      %1277 = vmatprep.subr.bf16.mxu0 0
      %1278 = vmatpush1.bf16.msra.mxu0 0
      %1279 = vmatprep.subr.bf16.mxu0 0
      %1280 = vmatpush1.bf16.msra.mxu0 0
      %1281 = vmatprep.subr.bf16.mxu0 0
      %1282 = vmatpush1.bf16.msra.mxu0 0
      %1283 = vmatprep.subr.bf16.mxu0 0
      %1284 = vmatpush1.bf16.msra.mxu0 0
      %1285 = vmatprep.subr.bf16.mxu0 0
      %1286 = vmatpush1.bf16.msra.mxu0 0
      %1287 = vmatprep.mubr.bf16.mxu0 0
      %1288 = vmatmul.mubr.bf16.gmra.mrb[0].mxu0 %v1253
      %v1289 = vpop.f32.mrb[0].mxu0
      %v1290 = vadd.f32 %v1238, %v1289
      %v1291 = vpop.f32.mrb[0].mxu0
      %v1292 = vpop.f32.mrb[0].mxu0
      %v1293 = vpop.f32.mrb[0].mxu0
      %1294 = vdwg.mxu0
      %v1295 = vpack.c.bf16 %v1224, %v1224
      %v1296 = vpack.c.bf16 %v1290, %v1290
      %v1298 = vsel %vm609, %v1295, 0
      %v1301 = vsel %vm609, %v1296, 0
      %1303 = vmatprep.subr.bf16.mxu0 0
      %1304 = vmatpush1.bf16.xpose.msra.mxu0 %v1301
      %1305 = vmatprep.subr.bf16.mxu0 0
      %1306 = vmatpush1.bf16.xpose.msra.mxu0 0
      %1307 = vmatprep.subr.bf16.mxu0 0
      %1308 = vmatpush1.bf16.xpose.msra.mxu0 0
      %1309 = vmatprep.subr.bf16.mxu0 0
      %1310 = vmatpush1.bf16.xpose.msra.mxu0 0
      %1311 = vmatprep.subr.bf16.mxu0 0
      %1312 = vmatpush1.bf16.xpose.msra.mxu0 0
      %1313 = vmatprep.subr.bf16.mxu0 0
      %1314 = vmatpush1.bf16.xpose.msra.mxu0 0
      %1315 = vmatprep.subr.bf16.mxu0 0
      %1316 = vmatpush1.bf16.xpose.msra.mxu0 0
      %1317 = vmatprep.subr.bf16.mxu0 0
      %1318 = vmatpush1.bf16.xpose.msra.mxu0 0
      %1319 = vmatprep.subr.bf16.mxu0 0
      %1320 = vmatpush1.bf16.xpose.msra.mxu0 0
      %1321 = vmatprep.subr.bf16.mxu0 0
      %1322 = vmatpush1.bf16.xpose.msra.mxu0 0
      %1323 = vmatprep.subr.bf16.mxu0 0
      %1324 = vmatpush1.bf16.xpose.msra.mxu0 0
      %1325 = vmatprep.subr.bf16.mxu0 0
      %1326 = vmatpush1.bf16.xpose.msra.mxu0 0
      %1327 = vmatprep.subr.bf16.mxu0 0
      %1328 = vmatpush1.bf16.xpose.msra.mxu0 0
      %1329 = vmatprep.subr.bf16.mxu0 0
      %1330 = vmatpush1.bf16.xpose.msra.mxu0 0
      %1331 = vmatprep.subr.bf16.mxu0 0
      %1332 = vmatpush1.bf16.xpose.msra.mxu0 0
      %1333 = vmatprep.subr.bf16.mxu0 0
      %1334 = vmatpush1.bf16.xpose.msra.mxu0 0
      %1335 = vmatprep.mubr.bf16.mxu0 0
      %1336 = vmatmul.mubr.bf16.gmra.mrb[0].mxu0 %v1298
      %v1337 = vpop.f32.mrb[0].mxu0
      %v1338 = vadd.f32 0.0, %v1337
      %v1339 = vpop.f32.mrb[0].mxu0
      %v1340 = vpop.f32.mrb[0].mxu0
      %v1341 = vpop.f32.mrb[0].mxu0
      %1342 = vdwg.mxu0
      %v1343 = vsel %vm609, %v1338, -inf
      %1344 = vmax.xlane.f32.xlu0 %v1343
      %v1345 = vpop.xlane.xlu0 %1344
      %v1346 = vsub.f32 %v1338, %v1345
      %v1347 = vmul.f32 %v1346, 1.442695
      %v1348 = vpow.pop %v1347
      %v1349 = vsel %vm609, %v1348, 0.0
      %1350 = vadd.xlane.f32.xlu0 %v1349
      %v1351 = vpop.xlane.xlu0 %1350
      %v1352 = vrcp.pop %v1351
      %v1353 = vmul.f32 %v1348, %v1352
      %v1354 = vpack.c.bf16 %v1353, %v1353
      %1356 = vrot.lane.b32.xlu0 %v1296, 96
      %v1357 = vpop.permute.xlu0 %1356
      %v1359 = vsel %vm609, %v1354, 0
      %v1362 = vsel %vm673, %v1357, 0
      %1364 = vmatprep.subr.bf16.mxu0 0
      %1365 = vmatpush1.bf16.msra.mxu0 %v1362
      %1366 = vmatprep.subr.bf16.mxu0 0
      %1367 = vmatpush1.bf16.msra.mxu0 0
      %1368 = vmatprep.subr.bf16.mxu0 0
      %1369 = vmatpush1.bf16.msra.mxu0 0
      %1370 = vmatprep.subr.bf16.mxu0 0
      %1371 = vmatpush1.bf16.msra.mxu0 0
      %1372 = vmatprep.subr.bf16.mxu0 0
      %1373 = vmatpush1.bf16.msra.mxu0 0
      %1374 = vmatprep.subr.bf16.mxu0 0
      %1375 = vmatpush1.bf16.msra.mxu0 0
      %1376 = vmatprep.subr.bf16.mxu0 0
      %1377 = vmatpush1.bf16.msra.mxu0 0
      %1378 = vmatprep.subr.bf16.mxu0 0
      %1379 = vmatpush1.bf16.msra.mxu0 0
      %1380 = vmatprep.subr.bf16.mxu0 0
      %1381 = vmatpush1.bf16.msra.mxu0 0
      %1382 = vmatprep.subr.bf16.mxu0 0
      %1383 = vmatpush1.bf16.msra.mxu0 0
      %1384 = vmatprep.subr.bf16.mxu0 0
      %1385 = vmatpush1.bf16.msra.mxu0 0
      %1386 = vmatprep.subr.bf16.mxu0 0
      %1387 = vmatpush1.bf16.msra.mxu0 0
      %1388 = vmatprep.subr.bf16.mxu0 0
      %1389 = vmatpush1.bf16.msra.mxu0 0
      %1390 = vmatprep.subr.bf16.mxu0 0
      %1391 = vmatpush1.bf16.msra.mxu0 0
      %1392 = vmatprep.subr.bf16.mxu0 0
      %1393 = vmatpush1.bf16.msra.mxu0 0
      %1394 = vmatprep.subr.bf16.mxu0 0
      %1395 = vmatpush1.bf16.msra.mxu0 0
      %1396 = vmatprep.mubr.bf16.mxu0 0
      %1397 = vmatmul.mubr.bf16.gmra.mrb[0].mxu0 %v1359
      %v1398 = vpop.f32.mrb[0].mxu0
      %v1399 = vadd.f32 0.0, %v1398
      %v1400 = vpop.f32.mrb[0].mxu0
      %v1401 = vpop.f32.mrb[0].mxu0
      %v1402 = vpop.f32.mrb[0].mxu0
      %1403 = vdwg.mxu0
      %1405 = vrot.lane.b32.xlu0 %v1295, 120
      %v1406 = vpop.permute.xlu0 %1405
      %1407 = vrot.lane.b32.xlu0 %v1296, 120
      %v1408 = vpop.permute.xlu0 %1407
      %v1410 = vsel %vm609, %v1406, 0
      %v1413 = vsel %vm609, %v1408, 0
      %1415 = vmatprep.subr.bf16.mxu0 0
      %1416 = vmatpush1.bf16.xpose.msra.mxu0 %v1413
      %1417 = vmatprep.subr.bf16.mxu0 0
      %1418 = vmatpush1.bf16.xpose.msra.mxu0 0
      %1419 = vmatprep.subr.bf16.mxu0 0
      %1420 = vmatpush1.bf16.xpose.msra.mxu0 0
      %1421 = vmatprep.subr.bf16.mxu0 0
      %1422 = vmatpush1.bf16.xpose.msra.mxu0 0
      %1423 = vmatprep.subr.bf16.mxu0 0
      %1424 = vmatpush1.bf16.xpose.msra.mxu0 0
      %1425 = vmatprep.subr.bf16.mxu0 0
      %1426 = vmatpush1.bf16.xpose.msra.mxu0 0
      %1427 = vmatprep.subr.bf16.mxu0 0
      %1428 = vmatpush1.bf16.xpose.msra.mxu0 0
      %1429 = vmatprep.subr.bf16.mxu0 0
      %1430 = vmatpush1.bf16.xpose.msra.mxu0 0
      %1431 = vmatprep.subr.bf16.mxu0 0
      %1432 = vmatpush1.bf16.xpose.msra.mxu0 0
      %1433 = vmatprep.subr.bf16.mxu0 0
      %1434 = vmatpush1.bf16.xpose.msra.mxu0 0
      %1435 = vmatprep.subr.bf16.mxu0 0
      %1436 = vmatpush1.bf16.xpose.msra.mxu0 0
      %1437 = vmatprep.subr.bf16.mxu0 0
      %1438 = vmatpush1.bf16.xpose.msra.mxu0 0
      %1439 = vmatprep.subr.bf16.mxu0 0
      %1440 = vmatpush1.bf16.xpose.msra.mxu0 0
      %1441 = vmatprep.subr.bf16.mxu0 0
      %1442 = vmatpush1.bf16.xpose.msra.mxu0 0
      %1443 = vmatprep.subr.bf16.mxu0 0
      %1444 = vmatpush1.bf16.xpose.msra.mxu0 0
      %1445 = vmatprep.subr.bf16.mxu0 0
      %1446 = vmatpush1.bf16.xpose.msra.mxu0 0
      %1447 = vmatprep.mubr.bf16.mxu0 0
      %1448 = vmatmul.mubr.bf16.gmra.mrb[0].mxu0 %v1410
      %v1449 = vpop.f32.mrb[0].mxu0
      %v1450 = vadd.f32 0.0, %v1449
      %v1451 = vpop.f32.mrb[0].mxu0
      %v1452 = vpop.f32.mrb[0].mxu0
      %v1453 = vpop.f32.mrb[0].mxu0
      %1454 = vdwg.mxu0
      %v1455 = vsel %vm609, %v1450, -inf
      %1456 = vmax.xlane.f32.xlu0 %v1455
      %v1457 = vpop.xlane.xlu0 %1456
      %v1458 = vsub.f32 %v1450, %v1457
      %v1459 = vmul.f32 %v1458, 1.442695
      %v1460 = vpow.pop %v1459
      %v1461 = vsel %vm609, %v1460, 0.0
      %1462 = vadd.xlane.f32.xlu0 %v1461
      %v1463 = vpop.xlane.xlu0 %1462
      %v1464 = vrcp.pop %v1463
      %v1465 = vmul.f32 %v1460, %v1464
      %v1466 = vpack.c.bf16 %v1465, %v1465
      %1467 = vrot.lane.b32.xlu0 %v1296, 88
      %v1468 = vpop.permute.xlu0 %1467
      %v1470 = vsel %vm609, %v1466, 0
      %v1473 = vsel %vm673, %v1468, 0
      %1475 = vmatprep.subr.bf16.mxu0 0
      %1476 = vmatpush1.bf16.msra.mxu0 %v1473
      %1477 = vmatprep.subr.bf16.mxu0 0
      %1478 = vmatpush1.bf16.msra.mxu0 0
      %1479 = vmatprep.subr.bf16.mxu0 0
      %1480 = vmatpush1.bf16.msra.mxu0 0
      %1481 = vmatprep.subr.bf16.mxu0 0
      %1482 = vmatpush1.bf16.msra.mxu0 0
      %1483 = vmatprep.subr.bf16.mxu0 0
      %1484 = vmatpush1.bf16.msra.mxu0 0
      %1485 = vmatprep.subr.bf16.mxu0 0
      %1486 = vmatpush1.bf16.msra.mxu0 0
      %1487 = vmatprep.subr.bf16.mxu0 0
      %1488 = vmatpush1.bf16.msra.mxu0 0
      %1489 = vmatprep.subr.bf16.mxu0 0
      %1490 = vmatpush1.bf16.msra.mxu0 0
      %1491 = vmatprep.subr.bf16.mxu0 0
      %1492 = vmatpush1.bf16.msra.mxu0 0
      %1493 = vmatprep.subr.bf16.mxu0 0
      %1494 = vmatpush1.bf16.msra.mxu0 0
      %1495 = vmatprep.subr.bf16.mxu0 0
      %1496 = vmatpush1.bf16.msra.mxu0 0
      %1497 = vmatprep.subr.bf16.mxu0 0
      %1498 = vmatpush1.bf16.msra.mxu0 0
      %1499 = vmatprep.subr.bf16.mxu0 0
      %1500 = vmatpush1.bf16.msra.mxu0 0
      %1501 = vmatprep.subr.bf16.mxu0 0
      %1502 = vmatpush1.bf16.msra.mxu0 0
      %1503 = vmatprep.subr.bf16.mxu0 0
      %1504 = vmatpush1.bf16.msra.mxu0 0
      %1505 = vmatprep.subr.bf16.mxu0 0
      %1506 = vmatpush1.bf16.msra.mxu0 0
      %1507 = vmatprep.mubr.bf16.mxu0 0
      %1508 = vmatmul.mubr.bf16.gmra.mrb[0].mxu0 %v1470
      %v1509 = vpop.f32.mrb[0].mxu0
      %v1510 = vadd.f32 0.0, %v1509
      %v1511 = vpop.f32.mrb[0].mxu0
      %v1512 = vpop.f32.mrb[0].mxu0
      %v1513 = vpop.f32.mrb[0].mxu0
      %1514 = vdwg.mxu0
      %1515 = vrot.lane.b32.xlu0 %v1295, 112
      %v1516 = vpop.permute.xlu0 %1515
      %1517 = vrot.lane.b32.xlu0 %v1296, 112
      %v1518 = vpop.permute.xlu0 %1517
      %v1520 = vsel %vm609, %v1516, 0
      %v1523 = vsel %vm609, %v1518, 0
      %1525 = vmatprep.subr.bf16.mxu0 0
      %1526 = vmatpush1.bf16.xpose.msra.mxu0 %v1523
      %1527 = vmatprep.subr.bf16.mxu0 0
      %1528 = vmatpush1.bf16.xpose.msra.mxu0 0
      %1529 = vmatprep.subr.bf16.mxu0 0
      %1530 = vmatpush1.bf16.xpose.msra.mxu0 0
      %1531 = vmatprep.subr.bf16.mxu0 0
      %1532 = vmatpush1.bf16.xpose.msra.mxu0 0
      %1533 = vmatprep.subr.bf16.mxu0 0
      %1534 = vmatpush1.bf16.xpose.msra.mxu0 0
      %1535 = vmatprep.subr.bf16.mxu0 0
      %1536 = vmatpush1.bf16.xpose.msra.mxu0 0
      %1537 = vmatprep.subr.bf16.mxu0 0
      %1538 = vmatpush1.bf16.xpose.msra.mxu0 0
      %1539 = vmatprep.subr.bf16.mxu0 0
      %1540 = vmatpush1.bf16.xpose.msra.mxu0 0
      %1541 = vmatprep.subr.bf16.mxu0 0
      %1542 = vmatpush1.bf16.xpose.msra.mxu0 0
      %1543 = vmatprep.subr.bf16.mxu0 0
      %1544 = vmatpush1.bf16.xpose.msra.mxu0 0
      %1545 = vmatprep.subr.bf16.mxu0 0
      %1546 = vmatpush1.bf16.xpose.msra.mxu0 0
      %1547 = vmatprep.subr.bf16.mxu0 0
      %1548 = vmatpush1.bf16.xpose.msra.mxu0 0
      %1549 = vmatprep.subr.bf16.mxu0 0
      %1550 = vmatpush1.bf16.xpose.msra.mxu0 0
      %1551 = vmatprep.subr.bf16.mxu0 0
      %1552 = vmatpush1.bf16.xpose.msra.mxu0 0
      %1553 = vmatprep.subr.bf16.mxu0 0
      %1554 = vmatpush1.bf16.xpose.msra.mxu0 0
      %1555 = vmatprep.subr.bf16.mxu0 0
      %1556 = vmatpush1.bf16.xpose.msra.mxu0 0
      %1557 = vmatprep.mubr.bf16.mxu0 0
      %1558 = vmatmul.mubr.bf16.gmra.mrb[0].mxu0 %v1520
      %v1559 = vpop.f32.mrb[0].mxu0
      %v1560 = vadd.f32 0.0, %v1559
      %v1561 = vpop.f32.mrb[0].mxu0
      %v1562 = vpop.f32.mrb[0].mxu0
      %v1563 = vpop.f32.mrb[0].mxu0
      %1564 = vdwg.mxu0
      %v1565 = vsel %vm609, %v1560, -inf
      %1566 = vmax.xlane.f32.xlu0 %v1565
      %v1567 = vpop.xlane.xlu0 %1566
      %v1568 = vsub.f32 %v1560, %v1567
      %v1569 = vmul.f32 %v1568, 1.442695
      %v1570 = vpow.pop %v1569
      %v1571 = vsel %vm609, %v1570, 0.0
      %1572 = vadd.xlane.f32.xlu0 %v1571
      %v1573 = vpop.xlane.xlu0 %1572
      %v1574 = vrcp.pop %v1573
      %v1575 = vmul.f32 %v1570, %v1574
      %v1576 = vpack.c.bf16 %v1575, %v1575
      %1577 = vrot.lane.b32.xlu0 %v1296, 80
      %v1578 = vpop.permute.xlu0 %1577
      %v1580 = vsel %vm609, %v1576, 0
      %v1583 = vsel %vm673, %v1578, 0
      %1585 = vmatprep.subr.bf16.mxu0 0
      %1586 = vmatpush1.bf16.msra.mxu0 %v1583
      %1587 = vmatprep.subr.bf16.mxu0 0
      %1588 = vmatpush1.bf16.msra.mxu0 0
      %1589 = vmatprep.subr.bf16.mxu0 0
      %1590 = vmatpush1.bf16.msra.mxu0 0
      %1591 = vmatprep.subr.bf16.mxu0 0
      %1592 = vmatpush1.bf16.msra.mxu0 0
      %1593 = vmatprep.subr.bf16.mxu0 0
      %1594 = vmatpush1.bf16.msra.mxu0 0
      %1595 = vmatprep.subr.bf16.mxu0 0
      %1596 = vmatpush1.bf16.msra.mxu0 0
      %1597 = vmatprep.subr.bf16.mxu0 0
      %1598 = vmatpush1.bf16.msra.mxu0 0
      %1599 = vmatprep.subr.bf16.mxu0 0
      %1600 = vmatpush1.bf16.msra.mxu0 0
      %1601 = vmatprep.subr.bf16.mxu0 0
      %1602 = vmatpush1.bf16.msra.mxu0 0
      %1603 = vmatprep.subr.bf16.mxu0 0
      %1604 = vmatpush1.bf16.msra.mxu0 0
      %1605 = vmatprep.subr.bf16.mxu0 0
      %1606 = vmatpush1.bf16.msra.mxu0 0
      %1607 = vmatprep.subr.bf16.mxu0 0
      %1608 = vmatpush1.bf16.msra.mxu0 0
      %1609 = vmatprep.subr.bf16.mxu0 0
      %1610 = vmatpush1.bf16.msra.mxu0 0
      %1611 = vmatprep.subr.bf16.mxu0 0
      %1612 = vmatpush1.bf16.msra.mxu0 0
      %1613 = vmatprep.subr.bf16.mxu0 0
      %1614 = vmatpush1.bf16.msra.mxu0 0
      %1615 = vmatprep.subr.bf16.mxu0 0
      %1616 = vmatpush1.bf16.msra.mxu0 0
      %1617 = vmatprep.mubr.bf16.mxu0 0
      %1618 = vmatmul.mubr.bf16.gmra.mrb[0].mxu0 %v1580
      %v1619 = vpop.f32.mrb[0].mxu0
      %v1620 = vadd.f32 0.0, %v1619
      %v1621 = vpop.f32.mrb[0].mxu0
      %v1622 = vpop.f32.mrb[0].mxu0
      %v1623 = vpop.f32.mrb[0].mxu0
      %1624 = vdwg.mxu0
      %1625 = vrot.lane.b32.xlu0 %v1295, 104
      %v1626 = vpop.permute.xlu0 %1625
      %1627 = vrot.lane.b32.xlu0 %v1296, 104
      %v1628 = vpop.permute.xlu0 %1627
      %v1630 = vsel %vm609, %v1626, 0
      %v1633 = vsel %vm609, %v1628, 0
      %1635 = vmatprep.subr.bf16.mxu0 0
      %1636 = vmatpush1.bf16.xpose.msra.mxu0 %v1633
      %1637 = vmatprep.subr.bf16.mxu0 0
      %1638 = vmatpush1.bf16.xpose.msra.mxu0 0
      %1639 = vmatprep.subr.bf16.mxu0 0
      %1640 = vmatpush1.bf16.xpose.msra.mxu0 0
      %1641 = vmatprep.subr.bf16.mxu0 0
      %1642 = vmatpush1.bf16.xpose.msra.mxu0 0
      %1643 = vmatprep.subr.bf16.mxu0 0
      %1644 = vmatpush1.bf16.xpose.msra.mxu0 0
      %1645 = vmatprep.subr.bf16.mxu0 0
      %1646 = vmatpush1.bf16.xpose.msra.mxu0 0
      %1647 = vmatprep.subr.bf16.mxu0 0
      %1648 = vmatpush1.bf16.xpose.msra.mxu0 0
      %1649 = vmatprep.subr.bf16.mxu0 0
      %1650 = vmatpush1.bf16.xpose.msra.mxu0 0
      %1651 = vmatprep.subr.bf16.mxu0 0
      %1652 = vmatpush1.bf16.xpose.msra.mxu0 0
      %1653 = vmatprep.subr.bf16.mxu0 0
      %1654 = vmatpush1.bf16.xpose.msra.mxu0 0
      %1655 = vmatprep.subr.bf16.mxu0 0
      %1656 = vmatpush1.bf16.xpose.msra.mxu0 0
      %1657 = vmatprep.subr.bf16.mxu0 0
      %1658 = vmatpush1.bf16.xpose.msra.mxu0 0
      %1659 = vmatprep.subr.bf16.mxu0 0
      %1660 = vmatpush1.bf16.xpose.msra.mxu0 0
      %1661 = vmatprep.subr.bf16.mxu0 0
      %1662 = vmatpush1.bf16.xpose.msra.mxu0 0
      %1663 = vmatprep.subr.bf16.mxu0 0
      %1664 = vmatpush1.bf16.xpose.msra.mxu0 0
      %1665 = vmatprep.subr.bf16.mxu0 0
      %1666 = vmatpush1.bf16.xpose.msra.mxu0 0
      %1667 = vmatprep.mubr.bf16.mxu0 0
      %1668 = vmatmul.mubr.bf16.gmra.mrb[0].mxu0 %v1630
      %v1669 = vpop.f32.mrb[0].mxu0
      %v1670 = vadd.f32 0.0, %v1669
      %v1671 = vpop.f32.mrb[0].mxu0
      %v1672 = vpop.f32.mrb[0].mxu0
      %v1673 = vpop.f32.mrb[0].mxu0
      %1674 = vdwg.mxu0
      %v1675 = vsel %vm609, %v1670, -inf
      %1676 = vmax.xlane.f32.xlu0 %v1675
      %v1677 = vpop.xlane.xlu0 %1676
      %v1678 = vsub.f32 %v1670, %v1677
      %v1679 = vmul.f32 %v1678, 1.442695
      %v1680 = vpow.pop %v1679
      %v1681 = vsel %vm609, %v1680, 0.0
      %1682 = vadd.xlane.f32.xlu0 %v1681
      %v1683 = vpop.xlane.xlu0 %1682
      %v1684 = vrcp.pop %v1683
      %v1685 = vmul.f32 %v1680, %v1684
      %v1686 = vpack.c.bf16 %v1685, %v1685
      %1687 = vrot.lane.b32.xlu0 %v1296, 72
      %v1688 = vpop.permute.xlu0 %1687
      %v1690 = vsel %vm609, %v1686, 0
      %v1693 = vsel %vm673, %v1688, 0
      %1695 = vmatprep.subr.bf16.mxu0 0
      %1696 = vmatpush1.bf16.msra.mxu0 %v1693
      %1697 = vmatprep.subr.bf16.mxu0 0
      %1698 = vmatpush1.bf16.msra.mxu0 0
      %1699 = vmatprep.subr.bf16.mxu0 0
      %1700 = vmatpush1.bf16.msra.mxu0 0
      %1701 = vmatprep.subr.bf16.mxu0 0
      %1702 = vmatpush1.bf16.msra.mxu0 0
      %1703 = vmatprep.subr.bf16.mxu0 0
      %1704 = vmatpush1.bf16.msra.mxu0 0
      %1705 = vmatprep.subr.bf16.mxu0 0
      %1706 = vmatpush1.bf16.msra.mxu0 0
      %1707 = vmatprep.subr.bf16.mxu0 0
      %1708 = vmatpush1.bf16.msra.mxu0 0
      %1709 = vmatprep.subr.bf16.mxu0 0
      %1710 = vmatpush1.bf16.msra.mxu0 0
      %1711 = vmatprep.subr.bf16.mxu0 0
      %1712 = vmatpush1.bf16.msra.mxu0 0
      %1713 = vmatprep.subr.bf16.mxu0 0
      %1714 = vmatpush1.bf16.msra.mxu0 0
      %1715 = vmatprep.subr.bf16.mxu0 0
      %1716 = vmatpush1.bf16.msra.mxu0 0
      %1717 = vmatprep.subr.bf16.mxu0 0
      %1718 = vmatpush1.bf16.msra.mxu0 0
      %1719 = vmatprep.subr.bf16.mxu0 0
      %1720 = vmatpush1.bf16.msra.mxu0 0
      %1721 = vmatprep.subr.bf16.mxu0 0
      %1722 = vmatpush1.bf16.msra.mxu0 0
      %1723 = vmatprep.subr.bf16.mxu0 0
      %1724 = vmatpush1.bf16.msra.mxu0 0
      %1725 = vmatprep.subr.bf16.mxu0 0
      %1726 = vmatpush1.bf16.msra.mxu0 0
      %1727 = vmatprep.mubr.bf16.mxu0 0
      %1728 = vmatmul.mubr.bf16.gmra.mrb[0].mxu0 %v1690
      %v1729 = vpop.f32.mrb[0].mxu0
      %v1730 = vadd.f32 0.0, %v1729
      %v1731 = vpop.f32.mrb[0].mxu0
      %v1732 = vpop.f32.mrb[0].mxu0
      %v1733 = vpop.f32.mrb[0].mxu0
      %1734 = vdwg.mxu0
      %1736 = vrot.lane.b32.xlu0 %v1510, 8
      %v1737 = vpop.permute.xlu0 %1736
      %1740 = vrot.lane.b32.xlu0 %v1620, 16
      %v1741 = vpop.permute.xlu0 %1740
      %1744 = vrot.lane.b32.xlu0 %v1730, 24
      %v1745 = vpop.permute.xlu0 %1744
      %v1747 = vsel %vm609, %v1399, %v1737
      %v1748 = vsel %vm1060, %v1747, %v1741
      %v1749 = vsel %vm1062, %v1748, %v1745
      %v1750 = vpack.c.bf16 %v1749, %v1749
      %v1751 = vld [vmem:[%s12] sm:$0xf]
      %v1752 = vld [vmem:[%s12 + $0x4] sm:$0xf]
      %v1753 = vld [vmem:[%s12 + $0x8] sm:$0xf]
      %v1754 = vld [vmem:[%s12 + $0xc] sm:$0xf]
      %v1755 = vld [vmem:[%s13] sm:$0x1]
      %v1757 = vlaneseq
      %v1758 = vshrl.u32 %v1757, 7
      %v1759 = vsub.s32 0, %v1758
      %v1760 = vrot.slane %v1755, %v1759
      %v1766 = vunpack.c.l.b16 %v1751
      %v1767 = vunpack.c.l.b16 %v1752
      %v1768 = vunpack.c.l.b16 %v1753
      %v1769 = vunpack.c.l.b16 %v1754
      %v1770 = vpack.c.b16 %v1767, %v1766
      %v1771 = vpack.c.b16 %v1769, %v1768
      %v1775 = vsel %vm561, %v1750, 0
      %1777 = vmatprep.subr.bf16.mxu0 0
      %1778 = vmatpush1.bf16.msra.mxu0 %v1770
      %1779 = vmatprep.subr.bf16.mxu0 0
      %1780 = vmatpush1.bf16.msra.mxu0 %v1771
      %1781 = vmatprep.subr.bf16.mxu0 0
      %1782 = vmatpush1.bf16.msra.mxu0 0
      %1783 = vmatprep.subr.bf16.mxu0 0
      %1784 = vmatpush1.bf16.msra.mxu0 0
      %1785 = vmatprep.subr.bf16.mxu0 0
      %1786 = vmatpush1.bf16.msra.mxu0 0
      %1787 = vmatprep.subr.bf16.mxu0 0
      %1788 = vmatpush1.bf16.msra.mxu0 0
      %1789 = vmatprep.subr.bf16.mxu0 0
      %1790 = vmatpush1.bf16.msra.mxu0 0
      %1791 = vmatprep.subr.bf16.mxu0 0
      %1792 = vmatpush1.bf16.msra.mxu0 0
      %1793 = vmatprep.subr.bf16.mxu0 0
      %1794 = vmatpush1.bf16.msra.mxu0 0
      %1795 = vmatprep.subr.bf16.mxu0 0
      %1796 = vmatpush1.bf16.msra.mxu0 0
      %1797 = vmatprep.subr.bf16.mxu0 0
      %1798 = vmatpush1.bf16.msra.mxu0 0
      %1799 = vmatprep.subr.bf16.mxu0 0
      %1800 = vmatpush1.bf16.msra.mxu0 0
      %1801 = vmatprep.subr.bf16.mxu0 0
      %1802 = vmatpush1.bf16.msra.mxu0 0
      %1803 = vmatprep.subr.bf16.mxu0 0
      %1804 = vmatpush1.bf16.msra.mxu0 0
      %1805 = vmatprep.subr.bf16.mxu0 0
      %1806 = vmatpush1.bf16.msra.mxu0 0
      %1807 = vmatprep.subr.bf16.mxu0 0
      %1808 = vmatpush1.bf16.msra.mxu0 0
      %1809 = vmatprep.mubr.bf16.mxu0 0
      %1810 = vmatmul.mubr.bf16.gmra.mrb[0].mxu0 %v1775
      %v1811 = vpop.f32.mrb[0].mxu0
      %v1812 = vadd.f32 %v1760, %v1811
      %v1813 = vpop.f32.mrb[0].mxu0
      %v1814 = vpop.f32.mrb[0].mxu0
      %v1815 = vpop.f32.mrb[0].mxu0
      %1816 = vdwg.mxu0
      %v1817 = vadd.f32 %v1812, %v1161
      %v1818 = vsel %vm561, %v1817, 0.0
      %1819 = vadd.xlane.f32.xlu0 %v1818
      %v1820 = vpop.xlane.xlu0 %1819
      %v1821 = vmul.f32 %v1820, %v1135
      %v1822 = vsub.f32 %v1817, %v1821
      %v1823 = vmul.f32 %v1822, %v1822
      %v1824 = vsel %vm561, %v1823, 0.0
      %1825 = vadd.xlane.f32.xlu0 %v1824
      %v1826 = vpop.xlane.xlu0 %1825
      %v1827 = vmul.f32 %v1826, %v1135
      %v1828 = vadd.f32 %v1827, 1e-05
      %v1829 = vrsqrt.pop %v1828
      %v1830 = vmul.f32 %v1822, %v1829
      %v1831 = vld [vmem:[%s14] sm:$0x1]
      %v1833 = vlaneseq
      %v1834 = vshrl.u32 %v1833, 7
      %v1835 = vsub.s32 0, %v1834
      %v1836 = vrot.slane %v1831, %v1835
      %v1838 = vmul.f32 %v1830, %v1836
      %v1839 = vld [vmem:[%s15] sm:$0x1]
      %v1841 = vlaneseq
      %v1842 = vshrl.u32 %v1841, 7
      %v1843 = vsub.s32 0, %v1842
      %v1844 = vrot.slane %v1839, %v1843
      %v1846 = vadd.f32 %v1838, %v1844
      %v1847 = vpack.c.bf16 %v1846, %v1846
      %vm1848 = vcmask 257024
      %1849 = vst.msk [vmem:[%s533] sm:$0xf] %vm1848, %v1847
      %p1850 = scmp.lt.s32.totalorder %s27, 1
      %s1851 = scalar_select %p1850, %s27, 1
      %s1852 = smul.addr %s1851, 4
      %s1853 = scalar_lea.vmem %s16, %s1852
      // Predicated region
      $region85: #{transformer_decoder_forward.8} parent=83 // pred_check
        %p1854 = pneg %p391
      $region86: #{transformer_decoder_forward.8} parent=83 // pred_check_branch
        %1856 = sbr.rel (%p1854) target = $region88
      $region87: #{transformer_decoder_forward.8} parent=83 // pred_region
        _
      $region88: #{transformer_decoder_forward.8} parent=83 // pred_fallthru
        _
    $region84: #{transformer_decoder_forward.8} parent=5 // pred_fallthru
      _
    %p1857 = scmp.le.s32.totalorder 2, %s22
    // Predicated region
    $region89: #{transformer_decoder_forward.8} parent=5 // pred_check
      %p1858 = pneg %p1857
    $region90: #{transformer_decoder_forward.8} parent=5 // pred_check_branch
      %1860 = sbr.rel (%p1858) target = $region92
    $region91: #{transformer_decoder_forward.8} parent=5 // pred_region
      %s1861 = ssub.s32 %s22, 2
      // Predicated region
      $region93: #{transformer_decoder_forward.8} parent=91 // pred_check
        %p1862 = pneg %p397
      $region94: #{transformer_decoder_forward.8} parent=91 // pred_check_branch
        %1864 = sbr.rel (%p1862) target = $region96
      $region95: #{transformer_decoder_forward.8} parent=91 // pred_region
        %p1865 = scmp.lt.s32.totalorder %s28, 1
        %s1866 = scalar_select %p1865, %s28, 1
        %s1867 = smul.addr %s1866, 4
        %s1868 = scalar_lea.vmem %s16, %s1867
      $region96: #{transformer_decoder_forward.8} parent=91 // pred_fallthru
        _
    $region92: #{transformer_decoder_forward.8} parent=5 // pred_fallthru
      _
  $region6: #{transformer_decoder_forward.8} parent=0 // loop_footer
    %s26 = sadd.s32 1, %s22
  $region7: #{transformer_decoder_forward.8} parent=0 // loop_footer_branch
    %21 = sbr.rel target = $region3
  $region8: #{transformer_decoder_forward.8} parent=0 // loop_exit
    _

// kernel: transformer_decoder_forward.9
$region0: #{transformer_decoder_forward.9}
  #allocation0 [shape = 'u32[]', space=smem, size = 0x4, offset = 0x4, fixed_abs, tag = 'smem constant byte address 0x4 - core index']
  #allocation1 [shape = 'u32[144,128]{1,0:T(1,128)}', space=vmem, size = 0x12000, scoped, tag = 'internal scratch']
  #allocation2 [shape = 'f32[16,32]{1,0:T(8,128)}', space=vmem, size = 0x2000, scoped, tag = 'scratch operand']
  %s0 = inlined_call_operand.vmem [shape: bf16[16,32], index: 0, kind: input, shape index: {}]
  %s1 = inlined_call_operand.vmem [shape: bf16[32,2048], index: 1, kind: input, shape index: {}]
  %s2 = inlined_call_operand.vmem [shape: f32[1,2048], index: 2, kind: input, shape index: {}]
  %s3 = inlined_call_operand.vmem [shape: bf16[2048,32], index: 3, kind: input, shape index: {}]
  %s4 = inlined_call_operand.vmem [shape: f32[1,32], index: 4, kind: input, shape index: {}]
  %s5 = inlined_call_operand.vmem [shape: f32[1,32], index: 5, kind: input, shape index: {}]
  %s6 = inlined_call_operand.vmem [shape: f32[1,32], index: 6, kind: input, shape index: {}]
  %s7 = inlined_call_operand.vmem [shape: f32[1,32], index: 7, kind: input, shape index: {}]
  %s8 = inlined_call_operand.vmem [shape: f32[1,32], index: 8, kind: input, shape index: {}]
  %s9 = inlined_call_operand.hbm [shape: f32[16,32], index: 9, kind: output, shape index: {}]
  %s10 = sld [smem:[#allocation0]]
  $region100: #{transformer_decoder_forward.9} parent=0
    _
  %s12 = ssub.s32 1, %s10
  %s13 = scalar_select 0, %s12, %s10
  $region1: #{transformer_decoder_forward.9} parent=0
    #allocation3 [shape = 'u8[65536]{0}', space=vmem, size = 0x10000, scoped, tag = 'input window, operand 1']
    #allocation4 [shape = 'u8[8192]{0}', space=vmem, size = 0x2000, scoped, tag = 'output window, operand 0, single buffered']
    #allocation5 [shape = 's32[2]{0}', space=sflag, size = 0x8, scoped, tag = 'scoped memory for transformer_decoder_forward.9']
    %14 = vsyncpa [#allocation5], 0
    loop: start=0, step=1, limit=6
    $region2: #{transformer_decoder_forward.9} parent=1 // loop_pre_header
      _
    $region3: #{transformer_decoder_forward.9} parent=1 // loop_header
      %s16 = sphi 0, %s20
      %p17 = scmp.ge.s32.totalorder %s16, 6
      %s24 = sphi 0, %s24
      %s26 = sphi 0, %s24
      %s27 = sphi 0, %s26
      %s41 = sphi 0, %s27
      %s47 = sphi 0, %s49
      %s50 = sphi 0, %s47
      %s51 = sphi 0, %s50
      %s67 = sphi 0, %s51
      %s73 = sphi 0, %s75
      %s76 = sphi 0, %s73
      %s77 = sphi 0, %s76
      %s93 = sphi 0, %s77
      %s99 = sphi 0, %s101
      %s102 = sphi 0, %s99
      %s103 = sphi 0, %s102
      %s119 = sphi 0, %s103
      %s123 = sphi 0, %s123
      %s125 = sphi 0, %s123
      %s126 = sphi 0, %s125
      %s140 = sphi 0, %s126
      %s144 = sphi 0, %s144
      %s146 = sphi 0, %s144
      %s147 = sphi 0, %s146
      %s161 = sphi 0, %s147
      %s165 = sphi 0, %s165
      %s167 = sphi 0, %s165
      %s168 = sphi 0, %s167
      %s182 = sphi 0, %s168
      %s186 = sphi 0, %s186
      %s188 = sphi 0, %s186
      %s189 = sphi 0, %s188
      %s203 = sphi 0, %s189
      %s207 = sphi 0, %s207
      %s209 = sphi 0, %s207
      %s210 = sphi 0, %s209
      %s224 = sphi 0, %s210
      %s228 = sphi 0, %s228
      %s230 = sphi 0, %s228
      %s231 = sphi 0, %s230
      %s245 = sphi 0, %s231
    $region4: #{transformer_decoder_forward.9} parent=1 // loop_header_branch
      %19 = sbr.rel (%p17) target = $region8
    $region5: #{transformer_decoder_forward.9} parent=1 // loop_body
      %s21 = ssub.s32 %s16, 1
      %s22 = ssub.s32 %s16, 2
      %s23 = sadd.s32 %s16, 1
      %s25 = sadd.s32 %s24, 1
      %p28 = scmp.eq.s32.totalorder %s16, 3
      %p29 = scmp.ne.s32.totalorder %s24, %s26
      %p30 = scmp.eq.s32.totalorder %s16, 0
      %p31 = por %p29, %p30
      %p32 = scmp.ne.s32.totalorder %s24, %s26
      %p33 = scmp.eq.s32.totalorder %s21, 3
      %p34 = por %p32, %p33
      %p35 = scmp.ne.s32.totalorder %s26, %s27
      %p36 = scmp.eq.s32.totalorder %s21, 0
      %p37 = por %p35, %p36
      %p38 = scmp.ne.s32.totalorder %s26, %s27
      %p39 = scmp.eq.s32.totalorder %s22, 3
      %p40 = por %p38, %p39
      %p42 = scmp.ne.s32.totalorder %s27, %s41
      %p43 = scmp.eq.s32.totalorder %s22, 0
      %p44 = por %p42, %p43
      %s45 = ssub.s32 %s16, %s23
      %p46 = scmp.eq.s32.totalorder %s45, 0
      %s48 = sadd.s32 %s47, 1
      %s49 = scalar_select %p46, %s47, %s48
      %p52 = pneg %p46
      %p53 = scmp.eq.s32.totalorder %s16, 3
      %p54 = por %p52, %p53
      %p55 = scmp.ne.s32.totalorder %s47, %s50
      %p56 = scmp.eq.s32.totalorder %s16, 0
      %p57 = por %p55, %p56
      %p58 = scmp.ne.s32.totalorder %s47, %s50
      %p59 = scmp.eq.s32.totalorder %s21, 3
      %p60 = por %p58, %p59
      %p61 = scmp.ne.s32.totalorder %s50, %s51
      %p62 = scmp.eq.s32.totalorder %s21, 0
      %p63 = por %p61, %p62
      %p64 = scmp.ne.s32.totalorder %s50, %s51
      %p65 = scmp.eq.s32.totalorder %s22, 3
      %p66 = por %p64, %p65
      %p68 = scmp.ne.s32.totalorder %s51, %s67
      %p69 = scmp.eq.s32.totalorder %s22, 0
      %p70 = por %p68, %p69
      %s71 = ssub.s32 %s16, %s23
      %p72 = scmp.eq.s32.totalorder %s71, 0
      %s74 = sadd.s32 %s73, 1
      %s75 = scalar_select %p72, %s73, %s74
      %p78 = pneg %p72
      %p79 = scmp.eq.s32.totalorder %s16, 3
      %p80 = por %p78, %p79
      %p81 = scmp.ne.s32.totalorder %s73, %s76
      %p82 = scmp.eq.s32.totalorder %s16, 0
      %p83 = por %p81, %p82
      %p84 = scmp.ne.s32.totalorder %s73, %s76
      %p85 = scmp.eq.s32.totalorder %s21, 3
      %p86 = por %p84, %p85
      %p87 = scmp.ne.s32.totalorder %s76, %s77
      %p88 = scmp.eq.s32.totalorder %s21, 0
      %p89 = por %p87, %p88
      %p90 = scmp.ne.s32.totalorder %s76, %s77
      %p91 = scmp.eq.s32.totalorder %s22, 3
      %p92 = por %p90, %p91
      %p94 = scmp.ne.s32.totalorder %s77, %s93
      %p95 = scmp.eq.s32.totalorder %s22, 0
      %p96 = por %p94, %p95
      %s97 = ssub.s32 %s16, %s23
      %p98 = scmp.eq.s32.totalorder %s97, 0
      %s100 = sadd.s32 %s99, 1
      %s101 = scalar_select %p98, %s99, %s100
      %p104 = pneg %p98
      %p105 = scmp.eq.s32.totalorder %s16, 3
      %p106 = por %p104, %p105
      %p107 = scmp.ne.s32.totalorder %s99, %s102
      %p108 = scmp.eq.s32.totalorder %s16, 0
      %p109 = por %p107, %p108
      %p110 = scmp.ne.s32.totalorder %s99, %s102
      %p111 = scmp.eq.s32.totalorder %s21, 3
      %p112 = por %p110, %p111
      %p113 = scmp.ne.s32.totalorder %s102, %s103
      %p114 = scmp.eq.s32.totalorder %s21, 0
      %p115 = por %p113, %p114
      %p116 = scmp.ne.s32.totalorder %s102, %s103
      %p117 = scmp.eq.s32.totalorder %s22, 3
      %p118 = por %p116, %p117
      %p120 = scmp.ne.s32.totalorder %s103, %s119
      %p121 = scmp.eq.s32.totalorder %s22, 0
      %p122 = por %p120, %p121
      %s124 = sadd.s32 %s123, 1
      %p127 = scmp.eq.s32.totalorder %s16, 3
      %p128 = scmp.ne.s32.totalorder %s123, %s125
      %p129 = scmp.eq.s32.totalorder %s16, 0
      %p130 = por %p128, %p129
      %p131 = scmp.ne.s32.totalorder %s123, %s125
      %p132 = scmp.eq.s32.totalorder %s21, 3
      %p133 = por %p131, %p132
      %p134 = scmp.ne.s32.totalorder %s125, %s126
      %p135 = scmp.eq.s32.totalorder %s21, 0
      %p136 = por %p134, %p135
      %p137 = scmp.ne.s32.totalorder %s125, %s126
      %p138 = scmp.eq.s32.totalorder %s22, 3
      %p139 = por %p137, %p138
      %p141 = scmp.ne.s32.totalorder %s126, %s140
      %p142 = scmp.eq.s32.totalorder %s22, 0
      %p143 = por %p141, %p142
      %s145 = sadd.s32 %s144, 1
      %p148 = scmp.eq.s32.totalorder %s16, 3
      %p149 = scmp.ne.s32.totalorder %s144, %s146
      %p150 = scmp.eq.s32.totalorder %s16, 0
      %p151 = por %p149, %p150
      %p152 = scmp.ne.s32.totalorder %s144, %s146
      %p153 = scmp.eq.s32.totalorder %s21, 3
      %p154 = por %p152, %p153
      %p155 = scmp.ne.s32.totalorder %s146, %s147
      %p156 = scmp.eq.s32.totalorder %s21, 0
      %p157 = por %p155, %p156
      %p158 = scmp.ne.s32.totalorder %s146, %s147
      %p159 = scmp.eq.s32.totalorder %s22, 3
      %p160 = por %p158, %p159
      %p162 = scmp.ne.s32.totalorder %s147, %s161
      %p163 = scmp.eq.s32.totalorder %s22, 0
      %p164 = por %p162, %p163
      %s166 = sadd.s32 %s165, 1
      %p169 = scmp.eq.s32.totalorder %s16, 3
      %p170 = scmp.ne.s32.totalorder %s165, %s167
      %p171 = scmp.eq.s32.totalorder %s16, 0
      %p172 = por %p170, %p171
      %p173 = scmp.ne.s32.totalorder %s165, %s167
      %p174 = scmp.eq.s32.totalorder %s21, 3
      %p175 = por %p173, %p174
      %p176 = scmp.ne.s32.totalorder %s167, %s168
      %p177 = scmp.eq.s32.totalorder %s21, 0
      %p178 = por %p176, %p177
      %p179 = scmp.ne.s32.totalorder %s167, %s168
      %p180 = scmp.eq.s32.totalorder %s22, 3
      %p181 = por %p179, %p180
      %p183 = scmp.ne.s32.totalorder %s168, %s182
      %p184 = scmp.eq.s32.totalorder %s22, 0
      %p185 = por %p183, %p184
      %s187 = sadd.s32 %s186, 1
      %p190 = scmp.eq.s32.totalorder %s16, 3
      %p191 = scmp.ne.s32.totalorder %s186, %s188
      %p192 = scmp.eq.s32.totalorder %s16, 0
      %p193 = por %p191, %p192
      %p194 = scmp.ne.s32.totalorder %s186, %s188
      %p195 = scmp.eq.s32.totalorder %s21, 3
      %p196 = por %p194, %p195
      %p197 = scmp.ne.s32.totalorder %s188, %s189
      %p198 = scmp.eq.s32.totalorder %s21, 0
      %p199 = por %p197, %p198
      %p200 = scmp.ne.s32.totalorder %s188, %s189
      %p201 = scmp.eq.s32.totalorder %s22, 3
      %p202 = por %p200, %p201
      %p204 = scmp.ne.s32.totalorder %s189, %s203
      %p205 = scmp.eq.s32.totalorder %s22, 0
      %p206 = por %p204, %p205
      %s208 = sadd.s32 %s207, 1
      %p211 = scmp.eq.s32.totalorder %s16, 3
      %p212 = scmp.ne.s32.totalorder %s207, %s209
      %p213 = scmp.eq.s32.totalorder %s16, 0
      %p214 = por %p212, %p213
      %p215 = scmp.ne.s32.totalorder %s207, %s209
      %p216 = scmp.eq.s32.totalorder %s21, 3
      %p217 = por %p215, %p216
      %p218 = scmp.ne.s32.totalorder %s209, %s210
      %p219 = scmp.eq.s32.totalorder %s21, 0
      %p220 = por %p218, %p219
      %p221 = scmp.ne.s32.totalorder %s209, %s210
      %p222 = scmp.eq.s32.totalorder %s22, 3
      %p223 = por %p221, %p222
      %p225 = scmp.ne.s32.totalorder %s210, %s224
      %p226 = scmp.eq.s32.totalorder %s22, 0
      %p227 = por %p225, %p226
      %s229 = sadd.s32 %s228, 1
      %p232 = scmp.eq.s32.totalorder %s16, 3
      %p233 = scmp.ne.s32.totalorder %s228, %s230
      %p234 = scmp.eq.s32.totalorder %s16, 0
      %p235 = por %p233, %p234
      %p236 = scmp.ne.s32.totalorder %s228, %s230
      %p237 = scmp.eq.s32.totalorder %s21, 3
      %p238 = por %p236, %p237
      %p239 = scmp.ne.s32.totalorder %s230, %s231
      %p240 = scmp.eq.s32.totalorder %s21, 0
      %p241 = por %p239, %p240
      %p242 = scmp.ne.s32.totalorder %s230, %s231
      %p243 = scmp.eq.s32.totalorder %s22, 3
      %p244 = por %p242, %p243
      %p246 = scmp.ne.s32.totalorder %s231, %s245
      %p247 = scmp.eq.s32.totalorder %s22, 0
      %p248 = por %p246, %p247
      %p249 = scmp.le.s32.totalorder 1, %s16
      %p250 = scmp.lt.s32.totalorder %s16, 5
      %p251 = pnand %p249, %p250
      %p252 = pneg %p251
      // Predicated region
      $region9: #{transformer_decoder_forward.9} parent=5 // pred_check
        _
      $region10: #{transformer_decoder_forward.9} parent=5 // pred_check_branch
        %254 = sbr.rel (%p251) target = $region12
      $region11: #{transformer_decoder_forward.9} parent=5 // pred_region
        %s255 = ssub.s32 %s16, 1
        // Predicated region
        $region13: #{transformer_decoder_forward.9} parent=11 // pred_check
          %p256 = pneg %p37
        $region14: #{transformer_decoder_forward.9} parent=11 // pred_check_branch
          %258 = sbr.rel (%p256) target = $region16
        $region15: #{transformer_decoder_forward.9} parent=11 // pred_region
          _
        $region16: #{transformer_decoder_forward.9} parent=11 // pred_fallthru
          _
        // Predicated region
        $region17: #{transformer_decoder_forward.9} parent=11 // pred_check
          %p259 = pneg %p136
        $region18: #{transformer_decoder_forward.9} parent=11 // pred_check_branch
          %261 = sbr.rel (%p259) target = $region20
        $region19: #{transformer_decoder_forward.9} parent=11 // pred_region
          _
        $region20: #{transformer_decoder_forward.9} parent=11 // pred_fallthru
          _
        // Predicated region
        $region21: #{transformer_decoder_forward.9} parent=11 // pred_check
          %p262 = pneg %p157
        $region22: #{transformer_decoder_forward.9} parent=11 // pred_check_branch
          %264 = sbr.rel (%p262) target = $region24
        $region23: #{transformer_decoder_forward.9} parent=11 // pred_region
          _
        $region24: #{transformer_decoder_forward.9} parent=11 // pred_fallthru
          _
        // Predicated region
        $region25: #{transformer_decoder_forward.9} parent=11 // pred_check
          %p265 = pneg %p178
        $region26: #{transformer_decoder_forward.9} parent=11 // pred_check_branch
          %267 = sbr.rel (%p265) target = $region28
        $region27: #{transformer_decoder_forward.9} parent=11 // pred_region
          _
        $region28: #{transformer_decoder_forward.9} parent=11 // pred_fallthru
          _
        // Predicated region
        $region29: #{transformer_decoder_forward.9} parent=11 // pred_check
          %p268 = pneg %p199
        $region30: #{transformer_decoder_forward.9} parent=11 // pred_check_branch
          %270 = sbr.rel (%p268) target = $region32
        $region31: #{transformer_decoder_forward.9} parent=11 // pred_region
          _
        $region32: #{transformer_decoder_forward.9} parent=11 // pred_fallthru
          _
        // Predicated region
        $region33: #{transformer_decoder_forward.9} parent=11 // pred_check
          %p271 = pneg %p220
        $region34: #{transformer_decoder_forward.9} parent=11 // pred_check_branch
          %273 = sbr.rel (%p271) target = $region36
        $region35: #{transformer_decoder_forward.9} parent=11 // pred_region
          _
        $region36: #{transformer_decoder_forward.9} parent=11 // pred_fallthru
          _
      $region12: #{transformer_decoder_forward.9} parent=5 // pred_fallthru
        _
      %p274 = scmp.lt.s32.totalorder %s16, 4
      // Predicated region
      $region37: #{transformer_decoder_forward.9} parent=5 // pred_check
        %p275 = pneg %p274
      $region38: #{transformer_decoder_forward.9} parent=5 // pred_check_branch
        %277 = sbr.rel (%p275) target = $region40
      $region39: #{transformer_decoder_forward.9} parent=5 // pred_region
        // Predicated region
        $region41: #{transformer_decoder_forward.9} parent=39 // pred_check
          %p278 = pneg %p57
        $region42: #{transformer_decoder_forward.9} parent=39 // pred_check_branch
          %280 = sbr.rel (%p278) target = $region44
        $region43: #{transformer_decoder_forward.9} parent=39 // pred_region
          %s281 = sand.u32 %s47, 1
          %s282 = sand.u32 %s47, 1
          %s283 = smul.addr %s282, 64
          %s284 = scalar_lea.vmem [#allocation3], %s283
          %s285 = smul.u32 4, %s16
          %s286 = smul.addr %s285, 4
          %s287 = scalar_lea.vmem %s1, %s286
          // Predicated region
          $region45: #{transformer_decoder_forward.9} parent=43 // pred_check
            _
          $region46: #{transformer_decoder_forward.9} parent=43 // pred_check_branch
            %289 = sbr.rel (0) target = $region48
          $region47: #{transformer_decoder_forward.9} parent=43 // pred_region
            // Predicated region
            $region49: #{transformer_decoder_forward.9} parent=47 // pred_check
              _
            $region50: #{transformer_decoder_forward.9} parent=47 // pred_check_branch
              %291 = sbr.rel (0) target = $region52
            $region51: #{transformer_decoder_forward.9} parent=47 // pred_region
              loop: start=0, step=1, limit=1
              $region53: #{transformer_decoder_forward.9} parent=51 // loop_pre_header
                _
              $region54: #{transformer_decoder_forward.9} parent=51 // loop_header
                %s293 = sphi 0, %s297
                %p294 = scmp.ge.s32.totalorder %s293, 1
                %s298 = sphi %s287, %s287
                %s299 = sphi %s284, %s284
              $region55: #{transformer_decoder_forward.9} parent=51 // loop_header_branch
                %296 = sbr.rel (%p294) target = $region59
              $region56: #{transformer_decoder_forward.9} parent=51 // loop_body
                %v300 = vld [vmem:[%s298] sm:$0xff]
                %301 = vst [vmem:[%s299] sm:$0xff] %v300
                %v302 = vld [vmem:[%s298 + $0x8] sm:$0xff]
                %303 = vst [vmem:[%s299 + $0x8] sm:$0xff] %v302
                %v304 = vld [vmem:[%s298 + $0x40] sm:$0xff]
                %305 = vst [vmem:[%s299 + $0x10] sm:$0xff] %v304
                %v306 = vld [vmem:[%s298 + $0x48] sm:$0xff]
                %307 = vst [vmem:[%s299 + $0x18] sm:$0xff] %v306
                %v308 = vld [vmem:[%s298 + $0x80] sm:$0xff]
                %309 = vst [vmem:[%s299 + $0x20] sm:$0xff] %v308
                %v310 = vld [vmem:[%s298 + $0x88] sm:$0xff]
                %311 = vst [vmem:[%s299 + $0x28] sm:$0xff] %v310
                %v312 = vld [vmem:[%s298 + $0xc0] sm:$0xff]
                %313 = vst [vmem:[%s299 + $0x30] sm:$0xff] %v312
                %v314 = vld [vmem:[%s298 + $0xc8] sm:$0xff]
                %315 = vst [vmem:[%s299 + $0x38] sm:$0xff] %v314
              $region57: #{transformer_decoder_forward.9} parent=51 // loop_footer
                %s297 = sadd.s32 1, %s293
              $region58: #{transformer_decoder_forward.9} parent=51 // loop_footer_branch
                %292 = sbr.rel target = $region54
              $region59: #{transformer_decoder_forward.9} parent=51 // loop_exit
                _
            $region52: #{transformer_decoder_forward.9} parent=47 // pred_fallthru
              _
            // Predicated region
            $region60: #{transformer_decoder_forward.9} parent=47 // pred_check
              _
            $region61: #{transformer_decoder_forward.9} parent=47 // pred_check_branch
              %317 = sbr.rel target = $region63
            $region62: #{transformer_decoder_forward.9} parent=47 // pred_region
              _
            $region63: #{transformer_decoder_forward.9} parent=47 // pred_fallthru
              _
          $region48: #{transformer_decoder_forward.9} parent=43 // pred_fallthru
            _
          %318 = vnop
        $region44: #{transformer_decoder_forward.9} parent=39 // pred_fallthru
          _
        // Predicated region
        $region64: #{transformer_decoder_forward.9} parent=39 // pred_check
          %p319 = pneg %p83
        $region65: #{transformer_decoder_forward.9} parent=39 // pred_check_branch
          %321 = sbr.rel (%p319) target = $region67
        $region66: #{transformer_decoder_forward.9} parent=39 // pred_region
          %s322 = smul.u32 4, %s16
          %p323 = scmp.lt.s32.totalorder %s322, 15
          %s324 = scalar_select %p323, %s322, 15
          %s325 = scalar_lea.vmem %s2, %s324
          %s326 = smul.u32 4, %s16
        $region67: #{transformer_decoder_forward.9} parent=39 // pred_fallthru
          _
        // Predicated region
        $region68: #{transformer_decoder_forward.9} parent=39 // pred_check
          %p327 = pneg %p109
        $region69: #{transformer_decoder_forward.9} parent=39 // pred_check_branch
          %329 = sbr.rel (%p327) target = $region71
        $region70: #{transformer_decoder_forward.9} parent=39 // pred_region
          %s330 = smul.u32 64, %s16
          %p331 = scmp.lt.s32.totalorder %s330, 255
          %s332 = scalar_select %p331, %s330, 255
          %s333 = smul.addr %s332, 4
          %s334 = scalar_lea.vmem %s3, %s333
          %s335 = smul.u32 64, %s16
        $region71: #{transformer_decoder_forward.9} parent=39 // pred_fallthru
          _
      $region40: #{transformer_decoder_forward.9} parent=5 // pred_fallthru
        _
      %p336 = scmp.le.s32.totalorder 1, %s16
      %p337 = scmp.lt.s32.totalorder %s16, 5
      %p338 = pnand %p336, %p337
      %p339 = pneg %p338
      // Predicated region
      $region72: #{transformer_decoder_forward.9} parent=5 // pred_check
        _
      $region73: #{transformer_decoder_forward.9} parent=5 // pred_check_branch
        %341 = sbr.rel (%p338) target = $region75
      $region74: #{transformer_decoder_forward.9} parent=5 // pred_region
        %s342 = ssub.s32 %s16, 1
        %s343 = sand.u32 %s50, 1
        %s344 = sand.u32 %s50, 1
        %s345 = smul.addr %s344, 64
        %s346 = scalar_lea.vmem [#allocation3], %s345
        // Predicated region
        $region76: #{transformer_decoder_forward.9} parent=74 // pred_check
          %p347 = pneg %p63
        $region77: #{transformer_decoder_forward.9} parent=74 // pred_check_branch
          %349 = sbr.rel (%p347) target = $region79
        $region78: #{transformer_decoder_forward.9} parent=74 // pred_region
          _
        $region79: #{transformer_decoder_forward.9} parent=74 // pred_fallthru
          _
        %p350 = pneg %p37
        %p351 = pneg %p34
        %s352 = sand.u32 %s50, 1
        %s353 = sand.u32 %s50, 1
        %s354 = smul.addr %s353, 64
        %s355 = scalar_lea.vmem [#allocation3], %s354
        %p356 = pneg %p63
        %p357 = pneg %p60
        %s358 = smul.u32 4, %s21
        %p359 = scmp.lt.s32.totalorder %s358, 15
        %s360 = scalar_select %p359, %s358, 15
        %s361 = scalar_lea.vmem %s2, %s360
        %p362 = pneg %p89
        %p363 = pneg %p86
        %s364 = smul.u32 64, %s21
        %p365 = scmp.lt.s32.totalorder %s364, 255
        %s366 = scalar_select %p365, %s364, 255
        %s367 = smul.addr %s366, 4
        %s368 = scalar_lea.vmem %s3, %s367
        %p369 = pneg %p115
        %p370 = pneg %p112
        %p371 = pneg %p136
        %p372 = pneg %p133
        %p373 = pneg %p157
        %p374 = pneg %p154
        %p375 = pneg %p178
        %p376 = pneg %p175
        %p377 = pneg %p199
        %p378 = pneg %p196
        %p379 = pneg %p220
        %p380 = pneg %p217
        %p381 = pneg %p241
        %p382 = pneg %p238
        %s383 = smul.u32 4, %s21
        %s384 = smul.u32 4, %s21
        %p385 = scmp.lt.s32.totalorder %s384, 15
        %s386 = scalar_select %p385, %s384, 15
        %s387 = scalar_lea.vmem %s2, %s386
        %s388 = smul.u32 4, %s21
        %s389 = smul.u32 64, %s21
        %p390 = scmp.lt.s32.totalorder %s389, 255
        %s391 = scalar_select %p390, %s389, 255
        %s392 = smul.addr %s391, 4
        %s393 = scalar_lea.vmem %s3, %s392
        %s394 = smul.u32 64, %s21
        %p396 = scmp.eq.s32.totalorder %s21, 0
        // Predicated region
        $region80: #{transformer_decoder_forward.9} parent=74 // pred_check
          %p397 = pneg %p396
        $region81: #{transformer_decoder_forward.9} parent=74 // pred_check_branch
          %399 = sbr.rel (%p397) target = $region83
        $region82: #{transformer_decoder_forward.9} parent=74 // pred_region
          %vm400 = vcmask 261120
          %401 = vst.msk [vmem:[#allocation2] sm:$0xff] %vm400, 0.0
          %402 = vst.msk [vmem:[#allocation2 + $0x8] sm:$0xff] %vm400, 0.0
        $region83: #{transformer_decoder_forward.9} parent=74 // pred_fallthru
          _
        %v403 = vld [vmem:[%s0] sm:$0xf]
        %v404 = vld [vmem:[%s0 + $0x4] sm:$0xf]
        %v405 = vld [vmem:[%s346] sm:$0xff]
        %v406 = vld [vmem:[%s346 + $0x8] sm:$0xff]
        %v407 = vld [vmem:[%s346 + $0x10] sm:$0xff]
        %v408 = vld [vmem:[%s346 + $0x18] sm:$0xff]
        %v409 = vld [vmem:[%s346 + $0x20] sm:$0xff]
        %v410 = vld [vmem:[%s346 + $0x28] sm:$0xff]
        %v411 = vld [vmem:[%s346 + $0x30] sm:$0xff]
        %v412 = vld [vmem:[%s346 + $0x38] sm:$0xff]
        %v413 = vld [vmem:[%s387] sm:$0xf]
        %v415 = vlaneseq
        %v416 = vshrl.u32 %v415, 7
        %v417 = vsub.s32 0, %v416
        %v418 = vrot.slane %v413, %v417
        %v419 = vlaneseq
        %v420 = vshrl.u32 %v419, 7
        %v421 = vsub.s32 1, %v420
        %v422 = vrot.slane %v413, %v421
        %v423 = vlaneseq
        %v424 = vshrl.u32 %v423, 7
        %v425 = vsub.s32 2, %v424
        %v426 = vrot.slane %v413, %v425
        %v427 = vlaneseq
        %v428 = vshrl.u32 %v427, 7
        %v429 = vsub.s32 3, %v428
        %v430 = vrot.slane %v413, %v429
        %v437 = vunpack.c.l.b16 %v403
        %v438 = vunpack.c.l.b16 %v404
        %v439 = vpack.c.b16 %v438, %v437
        %v448 = vunpack.c.l.b16 %v405
        %v449 = vunpack.c.h.b16 %v405
        %v450 = vunpack.c.l.b16 %v406
        %v451 = vunpack.c.h.b16 %v406
        %v452 = vunpack.c.l.b16 %v407
        %v453 = vunpack.c.h.b16 %v407
        %v454 = vunpack.c.l.b16 %v408
        %v455 = vunpack.c.h.b16 %v408
        %v456 = vunpack.c.l.b16 %v409
        %v457 = vunpack.c.h.b16 %v409
        %v458 = vunpack.c.l.b16 %v410
        %v459 = vunpack.c.h.b16 %v410
        %v460 = vunpack.c.l.b16 %v411
        %v461 = vunpack.c.h.b16 %v411
        %v462 = vunpack.c.l.b16 %v412
        %v463 = vunpack.c.h.b16 %v412
        %v464 = vpack.c.b16 %v452, %v448
        %v465 = vpack.c.b16 %v453, %v449
        %v466 = vpack.c.b16 %v454, %v450
        %v467 = vpack.c.b16 %v455, %v451
        %v468 = vpack.c.b16 %v460, %v456
        %v469 = vpack.c.b16 %v461, %v457
        %v470 = vpack.c.b16 %v462, %v458
        %v471 = vpack.c.b16 %v463, %v459
        %vm480 = vcmask 261120
        %v482 = vsel %vm480, %v439, 0
        %484 = vmatprep.subr.bf16.mxu0 %v465
        %485 = vmatpush1.bf16.msra.mxu0 %v464
        %486 = vmatprep.subr.bf16.mxu0 %v469
        %487 = vmatpush1.bf16.msra.mxu0 %v468
        %488 = vmatprep.subr.bf16.mxu0 0
        %489 = vmatpush1.bf16.msra.mxu0 0
        %490 = vmatprep.subr.bf16.mxu0 0
        %491 = vmatpush1.bf16.msra.mxu0 0
        %492 = vmatprep.subr.bf16.mxu0 0
        %493 = vmatpush1.bf16.msra.mxu0 0
        %494 = vmatprep.subr.bf16.mxu0 0
        %495 = vmatpush1.bf16.msra.mxu0 0
        %496 = vmatprep.subr.bf16.mxu0 0
        %497 = vmatpush1.bf16.msra.mxu0 0
        %498 = vmatprep.subr.bf16.mxu0 0
        %499 = vmatpush1.bf16.msra.mxu0 0
        %500 = vmatprep.subr.bf16.mxu0 0
        %501 = vmatpush1.bf16.msra.mxu0 0
        %502 = vmatprep.subr.bf16.mxu0 0
        %503 = vmatpush1.bf16.msra.mxu0 0
        %504 = vmatprep.subr.bf16.mxu0 0
        %505 = vmatpush1.bf16.msra.mxu0 0
        %506 = vmatprep.subr.bf16.mxu0 0
        %507 = vmatpush1.bf16.msra.mxu0 0
        %508 = vmatprep.subr.bf16.mxu0 0
        %509 = vmatpush1.bf16.msra.mxu0 0
        %510 = vmatprep.subr.bf16.mxu0 0
        %511 = vmatpush1.bf16.msra.mxu0 0
        %512 = vmatprep.subr.bf16.mxu0 0
        %513 = vmatpush1.bf16.msra.mxu0 0
        %514 = vmatprep.subr.bf16.mxu0 0
        %515 = vmatpush1.bf16.msra.mxu0 0
        %516 = vmatprep.mubr.bf16.mxu0 0
        %517 = vmatmul.mubr.bf16.gmra.mrb[0].mxu0 %v482
        %v518 = vpop.f32.mrb[0].mxu0
        %v519 = vadd.f32 %v418, %v518
        %v520 = vpop.f32.mrb[0].mxu0
        %v521 = vadd.f32 %v422, %v520
        %v522 = vpop.f32.mrb[0].mxu0
        %v523 = vadd.f32 %v418, %v522
        %v524 = vpop.f32.mrb[0].mxu0
        %v525 = vadd.f32 %v422, %v524
        %526 = vdwg.mxu0
        %527 = vmatprep.subr.bf16.mxu0 %v467
        %528 = vmatpush1.bf16.msra.mxu0 %v466
        %529 = vmatprep.subr.bf16.mxu0 %v471
        %530 = vmatpush1.bf16.msra.mxu0 %v470
        %531 = vmatprep.subr.bf16.mxu0 0
        %532 = vmatpush1.bf16.msra.mxu0 0
        %533 = vmatprep.subr.bf16.mxu0 0
        %534 = vmatpush1.bf16.msra.mxu0 0
        %535 = vmatprep.subr.bf16.mxu0 0
        %536 = vmatpush1.bf16.msra.mxu0 0
        %537 = vmatprep.subr.bf16.mxu0 0
        %538 = vmatpush1.bf16.msra.mxu0 0
        %539 = vmatprep.subr.bf16.mxu0 0
        %540 = vmatpush1.bf16.msra.mxu0 0
        %541 = vmatprep.subr.bf16.mxu0 0
        %542 = vmatpush1.bf16.msra.mxu0 0
        %543 = vmatprep.subr.bf16.mxu0 0
        %544 = vmatpush1.bf16.msra.mxu0 0
        %545 = vmatprep.subr.bf16.mxu0 0
        %546 = vmatpush1.bf16.msra.mxu0 0
        %547 = vmatprep.subr.bf16.mxu0 0
        %548 = vmatpush1.bf16.msra.mxu0 0
        %549 = vmatprep.subr.bf16.mxu0 0
        %550 = vmatpush1.bf16.msra.mxu0 0
        %551 = vmatprep.subr.bf16.mxu0 0
        %552 = vmatpush1.bf16.msra.mxu0 0
        %553 = vmatprep.subr.bf16.mxu0 0
        %554 = vmatpush1.bf16.msra.mxu0 0
        %555 = vmatprep.subr.bf16.mxu0 0
        %556 = vmatpush1.bf16.msra.mxu0 0
        %557 = vmatprep.subr.bf16.mxu0 0
        %558 = vmatpush1.bf16.msra.mxu0 0
        %559 = vmatprep.mubr.bf16.mxu0 0
        %560 = vmatmul.mubr.bf16.gmra.mrb[0].mxu0 %v482
        %v561 = vpop.f32.mrb[0].mxu0
        %v562 = vadd.f32 %v426, %v561
        %v563 = vpop.f32.mrb[0].mxu0
        %v564 = vadd.f32 %v430, %v563
        %v565 = vpop.f32.mrb[0].mxu0
        %v566 = vadd.f32 %v426, %v565
        %v567 = vpop.f32.mrb[0].mxu0
        %v568 = vadd.f32 %v430, %v567
        %569 = vdwg.mxu0
        %v570 = vmax.f32 %v519, 0.0
        %v571 = vmax.f32 %v521, 0.0
        %v572 = vmax.f32 %v562, 0.0
        %v573 = vmax.f32 %v564, 0.0
        %v574 = vmax.f32 %v523, 0.0
        %v575 = vmax.f32 %v525, 0.0
        %v576 = vmax.f32 %v566, 0.0
        %v577 = vmax.f32 %v568, 0.0
        %v578 = vld [vmem:[#allocation2] sm:$0xff]
        %v579 = vld [vmem:[#allocation2 + $0x8] sm:$0xff]
        %v580 = vpack.c.bf16 %v574, %v570
        %v581 = vpack.c.bf16 %v575, %v571
        %v582 = vpack.c.bf16 %v576, %v572
        %v583 = vpack.c.bf16 %v577, %v573
        %v584 = vld [vmem:[%s393] sm:$0xf]
        %v585 = vld [vmem:[%s393 + $0x4] sm:$0xf]
        %v586 = vld [vmem:[%s393 + $0x8] sm:$0xf]
        %v587 = vld [vmem:[%s393 + $0xc] sm:$0xf]
        %v588 = vld [vmem:[%s393 + $0x10] sm:$0xf]
        %v589 = vld [vmem:[%s393 + $0x14] sm:$0xf]
        %v590 = vld [vmem:[%s393 + $0x18] sm:$0xf]
        %v591 = vld [vmem:[%s393 + $0x1c] sm:$0xf]
        %v592 = vld [vmem:[%s393 + $0x20] sm:$0xf]
        %v593 = vld [vmem:[%s393 + $0x24] sm:$0xf]
        %v594 = vld [vmem:[%s393 + $0x28] sm:$0xf]
        %v595 = vld [vmem:[%s393 + $0x2c] sm:$0xf]
        %v596 = vld [vmem:[%s393 + $0x30] sm:$0xf]
        %v597 = vld [vmem:[%s393 + $0x34] sm:$0xf]
        %v598 = vld [vmem:[%s393 + $0x38] sm:$0xf]
        %v599 = vld [vmem:[%s393 + $0x3c] sm:$0xf]
        %v600 = vld [vmem:[%s393 + $0x40] sm:$0xf]
        %v601 = vld [vmem:[%s393 + $0x44] sm:$0xf]
        %v602 = vld [vmem:[%s393 + $0x48] sm:$0xf]
        %v603 = vld [vmem:[%s393 + $0x4c] sm:$0xf]
        %v604 = vld [vmem:[%s393 + $0x50] sm:$0xf]
        %v605 = vld [vmem:[%s393 + $0x54] sm:$0xf]
        %v606 = vld [vmem:[%s393 + $0x58] sm:$0xf]
        %v607 = vld [vmem:[%s393 + $0x5c] sm:$0xf]
        %v608 = vld [vmem:[%s393 + $0x60] sm:$0xf]
        %v609 = vld [vmem:[%s393 + $0x64] sm:$0xf]
        %v610 = vld [vmem:[%s393 + $0x68] sm:$0xf]
        %v611 = vld [vmem:[%s393 + $0x6c] sm:$0xf]
        %v612 = vld [vmem:[%s393 + $0x70] sm:$0xf]
        %v613 = vld [vmem:[%s393 + $0x74] sm:$0xf]
        %v614 = vld [vmem:[%s393 + $0x78] sm:$0xf]
        %v615 = vld [vmem:[%s393 + $0x7c] sm:$0xf]
        %v616 = vld [vmem:[%s393 + $0x80] sm:$0xf]
        %v617 = vld [vmem:[%s393 + $0x84] sm:$0xf]
        %v618 = vld [vmem:[%s393 + $0x88] sm:$0xf]
        %v619 = vld [vmem:[%s393 + $0x8c] sm:$0xf]
        %v620 = vld [vmem:[%s393 + $0x90] sm:$0xf]
        %v621 = vld [vmem:[%s393 + $0x94] sm:$0xf]
        %v622 = vld [vmem:[%s393 + $0x98] sm:$0xf]
        %v623 = vld [vmem:[%s393 + $0x9c] sm:$0xf]
        %v624 = vld [vmem:[%s393 + $0xa0] sm:$0xf]
        %v625 = vld [vmem:[%s393 + $0xa4] sm:$0xf]
        %v626 = vld [vmem:[%s393 + $0xa8] sm:$0xf]
        %v627 = vld [vmem:[%s393 + $0xac] sm:$0xf]
        %v628 = vld [vmem:[%s393 + $0xb0] sm:$0xf]
        %v629 = vld [vmem:[%s393 + $0xb4] sm:$0xf]
        %v630 = vld [vmem:[%s393 + $0xb8] sm:$0xf]
        %v631 = vld [vmem:[%s393 + $0xbc] sm:$0xf]
        %v632 = vld [vmem:[%s393 + $0xc0] sm:$0xf]
        %v633 = vld [vmem:[%s393 + $0xc4] sm:$0xf]
        %v634 = vld [vmem:[%s393 + $0xc8] sm:$0xf]
        %v635 = vld [vmem:[%s393 + $0xcc] sm:$0xf]
        %v636 = vld [vmem:[%s393 + $0xd0] sm:$0xf]
        %v637 = vld [vmem:[%s393 + $0xd4] sm:$0xf]
        %v638 = vld [vmem:[%s393 + $0xd8] sm:$0xf]
        %v639 = vld [vmem:[%s393 + $0xdc] sm:$0xf]
        %v640 = vld [vmem:[%s393 + $0xe0] sm:$0xf]
        %v641 = vld [vmem:[%s393 + $0xe4] sm:$0xf]
        %v642 = vld [vmem:[%s393 + $0xe8] sm:$0xf]
        %v643 = vld [vmem:[%s393 + $0xec] sm:$0xf]
        %v644 = vld [vmem:[%s393 + $0xf0] sm:$0xf]
        %v645 = vld [vmem:[%s393 + $0xf4] sm:$0xf]
        %v646 = vld [vmem:[%s393 + $0xf8] sm:$0xf]
        %v647 = vld [vmem:[%s393 + $0xfc] sm:$0xf]
        %v712 = vunpack.c.l.b16 %v584
        %v713 = vunpack.c.l.b16 %v585
        %v714 = vunpack.c.l.b16 %v586
        %v715 = vunpack.c.l.b16 %v587
        %v716 = vunpack.c.l.b16 %v588
        %v717 = vunpack.c.l.b16 %v589
        %v718 = vunpack.c.l.b16 %v590
        %v719 = vunpack.c.l.b16 %v591
        %v720 = vunpack.c.l.b16 %v592
        %v721 = vunpack.c.l.b16 %v593
        %v722 = vunpack.c.l.b16 %v594
        %v723 = vunpack.c.l.b16 %v595
        %v724 = vunpack.c.l.b16 %v596
        %v725 = vunpack.c.l.b16 %v597
        %v726 = vunpack.c.l.b16 %v598
        %v727 = vunpack.c.l.b16 %v599
        %v728 = vunpack.c.l.b16 %v600
        %v729 = vunpack.c.l.b16 %v601
        %v730 = vunpack.c.l.b16 %v602
        %v731 = vunpack.c.l.b16 %v603
        %v732 = vunpack.c.l.b16 %v604
        %v733 = vunpack.c.l.b16 %v605
        %v734 = vunpack.c.l.b16 %v606
        %v735 = vunpack.c.l.b16 %v607
        %v736 = vunpack.c.l.b16 %v608
        %v737 = vunpack.c.l.b16 %v609
        %v738 = vunpack.c.l.b16 %v610
        %v739 = vunpack.c.l.b16 %v611
        %v740 = vunpack.c.l.b16 %v612
        %v741 = vunpack.c.l.b16 %v613
        %v742 = vunpack.c.l.b16 %v614
        %v743 = vunpack.c.l.b16 %v615
        %v744 = vunpack.c.l.b16 %v616
        %v745 = vunpack.c.l.b16 %v617
        %v746 = vunpack.c.l.b16 %v618
        %v747 = vunpack.c.l.b16 %v619
        %v748 = vunpack.c.l.b16 %v620
        %v749 = vunpack.c.l.b16 %v621
        %v750 = vunpack.c.l.b16 %v622
        %v751 = vunpack.c.l.b16 %v623
        %v752 = vunpack.c.l.b16 %v624
        %v753 = vunpack.c.l.b16 %v625
        %v754 = vunpack.c.l.b16 %v626
        %v755 = vunpack.c.l.b16 %v627
        %v756 = vunpack.c.l.b16 %v628
        %v757 = vunpack.c.l.b16 %v629
        %v758 = vunpack.c.l.b16 %v630
        %v759 = vunpack.c.l.b16 %v631
        %v760 = vunpack.c.l.b16 %v632
        %v761 = vunpack.c.l.b16 %v633
        %v762 = vunpack.c.l.b16 %v634
        %v763 = vunpack.c.l.b16 %v635
        %v764 = vunpack.c.l.b16 %v636
        %v765 = vunpack.c.l.b16 %v637
        %v766 = vunpack.c.l.b16 %v638
        %v767 = vunpack.c.l.b16 %v639
        %v768 = vunpack.c.l.b16 %v640
        %v769 = vunpack.c.l.b16 %v641
        %v770 = vunpack.c.l.b16 %v642
        %v771 = vunpack.c.l.b16 %v643
        %v772 = vunpack.c.l.b16 %v644
        %v773 = vunpack.c.l.b16 %v645
        %v774 = vunpack.c.l.b16 %v646
        %v775 = vunpack.c.l.b16 %v647
        %v776 = vpack.c.b16 %v713, %v712
        %v777 = vpack.c.b16 %v715, %v714
        %v778 = vpack.c.b16 %v717, %v716
        %v779 = vpack.c.b16 %v719, %v718
        %v780 = vpack.c.b16 %v721, %v720
        %v781 = vpack.c.b16 %v723, %v722
        %v782 = vpack.c.b16 %v725, %v724
        %v783 = vpack.c.b16 %v727, %v726
        %v784 = vpack.c.b16 %v729, %v728
        %v785 = vpack.c.b16 %v731, %v730
        %v786 = vpack.c.b16 %v733, %v732
        %v787 = vpack.c.b16 %v735, %v734
        %v788 = vpack.c.b16 %v737, %v736
        %v789 = vpack.c.b16 %v739, %v738
        %v790 = vpack.c.b16 %v741, %v740
        %v791 = vpack.c.b16 %v743, %v742
        %v792 = vpack.c.b16 %v745, %v744
        %v793 = vpack.c.b16 %v747, %v746
        %v794 = vpack.c.b16 %v749, %v748
        %v795 = vpack.c.b16 %v751, %v750
        %v796 = vpack.c.b16 %v753, %v752
        %v797 = vpack.c.b16 %v755, %v754
        %v798 = vpack.c.b16 %v757, %v756
        %v799 = vpack.c.b16 %v759, %v758
        %v800 = vpack.c.b16 %v761, %v760
        %v801 = vpack.c.b16 %v763, %v762
        %v802 = vpack.c.b16 %v765, %v764
        %v803 = vpack.c.b16 %v767, %v766
        %v804 = vpack.c.b16 %v769, %v768
        %v805 = vpack.c.b16 %v771, %v770
        %v806 = vpack.c.b16 %v773, %v772
        %v807 = vpack.c.b16 %v775, %v774
        %840 = vmatprep.subr.bf16.mxu0 0
        %841 = vmatpush1.bf16.msra.mxu0 %v776
        %842 = vmatprep.subr.bf16.mxu0 0
        %843 = vmatpush1.bf16.msra.mxu0 %v777
        %844 = vmatprep.subr.bf16.mxu0 0
        %845 = vmatpush1.bf16.msra.mxu0 %v778
        %846 = vmatprep.subr.bf16.mxu0 0
        %847 = vmatpush1.bf16.msra.mxu0 %v779
        %848 = vmatprep.subr.bf16.mxu0 0
        %849 = vmatpush1.bf16.msra.mxu0 %v780
        %850 = vmatprep.subr.bf16.mxu0 0
        %851 = vmatpush1.bf16.msra.mxu0 %v781
        %852 = vmatprep.subr.bf16.mxu0 0
        %853 = vmatpush1.bf16.msra.mxu0 %v782
        %854 = vmatprep.subr.bf16.mxu0 0
        %855 = vmatpush1.bf16.msra.mxu0 %v783
        %856 = vmatprep.subr.bf16.mxu0 0
        %857 = vmatpush1.bf16.msra.mxu0 %v784
        %858 = vmatprep.subr.bf16.mxu0 0
        %859 = vmatpush1.bf16.msra.mxu0 %v785
        %860 = vmatprep.subr.bf16.mxu0 0
        %861 = vmatpush1.bf16.msra.mxu0 %v786
        %862 = vmatprep.subr.bf16.mxu0 0
        %863 = vmatpush1.bf16.msra.mxu0 %v787
        %864 = vmatprep.subr.bf16.mxu0 0
        %865 = vmatpush1.bf16.msra.mxu0 %v788
        %866 = vmatprep.subr.bf16.mxu0 0
        %867 = vmatpush1.bf16.msra.mxu0 %v789
        %868 = vmatprep.subr.bf16.mxu0 0
        %869 = vmatpush1.bf16.msra.mxu0 %v790
        %870 = vmatprep.subr.bf16.mxu0 0
        %871 = vmatpush1.bf16.msra.mxu0 %v791
        %872 = vmatprep.mubr.bf16.mxu0 %v581
        %873 = vmatmul.mubr.bf16.gmra.mrb[0].mxu0 %v580
        %v874 = vpop.f32.mrb[0].mxu0
        %v875 = vadd.f32 0.0, %v874
        %v876 = vpop.f32.mrb[0].mxu0
        %v877 = vpop.f32.mrb[0].mxu0
        %v878 = vadd.f32 0.0, %v877
        %v879 = vpop.f32.mrb[0].mxu0
        %880 = vdwg.mxu0
        %881 = vmatprep.subr.bf16.mxu0 0
        %882 = vmatpush1.bf16.msra.mxu0 %v792
        %883 = vmatprep.subr.bf16.mxu0 0
        %884 = vmatpush1.bf16.msra.mxu0 %v793
        %885 = vmatprep.subr.bf16.mxu0 0
        %886 = vmatpush1.bf16.msra.mxu0 %v794
        %887 = vmatprep.subr.bf16.mxu0 0
        %888 = vmatpush1.bf16.msra.mxu0 %v795
        %889 = vmatprep.subr.bf16.mxu0 0
        %890 = vmatpush1.bf16.msra.mxu0 %v796
        %891 = vmatprep.subr.bf16.mxu0 0
        %892 = vmatpush1.bf16.msra.mxu0 %v797
        %893 = vmatprep.subr.bf16.mxu0 0
        %894 = vmatpush1.bf16.msra.mxu0 %v798
        %895 = vmatprep.subr.bf16.mxu0 0
        %896 = vmatpush1.bf16.msra.mxu0 %v799
        %897 = vmatprep.subr.bf16.mxu0 0
        %898 = vmatpush1.bf16.msra.mxu0 %v800
        %899 = vmatprep.subr.bf16.mxu0 0
        %900 = vmatpush1.bf16.msra.mxu0 %v801
        %901 = vmatprep.subr.bf16.mxu0 0
        %902 = vmatpush1.bf16.msra.mxu0 %v802
        %903 = vmatprep.subr.bf16.mxu0 0
        %904 = vmatpush1.bf16.msra.mxu0 %v803
        %905 = vmatprep.subr.bf16.mxu0 0
        %906 = vmatpush1.bf16.msra.mxu0 %v804
        %907 = vmatprep.subr.bf16.mxu0 0
        %908 = vmatpush1.bf16.msra.mxu0 %v805
        %909 = vmatprep.subr.bf16.mxu0 0
        %910 = vmatpush1.bf16.msra.mxu0 %v806
        %911 = vmatprep.subr.bf16.mxu0 0
        %912 = vmatpush1.bf16.msra.mxu0 %v807
        %913 = vmatprep.mubr.bf16.mxu0 %v583
        %914 = vmatmul.mubr.bf16.gmra.mrb[0].mxu0 %v582
        %v915 = vpop.f32.mrb[0].mxu0
        %v916 = vadd.f32 %v875, %v915
        %v917 = vpop.f32.mrb[0].mxu0
        %v918 = vpop.f32.mrb[0].mxu0
        %v919 = vadd.f32 %v878, %v918
        %v920 = vpop.f32.mrb[0].mxu0
        %921 = vdwg.mxu0
        %v922 = vadd.f32 %v578, %v916
        %v923 = vadd.f32 %v579, %v919
        %924 = vst.msk [vmem:[#allocation2] sm:$0xff] %vm480, %v922
        %925 = vst.msk [vmem:[#allocation2 + $0x8] sm:$0xff] %vm480, %v923
        %p926 = scmp.eq.s32.totalorder %s21, 3
        // Predicated region
        $region84: #{transformer_decoder_forward.9} parent=74 // pred_check
          %p927 = pneg %p926
        $region85: #{transformer_decoder_forward.9} parent=74 // pred_check_branch
          %929 = sbr.rel (%p927) target = $region87
        $region86: #{transformer_decoder_forward.9} parent=74 // pred_region
          %v930 = vld [vmem:[#allocation2] sm:$0xff]
          %v931 = vld [vmem:[#allocation2 + $0x8] sm:$0xff]
          %v932 = vld [vmem:[%s4] sm:$0x1]
          %v934 = vlaneseq
          %v935 = vshrl.u32 %v934, 7
          %v936 = vsub.s32 0, %v935
          %v937 = vrot.slane %v932, %v936
          %v939 = vadd.f32 %v930, %v937
          %v940 = vadd.f32 %v931, %v937
          %v941 = vld [vmem:[%s0] sm:$0xf]
          %v942 = vld [vmem:[%s0 + $0x4] sm:$0xf]
          %v943 = vunpack.c.l.bf16 %v941
          %v944 = vunpack.c.l.bf16 %v942
          %v945 = vadd.f32 %v939, %v943
          %v946 = vadd.f32 %v940, %v944
          %v947 = vsel %vm480, %v945, 0.0
          %948 = vadd.xlane.f32.xlu0 %v947
          %v949 = vpop.xlane.xlu0 %948
          %v950 = vsel %vm480, %v946, 0.0
          %951 = vadd.xlane.f32.xlu0 %v950
          %v952 = vpop.xlane.xlu0 %951
          %v953 = vrcp.pop 32.0
          %v954 = vmul.f32 %v949, %v953
          %v955 = vmul.f32 %v952, %v953
          %v956 = vsub.f32 %v945, %v954
          %v957 = vsub.f32 %v946, %v955
          %v958 = vmul.f32 %v956, %v956
          %v959 = vmul.f32 %v957, %v957
          %v960 = vsel %vm480, %v958, 0.0
          %961 = vadd.xlane.f32.xlu0 %v960
          %v962 = vpop.xlane.xlu0 %961
          %v963 = vsel %vm480, %v959, 0.0
          %964 = vadd.xlane.f32.xlu0 %v963
          %v965 = vpop.xlane.xlu0 %964
          %v966 = vmul.f32 %v962, %v953
          %v967 = vmul.f32 %v965, %v953
          %v968 = vadd.f32 %v966, 1e-05
          %v969 = vadd.f32 %v967, 1e-05
          %v970 = vrsqrt.pop %v968
          %v971 = vrsqrt.pop %v969
          %v972 = vmul.f32 %v956, %v970
          %v973 = vmul.f32 %v957, %v971
          %v974 = vld [vmem:[%s5] sm:$0x1]
          %v976 = vlaneseq
          %v977 = vshrl.u32 %v976, 7
          %v978 = vsub.s32 0, %v977
          %v979 = vrot.slane %v974, %v978
          %v981 = vmul.f32 %v972, %v979
          %v982 = vmul.f32 %v973, %v979
          %v983 = vld [vmem:[%s6] sm:$0x1]
          %v985 = vlaneseq
          %v986 = vshrl.u32 %v985, 7
          %v987 = vsub.s32 0, %v986
          %v988 = vrot.slane %v983, %v987
          %v990 = vadd.f32 %v981, %v988
          %v991 = vadd.f32 %v982, %v988
          %v992 = vsel %vm480, %v990, 0.0
          %993 = vadd.xlane.f32.xlu0 %v992
          %v994 = vpop.xlane.xlu0 %993
          %v995 = vsel %vm480, %v991, 0.0
          %996 = vadd.xlane.f32.xlu0 %v995
          %v997 = vpop.xlane.xlu0 %996
          %v998 = vmul.f32 %v994, %v953
          %v999 = vmul.f32 %v997, %v953
          %v1000 = vsub.f32 %v990, %v998
          %v1001 = vsub.f32 %v991, %v999
          %v1002 = vmul.f32 %v1000, %v1000
          %v1003 = vmul.f32 %v1001, %v1001
          %v1004 = vsel %vm480, %v1002, 0.0
          %1005 = vadd.xlane.f32.xlu0 %v1004
          %v1006 = vpop.xlane.xlu0 %1005
          %v1007 = vsel %vm480, %v1003, 0.0
          %1008 = vadd.xlane.f32.xlu0 %v1007
          %v1009 = vpop.xlane.xlu0 %1008
          %v1010 = vmul.f32 %v1006, %v953
          %v1011 = vmul.f32 %v1009, %v953
          %v1012 = vadd.f32 %v1010, 1e-05
          %v1013 = vadd.f32 %v1011, 1e-05
          %v1014 = vrsqrt.pop %v1012
          %v1015 = vrsqrt.pop %v1013
          %v1016 = vmul.f32 %v1000, %v1014
          %v1017 = vmul.f32 %v1001, %v1015
          %v1018 = vld [vmem:[%s7] sm:$0x1]
          %v1020 = vlaneseq
          %v1021 = vshrl.u32 %v1020, 7
          %v1022 = vsub.s32 0, %v1021
          %v1023 = vrot.slane %v1018, %v1022
          %v1025 = vmul.f32 %v1016, %v1023
          %v1026 = vmul.f32 %v1017, %v1023
          %v1027 = vld [vmem:[%s8] sm:$0x1]
          %v1029 = vlaneseq
          %v1030 = vshrl.u32 %v1029, 7
          %v1031 = vsub.s32 0, %v1030
          %v1032 = vrot.slane %v1027, %v1031
          %v1034 = vadd.f32 %v1025, %v1032
          %v1035 = vadd.f32 %v1026, %v1032
          %1036 = vst.msk [vmem:[#allocation4] sm:$0xff] %vm480, %v1034
          %1037 = vst.msk [vmem:[#allocation4 + $0x8] sm:$0xff] %vm480, %v1035
        $region87: #{transformer_decoder_forward.9} parent=74 // pred_fallthru
          _
        // Predicated region
        $region88: #{transformer_decoder_forward.9} parent=74 // pred_check
          %p1038 = pneg %p238
        $region89: #{transformer_decoder_forward.9} parent=74 // pred_check_branch
          %1040 = sbr.rel (%p1038) target = $region91
        $region90: #{transformer_decoder_forward.9} parent=74 // pred_region
          %s1042 = ssub.s32 256, 256
          %1043 = vsyncadd [#allocation5], %s1042
          %s1044 = sshll.u32 [#allocation4], 4
          %s1045 = int_to_ptr.vmem [resolvable:$true] %s1044
          %1050 = dma.vmem_to_hbm [thread:$0]  %s1045, 256, %s9, [#allocation5], 128, 128, 8
        $region91: #{transformer_decoder_forward.9} parent=74 // pred_fallthru
          _
        // Predicated region
        $region92: #{transformer_decoder_forward.9} parent=74 // pred_check
          %p1051 = pneg %p238
        $region93: #{transformer_decoder_forward.9} parent=74 // pred_check_branch
          %1053 = sbr.rel (%p1051) target = $region95
        $region94: #{transformer_decoder_forward.9} parent=74 // pred_region
          %1054 = dma.done [#allocation5], 256
        $region95: #{transformer_decoder_forward.9} parent=74 // pred_fallthru
          _
      $region75: #{transformer_decoder_forward.9} parent=5 // pred_fallthru
        _
      %p1055 = scmp.le.s32.totalorder 2, %s16
      // Predicated region
      $region96: #{transformer_decoder_forward.9} parent=5 // pred_check
        %p1056 = pneg %p1055
      $region97: #{transformer_decoder_forward.9} parent=5 // pred_check_branch
        %1058 = sbr.rel (%p1056) target = $region99
      $region98: #{transformer_decoder_forward.9} parent=5 // pred_region
        %s1059 = ssub.s32 %s16, 2
      $region99: #{transformer_decoder_forward.9} parent=5 // pred_fallthru
        _
    $region6: #{transformer_decoder_forward.9} parent=1 // loop_footer
      %s20 = sadd.s32 1, %s16
    $region7: #{transformer_decoder_forward.9} parent=1 // loop_footer_branch
      %15 = sbr.rel target = $region3
    $region8: #{transformer_decoder_forward.9} parent=1 // loop_exit
      _
    %1060 = vsyncpa [#allocation5], 1
    %s1061 = scalar_lea.sflag [#allocation5], 1
    %1062 = vsyncpa %s1061, 1

</llo_original>
